<compile_context>
chip_gen: v6e
topology: v6e:2x2x1
jax: 0.10.0
libtpu: 0.0.40
codegen_flags: <defaults>
</compile_context>

<pallas_src>
import functools

import jax
import jax.numpy as jnp
from jax.experimental import pallas as pl
from jax.experimental.pallas import tpu as pltpu


def _round_up(x, m):
    return (x + m - 1) // m * m


def _vmem_capacity_bytes():
    """Physical per-core VMEM (generation aware) with a conservative fallback."""
    try:
        info = pltpu.get_tpu_info()
        cap = int(getattr(info, "vmem_capacity_bytes", 0) or 0)
        if cap > 0:
            return cap
    except Exception:
        pass
    return 64 * 2 ** 20          # v7x has the smallest per-core VMEM (64 MiB)


# ----------------------------------------------------------------------------
# Pallas kernel: one (batch, row-tile) step of dilated local attention
# ----------------------------------------------------------------------------
def _dilate_attention_kernel(sum_ref, qkm_ref, tile_ref, den_ref, pvm_ref,
                             q_ref, k_ref, v_ref, o_ref, *,
                             ks, dil, th, w, nh, d):
    # sum_ref : (d, nh)            channel->head sum one-hot, softmax scale folded in
    # qkm_ref : (ks*ks, d, ks*ks*nh)  per-neighbour placement of the scaled head-sum
    # tile_ref: (nh, ks*ks*nh)     head -> all-neighbour-slot broadcast
    # den_ref : (ks*ks*nh, nh)     neighbour-slot -> head sum (softmax denominator)
    # pvm_ref : (ks*ks, ks*ks*nh, d)  neighbour j's head prob -> channel broadcast
    # q_ref   : (1, P, d)   bf16   P = th * w query pixels of this row tile
    # k_ref   : (1, Hp, Wp, d) bf16  whole zero-padded K image (resident per batch)
    # v_ref   : (1, Hp, Wp, d) bf16  whole zero-padded V image (resident per batch)
    # o_ref   : (1, P, d)   f32
    P = th * w
    r0 = pl.program_id(1) * th                       # first query row of this tile
    panel_rows = th + (ks - 1) * dil

    qf = q_ref[0].astype(jnp.float32)                # (P, d)
    sum_mat = sum_ref[...]                           # (d, nh)
    tile_mat = tile_ref[...]                         # (nh, ks*ks*nh)

    # ---- QK stage: lane-packed logits over the ks*ks neighbours --------------
    # One fully-aligned full-width panel load + cast; 3 column (sublane) shifts.
    kpan = k_ref[0, pl.ds(r0, panel_rows), :, :].astype(jnp.float32)  # (rows, Wp, d)
    logits = None                                    # (P, ks*ks*nh), packed
    m = None                                         # (P, nh), per-head running max
    for kw in range(ks):
        kcol = kpan[:, kw * dil:kw * dil + w, :]     # one sublane shift per kw
        for kh in range(ks):
            j = kw * ks + kh
            kj = kcol[kh * dil:kh * dil + th].reshape(P, d)   # free slice + no-op merge
            prod = qf * kj                                     # (P, d) f32
            contrib = jnp.dot(prod, qkm_ref[j],
                              preferred_element_type=jnp.float32)   # packed block j
            logits = contrib if logits is None else logits + contrib
            lj = jnp.dot(prod, sum_mat,
                         preferred_element_type=jnp.float32)        # (P, nh)
            m = lj if m is None else jnp.maximum(m, lj)

    # ---- numerically-stable softmax over the neighbours (per pixel, head) ----
    m_b = jnp.dot(m, tile_mat, preferred_element_type=jnp.float32)  # (P, ks*ks*nh)
    pexp = jnp.exp(logits - m_b)
    denom = jnp.dot(pexp, den_ref[...], preferred_element_type=jnp.float32)  # (P, nh)
    inv = pl.reciprocal(denom, approx=True)                                  # EUP
    pn = pexp * jnp.dot(inv, tile_mat, preferred_element_type=jnp.float32)

    # ---- PV stage: out[p, c] = sum_j pn[p, j*nh + head(c)] * v_j[p, c] -------
    vpan = v_ref[0, pl.ds(r0, panel_rows), :, :].astype(jnp.float32)
    acc = None
    for kw in range(ks):
        vcol = vpan[:, kw * dil:kw * dil + w, :]
        for kh in range(ks):
            j = kw * ks + kh
            vj = vcol[kh * dil:kh * dil + th].reshape(P, d)
            term = jnp.dot(pn, pvm_ref[j], preferred_element_type=jnp.float32) * vj
            acc = term if acc is None else acc + term
    o_ref[0] = acc.astype(o_ref.dtype)


# ----------------------------------------------------------------------------
# Wrapper: layout plumbing (NCHW -> channels-last, zero padding, bf16) + pallas_call
# ----------------------------------------------------------------------------
def dilate_attention(q, k, v, *, head_dim, qk_scale=None, kernel_size=3,
                     dilation=1, tile_pixels=1024, storage_dtype=jnp.bfloat16):
    B, d, H, W = q.shape
    assert d % head_dim == 0, "d must be divisible by head_dim"
    nh = d // head_dim
    kk = kernel_size * kernel_size
    cn = kk * nh
    scale = qk_scale if qk_scale is not None else head_dim ** (-0.5)
    pad = dilation * (kernel_size - 1) // 2
    extra = (kernel_size - 1) * dilation - pad       # == pad for odd kernel sizes

    # lane-friendly width: (th, Wq, d) -> (P, d) merge is a layout no-op iff Wq % 8 == 0
    Wq = _round_up(W, 8)
    dW = Wq - W

    # row tiling (~tile_pixels query pixels per grid step)
    th = max(1, -(-tile_pixels // Wq))
    th = min(th, H)
    n_tiles = -(-H // th)
    h_pad = n_tiles * th
    P = th * Wq
    Np = h_pad * Wq
    Hp = h_pad + pad + extra
    Wp = Wq + pad + extra

    # channels-last + zero padding (done once in the wrapper) + bf16 storage
    q_cl = jnp.transpose(q, (0, 2, 3, 1))            # (B, H, W, d)
    k_cl = jnp.transpose(k, (0, 2, 3, 1))
    v_cl = jnp.transpose(v, (0, 2, 3, 1))
    q_flat = jnp.pad(q_cl, ((0, 0), (0, h_pad - H), (0, dW), (0, 0))
                     ).reshape(B, Np, d).astype(storage_dtype)
    k_pad = jnp.pad(k_cl, ((0, 0), (pad, extra + h_pad - H),
                           (pad, extra + dW), (0, 0))).astype(storage_dtype)
    v_pad = jnp.pad(v_cl, ((0, 0), (pad, extra + h_pad - H),
                           (pad, extra + dW), (0, 0))).astype(storage_dtype)

    # tiny constant one-hot matrices (resident in VMEM, DMA'd once; scale folded in)
    c = jnp.arange(d)
    h_idx = jnp.arange(nh)
    cols = jnp.arange(cn)
    head_of_c = c // head_dim
    sum_mat = (head_of_c[:, None] == h_idx[None, :]).astype(jnp.float32) * scale
    qk_mats = jnp.stack(
        [(cols[None, :] == (j * nh + head_of_c[:, None])).astype(jnp.float32) * scale
         for j in range(kk)], axis=0)                                  # (kk, d, cn)
    tile_mat = (cols[None, :] % nh == h_idx[:, None]).astype(jnp.float32)  # (nh, cn)
    den_mat = (cols[:, None] % nh == h_idx[None, :]).astype(jnp.float32)   # (cn, nh)
    pv_mats = jnp.stack(
        [(cols[:, None] == (j * nh + head_of_c[None, :])).astype(jnp.float32)
         for j in range(kk)], axis=0)                                  # (kk, cn, d)

    # --- generation-aware VMEM budget (accounts for lane padding of d < 128) ---
    LANE = 128
    sb = jnp.dtype(storage_dtype).itemsize
    row_pack = 8 * max(1, 4 // sb)
    d_pad = _round_up(max(d, LANE), LANE)
    cn_pad = _round_up(max(cn, LANE), LANE)
    kv_blk = Hp * _round_up(Wp, row_pack) * d_pad * sb    # one padded K or V image block
    q_blk = _round_up(P, row_pack) * d_pad * sb
    o_blk = _round_up(P, 8) * d_pad * 4
    panel = (th + (kernel_size - 1) * dilation) * _round_up(Wp, 8) * d_pad * 4
    tmp = 12 * P * max(d_pad, cn_pad) * 4 + 2 * panel     # packed/lane-padded temporaries
    consts = (2 * kk + 3) * _round_up(max(d, cn), 8) * max(d_pad, cn_pad) * 4
    est = 2 * (2 * kv_blk + q_blk + o_blk + consts) + tmp
    cap = _vmem_capacity_bytes()
    vmem_limit = int(min(int(0.72 * cap), max(32 * 2 ** 20, 2 * est)))

    kernel = functools.partial(
        _dilate_attention_kernel, ks=kernel_size, dil=dilation,
        th=th, w=Wq, nh=nh, d=d)

    out = pl.pallas_call(
        kernel,
        out_shape=jax.ShapeDtypeStruct((B, Np, d), jnp.float32),
        grid=(B, n_tiles),
        in_specs=[
            # tiny resident one-hot matrices (constant index_map -> DMA'd once)
            pl.BlockSpec((d, nh), lambda b, i: (0, 0)),
            pl.BlockSpec((kk, d, cn), lambda b, i: (0, 0, 0)),
            pl.BlockSpec((nh, cn), lambda b, i: (0, 0)),
            pl.BlockSpec((cn, nh), lambda b, i: (0, 0)),
            pl.BlockSpec((kk, cn, d), lambda b, i: (0, 0, 0)),
            # query pixels: tiled along the flattened (row-major) pixel axis
            pl.BlockSpec((1, P, d), lambda b, i: (b, i, 0)),
            # K/V: whole padded image per batch; constant across the i axis
            # -> resident in VMEM, DMA'd once per batch (no 9x unfold in HBM)
            pl.BlockSpec((1, Hp, Wp, d), lambda b, i: (b, 0, 0, 0)),
            pl.BlockSpec((1, Hp, Wp, d), lambda b, i: (b, 0, 0, 0)),
        ],
        out_specs=pl.BlockSpec((1, P, d), lambda b, i: (b, i, 0)),
        compiler_params=pltpu.CompilerParams(
            # batch axis parallel (megacore split there keeps one K/V copy per core),
            # row-tile axis arbitrary (avoids both cores re-DMAing the same K/V image)
            dimension_semantics=("parallel", "arbitrary"),
            vmem_limit_bytes=vmem_limit,
        ),
    )(sum_mat, qk_mats, tile_mat, den_mat, pv_mats, q_flat, k_pad, v_pad)

    out = out.reshape(B, h_pad, Wq, d)[:, :H, :W, :]   # drop row/column padding
    return out                                          # (B, H, W, d)


# ----------------------------------------------------------------------------
# Pure-JAX reference (nn.Unfold semantics) for correctness checking
# ----------------------------------------------------------------------------
def _ref_dilate_attention(q, k, v, head_dim, kernel_size, dilation, scale):
    B, d, H, W = q.shape
    nh = d // head_dim
    kk = kernel_size * kernel_size
    pad = dilation * (kernel_size - 1) // 2

    def unfold(x):                                    # (B, d, H, W) -> (B, d, kk, H, W)
        xp = jnp.pad(x, ((0, 0), (0, 0), (pad, pad), (pad, pad)))
        pats = []
        for kh in range(kernel_size):
            for kw in range(kernel_size):
                pats.append(xp[:, :, kh * dilation: kh * dilation + H,
                               kw * dilation: kw * dilation + W])
        return jnp.stack(pats, axis=2)

    ku = unfold(k).reshape(B, nh, head_dim, kk, H * W)
    vu = unfold(v).reshape(B, nh, head_dim, kk, H * W)
    qh = q.reshape(B, nh, head_dim, H * W)
    logits = jnp.einsum("bhdn,bhdkn->bhkn", qh, ku) * scale
    p = jax.nn.softmax(logits, axis=2)
    out = jnp.einsum("bhkn,bhdkn->bhdn", p, vu).reshape(B, d, H, W)
    return jnp.transpose(out, (0, 2, 3, 1))           # (B, H, W, d)


# ----------------------------------------------------------------------------
if __name__ == "__main__":
    key = jax.random.PRNGKey(0)

    # Config 1: default DilateAttention shapes; dilation 1 and 2.
    B, d, H, W = 2, 32, 16, 16
    head_dim = 8
    kq, kk_, kv = jax.random.split(key, 3)
    q = jax.random.normal(kq, (B, d, H, W), jnp.float32)
    k = jax.random.normal(kk_, (B, d, H, W), jnp.float32)
    v = jax.random.normal(kv, (B, d, H, W), jnp.float32)

    # The kernel stores/DMAs q/k/v as bf16 (perf feedback); compare against a
    # reference fed the same bf16-rounded operands (compute is f32 in both).
    qr = q.astype(jnp.bfloat16).astype(jnp.float32)
    kr = k.astype(jnp.bfloat16).astype(jnp.float32)
    vr = v.astype(jnp.bfloat16).astype(jnp.float32)

    for dil in (1, 2):
        out = jax.block_until_ready(
            dilate_attention(q, k, v, head_dim=head_dim, kernel_size=3, dilation=dil))
        assert out.shape == (B, H, W, d)
        ref = jax.block_until_ready(
            _ref_dilate_attention(qr, kr, vr, head_dim, 3, dil, head_dim ** (-0.5)))
        err = float(jnp.max(jnp.abs(out - ref)))
        assert err < 2e-2, f"mismatch vs reference (dilation={dil}): {err}"

    # Config 2: ragged H, W not a multiple of 8, multi-tile grid, dilation 3.
    B2, d2, H2, W2, hd2 = 1, 24, 10, 12, 4
    kq2, kk2, kv2 = jax.random.split(jax.random.PRNGKey(1), 3)
    q2 = jax.random.normal(kq2, (B2, d2, H2, W2), jnp.float32)
    k2 = jax.random.normal(kk2, (B2, d2, H2, W2), jnp.float32)
    v2 = jax.random.normal(kv2, (B2, d2, H2, W2), jnp.float32)
    q2r = q2.astype(jnp.bfloat16).astype(jnp.float32)
    k2r = k2.astype(jnp.bfloat16).astype(jnp.float32)
    v2r = v2.astype(jnp.bfloat16).astype(jnp.float32)

    out2 = jax.block_until_ready(
        dilate_attention(q2, k2, v2, head_dim=hd2, kernel_size=3, dilation=3,
                         tile_pixels=64))
    ref2 = jax.block_until_ready(
        _ref_dilate_attention(q2r, k2r, v2r, hd2, 3, 3, hd2 ** (-0.5)))
    err2 = float(jnp.max(jnp.abs(out2 - ref2)))
    assert out2.shape == (B2, H2, W2, d2)
    assert err2 < 2e-2, f"mismatch vs reference (ragged config): {err2}"

    print("KERNEL_OK")
</pallas_src>

<mosaic_0001>
module attributes {stable_mosaic.version = 11 : i64} {
  func.func @_dilate_attention_kernel(%arg0: i32, %arg1: i32, %arg2: memref<32x4xf32, #tpu.memory_space<vmem>>, %arg3: memref<9x32x36xf32, #tpu.memory_space<vmem>>, %arg4: memref<4x36xf32, #tpu.memory_space<vmem>>, %arg5: memref<36x4xf32, #tpu.memory_space<vmem>>, %arg6: memref<9x36x32xf32, #tpu.memory_space<vmem>>, %arg7: memref<1x256x32xbf16, #tpu.memory_space<vmem>>, %arg8: memref<1x18x18x32xbf16, #tpu.memory_space<vmem>>, %arg9: memref<1x18x18x32xbf16, #tpu.memory_space<vmem>>, %arg10: memref<1x256x32xf32, #tpu.memory_space<vmem>>) attributes {dimension_semantics = [#tpu.dimension_semantics<parallel>, #tpu.dimension_semantics<arbitrary>], iteration_bounds = array<i64: 2, 1>, scalar_prefetch = 0 : i64, scratch_operands = 0 : i64, tpu.core_type = #tpu.core_type<tc>, window_params = [{pipeline_mode = #tpu.pipeline_mode<synchronous>, transform_indices = @transform_0, window_bounds = array<i64: 32, 4>}, {pipeline_mode = #tpu.pipeline_mode<synchronous>, transform_indices = @transform_1, window_bounds = array<i64: 9, 32, 36>}, {pipeline_mode = #tpu.pipeline_mode<synchronous>, transform_indices = @transform_2, window_bounds = array<i64: 4, 36>}, {pipeline_mode = #tpu.pipeline_mode<synchronous>, transform_indices = @transform_3, window_bounds = array<i64: 36, 4>}, {pipeline_mode = #tpu.pipeline_mode<synchronous>, transform_indices = @transform_4, window_bounds = array<i64: 9, 36, 32>}, {transform_indices = @transform_5, window_bounds = array<i64: 1, 256, 32>}, {transform_indices = @transform_6, window_bounds = array<i64: 1, 18, 18, 32>}, {transform_indices = @transform_7, window_bounds = array<i64: 1, 18, 18, 32>}, {transform_indices = @transform_8, window_bounds = array<i64: 1, 256, 32>}]} {
    %c16_i32 = arith.constant 16 : i32
    %0 = arith.muli %arg1, %c16_i32 : i32
    %c0 = arith.constant 0 : index
    %c0_0 = arith.constant 0 : index
    %c0_1 = arith.constant 0 : index
    %1 = vector.load %arg7[%c0, %c0_0, %c0_1] : memref<1x256x32xbf16, #tpu.memory_space<vmem>>, vector<1x256x32xbf16>
    %2 = vector.shape_cast %1 : vector<1x256x32xbf16> to vector<256x32xbf16>
    %3 = arith.extf %2 : vector<256x32xbf16> to vector<256x32xf32>
    %c0_2 = arith.constant 0 : index
    %c0_3 = arith.constant 0 : index
    %4 = vector.load %arg2[%c0_2, %c0_3] : memref<32x4xf32, #tpu.memory_space<vmem>>, vector<32x4xf32>
    %c0_4 = arith.constant 0 : index
    %c0_5 = arith.constant 0 : index
    %5 = vector.load %arg4[%c0_4, %c0_5] : memref<4x36xf32, #tpu.memory_space<vmem>>, vector<4x36xf32>
    %c0_6 = arith.constant 0 : index
    %6 = arith.index_cast %0 : i32 to index
    %c0_7 = arith.constant 0 : index
    %c0_8 = arith.constant 0 : index
    %7 = vector.load %arg8[%c0_6, %6, %c0_7, %c0_8] : memref<1x18x18x32xbf16, #tpu.memory_space<vmem>>, vector<1x18x18x32xbf16>
    %8 = vector.shape_cast %7 : vector<1x18x18x32xbf16> to vector<18x18x32xbf16>
    %9 = arith.extf %8 : vector<18x18x32xbf16> to vector<18x18x32xf32>
    %10 = vector.extract_strided_slice %9 {offsets = [0, 0, 0], sizes = [18, 16, 32], strides = [1, 1, 1]} : vector<18x18x32xf32> to vector<18x16x32xf32>
    %11 = vector.extract_strided_slice %10 {offsets = [0, 0, 0], sizes = [16, 16, 32], strides = [1, 1, 1]} : vector<18x16x32xf32> to vector<16x16x32xf32>
    %12 = vector.shape_cast %11 : vector<16x16x32xf32> to vector<256x32xf32>
    %13 = arith.mulf %3, %12 : vector<256x32xf32>
    %c0_9 = arith.constant 0 : index
    %c0_10 = arith.constant 0 : index
    %c0_11 = arith.constant 0 : index
    %14 = vector.load %arg3[%c0_9, %c0_10, %c0_11] : memref<9x32x36xf32, #tpu.memory_space<vmem>>, vector<1x32x36xf32>
    %15 = vector.shape_cast %14 : vector<1x32x36xf32> to vector<32x36xf32>
    %cst = arith.constant dense<0.000000e+00> : vector<256x36xf32>
    %16 = tpu.matmul %13, %15, %cst {dimension_numbers = #tpu.dot_dimension_numbers<[1], [0], [0], [1], [0, 0, 1, 1], [], []>} : vector<256x32xf32>, vector<32x36xf32>, vector<256x36xf32> -> vector<256x36xf32>
    %cst_12 = arith.constant dense<0.000000e+00> : vector<256x4xf32>
    %17 = tpu.matmul %13, %4, %cst_12 {dimension_numbers = #tpu.dot_dimension_numbers<[1], [0], [0], [1], [0, 0, 1, 1], [], []>} : vector<256x32xf32>, vector<32x4xf32>, vector<256x4xf32> -> vector<256x4xf32>
    %18 = vector.extract_strided_slice %10 {offsets = [1, 0, 0], sizes = [16, 16, 32], strides = [1, 1, 1]} : vector<18x16x32xf32> to vector<16x16x32xf32>
    %19 = vector.shape_cast %18 : vector<16x16x32xf32> to vector<256x32xf32>
    %20 = arith.mulf %3, %19 : vector<256x32xf32>
    %c1 = arith.constant 1 : index
    %c0_13 = arith.constant 0 : index
    %c0_14 = arith.constant 0 : index
    %21 = vector.load %arg3[%c1, %c0_13, %c0_14] : memref<9x32x36xf32, #tpu.memory_space<vmem>>, vector<1x32x36xf32>
    %22 = vector.shape_cast %21 : vector<1x32x36xf32> to vector<32x36xf32>
    %cst_15 = arith.constant dense<0.000000e+00> : vector<256x36xf32>
    %23 = tpu.matmul %20, %22, %cst_15 {dimension_numbers = #tpu.dot_dimension_numbers<[1], [0], [0], [1], [0, 0, 1, 1], [], []>} : vector<256x32xf32>, vector<32x36xf32>, vector<256x36xf32> -> vector<256x36xf32>
    %24 = arith.addf %16, %23 : vector<256x36xf32>
    %cst_16 = arith.constant dense<0.000000e+00> : vector<256x4xf32>
    %25 = tpu.matmul %20, %4, %cst_16 {dimension_numbers = #tpu.dot_dimension_numbers<[1], [0], [0], [1], [0, 0, 1, 1], [], []>} : vector<256x32xf32>, vector<32x4xf32>, vector<256x4xf32> -> vector<256x4xf32>
    %26 = arith.maximumf %17, %25 : vector<256x4xf32>
    %27 = vector.extract_strided_slice %10 {offsets = [2, 0, 0], sizes = [16, 16, 32], strides = [1, 1, 1]} : vector<18x16x32xf32> to vector<16x16x32xf32>
    %28 = vector.shape_cast %27 : vector<16x16x32xf32> to vector<256x32xf32>
    %29 = arith.mulf %3, %28 : vector<256x32xf32>
    %c2 = arith.constant 2 : index
    %c0_17 = arith.constant 0 : index
    %c0_18 = arith.constant 0 : index
    %30 = vector.load %arg3[%c2, %c0_17, %c0_18] : memref<9x32x36xf32, #tpu.memory_space<vmem>>, vector<1x32x36xf32>
    %31 = vector.shape_cast %30 : vector<1x32x36xf32> to vector<32x36xf32>
    %cst_19 = arith.constant dense<0.000000e+00> : vector<256x36xf32>
    %32 = tpu.matmul %29, %31, %cst_19 {dimension_numbers = #tpu.dot_dimension_numbers<[1], [0], [0], [1], [0, 0, 1, 1], [], []>} : vector<256x32xf32>, vector<32x36xf32>, vector<256x36xf32> -> vector<256x36xf32>
    %33 = arith.addf %24, %32 : vector<256x36xf32>
    %cst_20 = arith.constant dense<0.000000e+00> : vector<256x4xf32>
    %34 = tpu.matmul %29, %4, %cst_20 {dimension_numbers = #tpu.dot_dimension_numbers<[1], [0], [0], [1], [0, 0, 1, 1], [], []>} : vector<256x32xf32>, vector<32x4xf32>, vector<256x4xf32> -> vector<256x4xf32>
    %35 = arith.maximumf %26, %34 : vector<256x4xf32>
    %36 = vector.extract_strided_slice %9 {offsets = [0, 1, 0], sizes = [18, 16, 32], strides = [1, 1, 1]} : vector<18x18x32xf32> to vector<18x16x32xf32>
    %37 = vector.extract_strided_slice %36 {offsets = [0, 0, 0], sizes = [16, 16, 32], strides = [1, 1, 1]} : vector<18x16x32xf32> to vector<16x16x32xf32>
    %38 = vector.shape_cast %37 : vector<16x16x32xf32> to vector<256x32xf32>
    %39 = arith.mulf %3, %38 : vector<256x32xf32>
    %c3 = arith.constant 3 : index
    %c0_21 = arith.constant 0 : index
    %c0_22 = arith.constant 0 : index
    %40 = vector.load %arg3[%c3, %c0_21, %c0_22] : memref<9x32x36xf32, #tpu.memory_space<vmem>>, vector<1x32x36xf32>
    %41 = vector.shape_cast %40 : vector<1x32x36xf32> to vector<32x36xf32>
    %cst_23 = arith.constant dense<0.000000e+00> : vector<256x36xf32>
    %42 = tpu.matmul %39, %41, %cst_23 {dimension_numbers = #tpu.dot_dimension_numbers<[1], [0], [0], [1], [0, 0, 1, 1], [], []>} : vector<256x32xf32>, vector<32x36xf32>, vector<256x36xf32> -> vector<256x36xf32>
    %43 = arith.addf %33, %42 : vector<256x36xf32>
    %cst_24 = arith.constant dense<0.000000e+00> : vector<256x4xf32>
    %44 = tpu.matmul %39, %4, %cst_24 {dimension_numbers = #tpu.dot_dimension_numbers<[1], [0], [0], [1], [0, 0, 1, 1], [], []>} : vector<256x32xf32>, vector<32x4xf32>, vector<256x4xf32> -> vector<256x4xf32>
    %45 = arith.maximumf %35, %44 : vector<256x4xf32>
    %46 = vector.extract_strided_slice %36 {offsets = [1, 0, 0], sizes = [16, 16, 32], strides = [1, 1, 1]} : vector<18x16x32xf32> to vector<16x16x32xf32>
    %47 = vector.shape_cast %46 : vector<16x16x32xf32> to vector<256x32xf32>
    %48 = arith.mulf %3, %47 : vector<256x32xf32>
    %c4 = arith.constant 4 : index
    %c0_25 = arith.constant 0 : index
    %c0_26 = arith.constant 0 : index
    %49 = vector.load %arg3[%c4, %c0_25, %c0_26] : memref<9x32x36xf32, #tpu.memory_space<vmem>>, vector<1x32x36xf32>
    %50 = vector.shape_cast %49 : vector<1x32x36xf32> to vector<32x36xf32>
    %cst_27 = arith.constant dense<0.000000e+00> : vector<256x36xf32>
    %51 = tpu.matmul %48, %50, %cst_27 {dimension_numbers = #tpu.dot_dimension_numbers<[1], [0], [0], [1], [0, 0, 1, 1], [], []>} : vector<256x32xf32>, vector<32x36xf32>, vector<256x36xf32> -> vector<256x36xf32>
    %52 = arith.addf %43, %51 : vector<256x36xf32>
    %cst_28 = arith.constant dense<0.000000e+00> : vector<256x4xf32>
    %53 = tpu.matmul %48, %4, %cst_28 {dimension_numbers = #tpu.dot_dimension_numbers<[1], [0], [0], [1], [0, 0, 1, 1], [], []>} : vector<256x32xf32>, vector<32x4xf32>, vector<256x4xf32> -> vector<256x4xf32>
    %54 = arith.maximumf %45, %53 : vector<256x4xf32>
    %55 = vector.extract_strided_slice %36 {offsets = [2, 0, 0], sizes = [16, 16, 32], strides = [1, 1, 1]} : vector<18x16x32xf32> to vector<16x16x32xf32>
    %56 = vector.shape_cast %55 : vector<16x16x32xf32> to vector<256x32xf32>
    %57 = arith.mulf %3, %56 : vector<256x32xf32>
    %c5 = arith.constant 5 : index
    %c0_29 = arith.constant 0 : index
    %c0_30 = arith.constant 0 : index
    %58 = vector.load %arg3[%c5, %c0_29, %c0_30] : memref<9x32x36xf32, #tpu.memory_space<vmem>>, vector<1x32x36xf32>
    %59 = vector.shape_cast %58 : vector<1x32x36xf32> to vector<32x36xf32>
    %cst_31 = arith.constant dense<0.000000e+00> : vector<256x36xf32>
    %60 = tpu.matmul %57, %59, %cst_31 {dimension_numbers = #tpu.dot_dimension_numbers<[1], [0], [0], [1], [0, 0, 1, 1], [], []>} : vector<256x32xf32>, vector<32x36xf32>, vector<256x36xf32> -> vector<256x36xf32>
    %61 = arith.addf %52, %60 : vector<256x36xf32>
    %cst_32 = arith.constant dense<0.000000e+00> : vector<256x4xf32>
    %62 = tpu.matmul %57, %4, %cst_32 {dimension_numbers = #tpu.dot_dimension_numbers<[1], [0], [0], [1], [0, 0, 1, 1], [], []>} : vector<256x32xf32>, vector<32x4xf32>, vector<256x4xf32> -> vector<256x4xf32>
    %63 = arith.maximumf %54, %62 : vector<256x4xf32>
    %64 = vector.extract_strided_slice %9 {offsets = [0, 2, 0], sizes = [18, 16, 32], strides = [1, 1, 1]} : vector<18x18x32xf32> to vector<18x16x32xf32>
    %65 = vector.extract_strided_slice %64 {offsets = [0, 0, 0], sizes = [16, 16, 32], strides = [1, 1, 1]} : vector<18x16x32xf32> to vector<16x16x32xf32>
    %66 = vector.shape_cast %65 : vector<16x16x32xf32> to vector<256x32xf32>
    %67 = arith.mulf %3, %66 : vector<256x32xf32>
    %c6 = arith.constant 6 : index
    %c0_33 = arith.constant 0 : index
    %c0_34 = arith.constant 0 : index
    %68 = vector.load %arg3[%c6, %c0_33, %c0_34] : memref<9x32x36xf32, #tpu.memory_space<vmem>>, vector<1x32x36xf32>
    %69 = vector.shape_cast %68 : vector<1x32x36xf32> to vector<32x36xf32>
    %cst_35 = arith.constant dense<0.000000e+00> : vector<256x36xf32>
    %70 = tpu.matmul %67, %69, %cst_35 {dimension_numbers = #tpu.dot_dimension_numbers<[1], [0], [0], [1], [0, 0, 1, 1], [], []>} : vector<256x32xf32>, vector<32x36xf32>, vector<256x36xf32> -> vector<256x36xf32>
    %71 = arith.addf %61, %70 : vector<256x36xf32>
    %cst_36 = arith.constant dense<0.000000e+00> : vector<256x4xf32>
    %72 = tpu.matmul %67, %4, %cst_36 {dimension_numbers = #tpu.dot_dimension_numbers<[1], [0], [0], [1], [0, 0, 1, 1], [], []>} : vector<256x32xf32>, vector<32x4xf32>, vector<256x4xf32> -> vector<256x4xf32>
    %73 = arith.maximumf %63, %72 : vector<256x4xf32>
    %74 = vector.extract_strided_slice %64 {offsets = [1, 0, 0], sizes = [16, 16, 32], strides = [1, 1, 1]} : vector<18x16x32xf32> to vector<16x16x32xf32>
    %75 = vector.shape_cast %74 : vector<16x16x32xf32> to vector<256x32xf32>
    %76 = arith.mulf %3, %75 : vector<256x32xf32>
    %c7 = arith.constant 7 : index
    %c0_37 = arith.constant 0 : index
    %c0_38 = arith.constant 0 : index
    %77 = vector.load %arg3[%c7, %c0_37, %c0_38] : memref<9x32x36xf32, #tpu.memory_space<vmem>>, vector<1x32x36xf32>
    %78 = vector.shape_cast %77 : vector<1x32x36xf32> to vector<32x36xf32>
    %cst_39 = arith.constant dense<0.000000e+00> : vector<256x36xf32>
    %79 = tpu.matmul %76, %78, %cst_39 {dimension_numbers = #tpu.dot_dimension_numbers<[1], [0], [0], [1], [0, 0, 1, 1], [], []>} : vector<256x32xf32>, vector<32x36xf32>, vector<256x36xf32> -> vector<256x36xf32>
    %80 = arith.addf %71, %79 : vector<256x36xf32>
    %cst_40 = arith.constant dense<0.000000e+00> : vector<256x4xf32>
    %81 = tpu.matmul %76, %4, %cst_40 {dimension_numbers = #tpu.dot_dimension_numbers<[1], [0], [0], [1], [0, 0, 1, 1], [], []>} : vector<256x32xf32>, vector<32x4xf32>, vector<256x4xf32> -> vector<256x4xf32>
    %82 = arith.maximumf %73, %81 : vector<256x4xf32>
    %83 = vector.extract_strided_slice %64 {offsets = [2, 0, 0], sizes = [16, 16, 32], strides = [1, 1, 1]} : vector<18x16x32xf32> to vector<16x16x32xf32>
    %84 = vector.shape_cast %83 : vector<16x16x32xf32> to vector<256x32xf32>
    %85 = arith.mulf %3, %84 : vector<256x32xf32>
    %c8 = arith.constant 8 : index
    %c0_41 = arith.constant 0 : index
    %c0_42 = arith.constant 0 : index
    %86 = vector.load %arg3[%c8, %c0_41, %c0_42] : memref<9x32x36xf32, #tpu.memory_space<vmem>>, vector<1x32x36xf32>
    %87 = vector.shape_cast %86 : vector<1x32x36xf32> to vector<32x36xf32>
    %cst_43 = arith.constant dense<0.000000e+00> : vector<256x36xf32>
    %88 = tpu.matmul %85, %87, %cst_43 {dimension_numbers = #tpu.dot_dimension_numbers<[1], [0], [0], [1], [0, 0, 1, 1], [], []>} : vector<256x32xf32>, vector<32x36xf32>, vector<256x36xf32> -> vector<256x36xf32>
    %89 = arith.addf %80, %88 : vector<256x36xf32>
    %cst_44 = arith.constant dense<0.000000e+00> : vector<256x4xf32>
    %90 = tpu.matmul %85, %4, %cst_44 {dimension_numbers = #tpu.dot_dimension_numbers<[1], [0], [0], [1], [0, 0, 1, 1], [], []>} : vector<256x32xf32>, vector<32x4xf32>, vector<256x4xf32> -> vector<256x4xf32>
    %91 = arith.maximumf %82, %90 : vector<256x4xf32>
    %cst_45 = arith.constant dense<0.000000e+00> : vector<256x36xf32>
    %92 = tpu.matmul %91, %5, %cst_45 {dimension_numbers = #tpu.dot_dimension_numbers<[1], [0], [0], [1], [0, 0, 1, 1], [], []>} : vector<256x4xf32>, vector<4x36xf32>, vector<256x36xf32> -> vector<256x36xf32>
    %93 = arith.subf %89, %92 : vector<256x36xf32>
    %94 = math.exp %93 : vector<256x36xf32>
    %c0_46 = arith.constant 0 : index
    %c0_47 = arith.constant 0 : index
    %95 = vector.load %arg5[%c0_46, %c0_47] : memref<36x4xf32, #tpu.memory_space<vmem>>, vector<36x4xf32>
    %cst_48 = arith.constant dense<0.000000e+00> : vector<256x4xf32>
    %96 = tpu.matmul %94, %95, %cst_48 {dimension_numbers = #tpu.dot_dimension_numbers<[1], [0], [0], [1], [0, 0, 1, 1], [], []>} : vector<256x36xf32>, vector<36x4xf32>, vector<256x4xf32> -> vector<256x4xf32>
    %97 = tpu.reciprocal %96 {approx = true} : vector<256x4xf32> -> vector<256x4xf32>
    %cst_49 = arith.constant dense<0.000000e+00> : vector<256x36xf32>
    %98 = tpu.matmul %97, %5, %cst_49 {dimension_numbers = #tpu.dot_dimension_numbers<[1], [0], [0], [1], [0, 0, 1, 1], [], []>} : vector<256x4xf32>, vector<4x36xf32>, vector<256x36xf32> -> vector<256x36xf32>
    %99 = arith.mulf %94, %98 : vector<256x36xf32>
    %c0_50 = arith.constant 0 : index
    %100 = arith.index_cast %0 : i32 to index
    %c0_51 = arith.constant 0 : index
    %c0_52 = arith.constant 0 : index
    %101 = vector.load %arg9[%c0_50, %100, %c0_51, %c0_52] : memref<1x18x18x32xbf16, #tpu.memory_space<vmem>>, vector<1x18x18x32xbf16>
    %102 = vector.shape_cast %101 : vector<1x18x18x32xbf16> to vector<18x18x32xbf16>
    %103 = arith.extf %102 : vector<18x18x32xbf16> to vector<18x18x32xf32>
    %104 = vector.extract_strided_slice %103 {offsets = [0, 0, 0], sizes = [18, 16, 32], strides = [1, 1, 1]} : vector<18x18x32xf32> to vector<18x16x32xf32>
    %105 = vector.extract_strided_slice %104 {offsets = [0, 0, 0], sizes = [16, 16, 32], strides = [1, 1, 1]} : vector<18x16x32xf32> to vector<16x16x32xf32>
    %106 = vector.shape_cast %105 : vector<16x16x32xf32> to vector<256x32xf32>
    %c0_53 = arith.constant 0 : index
    %c0_54 = arith.constant 0 : index
    %c0_55 = arith.constant 0 : index
    %107 = vector.load %arg6[%c0_53, %c0_54, %c0_55] : memref<9x36x32xf32, #tpu.memory_space<vmem>>, vector<1x36x32xf32>
    %108 = vector.shape_cast %107 : vector<1x36x32xf32> to vector<36x32xf32>
    %cst_56 = arith.constant dense<0.000000e+00> : vector<256x32xf32>
    %109 = tpu.matmul %99, %108, %cst_56 {dimension_numbers = #tpu.dot_dimension_numbers<[1], [0], [0], [1], [0, 0, 1, 1], [], []>} : vector<256x36xf32>, vector<36x32xf32>, vector<256x32xf32> -> vector<256x32xf32>
    %110 = arith.mulf %109, %106 : vector<256x32xf32>
    %111 = vector.extract_strided_slice %104 {offsets = [1, 0, 0], sizes = [16, 16, 32], strides = [1, 1, 1]} : vector<18x16x32xf32> to vector<16x16x32xf32>
    %112 = vector.shape_cast %111 : vector<16x16x32xf32> to vector<256x32xf32>
    %c1_57 = arith.constant 1 : index
    %c0_58 = arith.constant 0 : index
    %c0_59 = arith.constant 0 : index
    %113 = vector.load %arg6[%c1_57, %c0_58, %c0_59] : memref<9x36x32xf32, #tpu.memory_space<vmem>>, vector<1x36x32xf32>
    %114 = vector.shape_cast %113 : vector<1x36x32xf32> to vector<36x32xf32>
    %cst_60 = arith.constant dense<0.000000e+00> : vector<256x32xf32>
    %115 = tpu.matmul %99, %114, %cst_60 {dimension_numbers = #tpu.dot_dimension_numbers<[1], [0], [0], [1], [0, 0, 1, 1], [], []>} : vector<256x36xf32>, vector<36x32xf32>, vector<256x32xf32> -> vector<256x32xf32>
    %116 = arith.mulf %115, %112 : vector<256x32xf32>
    %117 = arith.addf %110, %116 : vector<256x32xf32>
    %118 = vector.extract_strided_slice %104 {offsets = [2, 0, 0], sizes = [16, 16, 32], strides = [1, 1, 1]} : vector<18x16x32xf32> to vector<16x16x32xf32>
    %119 = vector.shape_cast %118 : vector<16x16x32xf32> to vector<256x32xf32>
    %c2_61 = arith.constant 2 : index
    %c0_62 = arith.constant 0 : index
    %c0_63 = arith.constant 0 : index
    %120 = vector.load %arg6[%c2_61, %c0_62, %c0_63] : memref<9x36x32xf32, #tpu.memory_space<vmem>>, vector<1x36x32xf32>
    %121 = vector.shape_cast %120 : vector<1x36x32xf32> to vector<36x32xf32>
    %cst_64 = arith.constant dense<0.000000e+00> : vector<256x32xf32>
    %122 = tpu.matmul %99, %121, %cst_64 {dimension_numbers = #tpu.dot_dimension_numbers<[1], [0], [0], [1], [0, 0, 1, 1], [], []>} : vector<256x36xf32>, vector<36x32xf32>, vector<256x32xf32> -> vector<256x32xf32>
    %123 = arith.mulf %122, %119 : vector<256x32xf32>
    %124 = arith.addf %117, %123 : vector<256x32xf32>
    %125 = vector.extract_strided_slice %103 {offsets = [0, 1, 0], sizes = [18, 16, 32], strides = [1, 1, 1]} : vector<18x18x32xf32> to vector<18x16x32xf32>
    %126 = vector.extract_strided_slice %125 {offsets = [0, 0, 0], sizes = [16, 16, 32], strides = [1, 1, 1]} : vector<18x16x32xf32> to vector<16x16x32xf32>
    %127 = vector.shape_cast %126 : vector<16x16x32xf32> to vector<256x32xf32>
    %c3_65 = arith.constant 3 : index
    %c0_66 = arith.constant 0 : index
    %c0_67 = arith.constant 0 : index
    %128 = vector.load %arg6[%c3_65, %c0_66, %c0_67] : memref<9x36x32xf32, #tpu.memory_space<vmem>>, vector<1x36x32xf32>
    %129 = vector.shape_cast %128 : vector<1x36x32xf32> to vector<36x32xf32>
    %cst_68 = arith.constant dense<0.000000e+00> : vector<256x32xf32>
    %130 = tpu.matmul %99, %129, %cst_68 {dimension_numbers = #tpu.dot_dimension_numbers<[1], [0], [0], [1], [0, 0, 1, 1], [], []>} : vector<256x36xf32>, vector<36x32xf32>, vector<256x32xf32> -> vector<256x32xf32>
    %131 = arith.mulf %130, %127 : vector<256x32xf32>
    %132 = arith.addf %124, %131 : vector<256x32xf32>
    %133 = vector.extract_strided_slice %125 {offsets = [1, 0, 0], sizes = [16, 16, 32], strides = [1, 1, 1]} : vector<18x16x32xf32> to vector<16x16x32xf32>
    %134 = vector.shape_cast %133 : vector<16x16x32xf32> to vector<256x32xf32>
    %c4_69 = arith.constant 4 : index
    %c0_70 = arith.constant 0 : index
    %c0_71 = arith.constant 0 : index
    %135 = vector.load %arg6[%c4_69, %c0_70, %c0_71] : memref<9x36x32xf32, #tpu.memory_space<vmem>>, vector<1x36x32xf32>
    %136 = vector.shape_cast %135 : vector<1x36x32xf32> to vector<36x32xf32>
    %cst_72 = arith.constant dense<0.000000e+00> : vector<256x32xf32>
    %137 = tpu.matmul %99, %136, %cst_72 {dimension_numbers = #tpu.dot_dimension_numbers<[1], [0], [0], [1], [0, 0, 1, 1], [], []>} : vector<256x36xf32>, vector<36x32xf32>, vector<256x32xf32> -> vector<256x32xf32>
    %138 = arith.mulf %137, %134 : vector<256x32xf32>
    %139 = arith.addf %132, %138 : vector<256x32xf32>
    %140 = vector.extract_strided_slice %125 {offsets = [2, 0, 0], sizes = [16, 16, 32], strides = [1, 1, 1]} : vector<18x16x32xf32> to vector<16x16x32xf32>
    %141 = vector.shape_cast %140 : vector<16x16x32xf32> to vector<256x32xf32>
    %c5_73 = arith.constant 5 : index
    %c0_74 = arith.constant 0 : index
    %c0_75 = arith.constant 0 : index
    %142 = vector.load %arg6[%c5_73, %c0_74, %c0_75] : memref<9x36x32xf32, #tpu.memory_space<vmem>>, vector<1x36x32xf32>
    %143 = vector.shape_cast %142 : vector<1x36x32xf32> to vector<36x32xf32>
    %cst_76 = arith.constant dense<0.000000e+00> : vector<256x32xf32>
    %144 = tpu.matmul %99, %143, %cst_76 {dimension_numbers = #tpu.dot_dimension_numbers<[1], [0], [0], [1], [0, 0, 1, 1], [], []>} : vector<256x36xf32>, vector<36x32xf32>, vector<256x32xf32> -> vector<256x32xf32>
    %145 = arith.mulf %144, %141 : vector<256x32xf32>
    %146 = arith.addf %139, %145 : vector<256x32xf32>
    %147 = vector.extract_strided_slice %103 {offsets = [0, 2, 0], sizes = [18, 16, 32], strides = [1, 1, 1]} : vector<18x18x32xf32> to vector<18x16x32xf32>
    %148 = vector.extract_strided_slice %147 {offsets = [0, 0, 0], sizes = [16, 16, 32], strides = [1, 1, 1]} : vector<18x16x32xf32> to vector<16x16x32xf32>
    %149 = vector.shape_cast %148 : vector<16x16x32xf32> to vector<256x32xf32>
    %c6_77 = arith.constant 6 : index
    %c0_78 = arith.constant 0 : index
    %c0_79 = arith.constant 0 : index
    %150 = vector.load %arg6[%c6_77, %c0_78, %c0_79] : memref<9x36x32xf32, #tpu.memory_space<vmem>>, vector<1x36x32xf32>
    %151 = vector.shape_cast %150 : vector<1x36x32xf32> to vector<36x32xf32>
    %cst_80 = arith.constant dense<0.000000e+00> : vector<256x32xf32>
    %152 = tpu.matmul %99, %151, %cst_80 {dimension_numbers = #tpu.dot_dimension_numbers<[1], [0], [0], [1], [0, 0, 1, 1], [], []>} : vector<256x36xf32>, vector<36x32xf32>, vector<256x32xf32> -> vector<256x32xf32>
    %153 = arith.mulf %152, %149 : vector<256x32xf32>
    %154 = arith.addf %146, %153 : vector<256x32xf32>
    %155 = vector.extract_strided_slice %147 {offsets = [1, 0, 0], sizes = [16, 16, 32], strides = [1, 1, 1]} : vector<18x16x32xf32> to vector<16x16x32xf32>
    %156 = vector.shape_cast %155 : vector<16x16x32xf32> to vector<256x32xf32>
    %c7_81 = arith.constant 7 : index
    %c0_82 = arith.constant 0 : index
    %c0_83 = arith.constant 0 : index
    %157 = vector.load %arg6[%c7_81, %c0_82, %c0_83] : memref<9x36x32xf32, #tpu.memory_space<vmem>>, vector<1x36x32xf32>
    %158 = vector.shape_cast %157 : vector<1x36x32xf32> to vector<36x32xf32>
    %cst_84 = arith.constant dense<0.000000e+00> : vector<256x32xf32>
    %159 = tpu.matmul %99, %158, %cst_84 {dimension_numbers = #tpu.dot_dimension_numbers<[1], [0], [0], [1], [0, 0, 1, 1], [], []>} : vector<256x36xf32>, vector<36x32xf32>, vector<256x32xf32> -> vector<256x32xf32>
    %160 = arith.mulf %159, %156 : vector<256x32xf32>
    %161 = arith.addf %154, %160 : vector<256x32xf32>
    %162 = vector.extract_strided_slice %147 {offsets = [2, 0, 0], sizes = [16, 16, 32], strides = [1, 1, 1]} : vector<18x16x32xf32> to vector<16x16x32xf32>
    %163 = vector.shape_cast %162 : vector<16x16x32xf32> to vector<256x32xf32>
    %c8_85 = arith.constant 8 : index
    %c0_86 = arith.constant 0 : index
    %c0_87 = arith.constant 0 : index
    %164 = vector.load %arg6[%c8_85, %c0_86, %c0_87] : memref<9x36x32xf32, #tpu.memory_space<vmem>>, vector<1x36x32xf32>
    %165 = vector.shape_cast %164 : vector<1x36x32xf32> to vector<36x32xf32>
    %cst_88 = arith.constant dense<0.000000e+00> : vector<256x32xf32>
    %166 = tpu.matmul %99, %165, %cst_88 {dimension_numbers = #tpu.dot_dimension_numbers<[1], [0], [0], [1], [0, 0, 1, 1], [], []>} : vector<256x36xf32>, vector<36x32xf32>, vector<256x32xf32> -> vector<256x32xf32>
    %167 = arith.mulf %166, %163 : vector<256x32xf32>
    %168 = arith.addf %161, %167 : vector<256x32xf32>
    %c0_89 = arith.constant 0 : index
    %c0_90 = arith.constant 0 : index
    %c0_91 = arith.constant 0 : index
    %169 = vector.load %arg10[%c0_89, %c0_90, %c0_91] : memref<1x256x32xf32, #tpu.memory_space<vmem>>, vector<1x256x32xf32>
    %170 = vector.shape_cast %169 : vector<1x256x32xf32> to vector<256x32xf32>
    %171 = vector.shape_cast %168 : vector<256x32xf32> to vector<1x256x32xf32>
    tpu.vector_store %arg10[%c0_89, %c0_90, %c0_91], %171 {strides = array<i32>} : memref<1x256x32xf32, #tpu.memory_space<vmem>>, vector<1x256x32xf32>,
    return
  }
  func.func @transform_0(%arg0: i32, %arg1: i32) -> (i32, i32) {
    %c0_i32 = arith.constant 0 : i32
    %c0_i32_0 = arith.constant 0 : i32
    %c0_i32_1 = arith.constant 0 : i32
    return %c0_i32, %c0_i32_0 : i32, i32
  }
  func.func @transform_1(%arg0: i32, %arg1: i32) -> (i32, i32, i32) {
    %c0_i32 = arith.constant 0 : i32
    %c0_i32_0 = arith.constant 0 : i32
    %c0_i32_1 = arith.constant 0 : i32
    %c0_i32_2 = arith.constant 0 : i32
    return %c0_i32, %c0_i32_0, %c0_i32_1 : i32, i32, i32
  }
  func.func @transform_2(%arg0: i32, %arg1: i32) -> (i32, i32) {
    %c0_i32 = arith.constant 0 : i32
    %c0_i32_0 = arith.constant 0 : i32
    %c0_i32_1 = arith.constant 0 : i32
    return %c0_i32, %c0_i32_0 : i32, i32
  }
  func.func @transform_3(%arg0: i32, %arg1: i32) -> (i32, i32) {
    %c0_i32 = arith.constant 0 : i32
    %c0_i32_0 = arith.constant 0 : i32
    %c0_i32_1 = arith.constant 0 : i32
    return %c0_i32, %c0_i32_0 : i32, i32
  }
  func.func @transform_4(%arg0: i32, %arg1: i32) -> (i32, i32, i32) {
    %c0_i32 = arith.constant 0 : i32
    %c0_i32_0 = arith.constant 0 : i32
    %c0_i32_1 = arith.constant 0 : i32
    %c0_i32_2 = arith.constant 0 : i32
    return %c0_i32, %c0_i32_0, %c0_i32_1 : i32, i32, i32
  }
  func.func @transform_5(%arg0: i32, %arg1: i32) -> (i32, i32, i32) {
    %c0_i32 = arith.constant 0 : i32
    %c0_i32_0 = arith.constant 0 : i32
    return %arg0, %arg1, %c0_i32 : i32, i32, i32
  }
  func.func @transform_6(%arg0: i32, %arg1: i32) -> (i32, i32, i32, i32) {
    %c0_i32 = arith.constant 0 : i32
    %c0_i32_0 = arith.constant 0 : i32
    %c0_i32_1 = arith.constant 0 : i32
    %c0_i32_2 = arith.constant 0 : i32
    return %arg0, %c0_i32, %c0_i32_0, %c0_i32_1 : i32, i32, i32, i32
  }
  func.func @transform_7(%arg0: i32, %arg1: i32) -> (i32, i32, i32, i32) {
    %c0_i32 = arith.constant 0 : i32
    %c0_i32_0 = arith.constant 0 : i32
    %c0_i32_1 = arith.constant 0 : i32
    %c0_i32_2 = arith.constant 0 : i32
    return %arg0, %c0_i32, %c0_i32_0, %c0_i32_1 : i32, i32, i32, i32
  }
  func.func @transform_8(%arg0: i32, %arg1: i32) -> (i32, i32, i32) {
    %c0_i32 = arith.constant 0 : i32
    %c0_i32_0 = arith.constant 0 : i32
    return %arg0, %arg1, %c0_i32 : i32, i32, i32
  }
}

</mosaic_0001>

<llo_original>
// kernel: tpu_custom_call.1
$region0: #{tpu_custom_call.1}
  #allocation0 [shape = 'u32[]', space=smem, size = 0x4, offset = 0x4, fixed_abs, tag = 'smem constant byte address 0x4 - core index']
  #allocation1 [shape = 'u32[144,128]{1,0:T(1,128)}', space=vmem, size = 0x12000, scoped, tag = 'internal scratch']
  %s0 = inlined_call_operand.vmem [shape: f32[32,4], index: 0, kind: input, shape index: {}]
  %s1 = inlined_call_operand.vmem [shape: f32[9,32,36], index: 1, kind: input, shape index: {}]
  %s2 = inlined_call_operand.vmem [shape: f32[4,36], index: 2, kind: input, shape index: {}]
  %s3 = inlined_call_operand.vmem [shape: f32[36,4], index: 3, kind: input, shape index: {}]
  %s4 = inlined_call_operand.vmem [shape: f32[9,36,32], index: 4, kind: input, shape index: {}]
  %s5 = inlined_call_operand.vmem [shape: bf16[2,256,32], index: 5, kind: input, shape index: {}]
  %s6 = inlined_call_operand.vmem [shape: bf16[2,18,18,32], index: 6, kind: input, shape index: {}]
  %s7 = inlined_call_operand.vmem [shape: bf16[2,18,18,32], index: 7, kind: input, shape index: {}]
  %s8 = inlined_call_operand.vmem [shape: f32[2,256,32], index: 8, kind: output, shape index: {}]
  %s9 = sld [smem:[#allocation0]]
  $region65: #{tpu_custom_call.1} parent=0
    _
  %s11 = ssub.s32 1, %s9
  %s12 = scalar_select 0, %s11, %s9
  loop: start=0, step=1, limit=4
  $region2: #{tpu_custom_call.1} parent=0 // loop_pre_header
    _
  $region3: #{tpu_custom_call.1} parent=0 // loop_header
    %s14 = sphi 0, %s18
    %p15 = scmp.ge.s32.totalorder %s14, 4
    %s21 = sphi 0, %s33
    %s22 = sphi 0, %s29
    %s23 = sphi 0, %s21
    %s24 = sphi 0, %s22
    %s25 = sphi 0, %s23
    %s26 = sphi 0, %s24
    %s34 = sphi 0, %s34
    %s36 = sphi 0, %s34
    %s37 = sphi 0, %s36
    %s51 = sphi 0, %s37
    %s55 = sphi 0, %s55
    %s57 = sphi 0, %s55
    %s58 = sphi 0, %s57
    %s72 = sphi 0, %s58
    %s76 = sphi 0, %s76
    %s78 = sphi 0, %s76
    %s79 = sphi 0, %s78
    %s93 = sphi 0, %s79
    %s97 = sphi 0, %s97
    %s99 = sphi 0, %s97
    %s100 = sphi 0, %s99
    %s114 = sphi 0, %s100
    %s118 = sphi 0, %s118
    %s120 = sphi 0, %s118
    %s121 = sphi 0, %s120
    %s135 = sphi 0, %s121
    %s143 = sphi 0, %s145
    %s146 = sphi 0, %s143
    %s147 = sphi 0, %s146
    %s163 = sphi 0, %s147
    %s169 = sphi 0, %s171
    %s172 = sphi 0, %s169
    %s173 = sphi 0, %s172
    %s189 = sphi 0, %s173
    %s195 = sphi 0, %s197
    %s198 = sphi 0, %s195
    %s199 = sphi 0, %s198
    %s215 = sphi 0, %s199
    %s223 = sphi 0, %s225
    %s226 = sphi 0, %s223
    %s227 = sphi 0, %s226
    %s243 = sphi 0, %s227
  $region4: #{tpu_custom_call.1} parent=0 // loop_header_branch
    %17 = sbr.rel (%p15) target = $region8
  $region5: #{tpu_custom_call.1} parent=0 // loop_body
    %s19 = ssub.s32 %s14, 1
    %s20 = ssub.s32 %s14, 2
    %s27 = sadd.s32 1, %s22
    %p28 = scmp.ge.s32.totalorder %s27, 1
    %s29 = scalar_select %p28, 0, %s27
    %s30 = sadd.s32 1, %s21
    %s31 = scalar_select %p28, %s30, %s21
    %p32 = scmp.ge.s32.totalorder %s31, 2
    %s33 = scalar_select %p32, 0, %s31
    %s35 = sadd.s32 %s34, 1
    %p38 = scmp.eq.s32.totalorder %s14, 1
    %p39 = scmp.ne.s32.totalorder %s34, %s36
    %p40 = scmp.eq.s32.totalorder %s14, 0
    %p41 = por %p39, %p40
    %p42 = scmp.ne.s32.totalorder %s34, %s36
    %p43 = scmp.eq.s32.totalorder %s19, 1
    %p44 = por %p42, %p43
    %p45 = scmp.ne.s32.totalorder %s36, %s37
    %p46 = scmp.eq.s32.totalorder %s19, 0
    %p47 = por %p45, %p46
    %p48 = scmp.ne.s32.totalorder %s36, %s37
    %p49 = scmp.eq.s32.totalorder %s20, 1
    %p50 = por %p48, %p49
    %p52 = scmp.ne.s32.totalorder %s37, %s51
    %p53 = scmp.eq.s32.totalorder %s20, 0
    %p54 = por %p52, %p53
    %s56 = sadd.s32 %s55, 1
    %p59 = scmp.eq.s32.totalorder %s14, 1
    %p60 = scmp.ne.s32.totalorder %s55, %s57
    %p61 = scmp.eq.s32.totalorder %s14, 0
    %p62 = por %p60, %p61
    %p63 = scmp.ne.s32.totalorder %s55, %s57
    %p64 = scmp.eq.s32.totalorder %s19, 1
    %p65 = por %p63, %p64
    %p66 = scmp.ne.s32.totalorder %s57, %s58
    %p67 = scmp.eq.s32.totalorder %s19, 0
    %p68 = por %p66, %p67
    %p69 = scmp.ne.s32.totalorder %s57, %s58
    %p70 = scmp.eq.s32.totalorder %s20, 1
    %p71 = por %p69, %p70
    %p73 = scmp.ne.s32.totalorder %s58, %s72
    %p74 = scmp.eq.s32.totalorder %s20, 0
    %p75 = por %p73, %p74
    %s77 = sadd.s32 %s76, 1
    %p80 = scmp.eq.s32.totalorder %s14, 1
    %p81 = scmp.ne.s32.totalorder %s76, %s78
    %p82 = scmp.eq.s32.totalorder %s14, 0
    %p83 = por %p81, %p82
    %p84 = scmp.ne.s32.totalorder %s76, %s78
    %p85 = scmp.eq.s32.totalorder %s19, 1
    %p86 = por %p84, %p85
    %p87 = scmp.ne.s32.totalorder %s78, %s79
    %p88 = scmp.eq.s32.totalorder %s19, 0
    %p89 = por %p87, %p88
    %p90 = scmp.ne.s32.totalorder %s78, %s79
    %p91 = scmp.eq.s32.totalorder %s20, 1
    %p92 = por %p90, %p91
    %p94 = scmp.ne.s32.totalorder %s79, %s93
    %p95 = scmp.eq.s32.totalorder %s20, 0
    %p96 = por %p94, %p95
    %s98 = sadd.s32 %s97, 1
    %p101 = scmp.eq.s32.totalorder %s14, 1
    %p102 = scmp.ne.s32.totalorder %s97, %s99
    %p103 = scmp.eq.s32.totalorder %s14, 0
    %p104 = por %p102, %p103
    %p105 = scmp.ne.s32.totalorder %s97, %s99
    %p106 = scmp.eq.s32.totalorder %s19, 1
    %p107 = por %p105, %p106
    %p108 = scmp.ne.s32.totalorder %s99, %s100
    %p109 = scmp.eq.s32.totalorder %s19, 0
    %p110 = por %p108, %p109
    %p111 = scmp.ne.s32.totalorder %s99, %s100
    %p112 = scmp.eq.s32.totalorder %s20, 1
    %p113 = por %p111, %p112
    %p115 = scmp.ne.s32.totalorder %s100, %s114
    %p116 = scmp.eq.s32.totalorder %s20, 0
    %p117 = por %p115, %p116
    %s119 = sadd.s32 %s118, 1
    %p122 = scmp.eq.s32.totalorder %s14, 1
    %p123 = scmp.ne.s32.totalorder %s118, %s120
    %p124 = scmp.eq.s32.totalorder %s14, 0
    %p125 = por %p123, %p124
    %p126 = scmp.ne.s32.totalorder %s118, %s120
    %p127 = scmp.eq.s32.totalorder %s19, 1
    %p128 = por %p126, %p127
    %p129 = scmp.ne.s32.totalorder %s120, %s121
    %p130 = scmp.eq.s32.totalorder %s19, 0
    %p131 = por %p129, %p130
    %p132 = scmp.ne.s32.totalorder %s120, %s121
    %p133 = scmp.eq.s32.totalorder %s20, 1
    %p134 = por %p132, %p133
    %p136 = scmp.ne.s32.totalorder %s121, %s135
    %p137 = scmp.eq.s32.totalorder %s20, 0
    %p138 = por %p136, %p137
    %s139 = ssub.s32 %s21, %s33
    %s140 = ssub.s32 %s22, %s29
    %s141 = sor.u32 %s139, %s140
    %p142 = scmp.eq.s32.totalorder %s141, 0
    %s144 = sadd.s32 %s143, 1
    %s145 = scalar_select %p142, %s143, %s144
    %p148 = pneg %p142
    %p149 = scmp.eq.s32.totalorder %s14, 1
    %p150 = por %p148, %p149
    %p151 = scmp.ne.s32.totalorder %s143, %s146
    %p152 = scmp.eq.s32.totalorder %s14, 0
    %p153 = por %p151, %p152
    %p154 = scmp.ne.s32.totalorder %s143, %s146
    %p155 = scmp.eq.s32.totalorder %s19, 1
    %p156 = por %p154, %p155
    %p157 = scmp.ne.s32.totalorder %s146, %s147
    %p158 = scmp.eq.s32.totalorder %s19, 0
    %p159 = por %p157, %p158
    %p160 = scmp.ne.s32.totalorder %s146, %s147
    %p161 = scmp.eq.s32.totalorder %s20, 1
    %p162 = por %p160, %p161
    %p164 = scmp.ne.s32.totalorder %s147, %s163
    %p165 = scmp.eq.s32.totalorder %s20, 0
    %p166 = por %p164, %p165
    %s167 = ssub.s32 %s21, %s33
    %p168 = scmp.eq.s32.totalorder %s167, 0
    %s170 = sadd.s32 %s169, 1
    %s171 = scalar_select %p168, %s169, %s170
    %p174 = pneg %p168
    %p175 = scmp.eq.s32.totalorder %s14, 1
    %p176 = por %p174, %p175
    %p177 = scmp.ne.s32.totalorder %s169, %s172
    %p178 = scmp.eq.s32.totalorder %s14, 0
    %p179 = por %p177, %p178
    %p180 = scmp.ne.s32.totalorder %s169, %s172
    %p181 = scmp.eq.s32.totalorder %s19, 1
    %p182 = por %p180, %p181
    %p183 = scmp.ne.s32.totalorder %s172, %s173
    %p184 = scmp.eq.s32.totalorder %s19, 0
    %p185 = por %p183, %p184
    %p186 = scmp.ne.s32.totalorder %s172, %s173
    %p187 = scmp.eq.s32.totalorder %s20, 1
    %p188 = por %p186, %p187
    %p190 = scmp.ne.s32.totalorder %s173, %s189
    %p191 = scmp.eq.s32.totalorder %s20, 0
    %p192 = por %p190, %p191
    %s193 = ssub.s32 %s21, %s33
    %p194 = scmp.eq.s32.totalorder %s193, 0
    %s196 = sadd.s32 %s195, 1
    %s197 = scalar_select %p194, %s195, %s196
    %p200 = pneg %p194
    %p201 = scmp.eq.s32.totalorder %s14, 1
    %p202 = por %p200, %p201
    %p203 = scmp.ne.s32.totalorder %s195, %s198
    %p204 = scmp.eq.s32.totalorder %s14, 0
    %p205 = por %p203, %p204
    %p206 = scmp.ne.s32.totalorder %s195, %s198
    %p207 = scmp.eq.s32.totalorder %s19, 1
    %p208 = por %p206, %p207
    %p209 = scmp.ne.s32.totalorder %s198, %s199
    %p210 = scmp.eq.s32.totalorder %s19, 0
    %p211 = por %p209, %p210
    %p212 = scmp.ne.s32.totalorder %s198, %s199
    %p213 = scmp.eq.s32.totalorder %s20, 1
    %p214 = por %p212, %p213
    %p216 = scmp.ne.s32.totalorder %s199, %s215
    %p217 = scmp.eq.s32.totalorder %s20, 0
    %p218 = por %p216, %p217
    %s219 = ssub.s32 %s21, %s33
    %s220 = ssub.s32 %s22, %s29
    %s221 = sor.u32 %s219, %s220
    %p222 = scmp.eq.s32.totalorder %s221, 0
    %s224 = sadd.s32 %s223, 1
    %s225 = scalar_select %p222, %s223, %s224
    %p228 = pneg %p222
    %p229 = scmp.eq.s32.totalorder %s14, 1
    %p230 = por %p228, %p229
    %p231 = scmp.ne.s32.totalorder %s223, %s226
    %p232 = scmp.eq.s32.totalorder %s14, 0
    %p233 = por %p231, %p232
    %p234 = scmp.ne.s32.totalorder %s223, %s226
    %p235 = scmp.eq.s32.totalorder %s19, 1
    %p236 = por %p234, %p235
    %p237 = scmp.ne.s32.totalorder %s226, %s227
    %p238 = scmp.eq.s32.totalorder %s19, 0
    %p239 = por %p237, %p238
    %p240 = scmp.ne.s32.totalorder %s226, %s227
    %p241 = scmp.eq.s32.totalorder %s20, 1
    %p242 = por %p240, %p241
    %p244 = scmp.ne.s32.totalorder %s227, %s243
    %p245 = scmp.eq.s32.totalorder %s20, 0
    %p246 = por %p244, %p245
    %p247 = scmp.le.s32.totalorder 1, %s14
    %p248 = scmp.lt.s32.totalorder %s14, 3
    %p249 = pnand %p247, %p248
    %p250 = pneg %p249
    // Predicated region
    $region9: #{tpu_custom_call.1} parent=5 // pred_check
      _
    $region10: #{tpu_custom_call.1} parent=5 // pred_check_branch
      %252 = sbr.rel (%p249) target = $region12
    $region11: #{tpu_custom_call.1} parent=5 // pred_region
      %s253 = ssub.s32 %s14, 1
      // Predicated region
      $region13: #{tpu_custom_call.1} parent=11 // pred_check
        %p254 = pneg %p47
      $region14: #{tpu_custom_call.1} parent=11 // pred_check_branch
        %256 = sbr.rel (%p254) target = $region16
      $region15: #{tpu_custom_call.1} parent=11 // pred_region
        _
      $region16: #{tpu_custom_call.1} parent=11 // pred_fallthru
        _
      // Predicated region
      $region17: #{tpu_custom_call.1} parent=11 // pred_check
        %p257 = pneg %p68
      $region18: #{tpu_custom_call.1} parent=11 // pred_check_branch
        %259 = sbr.rel (%p257) target = $region20
      $region19: #{tpu_custom_call.1} parent=11 // pred_region
        _
      $region20: #{tpu_custom_call.1} parent=11 // pred_fallthru
        _
      // Predicated region
      $region21: #{tpu_custom_call.1} parent=11 // pred_check
        %p260 = pneg %p89
      $region22: #{tpu_custom_call.1} parent=11 // pred_check_branch
        %262 = sbr.rel (%p260) target = $region24
      $region23: #{tpu_custom_call.1} parent=11 // pred_region
        _
      $region24: #{tpu_custom_call.1} parent=11 // pred_fallthru
        _
      // Predicated region
      $region25: #{tpu_custom_call.1} parent=11 // pred_check
        %p263 = pneg %p110
      $region26: #{tpu_custom_call.1} parent=11 // pred_check_branch
        %265 = sbr.rel (%p263) target = $region28
      $region27: #{tpu_custom_call.1} parent=11 // pred_region
        _
      $region28: #{tpu_custom_call.1} parent=11 // pred_fallthru
        _
      // Predicated region
      $region29: #{tpu_custom_call.1} parent=11 // pred_check
        %p266 = pneg %p131
      $region30: #{tpu_custom_call.1} parent=11 // pred_check_branch
        %268 = sbr.rel (%p266) target = $region32
      $region31: #{tpu_custom_call.1} parent=11 // pred_region
        _
      $region32: #{tpu_custom_call.1} parent=11 // pred_fallthru
        _
    $region12: #{tpu_custom_call.1} parent=5 // pred_fallthru
      _
    %p269 = scmp.lt.s32.totalorder %s14, 2
    // Predicated region
    $region33: #{tpu_custom_call.1} parent=5 // pred_check
      %p270 = pneg %p269
    $region34: #{tpu_custom_call.1} parent=5 // pred_check_branch
      %272 = sbr.rel (%p270) target = $region36
    $region35: #{tpu_custom_call.1} parent=5 // pred_region
      // Predicated region
      $region37: #{tpu_custom_call.1} parent=35 // pred_check
        %p273 = pneg %p153
      $region38: #{tpu_custom_call.1} parent=35 // pred_check_branch
        %275 = sbr.rel (%p273) target = $region40
      $region39: #{tpu_custom_call.1} parent=35 // pred_region
        %s276 = smul.u32 32, %s22
        %p277 = scmp.lt.s32.totalorder %s21, 1
        %s278 = scalar_select %p277, %s21, 1
        %p279 = scmp.lt.s32.totalorder %s276, 31
        %s280 = scalar_select %p279, %s276, 31
        %s281 = smul.addr %s278, 32
        %s282 = sadd.s32 %s280, %s281
        %s283 = smul.addr %s282, 4
        %s284 = scalar_lea.vmem %s5, %s283
        %s285 = smul.u32 32, %s22
      $region40: #{tpu_custom_call.1} parent=35 // pred_fallthru
        _
      // Predicated region
      $region41: #{tpu_custom_call.1} parent=35 // pred_check
        %p286 = pneg %p179
      $region42: #{tpu_custom_call.1} parent=35 // pred_check_branch
        %288 = sbr.rel (%p286) target = $region44
      $region43: #{tpu_custom_call.1} parent=35 // pred_region
        %p289 = scmp.lt.s32.totalorder %s21, 1
        %s290 = scalar_select %p289, %s21, 1
        %s291 = smul.addr %s290, 54
        %s292 = smul.addr %s291, 4
        %s293 = scalar_lea.vmem %s6, %s292
      $region44: #{tpu_custom_call.1} parent=35 // pred_fallthru
        _
      // Predicated region
      $region45: #{tpu_custom_call.1} parent=35 // pred_check
        %p294 = pneg %p205
      $region46: #{tpu_custom_call.1} parent=35 // pred_check_branch
        %296 = sbr.rel (%p294) target = $region48
      $region47: #{tpu_custom_call.1} parent=35 // pred_region
        %p297 = scmp.lt.s32.totalorder %s21, 1
        %s298 = scalar_select %p297, %s21, 1
        %s299 = smul.addr %s298, 54
        %s300 = smul.addr %s299, 4
        %s301 = scalar_lea.vmem %s7, %s300
      $region48: #{tpu_custom_call.1} parent=35 // pred_fallthru
        _
    $region36: #{tpu_custom_call.1} parent=5 // pred_fallthru
      _
    %p302 = scmp.le.s32.totalorder 1, %s14
    %p303 = scmp.lt.s32.totalorder %s14, 3
    %p304 = pnand %p302, %p303
    %p305 = pneg %p304
    // Predicated region
    $region49: #{tpu_custom_call.1} parent=5 // pred_check
      _
    $region50: #{tpu_custom_call.1} parent=5 // pred_check_branch
      %307 = sbr.rel (%p304) target = $region52
    $region51: #{tpu_custom_call.1} parent=5 // pred_region
      %s308 = ssub.s32 %s14, 1
      %p309 = pneg %p47
      %p310 = pneg %p44
      %p311 = pneg %p68
      %p312 = pneg %p65
      %p313 = pneg %p89
      %p314 = pneg %p86
      %p315 = pneg %p110
      %p316 = pneg %p107
      %p317 = pneg %p131
      %p318 = pneg %p128
      %s319 = smul.u32 32, %s24
      %p320 = scmp.lt.s32.totalorder %s23, 1
      %s321 = scalar_select %p320, %s23, 1
      %p322 = scmp.lt.s32.totalorder %s319, 31
      %s323 = scalar_select %p322, %s319, 31
      %s324 = smul.addr %s321, 32
      %s325 = sadd.s32 %s323, %s324
      %s326 = smul.addr %s325, 4
      %s327 = scalar_lea.vmem %s5, %s326
      %p328 = pneg %p159
      %p329 = pneg %p156
      %p330 = scmp.lt.s32.totalorder %s23, 1
      %s331 = scalar_select %p330, %s23, 1
      %s332 = smul.addr %s331, 54
      %s333 = smul.addr %s332, 4
      %s334 = scalar_lea.vmem %s6, %s333
      %p335 = pneg %p185
      %p336 = pneg %p182
      %p337 = scmp.lt.s32.totalorder %s23, 1
      %s338 = scalar_select %p337, %s23, 1
      %s339 = smul.addr %s338, 54
      %s340 = smul.addr %s339, 4
      %s341 = scalar_lea.vmem %s7, %s340
      %p342 = pneg %p211
      %p343 = pneg %p208
      %p344 = pneg %p239
      %p345 = pneg %p236
      %s346 = smul.u32 32, %s24
      %p347 = scmp.lt.s32.totalorder %s23, 1
      %s348 = scalar_select %p347, %s23, 1
      %p349 = scmp.lt.s32.totalorder %s346, 31
      %s350 = scalar_select %p349, %s346, 31
      %s351 = smul.addr %s348, 32
      %s352 = sadd.s32 %s350, %s351
      %s353 = smul.addr %s352, 8
      %s354 = scalar_lea.vmem %s8, %s353
      %s355 = smul.u32 32, %s24
      %p356 = scmp.lt.s32.totalorder %s23, 1
      %s357 = scalar_select %p356, %s23, 1
      %p358 = scmp.lt.s32.totalorder %s355, 31
      %s359 = scalar_select %p358, %s355, 31
      %s360 = smul.addr %s357, 32
      %s361 = sadd.s32 %s359, %s360
      %s362 = smul.addr %s361, 4
      %s363 = scalar_lea.vmem %s5, %s362
      %s364 = smul.u32 32, %s24
      %p365 = scmp.lt.s32.totalorder %s23, 1
      %s366 = scalar_select %p365, %s23, 1
      %s367 = smul.addr %s366, 54
      %s368 = smul.addr %s367, 4
      %s369 = scalar_lea.vmem %s6, %s368
      %p370 = scmp.lt.s32.totalorder %s23, 1
      %s371 = scalar_select %p370, %s23, 1
      %s372 = smul.addr %s371, 54
      %s373 = smul.addr %s372, 4
      %s374 = scalar_lea.vmem %s7, %s373
      %s375 = smul.u32 32, %s24
      %p376 = scmp.lt.s32.totalorder %s23, 1
      %s377 = scalar_select %p376, %s23, 1
      %p378 = scmp.lt.s32.totalorder %s375, 31
      %s379 = scalar_select %p378, %s375, 31
      %s380 = smul.addr %s377, 32
      %s381 = sadd.s32 %s379, %s380
      %s382 = smul.addr %s381, 8
      %s383 = scalar_lea.vmem %s8, %s382
      %s384 = smul.u32 32, %s24
      %s385 = smul.u32 %s24, 16
      %v386 = vld [vmem:[%s363] sm:$0xf]
      %v387 = vld [vmem:[%s363 + $0x4] sm:$0xf]
      %v388 = vld [vmem:[%s363 + $0x8] sm:$0xf]
      %v389 = vld [vmem:[%s363 + $0xc] sm:$0xf]
      %v390 = vld [vmem:[%s363 + $0x10] sm:$0xf]
      %v391 = vld [vmem:[%s363 + $0x14] sm:$0xf]
      %v392 = vld [vmem:[%s363 + $0x18] sm:$0xf]
      %v393 = vld [vmem:[%s363 + $0x1c] sm:$0xf]
      %v394 = vld [vmem:[%s363 + $0x20] sm:$0xf]
      %v395 = vld [vmem:[%s363 + $0x24] sm:$0xf]
      %v396 = vld [vmem:[%s363 + $0x28] sm:$0xf]
      %v397 = vld [vmem:[%s363 + $0x2c] sm:$0xf]
      %v398 = vld [vmem:[%s363 + $0x30] sm:$0xf]
      %v399 = vld [vmem:[%s363 + $0x34] sm:$0xf]
      %v400 = vld [vmem:[%s363 + $0x38] sm:$0xf]
      %v401 = vld [vmem:[%s363 + $0x3c] sm:$0xf]
      %v402 = vld [vmem:[%s363 + $0x40] sm:$0xf]
      %v403 = vld [vmem:[%s363 + $0x44] sm:$0xf]
      %v404 = vld [vmem:[%s363 + $0x48] sm:$0xf]
      %v405 = vld [vmem:[%s363 + $0x4c] sm:$0xf]
      %v406 = vld [vmem:[%s363 + $0x50] sm:$0xf]
      %v407 = vld [vmem:[%s363 + $0x54] sm:$0xf]
      %v408 = vld [vmem:[%s363 + $0x58] sm:$0xf]
      %v409 = vld [vmem:[%s363 + $0x5c] sm:$0xf]
      %v410 = vld [vmem:[%s363 + $0x60] sm:$0xf]
      %v411 = vld [vmem:[%s363 + $0x64] sm:$0xf]
      %v412 = vld [vmem:[%s363 + $0x68] sm:$0xf]
      %v413 = vld [vmem:[%s363 + $0x6c] sm:$0xf]
      %v414 = vld [vmem:[%s363 + $0x70] sm:$0xf]
      %v415 = vld [vmem:[%s363 + $0x74] sm:$0xf]
      %v416 = vld [vmem:[%s363 + $0x78] sm:$0xf]
      %v417 = vld [vmem:[%s363 + $0x7c] sm:$0xf]
      %v418 = vunpack.c.l.bf16 %v386
      %v419 = vunpack.c.l.bf16 %v387
      %v420 = vunpack.c.l.bf16 %v388
      %v421 = vunpack.c.l.bf16 %v389
      %v422 = vunpack.c.l.bf16 %v390
      %v423 = vunpack.c.l.bf16 %v391
      %v424 = vunpack.c.l.bf16 %v392
      %v425 = vunpack.c.l.bf16 %v393
      %v426 = vunpack.c.l.bf16 %v394
      %v427 = vunpack.c.l.bf16 %v395
      %v428 = vunpack.c.l.bf16 %v396
      %v429 = vunpack.c.l.bf16 %v397
      %v430 = vunpack.c.l.bf16 %v398
      %v431 = vunpack.c.l.bf16 %v399
      %v432 = vunpack.c.l.bf16 %v400
      %v433 = vunpack.c.l.bf16 %v401
      %v434 = vunpack.c.l.bf16 %v402
      %v435 = vunpack.c.l.bf16 %v403
      %v436 = vunpack.c.l.bf16 %v404
      %v437 = vunpack.c.l.bf16 %v405
      %v438 = vunpack.c.l.bf16 %v406
      %v439 = vunpack.c.l.bf16 %v407
      %v440 = vunpack.c.l.bf16 %v408
      %v441 = vunpack.c.l.bf16 %v409
      %v442 = vunpack.c.l.bf16 %v410
      %v443 = vunpack.c.l.bf16 %v411
      %v444 = vunpack.c.l.bf16 %v412
      %v445 = vunpack.c.l.bf16 %v413
      %v446 = vunpack.c.l.bf16 %v414
      %v447 = vunpack.c.l.bf16 %v415
      %v448 = vunpack.c.l.bf16 %v416
      %v449 = vunpack.c.l.bf16 %v417
      %v450 = vld [vmem:[%s0] sm:$0xff]
      %v451 = vld [vmem:[%s0 + $0x8] sm:$0xff]
      %v452 = vld [vmem:[%s0 + $0x10] sm:$0xff]
      %v453 = vld [vmem:[%s0 + $0x18] sm:$0xff]
      %v454 = vld [vmem:[%s2] sm:$0xf]
      %s455 = smul.u32 %s385, 3
      %s456 = smul.addr %s455, 4
      %s457 = scalar_lea.vmem %s369, %s456
      %v458 = vld [vmem:[%s457] sm:$0xf]
      %v459 = vld [vmem:[%s457 + $0x4] sm:$0xf]
      %v460 = vld [vmem:[%s457 + $0x8] sm:$0x1]
      %v461 = vld [vmem:[%s457 + $0xc] sm:$0xf]
      %v462 = vld [vmem:[%s457 + $0x10] sm:$0xf]
      %v463 = vld [vmem:[%s457 + $0x14] sm:$0x1]
      %v464 = vld [vmem:[%s457 + $0x18] sm:$0xf]
      %v465 = vld [vmem:[%s457 + $0x1c] sm:$0xf]
      %v466 = vld [vmem:[%s457 + $0x20] sm:$0x1]
      %v467 = vld [vmem:[%s457 + $0x24] sm:$0xf]
      %v468 = vld [vmem:[%s457 + $0x28] sm:$0xf]
      %v469 = vld [vmem:[%s457 + $0x2c] sm:$0x1]
      %v470 = vld [vmem:[%s457 + $0x30] sm:$0xf]
      %v471 = vld [vmem:[%s457 + $0x34] sm:$0xf]
      %v472 = vld [vmem:[%s457 + $0x38] sm:$0x1]
      %v473 = vld [vmem:[%s457 + $0x3c] sm:$0xf]
      %v474 = vld [vmem:[%s457 + $0x40] sm:$0xf]
      %v475 = vld [vmem:[%s457 + $0x44] sm:$0x1]
      %v476 = vld [vmem:[%s457 + $0x48] sm:$0xf]
      %v477 = vld [vmem:[%s457 + $0x4c] sm:$0xf]
      %v478 = vld [vmem:[%s457 + $0x50] sm:$0x1]
      %v479 = vld [vmem:[%s457 + $0x54] sm:$0xf]
      %v480 = vld [vmem:[%s457 + $0x58] sm:$0xf]
      %v481 = vld [vmem:[%s457 + $0x5c] sm:$0x1]
      %v482 = vld [vmem:[%s457 + $0x60] sm:$0xf]
      %v483 = vld [vmem:[%s457 + $0x64] sm:$0xf]
      %v484 = vld [vmem:[%s457 + $0x68] sm:$0x1]
      %v485 = vld [vmem:[%s457 + $0x6c] sm:$0xf]
      %v486 = vld [vmem:[%s457 + $0x70] sm:$0xf]
      %v487 = vld [vmem:[%s457 + $0x74] sm:$0x1]
      %v488 = vld [vmem:[%s457 + $0x78] sm:$0xf]
      %v489 = vld [vmem:[%s457 + $0x7c] sm:$0xf]
      %v490 = vld [vmem:[%s457 + $0x80] sm:$0x1]
      %v491 = vld [vmem:[%s457 + $0x84] sm:$0xf]
      %v492 = vld [vmem:[%s457 + $0x88] sm:$0xf]
      %v493 = vld [vmem:[%s457 + $0x8c] sm:$0x1]
      %v494 = vld [vmem:[%s457 + $0x90] sm:$0xf]
      %v495 = vld [vmem:[%s457 + $0x94] sm:$0xf]
      %v496 = vld [vmem:[%s457 + $0x98] sm:$0x1]
      %v497 = vld [vmem:[%s457 + $0x9c] sm:$0xf]
      %v498 = vld [vmem:[%s457 + $0xa0] sm:$0xf]
      %v499 = vld [vmem:[%s457 + $0xa4] sm:$0x1]
      %v500 = vld [vmem:[%s457 + $0xa8] sm:$0xf]
      %v501 = vld [vmem:[%s457 + $0xac] sm:$0xf]
      %v502 = vld [vmem:[%s457 + $0xb0] sm:$0x1]
      %v503 = vld [vmem:[%s457 + $0xb4] sm:$0xf]
      %v504 = vld [vmem:[%s457 + $0xb8] sm:$0xf]
      %v505 = vld [vmem:[%s457 + $0xbc] sm:$0x1]
      %v506 = vld [vmem:[%s457 + $0xc0] sm:$0xf]
      %v507 = vld [vmem:[%s457 + $0xc4] sm:$0xf]
      %v508 = vld [vmem:[%s457 + $0xc8] sm:$0x1]
      %v509 = vld [vmem:[%s457 + $0xcc] sm:$0xf]
      %v510 = vld [vmem:[%s457 + $0xd0] sm:$0xf]
      %v511 = vld [vmem:[%s457 + $0xd4] sm:$0x1]
      %v512 = vunpack.c.l.bf16 %v458
      %v513 = vunpack.c.l.bf16 %v459
      %v514 = vunpack.c.l.bf16 %v460
      %v515 = vunpack.c.l.bf16 %v461
      %v516 = vunpack.c.l.bf16 %v462
      %v517 = vunpack.c.l.bf16 %v463
      %v518 = vunpack.c.l.bf16 %v464
      %v519 = vunpack.c.l.bf16 %v465
      %v520 = vunpack.c.l.bf16 %v466
      %v521 = vunpack.c.l.bf16 %v467
      %v522 = vunpack.c.l.bf16 %v468
      %v523 = vunpack.c.l.bf16 %v469
      %v524 = vunpack.c.l.bf16 %v470
      %v525 = vunpack.c.l.bf16 %v471
      %v526 = vunpack.c.l.bf16 %v472
      %v527 = vunpack.c.l.bf16 %v473
      %v528 = vunpack.c.l.bf16 %v474
      %v529 = vunpack.c.l.bf16 %v475
      %v530 = vunpack.c.l.bf16 %v476
      %v531 = vunpack.c.l.bf16 %v477
      %v532 = vunpack.c.l.bf16 %v478
      %v533 = vunpack.c.l.bf16 %v479
      %v534 = vunpack.c.l.bf16 %v480
      %v535 = vunpack.c.l.bf16 %v481
      %v536 = vunpack.c.l.bf16 %v482
      %v537 = vunpack.c.l.bf16 %v483
      %v538 = vunpack.c.l.bf16 %v484
      %v539 = vunpack.c.l.bf16 %v485
      %v540 = vunpack.c.l.bf16 %v486
      %v541 = vunpack.c.l.bf16 %v487
      %v542 = vunpack.c.l.bf16 %v488
      %v543 = vunpack.c.l.bf16 %v489
      %v544 = vunpack.c.l.bf16 %v490
      %v545 = vunpack.c.l.bf16 %v491
      %v546 = vunpack.c.l.bf16 %v492
      %v547 = vunpack.c.l.bf16 %v493
      %v548 = vunpack.c.l.bf16 %v494
      %v549 = vunpack.c.l.bf16 %v495
      %v550 = vunpack.c.l.bf16 %v496
      %v551 = vunpack.c.l.bf16 %v497
      %v552 = vunpack.c.l.bf16 %v498
      %v553 = vunpack.c.l.bf16 %v499
      %v554 = vunpack.c.l.bf16 %v500
      %v555 = vunpack.c.l.bf16 %v501
      %v556 = vunpack.c.l.bf16 %v502
      %v557 = vunpack.c.l.bf16 %v503
      %v558 = vunpack.c.l.bf16 %v504
      %v559 = vunpack.c.l.bf16 %v505
      %v560 = vunpack.c.l.bf16 %v506
      %v561 = vunpack.c.l.bf16 %v507
      %v562 = vunpack.c.l.bf16 %v508
      %v563 = vunpack.c.l.bf16 %v509
      %v564 = vunpack.c.l.bf16 %v510
      %v565 = vunpack.c.l.bf16 %v511
      %v566 = vmul.f32 %v418, %v512
      %v567 = vmul.f32 %v419, %v513
      %v568 = vmul.f32 %v420, %v515
      %v569 = vmul.f32 %v421, %v516
      %v570 = vmul.f32 %v422, %v518
      %v571 = vmul.f32 %v423, %v519
      %v572 = vmul.f32 %v424, %v521
      %v573 = vmul.f32 %v425, %v522
      %v574 = vmul.f32 %v426, %v524
      %v575 = vmul.f32 %v427, %v525
      %v576 = vmul.f32 %v428, %v527
      %v577 = vmul.f32 %v429, %v528
      %v578 = vmul.f32 %v430, %v530
      %v579 = vmul.f32 %v431, %v531
      %v580 = vmul.f32 %v432, %v533
      %v581 = vmul.f32 %v433, %v534
      %v582 = vmul.f32 %v434, %v536
      %v583 = vmul.f32 %v435, %v537
      %v584 = vmul.f32 %v436, %v539
      %v585 = vmul.f32 %v437, %v540
      %v586 = vmul.f32 %v438, %v542
      %v587 = vmul.f32 %v439, %v543
      %v588 = vmul.f32 %v440, %v545
      %v589 = vmul.f32 %v441, %v546
      %v590 = vmul.f32 %v442, %v548
      %v591 = vmul.f32 %v443, %v549
      %v592 = vmul.f32 %v444, %v551
      %v593 = vmul.f32 %v445, %v552
      %v594 = vmul.f32 %v446, %v554
      %v595 = vmul.f32 %v447, %v555
      %v596 = vmul.f32 %v448, %v557
      %v597 = vmul.f32 %v449, %v558
      %v598 = vld [vmem:[%s1] sm:$0xff]
      %v599 = vld [vmem:[%s1 + $0x8] sm:$0xff]
      %v600 = vld [vmem:[%s1 + $0x10] sm:$0xff]
      %v601 = vld [vmem:[%s1 + $0x18] sm:$0xff]
      %vm602 = vcmask 261120
      %v604 = vsel %vm602, %v566, 0
      %v607 = vsel %vm602, %v567, 0
      %v610 = vsel %vm602, %v568, 0
      %v613 = vsel %vm602, %v569, 0
      %v616 = vsel %vm602, %v570, 0
      %v619 = vsel %vm602, %v571, 0
      %v622 = vsel %vm602, %v572, 0
      %v625 = vsel %vm602, %v573, 0
      %v628 = vsel %vm602, %v574, 0
      %v631 = vsel %vm602, %v575, 0
      %v634 = vsel %vm602, %v576, 0
      %v637 = vsel %vm602, %v577, 0
      %v640 = vsel %vm602, %v578, 0
      %v643 = vsel %vm602, %v579, 0
      %v646 = vsel %vm602, %v580, 0
      %v649 = vsel %vm602, %v581, 0
      %v652 = vsel %vm602, %v582, 0
      %v655 = vsel %vm602, %v583, 0
      %v658 = vsel %vm602, %v584, 0
      %v661 = vsel %vm602, %v585, 0
      %v664 = vsel %vm602, %v586, 0
      %v667 = vsel %vm602, %v587, 0
      %v670 = vsel %vm602, %v588, 0
      %v673 = vsel %vm602, %v589, 0
      %v676 = vsel %vm602, %v590, 0
      %v679 = vsel %vm602, %v591, 0
      %v682 = vsel %vm602, %v592, 0
      %v685 = vsel %vm602, %v593, 0
      %v688 = vsel %vm602, %v594, 0
      %v691 = vsel %vm602, %v595, 0
      %v694 = vsel %vm602, %v596, 0
      %v697 = vsel %vm602, %v597, 0
      %699 = vmatprep.subr.mxu0 0.0
      %700 = vmatpush1.msra.mxu0 0.0
      %701 = vmatprep.subr.mxu0 0.0
      %702 = vmatpush1.msra.mxu0 0.0
      %703 = vmatprep.subr.mxu0 0.0
      %704 = vmatpush1.msra.mxu0 0.0
      %705 = vmatprep.subr.mxu0 0.0
      %706 = vmatpush1.msra.mxu0 0.0
      %707 = vmatprep.subr.mxu0 0.0
      %708 = vmatpush1.msra.mxu0 0.0
      %709 = vmatprep.subr.mxu0 0.0
      %710 = vmatpush1.msra.mxu0 0.0
      %711 = vmatprep.subr.mxu0 0.0
      %712 = vmatpush1.msra.mxu0 0.0
      %713 = vmatprep.subr.mxu0 0.0
      %714 = vmatpush1.msra.mxu0 0.0
      %715 = vmatprep.subr.mxu0 0.0
      %716 = vmatpush1.msra.mxu0 0.0
      %717 = vmatprep.subr.mxu0 0.0
      %718 = vmatpush1.msra.mxu0 0.0
      %719 = vmatprep.subr.mxu0 0.0
      %720 = vmatpush1.msra.mxu0 0.0
      %721 = vmatprep.subr.mxu0 0.0
      %722 = vmatpush1.msra.mxu0 0.0
      %723 = vmatprep.subr.mxu0 0.0
      %724 = vmatpush1.msra.mxu0 %v453
      %725 = vmatprep.subr.mxu0 0.0
      %726 = vmatpush1.msra.mxu0 %v452
      %727 = vmatprep.subr.mxu0 0.0
      %728 = vmatpush1.msra.mxu0 %v451
      %729 = vmatprep.subr.mxu0 0.0
      %730 = vmatpush1.msra.mxu0 %v450
      %731 = vmatprep.subr.mxu0 0.0
      %732 = vmatpush2.msra.mxu0 0.0
      %733 = vmatprep.subr.mxu0 0.0
      %734 = vmatpush2.msra.mxu0 0.0
      %735 = vmatprep.subr.mxu0 0.0
      %736 = vmatpush2.msra.mxu0 0.0
      %737 = vmatprep.subr.mxu0 0.0
      %738 = vmatpush2.msra.mxu0 0.0
      %739 = vmatprep.subr.mxu0 0.0
      %740 = vmatpush2.msra.mxu0 0.0
      %741 = vmatprep.subr.mxu0 0.0
      %742 = vmatpush2.msra.mxu0 0.0
      %743 = vmatprep.subr.mxu0 0.0
      %744 = vmatpush2.msra.mxu0 0.0
      %745 = vmatprep.subr.mxu0 0.0
      %746 = vmatpush2.msra.mxu0 0.0
      %747 = vmatprep.subr.mxu0 0.0
      %748 = vmatpush2.msra.mxu0 0.0
      %749 = vmatprep.subr.mxu0 0.0
      %750 = vmatpush2.msra.mxu0 0.0
      %751 = vmatprep.subr.mxu0 0.0
      %752 = vmatpush2.msra.mxu0 0.0
      %753 = vmatprep.subr.mxu0 0.0
      %754 = vmatpush2.msra.mxu0 0.0
      %755 = vmatprep.subr.mxu0 0.0
      %756 = vmatpush2.msra.mxu0 0.0
      %757 = vmatprep.subr.mxu0 0.0
      %758 = vmatpush2.msra.mxu0 0.0
      %759 = vmatprep.subr.mxu0 0.0
      %760 = vmatpush2.msra.mxu0 0.0
      %761 = vmatprep.subr.mxu0 0.0
      %762 = vmatpush2.msra.mxu0 0.0
      %763 = vmatprep.mubr.f32.mxu0 0.0
      %764 = vmatmul.mubr.f32.gmra.mxu0 %v604
      %v765 = vpop.f32.mrf.mxu0
      %v766 = vadd.f32 0.0, %v765
      %v767 = vpop.f32.mrf.mxu0
      %768 = vmatprep.mubr.f32.mxu0 0.0
      %769 = vmatmul.mubr.f32.gmra.mxu0 %v607
      %v770 = vpop.f32.mrf.mxu0
      %v771 = vadd.f32 0.0, %v770
      %v772 = vpop.f32.mrf.mxu0
      %773 = vmatprep.mubr.f32.mxu0 0.0
      %774 = vmatmul.mubr.f32.gmra.mxu0 %v610
      %v775 = vpop.f32.mrf.mxu0
      %v776 = vadd.f32 0.0, %v775
      %v777 = vpop.f32.mrf.mxu0
      %778 = vmatprep.mubr.f32.mxu0 0.0
      %779 = vmatmul.mubr.f32.gmra.mxu0 %v613
      %v780 = vpop.f32.mrf.mxu0
      %v781 = vadd.f32 0.0, %v780
      %v782 = vpop.f32.mrf.mxu0
      %783 = vmatprep.mubr.f32.mxu0 0.0
      %784 = vmatmul.mubr.f32.gmra.mxu0 %v616
      %v785 = vpop.f32.mrf.mxu0
      %v786 = vadd.f32 0.0, %v785
      %v787 = vpop.f32.mrf.mxu0
      %788 = vmatprep.mubr.f32.mxu0 0.0
      %789 = vmatmul.mubr.f32.gmra.mxu0 %v619
      %v790 = vpop.f32.mrf.mxu0
      %v791 = vadd.f32 0.0, %v790
      %v792 = vpop.f32.mrf.mxu0
      %793 = vmatprep.mubr.f32.mxu0 0.0
      %794 = vmatmul.mubr.f32.gmra.mxu0 %v622
      %v795 = vpop.f32.mrf.mxu0
      %v796 = vadd.f32 0.0, %v795
      %v797 = vpop.f32.mrf.mxu0
      %798 = vmatprep.mubr.f32.mxu0 0.0
      %799 = vmatmul.mubr.f32.gmra.mxu0 %v625
      %v800 = vpop.f32.mrf.mxu0
      %v801 = vadd.f32 0.0, %v800
      %v802 = vpop.f32.mrf.mxu0
      %803 = vmatprep.mubr.f32.mxu0 0.0
      %804 = vmatmul.mubr.f32.gmra.mxu0 %v628
      %v805 = vpop.f32.mrf.mxu0
      %v806 = vadd.f32 0.0, %v805
      %v807 = vpop.f32.mrf.mxu0
      %808 = vmatprep.mubr.f32.mxu0 0.0
      %809 = vmatmul.mubr.f32.gmra.mxu0 %v631
      %v810 = vpop.f32.mrf.mxu0
      %v811 = vadd.f32 0.0, %v810
      %v812 = vpop.f32.mrf.mxu0
      %813 = vmatprep.mubr.f32.mxu0 0.0
      %814 = vmatmul.mubr.f32.gmra.mxu0 %v634
      %v815 = vpop.f32.mrf.mxu0
      %v816 = vadd.f32 0.0, %v815
      %v817 = vpop.f32.mrf.mxu0
      %818 = vmatprep.mubr.f32.mxu0 0.0
      %819 = vmatmul.mubr.f32.gmra.mxu0 %v637
      %v820 = vpop.f32.mrf.mxu0
      %v821 = vadd.f32 0.0, %v820
      %v822 = vpop.f32.mrf.mxu0
      %823 = vmatprep.mubr.f32.mxu0 0.0
      %824 = vmatmul.mubr.f32.gmra.mxu0 %v640
      %v825 = vpop.f32.mrf.mxu0
      %v826 = vadd.f32 0.0, %v825
      %v827 = vpop.f32.mrf.mxu0
      %828 = vmatprep.mubr.f32.mxu0 0.0
      %829 = vmatmul.mubr.f32.gmra.mxu0 %v643
      %v830 = vpop.f32.mrf.mxu0
      %v831 = vadd.f32 0.0, %v830
      %v832 = vpop.f32.mrf.mxu0
      %833 = vmatprep.mubr.f32.mxu0 0.0
      %834 = vmatmul.mubr.f32.gmra.mxu0 %v646
      %v835 = vpop.f32.mrf.mxu0
      %v836 = vadd.f32 0.0, %v835
      %v837 = vpop.f32.mrf.mxu0
      %838 = vmatprep.mubr.f32.mxu0 0.0
      %839 = vmatmul.mubr.f32.gmra.mxu0 %v649
      %v840 = vpop.f32.mrf.mxu0
      %v841 = vadd.f32 0.0, %v840
      %v842 = vpop.f32.mrf.mxu0
      %843 = vmatprep.mubr.f32.mxu0 0.0
      %844 = vmatmul.mubr.f32.gmra.mxu0 %v652
      %v845 = vpop.f32.mrf.mxu0
      %v846 = vadd.f32 0.0, %v845
      %v847 = vpop.f32.mrf.mxu0
      %848 = vmatprep.mubr.f32.mxu0 0.0
      %849 = vmatmul.mubr.f32.gmra.mxu0 %v655
      %v850 = vpop.f32.mrf.mxu0
      %v851 = vadd.f32 0.0, %v850
      %v852 = vpop.f32.mrf.mxu0
      %853 = vmatprep.mubr.f32.mxu0 0.0
      %854 = vmatmul.mubr.f32.gmra.mxu0 %v658
      %v855 = vpop.f32.mrf.mxu0
      %v856 = vadd.f32 0.0, %v855
      %v857 = vpop.f32.mrf.mxu0
      %858 = vmatprep.mubr.f32.mxu0 0.0
      %859 = vmatmul.mubr.f32.gmra.mxu0 %v661
      %v860 = vpop.f32.mrf.mxu0
      %v861 = vadd.f32 0.0, %v860
      %v862 = vpop.f32.mrf.mxu0
      %863 = vmatprep.mubr.f32.mxu0 0.0
      %864 = vmatmul.mubr.f32.gmra.mxu0 %v664
      %v865 = vpop.f32.mrf.mxu0
      %v866 = vadd.f32 0.0, %v865
      %v867 = vpop.f32.mrf.mxu0
      %868 = vmatprep.mubr.f32.mxu0 0.0
      %869 = vmatmul.mubr.f32.gmra.mxu0 %v667
      %v870 = vpop.f32.mrf.mxu0
      %v871 = vadd.f32 0.0, %v870
      %v872 = vpop.f32.mrf.mxu0
      %873 = vmatprep.mubr.f32.mxu0 0.0
      %874 = vmatmul.mubr.f32.gmra.mxu0 %v670
      %v875 = vpop.f32.mrf.mxu0
      %v876 = vadd.f32 0.0, %v875
      %v877 = vpop.f32.mrf.mxu0
      %878 = vmatprep.mubr.f32.mxu0 0.0
      %879 = vmatmul.mubr.f32.gmra.mxu0 %v673
      %v880 = vpop.f32.mrf.mxu0
      %v881 = vadd.f32 0.0, %v880
      %v882 = vpop.f32.mrf.mxu0
      %883 = vmatprep.mubr.f32.mxu0 0.0
      %884 = vmatmul.mubr.f32.gmra.mxu0 %v676
      %v885 = vpop.f32.mrf.mxu0
      %v886 = vadd.f32 0.0, %v885
      %v887 = vpop.f32.mrf.mxu0
      %888 = vmatprep.mubr.f32.mxu0 0.0
      %889 = vmatmul.mubr.f32.gmra.mxu0 %v679
      %v890 = vpop.f32.mrf.mxu0
      %v891 = vadd.f32 0.0, %v890
      %v892 = vpop.f32.mrf.mxu0
      %893 = vmatprep.mubr.f32.mxu0 0.0
      %894 = vmatmul.mubr.f32.gmra.mxu0 %v682
      %v895 = vpop.f32.mrf.mxu0
      %v896 = vadd.f32 0.0, %v895
      %v897 = vpop.f32.mrf.mxu0
      %898 = vmatprep.mubr.f32.mxu0 0.0
      %899 = vmatmul.mubr.f32.gmra.mxu0 %v685
      %v900 = vpop.f32.mrf.mxu0
      %v901 = vadd.f32 0.0, %v900
      %v902 = vpop.f32.mrf.mxu0
      %903 = vmatprep.mubr.f32.mxu0 0.0
      %904 = vmatmul.mubr.f32.gmra.mxu0 %v688
      %v905 = vpop.f32.mrf.mxu0
      %v906 = vadd.f32 0.0, %v905
      %v907 = vpop.f32.mrf.mxu0
      %908 = vmatprep.mubr.f32.mxu0 0.0
      %909 = vmatmul.mubr.f32.gmra.mxu0 %v691
      %v910 = vpop.f32.mrf.mxu0
      %v911 = vadd.f32 0.0, %v910
      %v912 = vpop.f32.mrf.mxu0
      %913 = vmatprep.mubr.f32.mxu0 0.0
      %914 = vmatmul.mubr.f32.gmra.mxu0 %v694
      %v915 = vpop.f32.mrf.mxu0
      %v916 = vadd.f32 0.0, %v915
      %v917 = vpop.f32.mrf.mxu0
      %918 = vmatprep.mubr.f32.mxu0 0.0
      %919 = vmatmul.mubr.f32.gmra.mxu0 %v697
      %v920 = vpop.f32.mrf.mxu0
      %v921 = vadd.f32 0.0, %v920
      %v922 = vpop.f32.mrf.mxu0
      %923 = vdwg.mxu0
      %v924 = vmul.f32 %v418, %v515
      %v925 = vmul.f32 %v419, %v516
      %v926 = vmul.f32 %v420, %v518
      %v927 = vmul.f32 %v421, %v519
      %v928 = vmul.f32 %v422, %v521
      %v929 = vmul.f32 %v423, %v522
      %v930 = vmul.f32 %v424, %v524
      %v931 = vmul.f32 %v425, %v525
      %v932 = vmul.f32 %v426, %v527
      %v933 = vmul.f32 %v427, %v528
      %v934 = vmul.f32 %v428, %v530
      %v935 = vmul.f32 %v429, %v531
      %v936 = vmul.f32 %v430, %v533
      %v937 = vmul.f32 %v431, %v534
      %v938 = vmul.f32 %v432, %v536
      %v939 = vmul.f32 %v433, %v537
      %v940 = vmul.f32 %v434, %v539
      %v941 = vmul.f32 %v435, %v540
      %v942 = vmul.f32 %v436, %v542
      %v943 = vmul.f32 %v437, %v543
      %v944 = vmul.f32 %v438, %v545
      %v945 = vmul.f32 %v439, %v546
      %v946 = vmul.f32 %v440, %v548
      %v947 = vmul.f32 %v441, %v549
      %v948 = vmul.f32 %v442, %v551
      %v949 = vmul.f32 %v443, %v552
      %v950 = vmul.f32 %v444, %v554
      %v951 = vmul.f32 %v445, %v555
      %v952 = vmul.f32 %v446, %v557
      %v953 = vmul.f32 %v447, %v558
      %v954 = vmul.f32 %v448, %v560
      %v955 = vmul.f32 %v449, %v561
      %s956 = scalar_lea.vmem %s1, 32
      %v957 = vld [vmem:[%s956] sm:$0xff]
      %v958 = vld [vmem:[%s956 + $0x8] sm:$0xff]
      %v959 = vld [vmem:[%s956 + $0x10] sm:$0xff]
      %v960 = vld [vmem:[%s956 + $0x18] sm:$0xff]
      %v962 = vsel %vm602, %v924, 0
      %v965 = vsel %vm602, %v925, 0
      %v968 = vsel %vm602, %v926, 0
      %v971 = vsel %vm602, %v927, 0
      %v974 = vsel %vm602, %v928, 0
      %v977 = vsel %vm602, %v929, 0
      %v980 = vsel %vm602, %v930, 0
      %v983 = vsel %vm602, %v931, 0
      %v986 = vsel %vm602, %v932, 0
      %v989 = vsel %vm602, %v933, 0
      %v992 = vsel %vm602, %v934, 0
      %v995 = vsel %vm602, %v935, 0
      %v998 = vsel %vm602, %v936, 0
      %v1001 = vsel %vm602, %v937, 0
      %v1004 = vsel %vm602, %v938, 0
      %v1007 = vsel %vm602, %v939, 0
      %v1010 = vsel %vm602, %v940, 0
      %v1013 = vsel %vm602, %v941, 0
      %v1016 = vsel %vm602, %v942, 0
      %v1019 = vsel %vm602, %v943, 0
      %v1022 = vsel %vm602, %v944, 0
      %v1025 = vsel %vm602, %v945, 0
      %v1028 = vsel %vm602, %v946, 0
      %v1031 = vsel %vm602, %v947, 0
      %v1034 = vsel %vm602, %v948, 0
      %v1037 = vsel %vm602, %v949, 0
      %v1040 = vsel %vm602, %v950, 0
      %v1043 = vsel %vm602, %v951, 0
      %v1046 = vsel %vm602, %v952, 0
      %v1049 = vsel %vm602, %v953, 0
      %v1052 = vsel %vm602, %v954, 0
      %v1055 = vsel %vm602, %v955, 0
      %1057 = vmatprep.subr.mxu0 0.0
      %1058 = vmatpush1.msra.mxu0 0.0
      %1059 = vmatprep.subr.mxu0 0.0
      %1060 = vmatpush1.msra.mxu0 0.0
      %1061 = vmatprep.subr.mxu0 0.0
      %1062 = vmatpush1.msra.mxu0 0.0
      %1063 = vmatprep.subr.mxu0 0.0
      %1064 = vmatpush1.msra.mxu0 0.0
      %1065 = vmatprep.subr.mxu0 0.0
      %1066 = vmatpush1.msra.mxu0 0.0
      %1067 = vmatprep.subr.mxu0 0.0
      %1068 = vmatpush1.msra.mxu0 0.0
      %1069 = vmatprep.subr.mxu0 0.0
      %1070 = vmatpush1.msra.mxu0 0.0
      %1071 = vmatprep.subr.mxu0 0.0
      %1072 = vmatpush1.msra.mxu0 0.0
      %1073 = vmatprep.subr.mxu0 0.0
      %1074 = vmatpush1.msra.mxu0 0.0
      %1075 = vmatprep.subr.mxu0 0.0
      %1076 = vmatpush1.msra.mxu0 0.0
      %1077 = vmatprep.subr.mxu0 0.0
      %1078 = vmatpush1.msra.mxu0 0.0
      %1079 = vmatprep.subr.mxu0 0.0
      %1080 = vmatpush1.msra.mxu0 0.0
      %1081 = vmatprep.subr.mxu0 0.0
      %1082 = vmatpush1.msra.mxu0 %v960
      %1083 = vmatprep.subr.mxu0 0.0
      %1084 = vmatpush1.msra.mxu0 %v959
      %1085 = vmatprep.subr.mxu0 0.0
      %1086 = vmatpush1.msra.mxu0 %v958
      %1087 = vmatprep.subr.mxu0 0.0
      %1088 = vmatpush1.msra.mxu0 %v957
      %1089 = vmatprep.subr.mxu0 0.0
      %1090 = vmatpush2.msra.mxu0 0.0
      %1091 = vmatprep.subr.mxu0 0.0
      %1092 = vmatpush2.msra.mxu0 0.0
      %1093 = vmatprep.subr.mxu0 0.0
      %1094 = vmatpush2.msra.mxu0 0.0
      %1095 = vmatprep.subr.mxu0 0.0
      %1096 = vmatpush2.msra.mxu0 0.0
      %1097 = vmatprep.subr.mxu0 0.0
      %1098 = vmatpush2.msra.mxu0 0.0
      %1099 = vmatprep.subr.mxu0 0.0
      %1100 = vmatpush2.msra.mxu0 0.0
      %1101 = vmatprep.subr.mxu0 0.0
      %1102 = vmatpush2.msra.mxu0 0.0
      %1103 = vmatprep.subr.mxu0 0.0
      %1104 = vmatpush2.msra.mxu0 0.0
      %1105 = vmatprep.subr.mxu0 0.0
      %1106 = vmatpush2.msra.mxu0 0.0
      %1107 = vmatprep.subr.mxu0 0.0
      %1108 = vmatpush2.msra.mxu0 0.0
      %1109 = vmatprep.subr.mxu0 0.0
      %1110 = vmatpush2.msra.mxu0 0.0
      %1111 = vmatprep.subr.mxu0 0.0
      %1112 = vmatpush2.msra.mxu0 0.0
      %1113 = vmatprep.subr.mxu0 0.0
      %1114 = vmatpush2.msra.mxu0 0.0
      %1115 = vmatprep.subr.mxu0 0.0
      %1116 = vmatpush2.msra.mxu0 0.0
      %1117 = vmatprep.subr.mxu0 0.0
      %1118 = vmatpush2.msra.mxu0 0.0
      %1119 = vmatprep.subr.mxu0 0.0
      %1120 = vmatpush2.msra.mxu0 0.0
      %1121 = vmatprep.mubr.f32.mxu0 0.0
      %1122 = vmatmul.mubr.f32.gmra.mxu0 %v962
      %v1123 = vpop.f32.mrf.mxu0
      %v1124 = vadd.f32 0.0, %v1123
      %v1125 = vpop.f32.mrf.mxu0
      %1126 = vmatprep.mubr.f32.mxu0 0.0
      %1127 = vmatmul.mubr.f32.gmra.mxu0 %v965
      %v1128 = vpop.f32.mrf.mxu0
      %v1129 = vadd.f32 0.0, %v1128
      %v1130 = vpop.f32.mrf.mxu0
      %1131 = vmatprep.mubr.f32.mxu0 0.0
      %1132 = vmatmul.mubr.f32.gmra.mxu0 %v968
      %v1133 = vpop.f32.mrf.mxu0
      %v1134 = vadd.f32 0.0, %v1133
      %v1135 = vpop.f32.mrf.mxu0
      %1136 = vmatprep.mubr.f32.mxu0 0.0
      %1137 = vmatmul.mubr.f32.gmra.mxu0 %v971
      %v1138 = vpop.f32.mrf.mxu0
      %v1139 = vadd.f32 0.0, %v1138
      %v1140 = vpop.f32.mrf.mxu0
      %1141 = vmatprep.mubr.f32.mxu0 0.0
      %1142 = vmatmul.mubr.f32.gmra.mxu0 %v974
      %v1143 = vpop.f32.mrf.mxu0
      %v1144 = vadd.f32 0.0, %v1143
      %v1145 = vpop.f32.mrf.mxu0
      %1146 = vmatprep.mubr.f32.mxu0 0.0
      %1147 = vmatmul.mubr.f32.gmra.mxu0 %v977
      %v1148 = vpop.f32.mrf.mxu0
      %v1149 = vadd.f32 0.0, %v1148
      %v1150 = vpop.f32.mrf.mxu0
      %1151 = vmatprep.mubr.f32.mxu0 0.0
      %1152 = vmatmul.mubr.f32.gmra.mxu0 %v980
      %v1153 = vpop.f32.mrf.mxu0
      %v1154 = vadd.f32 0.0, %v1153
      %v1155 = vpop.f32.mrf.mxu0
      %1156 = vmatprep.mubr.f32.mxu0 0.0
      %1157 = vmatmul.mubr.f32.gmra.mxu0 %v983
      %v1158 = vpop.f32.mrf.mxu0
      %v1159 = vadd.f32 0.0, %v1158
      %v1160 = vpop.f32.mrf.mxu0
      %1161 = vmatprep.mubr.f32.mxu0 0.0
      %1162 = vmatmul.mubr.f32.gmra.mxu0 %v986
      %v1163 = vpop.f32.mrf.mxu0
      %v1164 = vadd.f32 0.0, %v1163
      %v1165 = vpop.f32.mrf.mxu0
      %1166 = vmatprep.mubr.f32.mxu0 0.0
      %1167 = vmatmul.mubr.f32.gmra.mxu0 %v989
      %v1168 = vpop.f32.mrf.mxu0
      %v1169 = vadd.f32 0.0, %v1168
      %v1170 = vpop.f32.mrf.mxu0
      %1171 = vmatprep.mubr.f32.mxu0 0.0
      %1172 = vmatmul.mubr.f32.gmra.mxu0 %v992
      %v1173 = vpop.f32.mrf.mxu0
      %v1174 = vadd.f32 0.0, %v1173
      %v1175 = vpop.f32.mrf.mxu0
      %1176 = vmatprep.mubr.f32.mxu0 0.0
      %1177 = vmatmul.mubr.f32.gmra.mxu0 %v995
      %v1178 = vpop.f32.mrf.mxu0
      %v1179 = vadd.f32 0.0, %v1178
      %v1180 = vpop.f32.mrf.mxu0
      %1181 = vmatprep.mubr.f32.mxu0 0.0
      %1182 = vmatmul.mubr.f32.gmra.mxu0 %v998
      %v1183 = vpop.f32.mrf.mxu0
      %v1184 = vadd.f32 0.0, %v1183
      %v1185 = vpop.f32.mrf.mxu0
      %1186 = vmatprep.mubr.f32.mxu0 0.0
      %1187 = vmatmul.mubr.f32.gmra.mxu0 %v1001
      %v1188 = vpop.f32.mrf.mxu0
      %v1189 = vadd.f32 0.0, %v1188
      %v1190 = vpop.f32.mrf.mxu0
      %1191 = vmatprep.mubr.f32.mxu0 0.0
      %1192 = vmatmul.mubr.f32.gmra.mxu0 %v1004
      %v1193 = vpop.f32.mrf.mxu0
      %v1194 = vadd.f32 0.0, %v1193
      %v1195 = vpop.f32.mrf.mxu0
      %1196 = vmatprep.mubr.f32.mxu0 0.0
      %1197 = vmatmul.mubr.f32.gmra.mxu0 %v1007
      %v1198 = vpop.f32.mrf.mxu0
      %v1199 = vadd.f32 0.0, %v1198
      %v1200 = vpop.f32.mrf.mxu0
      %1201 = vmatprep.mubr.f32.mxu0 0.0
      %1202 = vmatmul.mubr.f32.gmra.mxu0 %v1010
      %v1203 = vpop.f32.mrf.mxu0
      %v1204 = vadd.f32 0.0, %v1203
      %v1205 = vpop.f32.mrf.mxu0
      %1206 = vmatprep.mubr.f32.mxu0 0.0
      %1207 = vmatmul.mubr.f32.gmra.mxu0 %v1013
      %v1208 = vpop.f32.mrf.mxu0
      %v1209 = vadd.f32 0.0, %v1208
      %v1210 = vpop.f32.mrf.mxu0
      %1211 = vmatprep.mubr.f32.mxu0 0.0
      %1212 = vmatmul.mubr.f32.gmra.mxu0 %v1016
      %v1213 = vpop.f32.mrf.mxu0
      %v1214 = vadd.f32 0.0, %v1213
      %v1215 = vpop.f32.mrf.mxu0
      %1216 = vmatprep.mubr.f32.mxu0 0.0
      %1217 = vmatmul.mubr.f32.gmra.mxu0 %v1019
      %v1218 = vpop.f32.mrf.mxu0
      %v1219 = vadd.f32 0.0, %v1218
      %v1220 = vpop.f32.mrf.mxu0
      %1221 = vmatprep.mubr.f32.mxu0 0.0
      %1222 = vmatmul.mubr.f32.gmra.mxu0 %v1022
      %v1223 = vpop.f32.mrf.mxu0
      %v1224 = vadd.f32 0.0, %v1223
      %v1225 = vpop.f32.mrf.mxu0
      %1226 = vmatprep.mubr.f32.mxu0 0.0
      %1227 = vmatmul.mubr.f32.gmra.mxu0 %v1025
      %v1228 = vpop.f32.mrf.mxu0
      %v1229 = vadd.f32 0.0, %v1228
      %v1230 = vpop.f32.mrf.mxu0
      %1231 = vmatprep.mubr.f32.mxu0 0.0
      %1232 = vmatmul.mubr.f32.gmra.mxu0 %v1028
      %v1233 = vpop.f32.mrf.mxu0
      %v1234 = vadd.f32 0.0, %v1233
      %v1235 = vpop.f32.mrf.mxu0
      %1236 = vmatprep.mubr.f32.mxu0 0.0
      %1237 = vmatmul.mubr.f32.gmra.mxu0 %v1031
      %v1238 = vpop.f32.mrf.mxu0
      %v1239 = vadd.f32 0.0, %v1238
      %v1240 = vpop.f32.mrf.mxu0
      %1241 = vmatprep.mubr.f32.mxu0 0.0
      %1242 = vmatmul.mubr.f32.gmra.mxu0 %v1034
      %v1243 = vpop.f32.mrf.mxu0
      %v1244 = vadd.f32 0.0, %v1243
      %v1245 = vpop.f32.mrf.mxu0
      %1246 = vmatprep.mubr.f32.mxu0 0.0
      %1247 = vmatmul.mubr.f32.gmra.mxu0 %v1037
      %v1248 = vpop.f32.mrf.mxu0
      %v1249 = vadd.f32 0.0, %v1248
      %v1250 = vpop.f32.mrf.mxu0
      %1251 = vmatprep.mubr.f32.mxu0 0.0
      %1252 = vmatmul.mubr.f32.gmra.mxu0 %v1040
      %v1253 = vpop.f32.mrf.mxu0
      %v1254 = vadd.f32 0.0, %v1253
      %v1255 = vpop.f32.mrf.mxu0
      %1256 = vmatprep.mubr.f32.mxu0 0.0
      %1257 = vmatmul.mubr.f32.gmra.mxu0 %v1043
      %v1258 = vpop.f32.mrf.mxu0
      %v1259 = vadd.f32 0.0, %v1258
      %v1260 = vpop.f32.mrf.mxu0
      %1261 = vmatprep.mubr.f32.mxu0 0.0
      %1262 = vmatmul.mubr.f32.gmra.mxu0 %v1046
      %v1263 = vpop.f32.mrf.mxu0
      %v1264 = vadd.f32 0.0, %v1263
      %v1265 = vpop.f32.mrf.mxu0
      %1266 = vmatprep.mubr.f32.mxu0 0.0
      %1267 = vmatmul.mubr.f32.gmra.mxu0 %v1049
      %v1268 = vpop.f32.mrf.mxu0
      %v1269 = vadd.f32 0.0, %v1268
      %v1270 = vpop.f32.mrf.mxu0
      %1271 = vmatprep.mubr.f32.mxu0 0.0
      %1272 = vmatmul.mubr.f32.gmra.mxu0 %v1052
      %v1273 = vpop.f32.mrf.mxu0
      %v1274 = vadd.f32 0.0, %v1273
      %v1275 = vpop.f32.mrf.mxu0
      %1276 = vmatprep.mubr.f32.mxu0 0.0
      %1277 = vmatmul.mubr.f32.gmra.mxu0 %v1055
      %v1278 = vpop.f32.mrf.mxu0
      %v1279 = vadd.f32 0.0, %v1278
      %v1280 = vpop.f32.mrf.mxu0
      %1281 = vdwg.mxu0
      %1282 = vmatprep.subr.mxu0 0.0
      %1283 = vmatpush1.msra.mxu0 0.0
      %1284 = vmatprep.subr.mxu0 0.0
      %1285 = vmatpush1.msra.mxu0 0.0
      %1286 = vmatprep.subr.mxu0 0.0
      %1287 = vmatpush1.msra.mxu0 0.0
      %1288 = vmatprep.subr.mxu0 0.0
      %1289 = vmatpush1.msra.mxu0 0.0
      %1290 = vmatprep.subr.mxu0 0.0
      %1291 = vmatpush1.msra.mxu0 0.0
      %1292 = vmatprep.subr.mxu0 0.0
      %1293 = vmatpush1.msra.mxu0 0.0
      %1294 = vmatprep.subr.mxu0 0.0
      %1295 = vmatpush1.msra.mxu0 0.0
      %1296 = vmatprep.subr.mxu0 0.0
      %1297 = vmatpush1.msra.mxu0 0.0
      %1298 = vmatprep.subr.mxu0 0.0
      %1299 = vmatpush1.msra.mxu0 0.0
      %1300 = vmatprep.subr.mxu0 0.0
      %1301 = vmatpush1.msra.mxu0 0.0
      %1302 = vmatprep.subr.mxu0 0.0
      %1303 = vmatpush1.msra.mxu0 0.0
      %1304 = vmatprep.subr.mxu0 0.0
      %1305 = vmatpush1.msra.mxu0 0.0
      %1306 = vmatprep.subr.mxu0 0.0
      %1307 = vmatpush1.msra.mxu0 %v601
      %1308 = vmatprep.subr.mxu0 0.0
      %1309 = vmatpush1.msra.mxu0 %v600
      %1310 = vmatprep.subr.mxu0 0.0
      %1311 = vmatpush1.msra.mxu0 %v599
      %1312 = vmatprep.subr.mxu0 0.0
      %1313 = vmatpush1.msra.mxu0 %v598
      %1314 = vmatprep.subr.mxu0 0.0
      %1315 = vmatpush2.msra.mxu0 0.0
      %1316 = vmatprep.subr.mxu0 0.0
      %1317 = vmatpush2.msra.mxu0 0.0
      %1318 = vmatprep.subr.mxu0 0.0
      %1319 = vmatpush2.msra.mxu0 0.0
      %1320 = vmatprep.subr.mxu0 0.0
      %1321 = vmatpush2.msra.mxu0 0.0
      %1322 = vmatprep.subr.mxu0 0.0
      %1323 = vmatpush2.msra.mxu0 0.0
      %1324 = vmatprep.subr.mxu0 0.0
      %1325 = vmatpush2.msra.mxu0 0.0
      %1326 = vmatprep.subr.mxu0 0.0
      %1327 = vmatpush2.msra.mxu0 0.0
      %1328 = vmatprep.subr.mxu0 0.0
      %1329 = vmatpush2.msra.mxu0 0.0
      %1330 = vmatprep.subr.mxu0 0.0
      %1331 = vmatpush2.msra.mxu0 0.0
      %1332 = vmatprep.subr.mxu0 0.0
      %1333 = vmatpush2.msra.mxu0 0.0
      %1334 = vmatprep.subr.mxu0 0.0
      %1335 = vmatpush2.msra.mxu0 0.0
      %1336 = vmatprep.subr.mxu0 0.0
      %1337 = vmatpush2.msra.mxu0 0.0
      %1338 = vmatprep.subr.mxu0 0.0
      %1339 = vmatpush2.msra.mxu0 0.0
      %1340 = vmatprep.subr.mxu0 0.0
      %1341 = vmatpush2.msra.mxu0 0.0
      %1342 = vmatprep.subr.mxu0 0.0
      %1343 = vmatpush2.msra.mxu0 0.0
      %1344 = vmatprep.subr.mxu0 0.0
      %1345 = vmatpush2.msra.mxu0 0.0
      %1346 = vmatprep.mubr.f32.mxu0 0.0
      %1347 = vmatmul.mubr.f32.gmra.mxu0 %v604
      %v1348 = vpop.f32.mrf.mxu0
      %v1349 = vadd.f32 %v1124, %v1348
      %v1350 = vpop.f32.mrf.mxu0
      %1351 = vmatprep.mubr.f32.mxu0 0.0
      %1352 = vmatmul.mubr.f32.gmra.mxu0 %v607
      %v1353 = vpop.f32.mrf.mxu0
      %v1354 = vadd.f32 %v1129, %v1353
      %v1355 = vpop.f32.mrf.mxu0
      %1356 = vmatprep.mubr.f32.mxu0 0.0
      %1357 = vmatmul.mubr.f32.gmra.mxu0 %v610
      %v1358 = vpop.f32.mrf.mxu0
      %v1359 = vadd.f32 %v1134, %v1358
      %v1360 = vpop.f32.mrf.mxu0
      %1361 = vmatprep.mubr.f32.mxu0 0.0
      %1362 = vmatmul.mubr.f32.gmra.mxu0 %v613
      %v1363 = vpop.f32.mrf.mxu0
      %v1364 = vadd.f32 %v1139, %v1363
      %v1365 = vpop.f32.mrf.mxu0
      %1366 = vmatprep.mubr.f32.mxu0 0.0
      %1367 = vmatmul.mubr.f32.gmra.mxu0 %v616
      %v1368 = vpop.f32.mrf.mxu0
      %v1369 = vadd.f32 %v1144, %v1368
      %v1370 = vpop.f32.mrf.mxu0
      %1371 = vmatprep.mubr.f32.mxu0 0.0
      %1372 = vmatmul.mubr.f32.gmra.mxu0 %v619
      %v1373 = vpop.f32.mrf.mxu0
      %v1374 = vadd.f32 %v1149, %v1373
      %v1375 = vpop.f32.mrf.mxu0
      %1376 = vmatprep.mubr.f32.mxu0 0.0
      %1377 = vmatmul.mubr.f32.gmra.mxu0 %v622
      %v1378 = vpop.f32.mrf.mxu0
      %v1379 = vadd.f32 %v1154, %v1378
      %v1380 = vpop.f32.mrf.mxu0
      %1381 = vmatprep.mubr.f32.mxu0 0.0
      %1382 = vmatmul.mubr.f32.gmra.mxu0 %v625
      %v1383 = vpop.f32.mrf.mxu0
      %v1384 = vadd.f32 %v1159, %v1383
      %v1385 = vpop.f32.mrf.mxu0
      %1386 = vmatprep.mubr.f32.mxu0 0.0
      %1387 = vmatmul.mubr.f32.gmra.mxu0 %v628
      %v1388 = vpop.f32.mrf.mxu0
      %v1389 = vadd.f32 %v1164, %v1388
      %v1390 = vpop.f32.mrf.mxu0
      %1391 = vmatprep.mubr.f32.mxu0 0.0
      %1392 = vmatmul.mubr.f32.gmra.mxu0 %v631
      %v1393 = vpop.f32.mrf.mxu0
      %v1394 = vadd.f32 %v1169, %v1393
      %v1395 = vpop.f32.mrf.mxu0
      %1396 = vmatprep.mubr.f32.mxu0 0.0
      %1397 = vmatmul.mubr.f32.gmra.mxu0 %v634
      %v1398 = vpop.f32.mrf.mxu0
      %v1399 = vadd.f32 %v1174, %v1398
      %v1400 = vpop.f32.mrf.mxu0
      %1401 = vmatprep.mubr.f32.mxu0 0.0
      %1402 = vmatmul.mubr.f32.gmra.mxu0 %v637
      %v1403 = vpop.f32.mrf.mxu0
      %v1404 = vadd.f32 %v1179, %v1403
      %v1405 = vpop.f32.mrf.mxu0
      %1406 = vmatprep.mubr.f32.mxu0 0.0
      %1407 = vmatmul.mubr.f32.gmra.mxu0 %v640
      %v1408 = vpop.f32.mrf.mxu0
      %v1409 = vadd.f32 %v1184, %v1408
      %v1410 = vpop.f32.mrf.mxu0
      %1411 = vmatprep.mubr.f32.mxu0 0.0
      %1412 = vmatmul.mubr.f32.gmra.mxu0 %v643
      %v1413 = vpop.f32.mrf.mxu0
      %v1414 = vadd.f32 %v1189, %v1413
      %v1415 = vpop.f32.mrf.mxu0
      %1416 = vmatprep.mubr.f32.mxu0 0.0
      %1417 = vmatmul.mubr.f32.gmra.mxu0 %v646
      %v1418 = vpop.f32.mrf.mxu0
      %v1419 = vadd.f32 %v1194, %v1418
      %v1420 = vpop.f32.mrf.mxu0
      %1421 = vmatprep.mubr.f32.mxu0 0.0
      %1422 = vmatmul.mubr.f32.gmra.mxu0 %v649
      %v1423 = vpop.f32.mrf.mxu0
      %v1424 = vadd.f32 %v1199, %v1423
      %v1425 = vpop.f32.mrf.mxu0
      %1426 = vmatprep.mubr.f32.mxu0 0.0
      %1427 = vmatmul.mubr.f32.gmra.mxu0 %v652
      %v1428 = vpop.f32.mrf.mxu0
      %v1429 = vadd.f32 %v1204, %v1428
      %v1430 = vpop.f32.mrf.mxu0
      %1431 = vmatprep.mubr.f32.mxu0 0.0
      %1432 = vmatmul.mubr.f32.gmra.mxu0 %v655
      %v1433 = vpop.f32.mrf.mxu0
      %v1434 = vadd.f32 %v1209, %v1433
      %v1435 = vpop.f32.mrf.mxu0
      %1436 = vmatprep.mubr.f32.mxu0 0.0
      %1437 = vmatmul.mubr.f32.gmra.mxu0 %v658
      %v1438 = vpop.f32.mrf.mxu0
      %v1439 = vadd.f32 %v1214, %v1438
      %v1440 = vpop.f32.mrf.mxu0
      %1441 = vmatprep.mubr.f32.mxu0 0.0
      %1442 = vmatmul.mubr.f32.gmra.mxu0 %v661
      %v1443 = vpop.f32.mrf.mxu0
      %v1444 = vadd.f32 %v1219, %v1443
      %v1445 = vpop.f32.mrf.mxu0
      %1446 = vmatprep.mubr.f32.mxu0 0.0
      %1447 = vmatmul.mubr.f32.gmra.mxu0 %v664
      %v1448 = vpop.f32.mrf.mxu0
      %v1449 = vadd.f32 %v1224, %v1448
      %v1450 = vpop.f32.mrf.mxu0
      %1451 = vmatprep.mubr.f32.mxu0 0.0
      %1452 = vmatmul.mubr.f32.gmra.mxu0 %v667
      %v1453 = vpop.f32.mrf.mxu0
      %v1454 = vadd.f32 %v1229, %v1453
      %v1455 = vpop.f32.mrf.mxu0
      %1456 = vmatprep.mubr.f32.mxu0 0.0
      %1457 = vmatmul.mubr.f32.gmra.mxu0 %v670
      %v1458 = vpop.f32.mrf.mxu0
      %v1459 = vadd.f32 %v1234, %v1458
      %v1460 = vpop.f32.mrf.mxu0
      %1461 = vmatprep.mubr.f32.mxu0 0.0
      %1462 = vmatmul.mubr.f32.gmra.mxu0 %v673
      %v1463 = vpop.f32.mrf.mxu0
      %v1464 = vadd.f32 %v1239, %v1463
      %v1465 = vpop.f32.mrf.mxu0
      %1466 = vmatprep.mubr.f32.mxu0 0.0
      %1467 = vmatmul.mubr.f32.gmra.mxu0 %v676
      %v1468 = vpop.f32.mrf.mxu0
      %v1469 = vadd.f32 %v1244, %v1468
      %v1470 = vpop.f32.mrf.mxu0
      %1471 = vmatprep.mubr.f32.mxu0 0.0
      %1472 = vmatmul.mubr.f32.gmra.mxu0 %v679
      %v1473 = vpop.f32.mrf.mxu0
      %v1474 = vadd.f32 %v1249, %v1473
      %v1475 = vpop.f32.mrf.mxu0
      %1476 = vmatprep.mubr.f32.mxu0 0.0
      %1477 = vmatmul.mubr.f32.gmra.mxu0 %v682
      %v1478 = vpop.f32.mrf.mxu0
      %v1479 = vadd.f32 %v1254, %v1478
      %v1480 = vpop.f32.mrf.mxu0
      %1481 = vmatprep.mubr.f32.mxu0 0.0
      %1482 = vmatmul.mubr.f32.gmra.mxu0 %v685
      %v1483 = vpop.f32.mrf.mxu0
      %v1484 = vadd.f32 %v1259, %v1483
      %v1485 = vpop.f32.mrf.mxu0
      %1486 = vmatprep.mubr.f32.mxu0 0.0
      %1487 = vmatmul.mubr.f32.gmra.mxu0 %v688
      %v1488 = vpop.f32.mrf.mxu0
      %v1489 = vadd.f32 %v1264, %v1488
      %v1490 = vpop.f32.mrf.mxu0
      %1491 = vmatprep.mubr.f32.mxu0 0.0
      %1492 = vmatmul.mubr.f32.gmra.mxu0 %v691
      %v1493 = vpop.f32.mrf.mxu0
      %v1494 = vadd.f32 %v1269, %v1493
      %v1495 = vpop.f32.mrf.mxu0
      %1496 = vmatprep.mubr.f32.mxu0 0.0
      %1497 = vmatmul.mubr.f32.gmra.mxu0 %v694
      %v1498 = vpop.f32.mrf.mxu0
      %v1499 = vadd.f32 %v1274, %v1498
      %v1500 = vpop.f32.mrf.mxu0
      %1501 = vmatprep.mubr.f32.mxu0 0.0
      %1502 = vmatmul.mubr.f32.gmra.mxu0 %v697
      %v1503 = vpop.f32.mrf.mxu0
      %v1504 = vadd.f32 %v1279, %v1503
      %v1505 = vpop.f32.mrf.mxu0
      %1506 = vdwg.mxu0
      %1507 = vmatprep.subr.mxu0 0.0
      %1508 = vmatpush1.msra.mxu0 0.0
      %1509 = vmatprep.subr.mxu0 0.0
      %1510 = vmatpush1.msra.mxu0 0.0
      %1511 = vmatprep.subr.mxu0 0.0
      %1512 = vmatpush1.msra.mxu0 0.0
      %1513 = vmatprep.subr.mxu0 0.0
      %1514 = vmatpush1.msra.mxu0 0.0
      %1515 = vmatprep.subr.mxu0 0.0
      %1516 = vmatpush1.msra.mxu0 0.0
      %1517 = vmatprep.subr.mxu0 0.0
      %1518 = vmatpush1.msra.mxu0 0.0
      %1519 = vmatprep.subr.mxu0 0.0
      %1520 = vmatpush1.msra.mxu0 0.0
      %1521 = vmatprep.subr.mxu0 0.0
      %1522 = vmatpush1.msra.mxu0 0.0
      %1523 = vmatprep.subr.mxu0 0.0
      %1524 = vmatpush1.msra.mxu0 0.0
      %1525 = vmatprep.subr.mxu0 0.0
      %1526 = vmatpush1.msra.mxu0 0.0
      %1527 = vmatprep.subr.mxu0 0.0
      %1528 = vmatpush1.msra.mxu0 0.0
      %1529 = vmatprep.subr.mxu0 0.0
      %1530 = vmatpush1.msra.mxu0 0.0
      %1531 = vmatprep.subr.mxu0 0.0
      %1532 = vmatpush1.msra.mxu0 %v453
      %1533 = vmatprep.subr.mxu0 0.0
      %1534 = vmatpush1.msra.mxu0 %v452
      %1535 = vmatprep.subr.mxu0 0.0
      %1536 = vmatpush1.msra.mxu0 %v451
      %1537 = vmatprep.subr.mxu0 0.0
      %1538 = vmatpush1.msra.mxu0 %v450
      %1539 = vmatprep.subr.mxu0 0.0
      %1540 = vmatpush2.msra.mxu0 0.0
      %1541 = vmatprep.subr.mxu0 0.0
      %1542 = vmatpush2.msra.mxu0 0.0
      %1543 = vmatprep.subr.mxu0 0.0
      %1544 = vmatpush2.msra.mxu0 0.0
      %1545 = vmatprep.subr.mxu0 0.0
      %1546 = vmatpush2.msra.mxu0 0.0
      %1547 = vmatprep.subr.mxu0 0.0
      %1548 = vmatpush2.msra.mxu0 0.0
      %1549 = vmatprep.subr.mxu0 0.0
      %1550 = vmatpush2.msra.mxu0 0.0
      %1551 = vmatprep.subr.mxu0 0.0
      %1552 = vmatpush2.msra.mxu0 0.0
      %1553 = vmatprep.subr.mxu0 0.0
      %1554 = vmatpush2.msra.mxu0 0.0
      %1555 = vmatprep.subr.mxu0 0.0
      %1556 = vmatpush2.msra.mxu0 0.0
      %1557 = vmatprep.subr.mxu0 0.0
      %1558 = vmatpush2.msra.mxu0 0.0
      %1559 = vmatprep.subr.mxu0 0.0
      %1560 = vmatpush2.msra.mxu0 0.0
      %1561 = vmatprep.subr.mxu0 0.0
      %1562 = vmatpush2.msra.mxu0 0.0
      %1563 = vmatprep.subr.mxu0 0.0
      %1564 = vmatpush2.msra.mxu0 0.0
      %1565 = vmatprep.subr.mxu0 0.0
      %1566 = vmatpush2.msra.mxu0 0.0
      %1567 = vmatprep.subr.mxu0 0.0
      %1568 = vmatpush2.msra.mxu0 0.0
      %1569 = vmatprep.subr.mxu0 0.0
      %1570 = vmatpush2.msra.mxu0 0.0
      %1571 = vmatprep.mubr.f32.mxu0 0.0
      %1572 = vmatmul.mubr.f32.gmra.mxu0 %v962
      %v1573 = vpop.f32.mrf.mxu0
      %v1574 = vadd.f32 0.0, %v1573
      %v1575 = vpop.f32.mrf.mxu0
      %1576 = vmatprep.mubr.f32.mxu0 0.0
      %1577 = vmatmul.mubr.f32.gmra.mxu0 %v965
      %v1578 = vpop.f32.mrf.mxu0
      %v1579 = vadd.f32 0.0, %v1578
      %v1580 = vpop.f32.mrf.mxu0
      %1581 = vmatprep.mubr.f32.mxu0 0.0
      %1582 = vmatmul.mubr.f32.gmra.mxu0 %v968
      %v1583 = vpop.f32.mrf.mxu0
      %v1584 = vadd.f32 0.0, %v1583
      %v1585 = vpop.f32.mrf.mxu0
      %1586 = vmatprep.mubr.f32.mxu0 0.0
      %1587 = vmatmul.mubr.f32.gmra.mxu0 %v971
      %v1588 = vpop.f32.mrf.mxu0
      %v1589 = vadd.f32 0.0, %v1588
      %v1590 = vpop.f32.mrf.mxu0
      %1591 = vmatprep.mubr.f32.mxu0 0.0
      %1592 = vmatmul.mubr.f32.gmra.mxu0 %v974
      %v1593 = vpop.f32.mrf.mxu0
      %v1594 = vadd.f32 0.0, %v1593
      %v1595 = vpop.f32.mrf.mxu0
      %1596 = vmatprep.mubr.f32.mxu0 0.0
      %1597 = vmatmul.mubr.f32.gmra.mxu0 %v977
      %v1598 = vpop.f32.mrf.mxu0
      %v1599 = vadd.f32 0.0, %v1598
      %v1600 = vpop.f32.mrf.mxu0
      %1601 = vmatprep.mubr.f32.mxu0 0.0
      %1602 = vmatmul.mubr.f32.gmra.mxu0 %v980
      %v1603 = vpop.f32.mrf.mxu0
      %v1604 = vadd.f32 0.0, %v1603
      %v1605 = vpop.f32.mrf.mxu0
      %1606 = vmatprep.mubr.f32.mxu0 0.0
      %1607 = vmatmul.mubr.f32.gmra.mxu0 %v983
      %v1608 = vpop.f32.mrf.mxu0
      %v1609 = vadd.f32 0.0, %v1608
      %v1610 = vpop.f32.mrf.mxu0
      %1611 = vmatprep.mubr.f32.mxu0 0.0
      %1612 = vmatmul.mubr.f32.gmra.mxu0 %v986
      %v1613 = vpop.f32.mrf.mxu0
      %v1614 = vadd.f32 0.0, %v1613
      %v1615 = vpop.f32.mrf.mxu0
      %1616 = vmatprep.mubr.f32.mxu0 0.0
      %1617 = vmatmul.mubr.f32.gmra.mxu0 %v989
      %v1618 = vpop.f32.mrf.mxu0
      %v1619 = vadd.f32 0.0, %v1618
      %v1620 = vpop.f32.mrf.mxu0
      %1621 = vmatprep.mubr.f32.mxu0 0.0
      %1622 = vmatmul.mubr.f32.gmra.mxu0 %v992
      %v1623 = vpop.f32.mrf.mxu0
      %v1624 = vadd.f32 0.0, %v1623
      %v1625 = vpop.f32.mrf.mxu0
      %1626 = vmatprep.mubr.f32.mxu0 0.0
      %1627 = vmatmul.mubr.f32.gmra.mxu0 %v995
      %v1628 = vpop.f32.mrf.mxu0
      %v1629 = vadd.f32 0.0, %v1628
      %v1630 = vpop.f32.mrf.mxu0
      %1631 = vmatprep.mubr.f32.mxu0 0.0
      %1632 = vmatmul.mubr.f32.gmra.mxu0 %v998
      %v1633 = vpop.f32.mrf.mxu0
      %v1634 = vadd.f32 0.0, %v1633
      %v1635 = vpop.f32.mrf.mxu0
      %1636 = vmatprep.mubr.f32.mxu0 0.0
      %1637 = vmatmul.mubr.f32.gmra.mxu0 %v1001
      %v1638 = vpop.f32.mrf.mxu0
      %v1639 = vadd.f32 0.0, %v1638
      %v1640 = vpop.f32.mrf.mxu0
      %1641 = vmatprep.mubr.f32.mxu0 0.0
      %1642 = vmatmul.mubr.f32.gmra.mxu0 %v1004
      %v1643 = vpop.f32.mrf.mxu0
      %v1644 = vadd.f32 0.0, %v1643
      %v1645 = vpop.f32.mrf.mxu0
      %1646 = vmatprep.mubr.f32.mxu0 0.0
      %1647 = vmatmul.mubr.f32.gmra.mxu0 %v1007
      %v1648 = vpop.f32.mrf.mxu0
      %v1649 = vadd.f32 0.0, %v1648
      %v1650 = vpop.f32.mrf.mxu0
      %1651 = vmatprep.mubr.f32.mxu0 0.0
      %1652 = vmatmul.mubr.f32.gmra.mxu0 %v1010
      %v1653 = vpop.f32.mrf.mxu0
      %v1654 = vadd.f32 0.0, %v1653
      %v1655 = vpop.f32.mrf.mxu0
      %1656 = vmatprep.mubr.f32.mxu0 0.0
      %1657 = vmatmul.mubr.f32.gmra.mxu0 %v1013
      %v1658 = vpop.f32.mrf.mxu0
      %v1659 = vadd.f32 0.0, %v1658
      %v1660 = vpop.f32.mrf.mxu0
      %1661 = vmatprep.mubr.f32.mxu0 0.0
      %1662 = vmatmul.mubr.f32.gmra.mxu0 %v1016
      %v1663 = vpop.f32.mrf.mxu0
      %v1664 = vadd.f32 0.0, %v1663
      %v1665 = vpop.f32.mrf.mxu0
      %1666 = vmatprep.mubr.f32.mxu0 0.0
      %1667 = vmatmul.mubr.f32.gmra.mxu0 %v1019
      %v1668 = vpop.f32.mrf.mxu0
      %v1669 = vadd.f32 0.0, %v1668
      %v1670 = vpop.f32.mrf.mxu0
      %1671 = vmatprep.mubr.f32.mxu0 0.0
      %1672 = vmatmul.mubr.f32.gmra.mxu0 %v1022
      %v1673 = vpop.f32.mrf.mxu0
      %v1674 = vadd.f32 0.0, %v1673
      %v1675 = vpop.f32.mrf.mxu0
      %1676 = vmatprep.mubr.f32.mxu0 0.0
      %1677 = vmatmul.mubr.f32.gmra.mxu0 %v1025
      %v1678 = vpop.f32.mrf.mxu0
      %v1679 = vadd.f32 0.0, %v1678
      %v1680 = vpop.f32.mrf.mxu0
      %1681 = vmatprep.mubr.f32.mxu0 0.0
      %1682 = vmatmul.mubr.f32.gmra.mxu0 %v1028
      %v1683 = vpop.f32.mrf.mxu0
      %v1684 = vadd.f32 0.0, %v1683
      %v1685 = vpop.f32.mrf.mxu0
      %1686 = vmatprep.mubr.f32.mxu0 0.0
      %1687 = vmatmul.mubr.f32.gmra.mxu0 %v1031
      %v1688 = vpop.f32.mrf.mxu0
      %v1689 = vadd.f32 0.0, %v1688
      %v1690 = vpop.f32.mrf.mxu0
      %1691 = vmatprep.mubr.f32.mxu0 0.0
      %1692 = vmatmul.mubr.f32.gmra.mxu0 %v1034
      %v1693 = vpop.f32.mrf.mxu0
      %v1694 = vadd.f32 0.0, %v1693
      %v1695 = vpop.f32.mrf.mxu0
      %1696 = vmatprep.mubr.f32.mxu0 0.0
      %1697 = vmatmul.mubr.f32.gmra.mxu0 %v1037
      %v1698 = vpop.f32.mrf.mxu0
      %v1699 = vadd.f32 0.0, %v1698
      %v1700 = vpop.f32.mrf.mxu0
      %1701 = vmatprep.mubr.f32.mxu0 0.0
      %1702 = vmatmul.mubr.f32.gmra.mxu0 %v1040
      %v1703 = vpop.f32.mrf.mxu0
      %v1704 = vadd.f32 0.0, %v1703
      %v1705 = vpop.f32.mrf.mxu0
      %1706 = vmatprep.mubr.f32.mxu0 0.0
      %1707 = vmatmul.mubr.f32.gmra.mxu0 %v1043
      %v1708 = vpop.f32.mrf.mxu0
      %v1709 = vadd.f32 0.0, %v1708
      %v1710 = vpop.f32.mrf.mxu0
      %1711 = vmatprep.mubr.f32.mxu0 0.0
      %1712 = vmatmul.mubr.f32.gmra.mxu0 %v1046
      %v1713 = vpop.f32.mrf.mxu0
      %v1714 = vadd.f32 0.0, %v1713
      %v1715 = vpop.f32.mrf.mxu0
      %1716 = vmatprep.mubr.f32.mxu0 0.0
      %1717 = vmatmul.mubr.f32.gmra.mxu0 %v1049
      %v1718 = vpop.f32.mrf.mxu0
      %v1719 = vadd.f32 0.0, %v1718
      %v1720 = vpop.f32.mrf.mxu0
      %1721 = vmatprep.mubr.f32.mxu0 0.0
      %1722 = vmatmul.mubr.f32.gmra.mxu0 %v1052
      %v1723 = vpop.f32.mrf.mxu0
      %v1724 = vadd.f32 0.0, %v1723
      %v1725 = vpop.f32.mrf.mxu0
      %1726 = vmatprep.mubr.f32.mxu0 0.0
      %1727 = vmatmul.mubr.f32.gmra.mxu0 %v1055
      %v1728 = vpop.f32.mrf.mxu0
      %v1729 = vadd.f32 0.0, %v1728
      %v1730 = vpop.f32.mrf.mxu0
      %1731 = vdwg.mxu0
      %v1732 = vmax.f32 %v766, %v1574
      %v1733 = vmax.f32 %v771, %v1579
      %v1734 = vmax.f32 %v776, %v1584
      %v1735 = vmax.f32 %v781, %v1589
      %v1736 = vmax.f32 %v786, %v1594
      %v1737 = vmax.f32 %v791, %v1599
      %v1738 = vmax.f32 %v796, %v1604
      %v1739 = vmax.f32 %v801, %v1609
      %v1740 = vmax.f32 %v806, %v1614
      %v1741 = vmax.f32 %v811, %v1619
      %v1742 = vmax.f32 %v816, %v1624
      %v1743 = vmax.f32 %v821, %v1629
      %v1744 = vmax.f32 %v826, %v1634
      %v1745 = vmax.f32 %v831, %v1639
      %v1746 = vmax.f32 %v836, %v1644
      %v1747 = vmax.f32 %v841, %v1649
      %v1748 = vmax.f32 %v846, %v1654
      %v1749 = vmax.f32 %v851, %v1659
      %v1750 = vmax.f32 %v856, %v1664
      %v1751 = vmax.f32 %v861, %v1669
      %v1752 = vmax.f32 %v866, %v1674
      %v1753 = vmax.f32 %v871, %v1679
      %v1754 = vmax.f32 %v876, %v1684
      %v1755 = vmax.f32 %v881, %v1689
      %v1756 = vmax.f32 %v886, %v1694
      %v1757 = vmax.f32 %v891, %v1699
      %v1758 = vmax.f32 %v896, %v1704
      %v1759 = vmax.f32 %v901, %v1709
      %v1760 = vmax.f32 %v906, %v1714
      %v1761 = vmax.f32 %v911, %v1719
      %v1762 = vmax.f32 %v916, %v1724
      %v1763 = vmax.f32 %v921, %v1729
      %v1764 = vmul.f32 %v418, %v518
      %v1765 = vmul.f32 %v419, %v519
      %v1766 = vmul.f32 %v420, %v521
      %v1767 = vmul.f32 %v421, %v522
      %v1768 = vmul.f32 %v422, %v524
      %v1769 = vmul.f32 %v423, %v525
      %v1770 = vmul.f32 %v424, %v527
      %v1771 = vmul.f32 %v425, %v528
      %v1772 = vmul.f32 %v426, %v530
      %v1773 = vmul.f32 %v427, %v531
      %v1774 = vmul.f32 %v428, %v533
      %v1775 = vmul.f32 %v429, %v534
      %v1776 = vmul.f32 %v430, %v536
      %v1777 = vmul.f32 %v431, %v537
      %v1778 = vmul.f32 %v432, %v539
      %v1779 = vmul.f32 %v433, %v540
      %v1780 = vmul.f32 %v434, %v542
      %v1781 = vmul.f32 %v435, %v543
      %v1782 = vmul.f32 %v436, %v545
      %v1783 = vmul.f32 %v437, %v546
      %v1784 = vmul.f32 %v438, %v548
      %v1785 = vmul.f32 %v439, %v549
      %v1786 = vmul.f32 %v440, %v551
      %v1787 = vmul.f32 %v441, %v552
      %v1788 = vmul.f32 %v442, %v554
      %v1789 = vmul.f32 %v443, %v555
      %v1790 = vmul.f32 %v444, %v557
      %v1791 = vmul.f32 %v445, %v558
      %v1792 = vmul.f32 %v446, %v560
      %v1793 = vmul.f32 %v447, %v561
      %v1794 = vmul.f32 %v448, %v563
      %v1795 = vmul.f32 %v449, %v564
      %s1796 = scalar_lea.vmem %s1, 64
      %v1797 = vld [vmem:[%s1796] sm:$0xff]
      %v1798 = vld [vmem:[%s1796 + $0x8] sm:$0xff]
      %v1799 = vld [vmem:[%s1796 + $0x10] sm:$0xff]
      %v1800 = vld [vmem:[%s1796 + $0x18] sm:$0xff]
      %v1802 = vsel %vm602, %v1764, 0
      %v1805 = vsel %vm602, %v1765, 0
      %v1808 = vsel %vm602, %v1766, 0
      %v1811 = vsel %vm602, %v1767, 0
      %v1814 = vsel %vm602, %v1768, 0
      %v1817 = vsel %vm602, %v1769, 0
      %v1820 = vsel %vm602, %v1770, 0
      %v1823 = vsel %vm602, %v1771, 0
      %v1826 = vsel %vm602, %v1772, 0
      %v1829 = vsel %vm602, %v1773, 0
      %v1832 = vsel %vm602, %v1774, 0
      %v1835 = vsel %vm602, %v1775, 0
      %v1838 = vsel %vm602, %v1776, 0
      %v1841 = vsel %vm602, %v1777, 0
      %v1844 = vsel %vm602, %v1778, 0
      %v1847 = vsel %vm602, %v1779, 0
      %v1850 = vsel %vm602, %v1780, 0
      %v1853 = vsel %vm602, %v1781, 0
      %v1856 = vsel %vm602, %v1782, 0
      %v1859 = vsel %vm602, %v1783, 0
      %v1862 = vsel %vm602, %v1784, 0
      %v1865 = vsel %vm602, %v1785, 0
      %v1868 = vsel %vm602, %v1786, 0
      %v1871 = vsel %vm602, %v1787, 0
      %v1874 = vsel %vm602, %v1788, 0
      %v1877 = vsel %vm602, %v1789, 0
      %v1880 = vsel %vm602, %v1790, 0
      %v1883 = vsel %vm602, %v1791, 0
      %v1886 = vsel %vm602, %v1792, 0
      %v1889 = vsel %vm602, %v1793, 0
      %v1892 = vsel %vm602, %v1794, 0
      %v1895 = vsel %vm602, %v1795, 0
      %1897 = vmatprep.subr.mxu0 0.0
      %1898 = vmatpush1.msra.mxu0 0.0
      %1899 = vmatprep.subr.mxu0 0.0
      %1900 = vmatpush1.msra.mxu0 0.0
      %1901 = vmatprep.subr.mxu0 0.0
      %1902 = vmatpush1.msra.mxu0 0.0
      %1903 = vmatprep.subr.mxu0 0.0
      %1904 = vmatpush1.msra.mxu0 0.0
      %1905 = vmatprep.subr.mxu0 0.0
      %1906 = vmatpush1.msra.mxu0 0.0
      %1907 = vmatprep.subr.mxu0 0.0
      %1908 = vmatpush1.msra.mxu0 0.0
      %1909 = vmatprep.subr.mxu0 0.0
      %1910 = vmatpush1.msra.mxu0 0.0
      %1911 = vmatprep.subr.mxu0 0.0
      %1912 = vmatpush1.msra.mxu0 0.0
      %1913 = vmatprep.subr.mxu0 0.0
      %1914 = vmatpush1.msra.mxu0 0.0
      %1915 = vmatprep.subr.mxu0 0.0
      %1916 = vmatpush1.msra.mxu0 0.0
      %1917 = vmatprep.subr.mxu0 0.0
      %1918 = vmatpush1.msra.mxu0 0.0
      %1919 = vmatprep.subr.mxu0 0.0
      %1920 = vmatpush1.msra.mxu0 0.0
      %1921 = vmatprep.subr.mxu0 0.0
      %1922 = vmatpush1.msra.mxu0 %v1800
      %1923 = vmatprep.subr.mxu0 0.0
      %1924 = vmatpush1.msra.mxu0 %v1799
      %1925 = vmatprep.subr.mxu0 0.0
      %1926 = vmatpush1.msra.mxu0 %v1798
      %1927 = vmatprep.subr.mxu0 0.0
      %1928 = vmatpush1.msra.mxu0 %v1797
      %1929 = vmatprep.subr.mxu0 0.0
      %1930 = vmatpush2.msra.mxu0 0.0
      %1931 = vmatprep.subr.mxu0 0.0
      %1932 = vmatpush2.msra.mxu0 0.0
      %1933 = vmatprep.subr.mxu0 0.0
      %1934 = vmatpush2.msra.mxu0 0.0
      %1935 = vmatprep.subr.mxu0 0.0
      %1936 = vmatpush2.msra.mxu0 0.0
      %1937 = vmatprep.subr.mxu0 0.0
      %1938 = vmatpush2.msra.mxu0 0.0
      %1939 = vmatprep.subr.mxu0 0.0
      %1940 = vmatpush2.msra.mxu0 0.0
      %1941 = vmatprep.subr.mxu0 0.0
      %1942 = vmatpush2.msra.mxu0 0.0
      %1943 = vmatprep.subr.mxu0 0.0
      %1944 = vmatpush2.msra.mxu0 0.0
      %1945 = vmatprep.subr.mxu0 0.0
      %1946 = vmatpush2.msra.mxu0 0.0
      %1947 = vmatprep.subr.mxu0 0.0
      %1948 = vmatpush2.msra.mxu0 0.0
      %1949 = vmatprep.subr.mxu0 0.0
      %1950 = vmatpush2.msra.mxu0 0.0
      %1951 = vmatprep.subr.mxu0 0.0
      %1952 = vmatpush2.msra.mxu0 0.0
      %1953 = vmatprep.subr.mxu0 0.0
      %1954 = vmatpush2.msra.mxu0 0.0
      %1955 = vmatprep.subr.mxu0 0.0
      %1956 = vmatpush2.msra.mxu0 0.0
      %1957 = vmatprep.subr.mxu0 0.0
      %1958 = vmatpush2.msra.mxu0 0.0
      %1959 = vmatprep.subr.mxu0 0.0
      %1960 = vmatpush2.msra.mxu0 0.0
      %1961 = vmatprep.mubr.f32.mxu0 0.0
      %1962 = vmatmul.mubr.f32.gmra.mxu0 %v1802
      %v1963 = vpop.f32.mrf.mxu0
      %v1964 = vadd.f32 0.0, %v1963
      %v1965 = vpop.f32.mrf.mxu0
      %1966 = vmatprep.mubr.f32.mxu0 0.0
      %1967 = vmatmul.mubr.f32.gmra.mxu0 %v1805
      %v1968 = vpop.f32.mrf.mxu0
      %v1969 = vadd.f32 0.0, %v1968
      %v1970 = vpop.f32.mrf.mxu0
      %1971 = vmatprep.mubr.f32.mxu0 0.0
      %1972 = vmatmul.mubr.f32.gmra.mxu0 %v1808
      %v1973 = vpop.f32.mrf.mxu0
      %v1974 = vadd.f32 0.0, %v1973
      %v1975 = vpop.f32.mrf.mxu0
      %1976 = vmatprep.mubr.f32.mxu0 0.0
      %1977 = vmatmul.mubr.f32.gmra.mxu0 %v1811
      %v1978 = vpop.f32.mrf.mxu0
      %v1979 = vadd.f32 0.0, %v1978
      %v1980 = vpop.f32.mrf.mxu0
      %1981 = vmatprep.mubr.f32.mxu0 0.0
      %1982 = vmatmul.mubr.f32.gmra.mxu0 %v1814
      %v1983 = vpop.f32.mrf.mxu0
      %v1984 = vadd.f32 0.0, %v1983
      %v1985 = vpop.f32.mrf.mxu0
      %1986 = vmatprep.mubr.f32.mxu0 0.0
      %1987 = vmatmul.mubr.f32.gmra.mxu0 %v1817
      %v1988 = vpop.f32.mrf.mxu0
      %v1989 = vadd.f32 0.0, %v1988
      %v1990 = vpop.f32.mrf.mxu0
      %1991 = vmatprep.mubr.f32.mxu0 0.0
      %1992 = vmatmul.mubr.f32.gmra.mxu0 %v1820
      %v1993 = vpop.f32.mrf.mxu0
      %v1994 = vadd.f32 0.0, %v1993
      %v1995 = vpop.f32.mrf.mxu0
      %1996 = vmatprep.mubr.f32.mxu0 0.0
      %1997 = vmatmul.mubr.f32.gmra.mxu0 %v1823
      %v1998 = vpop.f32.mrf.mxu0
      %v1999 = vadd.f32 0.0, %v1998
      %v2000 = vpop.f32.mrf.mxu0
      %2001 = vmatprep.mubr.f32.mxu0 0.0
      %2002 = vmatmul.mubr.f32.gmra.mxu0 %v1826
      %v2003 = vpop.f32.mrf.mxu0
      %v2004 = vadd.f32 0.0, %v2003
      %v2005 = vpop.f32.mrf.mxu0
      %2006 = vmatprep.mubr.f32.mxu0 0.0
      %2007 = vmatmul.mubr.f32.gmra.mxu0 %v1829
      %v2008 = vpop.f32.mrf.mxu0
      %v2009 = vadd.f32 0.0, %v2008
      %v2010 = vpop.f32.mrf.mxu0
      %2011 = vmatprep.mubr.f32.mxu0 0.0
      %2012 = vmatmul.mubr.f32.gmra.mxu0 %v1832
      %v2013 = vpop.f32.mrf.mxu0
      %v2014 = vadd.f32 0.0, %v2013
      %v2015 = vpop.f32.mrf.mxu0
      %2016 = vmatprep.mubr.f32.mxu0 0.0
      %2017 = vmatmul.mubr.f32.gmra.mxu0 %v1835
      %v2018 = vpop.f32.mrf.mxu0
      %v2019 = vadd.f32 0.0, %v2018
      %v2020 = vpop.f32.mrf.mxu0
      %2021 = vmatprep.mubr.f32.mxu0 0.0
      %2022 = vmatmul.mubr.f32.gmra.mxu0 %v1838
      %v2023 = vpop.f32.mrf.mxu0
      %v2024 = vadd.f32 0.0, %v2023
      %v2025 = vpop.f32.mrf.mxu0
      %2026 = vmatprep.mubr.f32.mxu0 0.0
      %2027 = vmatmul.mubr.f32.gmra.mxu0 %v1841
      %v2028 = vpop.f32.mrf.mxu0
      %v2029 = vadd.f32 0.0, %v2028
      %v2030 = vpop.f32.mrf.mxu0
      %2031 = vmatprep.mubr.f32.mxu0 0.0
      %2032 = vmatmul.mubr.f32.gmra.mxu0 %v1844
      %v2033 = vpop.f32.mrf.mxu0
      %v2034 = vadd.f32 0.0, %v2033
      %v2035 = vpop.f32.mrf.mxu0
      %2036 = vmatprep.mubr.f32.mxu0 0.0
      %2037 = vmatmul.mubr.f32.gmra.mxu0 %v1847
      %v2038 = vpop.f32.mrf.mxu0
      %v2039 = vadd.f32 0.0, %v2038
      %v2040 = vpop.f32.mrf.mxu0
      %2041 = vmatprep.mubr.f32.mxu0 0.0
      %2042 = vmatmul.mubr.f32.gmra.mxu0 %v1850
      %v2043 = vpop.f32.mrf.mxu0
      %v2044 = vadd.f32 0.0, %v2043
      %v2045 = vpop.f32.mrf.mxu0
      %2046 = vmatprep.mubr.f32.mxu0 0.0
      %2047 = vmatmul.mubr.f32.gmra.mxu0 %v1853
      %v2048 = vpop.f32.mrf.mxu0
      %v2049 = vadd.f32 0.0, %v2048
      %v2050 = vpop.f32.mrf.mxu0
      %2051 = vmatprep.mubr.f32.mxu0 0.0
      %2052 = vmatmul.mubr.f32.gmra.mxu0 %v1856
      %v2053 = vpop.f32.mrf.mxu0
      %v2054 = vadd.f32 0.0, %v2053
      %v2055 = vpop.f32.mrf.mxu0
      %2056 = vmatprep.mubr.f32.mxu0 0.0
      %2057 = vmatmul.mubr.f32.gmra.mxu0 %v1859
      %v2058 = vpop.f32.mrf.mxu0
      %v2059 = vadd.f32 0.0, %v2058
      %v2060 = vpop.f32.mrf.mxu0
      %2061 = vmatprep.mubr.f32.mxu0 0.0
      %2062 = vmatmul.mubr.f32.gmra.mxu0 %v1862
      %v2063 = vpop.f32.mrf.mxu0
      %v2064 = vadd.f32 0.0, %v2063
      %v2065 = vpop.f32.mrf.mxu0
      %2066 = vmatprep.mubr.f32.mxu0 0.0
      %2067 = vmatmul.mubr.f32.gmra.mxu0 %v1865
      %v2068 = vpop.f32.mrf.mxu0
      %v2069 = vadd.f32 0.0, %v2068
      %v2070 = vpop.f32.mrf.mxu0
      %2071 = vmatprep.mubr.f32.mxu0 0.0
      %2072 = vmatmul.mubr.f32.gmra.mxu0 %v1868
      %v2073 = vpop.f32.mrf.mxu0
      %v2074 = vadd.f32 0.0, %v2073
      %v2075 = vpop.f32.mrf.mxu0
      %2076 = vmatprep.mubr.f32.mxu0 0.0
      %2077 = vmatmul.mubr.f32.gmra.mxu0 %v1871
      %v2078 = vpop.f32.mrf.mxu0
      %v2079 = vadd.f32 0.0, %v2078
      %v2080 = vpop.f32.mrf.mxu0
      %2081 = vmatprep.mubr.f32.mxu0 0.0
      %2082 = vmatmul.mubr.f32.gmra.mxu0 %v1874
      %v2083 = vpop.f32.mrf.mxu0
      %v2084 = vadd.f32 0.0, %v2083
      %v2085 = vpop.f32.mrf.mxu0
      %2086 = vmatprep.mubr.f32.mxu0 0.0
      %2087 = vmatmul.mubr.f32.gmra.mxu0 %v1877
      %v2088 = vpop.f32.mrf.mxu0
      %v2089 = vadd.f32 0.0, %v2088
      %v2090 = vpop.f32.mrf.mxu0
      %2091 = vmatprep.mubr.f32.mxu0 0.0
      %2092 = vmatmul.mubr.f32.gmra.mxu0 %v1880
      %v2093 = vpop.f32.mrf.mxu0
      %v2094 = vadd.f32 0.0, %v2093
      %v2095 = vpop.f32.mrf.mxu0
      %2096 = vmatprep.mubr.f32.mxu0 0.0
      %2097 = vmatmul.mubr.f32.gmra.mxu0 %v1883
      %v2098 = vpop.f32.mrf.mxu0
      %v2099 = vadd.f32 0.0, %v2098
      %v2100 = vpop.f32.mrf.mxu0
      %2101 = vmatprep.mubr.f32.mxu0 0.0
      %2102 = vmatmul.mubr.f32.gmra.mxu0 %v1886
      %v2103 = vpop.f32.mrf.mxu0
      %v2104 = vadd.f32 0.0, %v2103
      %v2105 = vpop.f32.mrf.mxu0
      %2106 = vmatprep.mubr.f32.mxu0 0.0
      %2107 = vmatmul.mubr.f32.gmra.mxu0 %v1889
      %v2108 = vpop.f32.mrf.mxu0
      %v2109 = vadd.f32 0.0, %v2108
      %v2110 = vpop.f32.mrf.mxu0
      %2111 = vmatprep.mubr.f32.mxu0 0.0
      %2112 = vmatmul.mubr.f32.gmra.mxu0 %v1892
      %v2113 = vpop.f32.mrf.mxu0
      %v2114 = vadd.f32 0.0, %v2113
      %v2115 = vpop.f32.mrf.mxu0
      %2116 = vmatprep.mubr.f32.mxu0 0.0
      %2117 = vmatmul.mubr.f32.gmra.mxu0 %v1895
      %v2118 = vpop.f32.mrf.mxu0
      %v2119 = vadd.f32 0.0, %v2118
      %v2120 = vpop.f32.mrf.mxu0
      %2121 = vdwg.mxu0
      %v2122 = vadd.f32 %v1349, %v1964
      %v2123 = vadd.f32 %v1354, %v1969
      %v2124 = vadd.f32 %v1359, %v1974
      %v2125 = vadd.f32 %v1364, %v1979
      %v2126 = vadd.f32 %v1369, %v1984
      %v2127 = vadd.f32 %v1374, %v1989
      %v2128 = vadd.f32 %v1379, %v1994
      %v2129 = vadd.f32 %v1384, %v1999
      %v2130 = vadd.f32 %v1389, %v2004
      %v2131 = vadd.f32 %v1394, %v2009
      %v2132 = vadd.f32 %v1399, %v2014
      %v2133 = vadd.f32 %v1404, %v2019
      %v2134 = vadd.f32 %v1409, %v2024
      %v2135 = vadd.f32 %v1414, %v2029
      %v2136 = vadd.f32 %v1419, %v2034
      %v2137 = vadd.f32 %v1424, %v2039
      %v2138 = vadd.f32 %v1429, %v2044
      %v2139 = vadd.f32 %v1434, %v2049
      %v2140 = vadd.f32 %v1439, %v2054
      %v2141 = vadd.f32 %v1444, %v2059
      %v2142 = vadd.f32 %v1449, %v2064
      %v2143 = vadd.f32 %v1454, %v2069
      %v2144 = vadd.f32 %v1459, %v2074
      %v2145 = vadd.f32 %v1464, %v2079
      %v2146 = vadd.f32 %v1469, %v2084
      %v2147 = vadd.f32 %v1474, %v2089
      %v2148 = vadd.f32 %v1479, %v2094
      %v2149 = vadd.f32 %v1484, %v2099
      %v2150 = vadd.f32 %v1489, %v2104
      %v2151 = vadd.f32 %v1494, %v2109
      %v2152 = vadd.f32 %v1499, %v2114
      %v2153 = vadd.f32 %v1504, %v2119
      %2154 = vmatprep.subr.mxu0 0.0
      %2155 = vmatpush1.msra.mxu0 0.0
      %2156 = vmatprep.subr.mxu0 0.0
      %2157 = vmatpush1.msra.mxu0 0.0
      %2158 = vmatprep.subr.mxu0 0.0
      %2159 = vmatpush1.msra.mxu0 0.0
      %2160 = vmatprep.subr.mxu0 0.0
      %2161 = vmatpush1.msra.mxu0 0.0
      %2162 = vmatprep.subr.mxu0 0.0
      %2163 = vmatpush1.msra.mxu0 0.0
      %2164 = vmatprep.subr.mxu0 0.0
      %2165 = vmatpush1.msra.mxu0 0.0
      %2166 = vmatprep.subr.mxu0 0.0
      %2167 = vmatpush1.msra.mxu0 0.0
      %2168 = vmatprep.subr.mxu0 0.0
      %2169 = vmatpush1.msra.mxu0 0.0
      %2170 = vmatprep.subr.mxu0 0.0
      %2171 = vmatpush1.msra.mxu0 0.0
      %2172 = vmatprep.subr.mxu0 0.0
      %2173 = vmatpush1.msra.mxu0 0.0
      %2174 = vmatprep.subr.mxu0 0.0
      %2175 = vmatpush1.msra.mxu0 0.0
      %2176 = vmatprep.subr.mxu0 0.0
      %2177 = vmatpush1.msra.mxu0 0.0
      %2178 = vmatprep.subr.mxu0 0.0
      %2179 = vmatpush1.msra.mxu0 %v453
      %2180 = vmatprep.subr.mxu0 0.0
      %2181 = vmatpush1.msra.mxu0 %v452
      %2182 = vmatprep.subr.mxu0 0.0
      %2183 = vmatpush1.msra.mxu0 %v451
      %2184 = vmatprep.subr.mxu0 0.0
      %2185 = vmatpush1.msra.mxu0 %v450
      %2186 = vmatprep.subr.mxu0 0.0
      %2187 = vmatpush2.msra.mxu0 0.0
      %2188 = vmatprep.subr.mxu0 0.0
      %2189 = vmatpush2.msra.mxu0 0.0
      %2190 = vmatprep.subr.mxu0 0.0
      %2191 = vmatpush2.msra.mxu0 0.0
      %2192 = vmatprep.subr.mxu0 0.0
      %2193 = vmatpush2.msra.mxu0 0.0
      %2194 = vmatprep.subr.mxu0 0.0
      %2195 = vmatpush2.msra.mxu0 0.0
      %2196 = vmatprep.subr.mxu0 0.0
      %2197 = vmatpush2.msra.mxu0 0.0
      %2198 = vmatprep.subr.mxu0 0.0
      %2199 = vmatpush2.msra.mxu0 0.0
      %2200 = vmatprep.subr.mxu0 0.0
      %2201 = vmatpush2.msra.mxu0 0.0
      %2202 = vmatprep.subr.mxu0 0.0
      %2203 = vmatpush2.msra.mxu0 0.0
      %2204 = vmatprep.subr.mxu0 0.0
      %2205 = vmatpush2.msra.mxu0 0.0
      %2206 = vmatprep.subr.mxu0 0.0
      %2207 = vmatpush2.msra.mxu0 0.0
      %2208 = vmatprep.subr.mxu0 0.0
      %2209 = vmatpush2.msra.mxu0 0.0
      %2210 = vmatprep.subr.mxu0 0.0
      %2211 = vmatpush2.msra.mxu0 0.0
      %2212 = vmatprep.subr.mxu0 0.0
      %2213 = vmatpush2.msra.mxu0 0.0
      %2214 = vmatprep.subr.mxu0 0.0
      %2215 = vmatpush2.msra.mxu0 0.0
      %2216 = vmatprep.subr.mxu0 0.0
      %2217 = vmatpush2.msra.mxu0 0.0
      %2218 = vmatprep.mubr.f32.mxu0 0.0
      %2219 = vmatmul.mubr.f32.gmra.mxu0 %v1802
      %v2220 = vpop.f32.mrf.mxu0
      %v2221 = vadd.f32 0.0, %v2220
      %v2222 = vpop.f32.mrf.mxu0
      %2223 = vmatprep.mubr.f32.mxu0 0.0
      %2224 = vmatmul.mubr.f32.gmra.mxu0 %v1805
      %v2225 = vpop.f32.mrf.mxu0
      %v2226 = vadd.f32 0.0, %v2225
      %v2227 = vpop.f32.mrf.mxu0
      %2228 = vmatprep.mubr.f32.mxu0 0.0
      %2229 = vmatmul.mubr.f32.gmra.mxu0 %v1808
      %v2230 = vpop.f32.mrf.mxu0
      %v2231 = vadd.f32 0.0, %v2230
      %v2232 = vpop.f32.mrf.mxu0
      %2233 = vmatprep.mubr.f32.mxu0 0.0
      %2234 = vmatmul.mubr.f32.gmra.mxu0 %v1811
      %v2235 = vpop.f32.mrf.mxu0
      %v2236 = vadd.f32 0.0, %v2235
      %v2237 = vpop.f32.mrf.mxu0
      %2238 = vmatprep.mubr.f32.mxu0 0.0
      %2239 = vmatmul.mubr.f32.gmra.mxu0 %v1814
      %v2240 = vpop.f32.mrf.mxu0
      %v2241 = vadd.f32 0.0, %v2240
      %v2242 = vpop.f32.mrf.mxu0
      %2243 = vmatprep.mubr.f32.mxu0 0.0
      %2244 = vmatmul.mubr.f32.gmra.mxu0 %v1817
      %v2245 = vpop.f32.mrf.mxu0
      %v2246 = vadd.f32 0.0, %v2245
      %v2247 = vpop.f32.mrf.mxu0
      %2248 = vmatprep.mubr.f32.mxu0 0.0
      %2249 = vmatmul.mubr.f32.gmra.mxu0 %v1820
      %v2250 = vpop.f32.mrf.mxu0
      %v2251 = vadd.f32 0.0, %v2250
      %v2252 = vpop.f32.mrf.mxu0
      %2253 = vmatprep.mubr.f32.mxu0 0.0
      %2254 = vmatmul.mubr.f32.gmra.mxu0 %v1823
      %v2255 = vpop.f32.mrf.mxu0
      %v2256 = vadd.f32 0.0, %v2255
      %v2257 = vpop.f32.mrf.mxu0
      %2258 = vmatprep.mubr.f32.mxu0 0.0
      %2259 = vmatmul.mubr.f32.gmra.mxu0 %v1826
      %v2260 = vpop.f32.mrf.mxu0
      %v2261 = vadd.f32 0.0, %v2260
      %v2262 = vpop.f32.mrf.mxu0
      %2263 = vmatprep.mubr.f32.mxu0 0.0
      %2264 = vmatmul.mubr.f32.gmra.mxu0 %v1829
      %v2265 = vpop.f32.mrf.mxu0
      %v2266 = vadd.f32 0.0, %v2265
      %v2267 = vpop.f32.mrf.mxu0
      %2268 = vmatprep.mubr.f32.mxu0 0.0
      %2269 = vmatmul.mubr.f32.gmra.mxu0 %v1832
      %v2270 = vpop.f32.mrf.mxu0
      %v2271 = vadd.f32 0.0, %v2270
      %v2272 = vpop.f32.mrf.mxu0
      %2273 = vmatprep.mubr.f32.mxu0 0.0
      %2274 = vmatmul.mubr.f32.gmra.mxu0 %v1835
      %v2275 = vpop.f32.mrf.mxu0
      %v2276 = vadd.f32 0.0, %v2275
      %v2277 = vpop.f32.mrf.mxu0
      %2278 = vmatprep.mubr.f32.mxu0 0.0
      %2279 = vmatmul.mubr.f32.gmra.mxu0 %v1838
      %v2280 = vpop.f32.mrf.mxu0
      %v2281 = vadd.f32 0.0, %v2280
      %v2282 = vpop.f32.mrf.mxu0
      %2283 = vmatprep.mubr.f32.mxu0 0.0
      %2284 = vmatmul.mubr.f32.gmra.mxu0 %v1841
      %v2285 = vpop.f32.mrf.mxu0
      %v2286 = vadd.f32 0.0, %v2285
      %v2287 = vpop.f32.mrf.mxu0
      %2288 = vmatprep.mubr.f32.mxu0 0.0
      %2289 = vmatmul.mubr.f32.gmra.mxu0 %v1844
      %v2290 = vpop.f32.mrf.mxu0
      %v2291 = vadd.f32 0.0, %v2290
      %v2292 = vpop.f32.mrf.mxu0
      %2293 = vmatprep.mubr.f32.mxu0 0.0
      %2294 = vmatmul.mubr.f32.gmra.mxu0 %v1847
      %v2295 = vpop.f32.mrf.mxu0
      %v2296 = vadd.f32 0.0, %v2295
      %v2297 = vpop.f32.mrf.mxu0
      %2298 = vmatprep.mubr.f32.mxu0 0.0
      %2299 = vmatmul.mubr.f32.gmra.mxu0 %v1850
      %v2300 = vpop.f32.mrf.mxu0
      %v2301 = vadd.f32 0.0, %v2300
      %v2302 = vpop.f32.mrf.mxu0
      %2303 = vmatprep.mubr.f32.mxu0 0.0
      %2304 = vmatmul.mubr.f32.gmra.mxu0 %v1853
      %v2305 = vpop.f32.mrf.mxu0
      %v2306 = vadd.f32 0.0, %v2305
      %v2307 = vpop.f32.mrf.mxu0
      %2308 = vmatprep.mubr.f32.mxu0 0.0
      %2309 = vmatmul.mubr.f32.gmra.mxu0 %v1856
      %v2310 = vpop.f32.mrf.mxu0
      %v2311 = vadd.f32 0.0, %v2310
      %v2312 = vpop.f32.mrf.mxu0
      %2313 = vmatprep.mubr.f32.mxu0 0.0
      %2314 = vmatmul.mubr.f32.gmra.mxu0 %v1859
      %v2315 = vpop.f32.mrf.mxu0
      %v2316 = vadd.f32 0.0, %v2315
      %v2317 = vpop.f32.mrf.mxu0
      %2318 = vmatprep.mubr.f32.mxu0 0.0
      %2319 = vmatmul.mubr.f32.gmra.mxu0 %v1862
      %v2320 = vpop.f32.mrf.mxu0
      %v2321 = vadd.f32 0.0, %v2320
      %v2322 = vpop.f32.mrf.mxu0
      %2323 = vmatprep.mubr.f32.mxu0 0.0
      %2324 = vmatmul.mubr.f32.gmra.mxu0 %v1865
      %v2325 = vpop.f32.mrf.mxu0
      %v2326 = vadd.f32 0.0, %v2325
      %v2327 = vpop.f32.mrf.mxu0
      %2328 = vmatprep.mubr.f32.mxu0 0.0
      %2329 = vmatmul.mubr.f32.gmra.mxu0 %v1868
      %v2330 = vpop.f32.mrf.mxu0
      %v2331 = vadd.f32 0.0, %v2330
      %v2332 = vpop.f32.mrf.mxu0
      %2333 = vmatprep.mubr.f32.mxu0 0.0
      %2334 = vmatmul.mubr.f32.gmra.mxu0 %v1871
      %v2335 = vpop.f32.mrf.mxu0
      %v2336 = vadd.f32 0.0, %v2335
      %v2337 = vpop.f32.mrf.mxu0
      %2338 = vmatprep.mubr.f32.mxu0 0.0
      %2339 = vmatmul.mubr.f32.gmra.mxu0 %v1874
      %v2340 = vpop.f32.mrf.mxu0
      %v2341 = vadd.f32 0.0, %v2340
      %v2342 = vpop.f32.mrf.mxu0
      %2343 = vmatprep.mubr.f32.mxu0 0.0
      %2344 = vmatmul.mubr.f32.gmra.mxu0 %v1877
      %v2345 = vpop.f32.mrf.mxu0
      %v2346 = vadd.f32 0.0, %v2345
      %v2347 = vpop.f32.mrf.mxu0
      %2348 = vmatprep.mubr.f32.mxu0 0.0
      %2349 = vmatmul.mubr.f32.gmra.mxu0 %v1880
      %v2350 = vpop.f32.mrf.mxu0
      %v2351 = vadd.f32 0.0, %v2350
      %v2352 = vpop.f32.mrf.mxu0
      %2353 = vmatprep.mubr.f32.mxu0 0.0
      %2354 = vmatmul.mubr.f32.gmra.mxu0 %v1883
      %v2355 = vpop.f32.mrf.mxu0
      %v2356 = vadd.f32 0.0, %v2355
      %v2357 = vpop.f32.mrf.mxu0
      %2358 = vmatprep.mubr.f32.mxu0 0.0
      %2359 = vmatmul.mubr.f32.gmra.mxu0 %v1886
      %v2360 = vpop.f32.mrf.mxu0
      %v2361 = vadd.f32 0.0, %v2360
      %v2362 = vpop.f32.mrf.mxu0
      %2363 = vmatprep.mubr.f32.mxu0 0.0
      %2364 = vmatmul.mubr.f32.gmra.mxu0 %v1889
      %v2365 = vpop.f32.mrf.mxu0
      %v2366 = vadd.f32 0.0, %v2365
      %v2367 = vpop.f32.mrf.mxu0
      %2368 = vmatprep.mubr.f32.mxu0 0.0
      %2369 = vmatmul.mubr.f32.gmra.mxu0 %v1892
      %v2370 = vpop.f32.mrf.mxu0
      %v2371 = vadd.f32 0.0, %v2370
      %v2372 = vpop.f32.mrf.mxu0
      %2373 = vmatprep.mubr.f32.mxu0 0.0
      %2374 = vmatmul.mubr.f32.gmra.mxu0 %v1895
      %v2375 = vpop.f32.mrf.mxu0
      %v2376 = vadd.f32 0.0, %v2375
      %v2377 = vpop.f32.mrf.mxu0
      %2378 = vdwg.mxu0
      %v2379 = vmax.f32 %v1732, %v2221
      %v2380 = vmax.f32 %v1733, %v2226
      %v2381 = vmax.f32 %v1734, %v2231
      %v2382 = vmax.f32 %v1735, %v2236
      %v2383 = vmax.f32 %v1736, %v2241
      %v2384 = vmax.f32 %v1737, %v2246
      %v2385 = vmax.f32 %v1738, %v2251
      %v2386 = vmax.f32 %v1739, %v2256
      %v2387 = vmax.f32 %v1740, %v2261
      %v2388 = vmax.f32 %v1741, %v2266
      %v2389 = vmax.f32 %v1742, %v2271
      %v2390 = vmax.f32 %v1743, %v2276
      %v2391 = vmax.f32 %v1744, %v2281
      %v2392 = vmax.f32 %v1745, %v2286
      %v2393 = vmax.f32 %v1746, %v2291
      %v2394 = vmax.f32 %v1747, %v2296
      %v2395 = vmax.f32 %v1748, %v2301
      %v2396 = vmax.f32 %v1749, %v2306
      %v2397 = vmax.f32 %v1750, %v2311
      %v2398 = vmax.f32 %v1751, %v2316
      %v2399 = vmax.f32 %v1752, %v2321
      %v2400 = vmax.f32 %v1753, %v2326
      %v2401 = vmax.f32 %v1754, %v2331
      %v2402 = vmax.f32 %v1755, %v2336
      %v2403 = vmax.f32 %v1756, %v2341
      %v2404 = vmax.f32 %v1757, %v2346
      %v2405 = vmax.f32 %v1758, %v2351
      %v2406 = vmax.f32 %v1759, %v2356
      %v2407 = vmax.f32 %v1760, %v2361
      %v2408 = vmax.f32 %v1761, %v2366
      %v2409 = vmax.f32 %v1762, %v2371
      %v2410 = vmax.f32 %v1763, %v2376
      %vm2459 = vcmask 1046528
      %v2460 = vrot.slane %v512, 1
      %v2461 = vrot.slane %v513, 1
      %v2462 = vsel %vm2459, %v2460, %v2461
      %v2463 = vrot.slane %v514, 1
      %v2464 = vsel %vm2459, %v2461, %v2463
      %v2465 = vrot.slane %v515, 1
      %v2466 = vrot.slane %v516, 1
      %v2467 = vsel %vm2459, %v2465, %v2466
      %v2468 = vrot.slane %v517, 1
      %v2469 = vsel %vm2459, %v2466, %v2468
      %v2470 = vrot.slane %v518, 1
      %v2471 = vrot.slane %v519, 1
      %v2472 = vsel %vm2459, %v2470, %v2471
      %v2473 = vrot.slane %v520, 1
      %v2474 = vsel %vm2459, %v2471, %v2473
      %v2475 = vrot.slane %v521, 1
      %v2476 = vrot.slane %v522, 1
      %v2477 = vsel %vm2459, %v2475, %v2476
      %v2478 = vrot.slane %v523, 1
      %v2479 = vsel %vm2459, %v2476, %v2478
      %v2480 = vrot.slane %v524, 1
      %v2481 = vrot.slane %v525, 1
      %v2482 = vsel %vm2459, %v2480, %v2481
      %v2483 = vrot.slane %v526, 1
      %v2484 = vsel %vm2459, %v2481, %v2483
      %v2485 = vrot.slane %v527, 1
      %v2486 = vrot.slane %v528, 1
      %v2487 = vsel %vm2459, %v2485, %v2486
      %v2488 = vrot.slane %v529, 1
      %v2489 = vsel %vm2459, %v2486, %v2488
      %v2490 = vrot.slane %v530, 1
      %v2491 = vrot.slane %v531, 1
      %v2492 = vsel %vm2459, %v2490, %v2491
      %v2493 = vrot.slane %v532, 1
      %v2494 = vsel %vm2459, %v2491, %v2493
      %v2495 = vrot.slane %v533, 1
      %v2496 = vrot.slane %v534, 1
      %v2497 = vsel %vm2459, %v2495, %v2496
      %v2498 = vrot.slane %v535, 1
      %v2499 = vsel %vm2459, %v2496, %v2498
      %v2500 = vrot.slane %v536, 1
      %v2501 = vrot.slane %v537, 1
      %v2502 = vsel %vm2459, %v2500, %v2501
      %v2503 = vrot.slane %v538, 1
      %v2504 = vsel %vm2459, %v2501, %v2503
      %v2505 = vrot.slane %v539, 1
      %v2506 = vrot.slane %v540, 1
      %v2507 = vsel %vm2459, %v2505, %v2506
      %v2508 = vrot.slane %v541, 1
      %v2509 = vsel %vm2459, %v2506, %v2508
      %v2510 = vrot.slane %v542, 1
      %v2511 = vrot.slane %v543, 1
      %v2512 = vsel %vm2459, %v2510, %v2511
      %v2513 = vrot.slane %v544, 1
      %v2514 = vsel %vm2459, %v2511, %v2513
      %v2515 = vrot.slane %v545, 1
      %v2516 = vrot.slane %v546, 1
      %v2517 = vsel %vm2459, %v2515, %v2516
      %v2518 = vrot.slane %v547, 1
      %v2519 = vsel %vm2459, %v2516, %v2518
      %v2520 = vrot.slane %v548, 1
      %v2521 = vrot.slane %v549, 1
      %v2522 = vsel %vm2459, %v2520, %v2521
      %v2523 = vrot.slane %v550, 1
      %v2524 = vsel %vm2459, %v2521, %v2523
      %v2525 = vrot.slane %v551, 1
      %v2526 = vrot.slane %v552, 1
      %v2527 = vsel %vm2459, %v2525, %v2526
      %v2528 = vrot.slane %v553, 1
      %v2529 = vsel %vm2459, %v2526, %v2528
      %v2530 = vrot.slane %v554, 1
      %v2531 = vrot.slane %v555, 1
      %v2532 = vsel %vm2459, %v2530, %v2531
      %v2533 = vrot.slane %v556, 1
      %v2534 = vsel %vm2459, %v2531, %v2533
      %v2535 = vrot.slane %v557, 1
      %v2536 = vrot.slane %v558, 1
      %v2537 = vsel %vm2459, %v2535, %v2536
      %v2538 = vrot.slane %v559, 1
      %v2539 = vsel %vm2459, %v2536, %v2538
      %v2572 = vmul.f32 %v418, %v2462
      %v2573 = vmul.f32 %v419, %v2464
      %v2574 = vmul.f32 %v420, %v2467
      %v2575 = vmul.f32 %v421, %v2469
      %v2576 = vmul.f32 %v422, %v2472
      %v2577 = vmul.f32 %v423, %v2474
      %v2578 = vmul.f32 %v424, %v2477
      %v2579 = vmul.f32 %v425, %v2479
      %v2580 = vmul.f32 %v426, %v2482
      %v2581 = vmul.f32 %v427, %v2484
      %v2582 = vmul.f32 %v428, %v2487
      %v2583 = vmul.f32 %v429, %v2489
      %v2584 = vmul.f32 %v430, %v2492
      %v2585 = vmul.f32 %v431, %v2494
      %v2586 = vmul.f32 %v432, %v2497
      %v2587 = vmul.f32 %v433, %v2499
      %v2588 = vmul.f32 %v434, %v2502
      %v2589 = vmul.f32 %v435, %v2504
      %v2590 = vmul.f32 %v436, %v2507
      %v2591 = vmul.f32 %v437, %v2509
      %v2592 = vmul.f32 %v438, %v2512
      %v2593 = vmul.f32 %v439, %v2514
      %v2594 = vmul.f32 %v440, %v2517
      %v2595 = vmul.f32 %v441, %v2519
      %v2596 = vmul.f32 %v442, %v2522
      %v2597 = vmul.f32 %v443, %v2524
      %v2598 = vmul.f32 %v444, %v2527
      %v2599 = vmul.f32 %v445, %v2529
      %v2600 = vmul.f32 %v446, %v2532
      %v2601 = vmul.f32 %v447, %v2534
      %v2602 = vmul.f32 %v448, %v2537
      %v2603 = vmul.f32 %v449, %v2539
      %s2604 = scalar_lea.vmem %s1, 96
      %v2605 = vld [vmem:[%s2604] sm:$0xff]
      %v2606 = vld [vmem:[%s2604 + $0x8] sm:$0xff]
      %v2607 = vld [vmem:[%s2604 + $0x10] sm:$0xff]
      %v2608 = vld [vmem:[%s2604 + $0x18] sm:$0xff]
      %v2610 = vsel %vm602, %v2572, 0
      %v2613 = vsel %vm602, %v2573, 0
      %v2616 = vsel %vm602, %v2574, 0
      %v2619 = vsel %vm602, %v2575, 0
      %v2622 = vsel %vm602, %v2576, 0
      %v2625 = vsel %vm602, %v2577, 0
      %v2628 = vsel %vm602, %v2578, 0
      %v2631 = vsel %vm602, %v2579, 0
      %v2634 = vsel %vm602, %v2580, 0
      %v2637 = vsel %vm602, %v2581, 0
      %v2640 = vsel %vm602, %v2582, 0
      %v2643 = vsel %vm602, %v2583, 0
      %v2646 = vsel %vm602, %v2584, 0
      %v2649 = vsel %vm602, %v2585, 0
      %v2652 = vsel %vm602, %v2586, 0
      %v2655 = vsel %vm602, %v2587, 0
      %v2658 = vsel %vm602, %v2588, 0
      %v2661 = vsel %vm602, %v2589, 0
      %v2664 = vsel %vm602, %v2590, 0
      %v2667 = vsel %vm602, %v2591, 0
      %v2670 = vsel %vm602, %v2592, 0
      %v2673 = vsel %vm602, %v2593, 0
      %v2676 = vsel %vm602, %v2594, 0
      %v2679 = vsel %vm602, %v2595, 0
      %v2682 = vsel %vm602, %v2596, 0
      %v2685 = vsel %vm602, %v2597, 0
      %v2688 = vsel %vm602, %v2598, 0
      %v2691 = vsel %vm602, %v2599, 0
      %v2694 = vsel %vm602, %v2600, 0
      %v2697 = vsel %vm602, %v2601, 0
      %v2700 = vsel %vm602, %v2602, 0
      %v2703 = vsel %vm602, %v2603, 0
      %2705 = vmatprep.subr.mxu0 0.0
      %2706 = vmatpush1.msra.mxu0 0.0
      %2707 = vmatprep.subr.mxu0 0.0
      %2708 = vmatpush1.msra.mxu0 0.0
      %2709 = vmatprep.subr.mxu0 0.0
      %2710 = vmatpush1.msra.mxu0 0.0
      %2711 = vmatprep.subr.mxu0 0.0
      %2712 = vmatpush1.msra.mxu0 0.0
      %2713 = vmatprep.subr.mxu0 0.0
      %2714 = vmatpush1.msra.mxu0 0.0
      %2715 = vmatprep.subr.mxu0 0.0
      %2716 = vmatpush1.msra.mxu0 0.0
      %2717 = vmatprep.subr.mxu0 0.0
      %2718 = vmatpush1.msra.mxu0 0.0
      %2719 = vmatprep.subr.mxu0 0.0
      %2720 = vmatpush1.msra.mxu0 0.0
      %2721 = vmatprep.subr.mxu0 0.0
      %2722 = vmatpush1.msra.mxu0 0.0
      %2723 = vmatprep.subr.mxu0 0.0
      %2724 = vmatpush1.msra.mxu0 0.0
      %2725 = vmatprep.subr.mxu0 0.0
      %2726 = vmatpush1.msra.mxu0 0.0
      %2727 = vmatprep.subr.mxu0 0.0
      %2728 = vmatpush1.msra.mxu0 0.0
      %2729 = vmatprep.subr.mxu0 0.0
      %2730 = vmatpush1.msra.mxu0 %v2608
      %2731 = vmatprep.subr.mxu0 0.0
      %2732 = vmatpush1.msra.mxu0 %v2607
      %2733 = vmatprep.subr.mxu0 0.0
      %2734 = vmatpush1.msra.mxu0 %v2606
      %2735 = vmatprep.subr.mxu0 0.0
      %2736 = vmatpush1.msra.mxu0 %v2605
      %2737 = vmatprep.subr.mxu0 0.0
      %2738 = vmatpush2.msra.mxu0 0.0
      %2739 = vmatprep.subr.mxu0 0.0
      %2740 = vmatpush2.msra.mxu0 0.0
      %2741 = vmatprep.subr.mxu0 0.0
      %2742 = vmatpush2.msra.mxu0 0.0
      %2743 = vmatprep.subr.mxu0 0.0
      %2744 = vmatpush2.msra.mxu0 0.0
      %2745 = vmatprep.subr.mxu0 0.0
      %2746 = vmatpush2.msra.mxu0 0.0
      %2747 = vmatprep.subr.mxu0 0.0
      %2748 = vmatpush2.msra.mxu0 0.0
      %2749 = vmatprep.subr.mxu0 0.0
      %2750 = vmatpush2.msra.mxu0 0.0
      %2751 = vmatprep.subr.mxu0 0.0
      %2752 = vmatpush2.msra.mxu0 0.0
      %2753 = vmatprep.subr.mxu0 0.0
      %2754 = vmatpush2.msra.mxu0 0.0
      %2755 = vmatprep.subr.mxu0 0.0
      %2756 = vmatpush2.msra.mxu0 0.0
      %2757 = vmatprep.subr.mxu0 0.0
      %2758 = vmatpush2.msra.mxu0 0.0
      %2759 = vmatprep.subr.mxu0 0.0
      %2760 = vmatpush2.msra.mxu0 0.0
      %2761 = vmatprep.subr.mxu0 0.0
      %2762 = vmatpush2.msra.mxu0 0.0
      %2763 = vmatprep.subr.mxu0 0.0
      %2764 = vmatpush2.msra.mxu0 0.0
      %2765 = vmatprep.subr.mxu0 0.0
      %2766 = vmatpush2.msra.mxu0 0.0
      %2767 = vmatprep.subr.mxu0 0.0
      %2768 = vmatpush2.msra.mxu0 0.0
      %2769 = vmatprep.mubr.f32.mxu0 0.0
      %2770 = vmatmul.mubr.f32.gmra.mxu0 %v2610
      %v2771 = vpop.f32.mrf.mxu0
      %v2772 = vadd.f32 0.0, %v2771
      %v2773 = vpop.f32.mrf.mxu0
      %2774 = vmatprep.mubr.f32.mxu0 0.0
      %2775 = vmatmul.mubr.f32.gmra.mxu0 %v2613
      %v2776 = vpop.f32.mrf.mxu0
      %v2777 = vadd.f32 0.0, %v2776
      %v2778 = vpop.f32.mrf.mxu0
      %2779 = vmatprep.mubr.f32.mxu0 0.0
      %2780 = vmatmul.mubr.f32.gmra.mxu0 %v2616
      %v2781 = vpop.f32.mrf.mxu0
      %v2782 = vadd.f32 0.0, %v2781
      %v2783 = vpop.f32.mrf.mxu0
      %2784 = vmatprep.mubr.f32.mxu0 0.0
      %2785 = vmatmul.mubr.f32.gmra.mxu0 %v2619
      %v2786 = vpop.f32.mrf.mxu0
      %v2787 = vadd.f32 0.0, %v2786
      %v2788 = vpop.f32.mrf.mxu0
      %2789 = vmatprep.mubr.f32.mxu0 0.0
      %2790 = vmatmul.mubr.f32.gmra.mxu0 %v2622
      %v2791 = vpop.f32.mrf.mxu0
      %v2792 = vadd.f32 0.0, %v2791
      %v2793 = vpop.f32.mrf.mxu0
      %2794 = vmatprep.mubr.f32.mxu0 0.0
      %2795 = vmatmul.mubr.f32.gmra.mxu0 %v2625
      %v2796 = vpop.f32.mrf.mxu0
      %v2797 = vadd.f32 0.0, %v2796
      %v2798 = vpop.f32.mrf.mxu0
      %2799 = vmatprep.mubr.f32.mxu0 0.0
      %2800 = vmatmul.mubr.f32.gmra.mxu0 %v2628
      %v2801 = vpop.f32.mrf.mxu0
      %v2802 = vadd.f32 0.0, %v2801
      %v2803 = vpop.f32.mrf.mxu0
      %2804 = vmatprep.mubr.f32.mxu0 0.0
      %2805 = vmatmul.mubr.f32.gmra.mxu0 %v2631
      %v2806 = vpop.f32.mrf.mxu0
      %v2807 = vadd.f32 0.0, %v2806
      %v2808 = vpop.f32.mrf.mxu0
      %2809 = vmatprep.mubr.f32.mxu0 0.0
      %2810 = vmatmul.mubr.f32.gmra.mxu0 %v2634
      %v2811 = vpop.f32.mrf.mxu0
      %v2812 = vadd.f32 0.0, %v2811
      %v2813 = vpop.f32.mrf.mxu0
      %2814 = vmatprep.mubr.f32.mxu0 0.0
      %2815 = vmatmul.mubr.f32.gmra.mxu0 %v2637
      %v2816 = vpop.f32.mrf.mxu0
      %v2817 = vadd.f32 0.0, %v2816
      %v2818 = vpop.f32.mrf.mxu0
      %2819 = vmatprep.mubr.f32.mxu0 0.0
      %2820 = vmatmul.mubr.f32.gmra.mxu0 %v2640
      %v2821 = vpop.f32.mrf.mxu0
      %v2822 = vadd.f32 0.0, %v2821
      %v2823 = vpop.f32.mrf.mxu0
      %2824 = vmatprep.mubr.f32.mxu0 0.0
      %2825 = vmatmul.mubr.f32.gmra.mxu0 %v2643
      %v2826 = vpop.f32.mrf.mxu0
      %v2827 = vadd.f32 0.0, %v2826
      %v2828 = vpop.f32.mrf.mxu0
      %2829 = vmatprep.mubr.f32.mxu0 0.0
      %2830 = vmatmul.mubr.f32.gmra.mxu0 %v2646
      %v2831 = vpop.f32.mrf.mxu0
      %v2832 = vadd.f32 0.0, %v2831
      %v2833 = vpop.f32.mrf.mxu0
      %2834 = vmatprep.mubr.f32.mxu0 0.0
      %2835 = vmatmul.mubr.f32.gmra.mxu0 %v2649
      %v2836 = vpop.f32.mrf.mxu0
      %v2837 = vadd.f32 0.0, %v2836
      %v2838 = vpop.f32.mrf.mxu0
      %2839 = vmatprep.mubr.f32.mxu0 0.0
      %2840 = vmatmul.mubr.f32.gmra.mxu0 %v2652
      %v2841 = vpop.f32.mrf.mxu0
      %v2842 = vadd.f32 0.0, %v2841
      %v2843 = vpop.f32.mrf.mxu0
      %2844 = vmatprep.mubr.f32.mxu0 0.0
      %2845 = vmatmul.mubr.f32.gmra.mxu0 %v2655
      %v2846 = vpop.f32.mrf.mxu0
      %v2847 = vadd.f32 0.0, %v2846
      %v2848 = vpop.f32.mrf.mxu0
      %2849 = vmatprep.mubr.f32.mxu0 0.0
      %2850 = vmatmul.mubr.f32.gmra.mxu0 %v2658
      %v2851 = vpop.f32.mrf.mxu0
      %v2852 = vadd.f32 0.0, %v2851
      %v2853 = vpop.f32.mrf.mxu0
      %2854 = vmatprep.mubr.f32.mxu0 0.0
      %2855 = vmatmul.mubr.f32.gmra.mxu0 %v2661
      %v2856 = vpop.f32.mrf.mxu0
      %v2857 = vadd.f32 0.0, %v2856
      %v2858 = vpop.f32.mrf.mxu0
      %2859 = vmatprep.mubr.f32.mxu0 0.0
      %2860 = vmatmul.mubr.f32.gmra.mxu0 %v2664
      %v2861 = vpop.f32.mrf.mxu0
      %v2862 = vadd.f32 0.0, %v2861
      %v2863 = vpop.f32.mrf.mxu0
      %2864 = vmatprep.mubr.f32.mxu0 0.0
      %2865 = vmatmul.mubr.f32.gmra.mxu0 %v2667
      %v2866 = vpop.f32.mrf.mxu0
      %v2867 = vadd.f32 0.0, %v2866
      %v2868 = vpop.f32.mrf.mxu0
      %2869 = vmatprep.mubr.f32.mxu0 0.0
      %2870 = vmatmul.mubr.f32.gmra.mxu0 %v2670
      %v2871 = vpop.f32.mrf.mxu0
      %v2872 = vadd.f32 0.0, %v2871
      %v2873 = vpop.f32.mrf.mxu0
      %2874 = vmatprep.mubr.f32.mxu0 0.0
      %2875 = vmatmul.mubr.f32.gmra.mxu0 %v2673
      %v2876 = vpop.f32.mrf.mxu0
      %v2877 = vadd.f32 0.0, %v2876
      %v2878 = vpop.f32.mrf.mxu0
      %2879 = vmatprep.mubr.f32.mxu0 0.0
      %2880 = vmatmul.mubr.f32.gmra.mxu0 %v2676
      %v2881 = vpop.f32.mrf.mxu0
      %v2882 = vadd.f32 0.0, %v2881
      %v2883 = vpop.f32.mrf.mxu0
      %2884 = vmatprep.mubr.f32.mxu0 0.0
      %2885 = vmatmul.mubr.f32.gmra.mxu0 %v2679
      %v2886 = vpop.f32.mrf.mxu0
      %v2887 = vadd.f32 0.0, %v2886
      %v2888 = vpop.f32.mrf.mxu0
      %2889 = vmatprep.mubr.f32.mxu0 0.0
      %2890 = vmatmul.mubr.f32.gmra.mxu0 %v2682
      %v2891 = vpop.f32.mrf.mxu0
      %v2892 = vadd.f32 0.0, %v2891
      %v2893 = vpop.f32.mrf.mxu0
      %2894 = vmatprep.mubr.f32.mxu0 0.0
      %2895 = vmatmul.mubr.f32.gmra.mxu0 %v2685
      %v2896 = vpop.f32.mrf.mxu0
      %v2897 = vadd.f32 0.0, %v2896
      %v2898 = vpop.f32.mrf.mxu0
      %2899 = vmatprep.mubr.f32.mxu0 0.0
      %2900 = vmatmul.mubr.f32.gmra.mxu0 %v2688
      %v2901 = vpop.f32.mrf.mxu0
      %v2902 = vadd.f32 0.0, %v2901
      %v2903 = vpop.f32.mrf.mxu0
      %2904 = vmatprep.mubr.f32.mxu0 0.0
      %2905 = vmatmul.mubr.f32.gmra.mxu0 %v2691
      %v2906 = vpop.f32.mrf.mxu0
      %v2907 = vadd.f32 0.0, %v2906
      %v2908 = vpop.f32.mrf.mxu0
      %2909 = vmatprep.mubr.f32.mxu0 0.0
      %2910 = vmatmul.mubr.f32.gmra.mxu0 %v2694
      %v2911 = vpop.f32.mrf.mxu0
      %v2912 = vadd.f32 0.0, %v2911
      %v2913 = vpop.f32.mrf.mxu0
      %2914 = vmatprep.mubr.f32.mxu0 0.0
      %2915 = vmatmul.mubr.f32.gmra.mxu0 %v2697
      %v2916 = vpop.f32.mrf.mxu0
      %v2917 = vadd.f32 0.0, %v2916
      %v2918 = vpop.f32.mrf.mxu0
      %2919 = vmatprep.mubr.f32.mxu0 0.0
      %2920 = vmatmul.mubr.f32.gmra.mxu0 %v2700
      %v2921 = vpop.f32.mrf.mxu0
      %v2922 = vadd.f32 0.0, %v2921
      %v2923 = vpop.f32.mrf.mxu0
      %2924 = vmatprep.mubr.f32.mxu0 0.0
      %2925 = vmatmul.mubr.f32.gmra.mxu0 %v2703
      %v2926 = vpop.f32.mrf.mxu0
      %v2927 = vadd.f32 0.0, %v2926
      %v2928 = vpop.f32.mrf.mxu0
      %2929 = vdwg.mxu0
      %v2930 = vadd.f32 %v2122, %v2772
      %v2931 = vadd.f32 %v2123, %v2777
      %v2932 = vadd.f32 %v2124, %v2782
      %v2933 = vadd.f32 %v2125, %v2787
      %v2934 = vadd.f32 %v2126, %v2792
      %v2935 = vadd.f32 %v2127, %v2797
      %v2936 = vadd.f32 %v2128, %v2802
      %v2937 = vadd.f32 %v2129, %v2807
      %v2938 = vadd.f32 %v2130, %v2812
      %v2939 = vadd.f32 %v2131, %v2817
      %v2940 = vadd.f32 %v2132, %v2822
      %v2941 = vadd.f32 %v2133, %v2827
      %v2942 = vadd.f32 %v2134, %v2832
      %v2943 = vadd.f32 %v2135, %v2837
      %v2944 = vadd.f32 %v2136, %v2842
      %v2945 = vadd.f32 %v2137, %v2847
      %v2946 = vadd.f32 %v2138, %v2852
      %v2947 = vadd.f32 %v2139, %v2857
      %v2948 = vadd.f32 %v2140, %v2862
      %v2949 = vadd.f32 %v2141, %v2867
      %v2950 = vadd.f32 %v2142, %v2872
      %v2951 = vadd.f32 %v2143, %v2877
      %v2952 = vadd.f32 %v2144, %v2882
      %v2953 = vadd.f32 %v2145, %v2887
      %v2954 = vadd.f32 %v2146, %v2892
      %v2955 = vadd.f32 %v2147, %v2897
      %v2956 = vadd.f32 %v2148, %v2902
      %v2957 = vadd.f32 %v2149, %v2907
      %v2958 = vadd.f32 %v2150, %v2912
      %v2959 = vadd.f32 %v2151, %v2917
      %v2960 = vadd.f32 %v2152, %v2922
      %v2961 = vadd.f32 %v2153, %v2927
      %2962 = vmatprep.subr.mxu0 0.0
      %2963 = vmatpush1.msra.mxu0 0.0
      %2964 = vmatprep.subr.mxu0 0.0
      %2965 = vmatpush1.msra.mxu0 0.0
      %2966 = vmatprep.subr.mxu0 0.0
      %2967 = vmatpush1.msra.mxu0 0.0
      %2968 = vmatprep.subr.mxu0 0.0
      %2969 = vmatpush1.msra.mxu0 0.0
      %2970 = vmatprep.subr.mxu0 0.0
      %2971 = vmatpush1.msra.mxu0 0.0
      %2972 = vmatprep.subr.mxu0 0.0
      %2973 = vmatpush1.msra.mxu0 0.0
      %2974 = vmatprep.subr.mxu0 0.0
      %2975 = vmatpush1.msra.mxu0 0.0
      %2976 = vmatprep.subr.mxu0 0.0
      %2977 = vmatpush1.msra.mxu0 0.0
      %2978 = vmatprep.subr.mxu0 0.0
      %2979 = vmatpush1.msra.mxu0 0.0
      %2980 = vmatprep.subr.mxu0 0.0
      %2981 = vmatpush1.msra.mxu0 0.0
      %2982 = vmatprep.subr.mxu0 0.0
      %2983 = vmatpush1.msra.mxu0 0.0
      %2984 = vmatprep.subr.mxu0 0.0
      %2985 = vmatpush1.msra.mxu0 0.0
      %2986 = vmatprep.subr.mxu0 0.0
      %2987 = vmatpush1.msra.mxu0 %v453
      %2988 = vmatprep.subr.mxu0 0.0
      %2989 = vmatpush1.msra.mxu0 %v452
      %2990 = vmatprep.subr.mxu0 0.0
      %2991 = vmatpush1.msra.mxu0 %v451
      %2992 = vmatprep.subr.mxu0 0.0
      %2993 = vmatpush1.msra.mxu0 %v450
      %2994 = vmatprep.subr.mxu0 0.0
      %2995 = vmatpush2.msra.mxu0 0.0
      %2996 = vmatprep.subr.mxu0 0.0
      %2997 = vmatpush2.msra.mxu0 0.0
      %2998 = vmatprep.subr.mxu0 0.0
      %2999 = vmatpush2.msra.mxu0 0.0
      %3000 = vmatprep.subr.mxu0 0.0
      %3001 = vmatpush2.msra.mxu0 0.0
      %3002 = vmatprep.subr.mxu0 0.0
      %3003 = vmatpush2.msra.mxu0 0.0
      %3004 = vmatprep.subr.mxu0 0.0
      %3005 = vmatpush2.msra.mxu0 0.0
      %3006 = vmatprep.subr.mxu0 0.0
      %3007 = vmatpush2.msra.mxu0 0.0
      %3008 = vmatprep.subr.mxu0 0.0
      %3009 = vmatpush2.msra.mxu0 0.0
      %3010 = vmatprep.subr.mxu0 0.0
      %3011 = vmatpush2.msra.mxu0 0.0
      %3012 = vmatprep.subr.mxu0 0.0
      %3013 = vmatpush2.msra.mxu0 0.0
      %3014 = vmatprep.subr.mxu0 0.0
      %3015 = vmatpush2.msra.mxu0 0.0
      %3016 = vmatprep.subr.mxu0 0.0
      %3017 = vmatpush2.msra.mxu0 0.0
      %3018 = vmatprep.subr.mxu0 0.0
      %3019 = vmatpush2.msra.mxu0 0.0
      %3020 = vmatprep.subr.mxu0 0.0
      %3021 = vmatpush2.msra.mxu0 0.0
      %3022 = vmatprep.subr.mxu0 0.0
      %3023 = vmatpush2.msra.mxu0 0.0
      %3024 = vmatprep.subr.mxu0 0.0
      %3025 = vmatpush2.msra.mxu0 0.0
      %3026 = vmatprep.mubr.f32.mxu0 0.0
      %3027 = vmatmul.mubr.f32.gmra.mxu0 %v2610
      %v3028 = vpop.f32.mrf.mxu0
      %v3029 = vadd.f32 0.0, %v3028
      %v3030 = vpop.f32.mrf.mxu0
      %3031 = vmatprep.mubr.f32.mxu0 0.0
      %3032 = vmatmul.mubr.f32.gmra.mxu0 %v2613
      %v3033 = vpop.f32.mrf.mxu0
      %v3034 = vadd.f32 0.0, %v3033
      %v3035 = vpop.f32.mrf.mxu0
      %3036 = vmatprep.mubr.f32.mxu0 0.0
      %3037 = vmatmul.mubr.f32.gmra.mxu0 %v2616
      %v3038 = vpop.f32.mrf.mxu0
      %v3039 = vadd.f32 0.0, %v3038
      %v3040 = vpop.f32.mrf.mxu0
      %3041 = vmatprep.mubr.f32.mxu0 0.0
      %3042 = vmatmul.mubr.f32.gmra.mxu0 %v2619
      %v3043 = vpop.f32.mrf.mxu0
      %v3044 = vadd.f32 0.0, %v3043
      %v3045 = vpop.f32.mrf.mxu0
      %3046 = vmatprep.mubr.f32.mxu0 0.0
      %3047 = vmatmul.mubr.f32.gmra.mxu0 %v2622
      %v3048 = vpop.f32.mrf.mxu0
      %v3049 = vadd.f32 0.0, %v3048
      %v3050 = vpop.f32.mrf.mxu0
      %3051 = vmatprep.mubr.f32.mxu0 0.0
      %3052 = vmatmul.mubr.f32.gmra.mxu0 %v2625
      %v3053 = vpop.f32.mrf.mxu0
      %v3054 = vadd.f32 0.0, %v3053
      %v3055 = vpop.f32.mrf.mxu0
      %3056 = vmatprep.mubr.f32.mxu0 0.0
      %3057 = vmatmul.mubr.f32.gmra.mxu0 %v2628
      %v3058 = vpop.f32.mrf.mxu0
      %v3059 = vadd.f32 0.0, %v3058
      %v3060 = vpop.f32.mrf.mxu0
      %3061 = vmatprep.mubr.f32.mxu0 0.0
      %3062 = vmatmul.mubr.f32.gmra.mxu0 %v2631
      %v3063 = vpop.f32.mrf.mxu0
      %v3064 = vadd.f32 0.0, %v3063
      %v3065 = vpop.f32.mrf.mxu0
      %3066 = vmatprep.mubr.f32.mxu0 0.0
      %3067 = vmatmul.mubr.f32.gmra.mxu0 %v2634
      %v3068 = vpop.f32.mrf.mxu0
      %v3069 = vadd.f32 0.0, %v3068
      %v3070 = vpop.f32.mrf.mxu0
      %3071 = vmatprep.mubr.f32.mxu0 0.0
      %3072 = vmatmul.mubr.f32.gmra.mxu0 %v2637
      %v3073 = vpop.f32.mrf.mxu0
      %v3074 = vadd.f32 0.0, %v3073
      %v3075 = vpop.f32.mrf.mxu0
      %3076 = vmatprep.mubr.f32.mxu0 0.0
      %3077 = vmatmul.mubr.f32.gmra.mxu0 %v2640
      %v3078 = vpop.f32.mrf.mxu0
      %v3079 = vadd.f32 0.0, %v3078
      %v3080 = vpop.f32.mrf.mxu0
      %3081 = vmatprep.mubr.f32.mxu0 0.0
      %3082 = vmatmul.mubr.f32.gmra.mxu0 %v2643
      %v3083 = vpop.f32.mrf.mxu0
      %v3084 = vadd.f32 0.0, %v3083
      %v3085 = vpop.f32.mrf.mxu0
      %3086 = vmatprep.mubr.f32.mxu0 0.0
      %3087 = vmatmul.mubr.f32.gmra.mxu0 %v2646
      %v3088 = vpop.f32.mrf.mxu0
      %v3089 = vadd.f32 0.0, %v3088
      %v3090 = vpop.f32.mrf.mxu0
      %3091 = vmatprep.mubr.f32.mxu0 0.0
      %3092 = vmatmul.mubr.f32.gmra.mxu0 %v2649
      %v3093 = vpop.f32.mrf.mxu0
      %v3094 = vadd.f32 0.0, %v3093
      %v3095 = vpop.f32.mrf.mxu0
      %3096 = vmatprep.mubr.f32.mxu0 0.0
      %3097 = vmatmul.mubr.f32.gmra.mxu0 %v2652
      %v3098 = vpop.f32.mrf.mxu0
      %v3099 = vadd.f32 0.0, %v3098
      %v3100 = vpop.f32.mrf.mxu0
      %3101 = vmatprep.mubr.f32.mxu0 0.0
      %3102 = vmatmul.mubr.f32.gmra.mxu0 %v2655
      %v3103 = vpop.f32.mrf.mxu0
      %v3104 = vadd.f32 0.0, %v3103
      %v3105 = vpop.f32.mrf.mxu0
      %3106 = vmatprep.mubr.f32.mxu0 0.0
      %3107 = vmatmul.mubr.f32.gmra.mxu0 %v2658
      %v3108 = vpop.f32.mrf.mxu0
      %v3109 = vadd.f32 0.0, %v3108
      %v3110 = vpop.f32.mrf.mxu0
      %3111 = vmatprep.mubr.f32.mxu0 0.0
      %3112 = vmatmul.mubr.f32.gmra.mxu0 %v2661
      %v3113 = vpop.f32.mrf.mxu0
      %v3114 = vadd.f32 0.0, %v3113
      %v3115 = vpop.f32.mrf.mxu0
      %3116 = vmatprep.mubr.f32.mxu0 0.0
      %3117 = vmatmul.mubr.f32.gmra.mxu0 %v2664
      %v3118 = vpop.f32.mrf.mxu0
      %v3119 = vadd.f32 0.0, %v3118
      %v3120 = vpop.f32.mrf.mxu0
      %3121 = vmatprep.mubr.f32.mxu0 0.0
      %3122 = vmatmul.mubr.f32.gmra.mxu0 %v2667
      %v3123 = vpop.f32.mrf.mxu0
      %v3124 = vadd.f32 0.0, %v3123
      %v3125 = vpop.f32.mrf.mxu0
      %3126 = vmatprep.mubr.f32.mxu0 0.0
      %3127 = vmatmul.mubr.f32.gmra.mxu0 %v2670
      %v3128 = vpop.f32.mrf.mxu0
      %v3129 = vadd.f32 0.0, %v3128
      %v3130 = vpop.f32.mrf.mxu0
      %3131 = vmatprep.mubr.f32.mxu0 0.0
      %3132 = vmatmul.mubr.f32.gmra.mxu0 %v2673
      %v3133 = vpop.f32.mrf.mxu0
      %v3134 = vadd.f32 0.0, %v3133
      %v3135 = vpop.f32.mrf.mxu0
      %3136 = vmatprep.mubr.f32.mxu0 0.0
      %3137 = vmatmul.mubr.f32.gmra.mxu0 %v2676
      %v3138 = vpop.f32.mrf.mxu0
      %v3139 = vadd.f32 0.0, %v3138
      %v3140 = vpop.f32.mrf.mxu0
      %3141 = vmatprep.mubr.f32.mxu0 0.0
      %3142 = vmatmul.mubr.f32.gmra.mxu0 %v2679
      %v3143 = vpop.f32.mrf.mxu0
      %v3144 = vadd.f32 0.0, %v3143
      %v3145 = vpop.f32.mrf.mxu0
      %3146 = vmatprep.mubr.f32.mxu0 0.0
      %3147 = vmatmul.mubr.f32.gmra.mxu0 %v2682
      %v3148 = vpop.f32.mrf.mxu0
      %v3149 = vadd.f32 0.0, %v3148
      %v3150 = vpop.f32.mrf.mxu0
      %3151 = vmatprep.mubr.f32.mxu0 0.0
      %3152 = vmatmul.mubr.f32.gmra.mxu0 %v2685
      %v3153 = vpop.f32.mrf.mxu0
      %v3154 = vadd.f32 0.0, %v3153
      %v3155 = vpop.f32.mrf.mxu0
      %3156 = vmatprep.mubr.f32.mxu0 0.0
      %3157 = vmatmul.mubr.f32.gmra.mxu0 %v2688
      %v3158 = vpop.f32.mrf.mxu0
      %v3159 = vadd.f32 0.0, %v3158
      %v3160 = vpop.f32.mrf.mxu0
      %3161 = vmatprep.mubr.f32.mxu0 0.0
      %3162 = vmatmul.mubr.f32.gmra.mxu0 %v2691
      %v3163 = vpop.f32.mrf.mxu0
      %v3164 = vadd.f32 0.0, %v3163
      %v3165 = vpop.f32.mrf.mxu0
      %3166 = vmatprep.mubr.f32.mxu0 0.0
      %3167 = vmatmul.mubr.f32.gmra.mxu0 %v2694
      %v3168 = vpop.f32.mrf.mxu0
      %v3169 = vadd.f32 0.0, %v3168
      %v3170 = vpop.f32.mrf.mxu0
      %3171 = vmatprep.mubr.f32.mxu0 0.0
      %3172 = vmatmul.mubr.f32.gmra.mxu0 %v2697
      %v3173 = vpop.f32.mrf.mxu0
      %v3174 = vadd.f32 0.0, %v3173
      %v3175 = vpop.f32.mrf.mxu0
      %3176 = vmatprep.mubr.f32.mxu0 0.0
      %3177 = vmatmul.mubr.f32.gmra.mxu0 %v2700
      %v3178 = vpop.f32.mrf.mxu0
      %v3179 = vadd.f32 0.0, %v3178
      %v3180 = vpop.f32.mrf.mxu0
      %3181 = vmatprep.mubr.f32.mxu0 0.0
      %3182 = vmatmul.mubr.f32.gmra.mxu0 %v2703
      %v3183 = vpop.f32.mrf.mxu0
      %v3184 = vadd.f32 0.0, %v3183
      %v3185 = vpop.f32.mrf.mxu0
      %3186 = vdwg.mxu0
      %v3187 = vmax.f32 %v2379, %v3029
      %v3188 = vmax.f32 %v2380, %v3034
      %v3189 = vmax.f32 %v2381, %v3039
      %v3190 = vmax.f32 %v2382, %v3044
      %v3191 = vmax.f32 %v2383, %v3049
      %v3192 = vmax.f32 %v2384, %v3054
      %v3193 = vmax.f32 %v2385, %v3059
      %v3194 = vmax.f32 %v2386, %v3064
      %v3195 = vmax.f32 %v2387, %v3069
      %v3196 = vmax.f32 %v2388, %v3074
      %v3197 = vmax.f32 %v2389, %v3079
      %v3198 = vmax.f32 %v2390, %v3084
      %v3199 = vmax.f32 %v2391, %v3089
      %v3200 = vmax.f32 %v2392, %v3094
      %v3201 = vmax.f32 %v2393, %v3099
      %v3202 = vmax.f32 %v2394, %v3104
      %v3203 = vmax.f32 %v2395, %v3109
      %v3204 = vmax.f32 %v2396, %v3114
      %v3205 = vmax.f32 %v2397, %v3119
      %v3206 = vmax.f32 %v2398, %v3124
      %v3207 = vmax.f32 %v2399, %v3129
      %v3208 = vmax.f32 %v2400, %v3134
      %v3209 = vmax.f32 %v2401, %v3139
      %v3210 = vmax.f32 %v2402, %v3144
      %v3211 = vmax.f32 %v2403, %v3149
      %v3212 = vmax.f32 %v2404, %v3154
      %v3213 = vmax.f32 %v2405, %v3159
      %v3214 = vmax.f32 %v2406, %v3164
      %v3215 = vmax.f32 %v2407, %v3169
      %v3216 = vmax.f32 %v2408, %v3174
      %v3217 = vmax.f32 %v2409, %v3179
      %v3218 = vmax.f32 %v2410, %v3184
      %v3222 = vrot.slane %v560, 1
      %v3223 = vrot.slane %v561, 1
      %v3224 = vsel %vm2459, %v3222, %v3223
      %v3225 = vrot.slane %v562, 1
      %v3226 = vsel %vm2459, %v3223, %v3225
      %v3229 = vmul.f32 %v418, %v2467
      %v3230 = vmul.f32 %v419, %v2469
      %v3231 = vmul.f32 %v420, %v2472
      %v3232 = vmul.f32 %v421, %v2474
      %v3233 = vmul.f32 %v422, %v2477
      %v3234 = vmul.f32 %v423, %v2479
      %v3235 = vmul.f32 %v424, %v2482
      %v3236 = vmul.f32 %v425, %v2484
      %v3237 = vmul.f32 %v426, %v2487
      %v3238 = vmul.f32 %v427, %v2489
      %v3239 = vmul.f32 %v428, %v2492
      %v3240 = vmul.f32 %v429, %v2494
      %v3241 = vmul.f32 %v430, %v2497
      %v3242 = vmul.f32 %v431, %v2499
      %v3243 = vmul.f32 %v432, %v2502
      %v3244 = vmul.f32 %v433, %v2504
      %v3245 = vmul.f32 %v434, %v2507
      %v3246 = vmul.f32 %v435, %v2509
      %v3247 = vmul.f32 %v436, %v2512
      %v3248 = vmul.f32 %v437, %v2514
      %v3249 = vmul.f32 %v438, %v2517
      %v3250 = vmul.f32 %v439, %v2519
      %v3251 = vmul.f32 %v440, %v2522
      %v3252 = vmul.f32 %v441, %v2524
      %v3253 = vmul.f32 %v442, %v2527
      %v3254 = vmul.f32 %v443, %v2529
      %v3255 = vmul.f32 %v444, %v2532
      %v3256 = vmul.f32 %v445, %v2534
      %v3257 = vmul.f32 %v446, %v2537
      %v3258 = vmul.f32 %v447, %v2539
      %v3259 = vmul.f32 %v448, %v3224
      %v3260 = vmul.f32 %v449, %v3226
      %s3261 = scalar_lea.vmem %s1, 128
      %v3262 = vld [vmem:[%s3261] sm:$0xff]
      %v3263 = vld [vmem:[%s3261 + $0x8] sm:$0xff]
      %v3264 = vld [vmem:[%s3261 + $0x10] sm:$0xff]
      %v3265 = vld [vmem:[%s3261 + $0x18] sm:$0xff]
      %v3267 = vsel %vm602, %v3229, 0
      %v3270 = vsel %vm602, %v3230, 0
      %v3273 = vsel %vm602, %v3231, 0
      %v3276 = vsel %vm602, %v3232, 0
      %v3279 = vsel %vm602, %v3233, 0
      %v3282 = vsel %vm602, %v3234, 0
      %v3285 = vsel %vm602, %v3235, 0
      %v3288 = vsel %vm602, %v3236, 0
      %v3291 = vsel %vm602, %v3237, 0
      %v3294 = vsel %vm602, %v3238, 0
      %v3297 = vsel %vm602, %v3239, 0
      %v3300 = vsel %vm602, %v3240, 0
      %v3303 = vsel %vm602, %v3241, 0
      %v3306 = vsel %vm602, %v3242, 0
      %v3309 = vsel %vm602, %v3243, 0
      %v3312 = vsel %vm602, %v3244, 0
      %v3315 = vsel %vm602, %v3245, 0
      %v3318 = vsel %vm602, %v3246, 0
      %v3321 = vsel %vm602, %v3247, 0
      %v3324 = vsel %vm602, %v3248, 0
      %v3327 = vsel %vm602, %v3249, 0
      %v3330 = vsel %vm602, %v3250, 0
      %v3333 = vsel %vm602, %v3251, 0
      %v3336 = vsel %vm602, %v3252, 0
      %v3339 = vsel %vm602, %v3253, 0
      %v3342 = vsel %vm602, %v3254, 0
      %v3345 = vsel %vm602, %v3255, 0
      %v3348 = vsel %vm602, %v3256, 0
      %v3351 = vsel %vm602, %v3257, 0
      %v3354 = vsel %vm602, %v3258, 0
      %v3357 = vsel %vm602, %v3259, 0
      %v3360 = vsel %vm602, %v3260, 0
      %3362 = vmatprep.subr.mxu0 0.0
      %3363 = vmatpush1.msra.mxu0 0.0
      %3364 = vmatprep.subr.mxu0 0.0
      %3365 = vmatpush1.msra.mxu0 0.0
      %3366 = vmatprep.subr.mxu0 0.0
      %3367 = vmatpush1.msra.mxu0 0.0
      %3368 = vmatprep.subr.mxu0 0.0
      %3369 = vmatpush1.msra.mxu0 0.0
      %3370 = vmatprep.subr.mxu0 0.0
      %3371 = vmatpush1.msra.mxu0 0.0
      %3372 = vmatprep.subr.mxu0 0.0
      %3373 = vmatpush1.msra.mxu0 0.0
      %3374 = vmatprep.subr.mxu0 0.0
      %3375 = vmatpush1.msra.mxu0 0.0
      %3376 = vmatprep.subr.mxu0 0.0
      %3377 = vmatpush1.msra.mxu0 0.0
      %3378 = vmatprep.subr.mxu0 0.0
      %3379 = vmatpush1.msra.mxu0 0.0
      %3380 = vmatprep.subr.mxu0 0.0
      %3381 = vmatpush1.msra.mxu0 0.0
      %3382 = vmatprep.subr.mxu0 0.0
      %3383 = vmatpush1.msra.mxu0 0.0
      %3384 = vmatprep.subr.mxu0 0.0
      %3385 = vmatpush1.msra.mxu0 0.0
      %3386 = vmatprep.subr.mxu0 0.0
      %3387 = vmatpush1.msra.mxu0 %v3265
      %3388 = vmatprep.subr.mxu0 0.0
      %3389 = vmatpush1.msra.mxu0 %v3264
      %3390 = vmatprep.subr.mxu0 0.0
      %3391 = vmatpush1.msra.mxu0 %v3263
      %3392 = vmatprep.subr.mxu0 0.0
      %3393 = vmatpush1.msra.mxu0 %v3262
      %3394 = vmatprep.subr.mxu0 0.0
      %3395 = vmatpush2.msra.mxu0 0.0
      %3396 = vmatprep.subr.mxu0 0.0
      %3397 = vmatpush2.msra.mxu0 0.0
      %3398 = vmatprep.subr.mxu0 0.0
      %3399 = vmatpush2.msra.mxu0 0.0
      %3400 = vmatprep.subr.mxu0 0.0
      %3401 = vmatpush2.msra.mxu0 0.0
      %3402 = vmatprep.subr.mxu0 0.0
      %3403 = vmatpush2.msra.mxu0 0.0
      %3404 = vmatprep.subr.mxu0 0.0
      %3405 = vmatpush2.msra.mxu0 0.0
      %3406 = vmatprep.subr.mxu0 0.0
      %3407 = vmatpush2.msra.mxu0 0.0
      %3408 = vmatprep.subr.mxu0 0.0
      %3409 = vmatpush2.msra.mxu0 0.0
      %3410 = vmatprep.subr.mxu0 0.0
      %3411 = vmatpush2.msra.mxu0 0.0
      %3412 = vmatprep.subr.mxu0 0.0
      %3413 = vmatpush2.msra.mxu0 0.0
      %3414 = vmatprep.subr.mxu0 0.0
      %3415 = vmatpush2.msra.mxu0 0.0
      %3416 = vmatprep.subr.mxu0 0.0
      %3417 = vmatpush2.msra.mxu0 0.0
      %3418 = vmatprep.subr.mxu0 0.0
      %3419 = vmatpush2.msra.mxu0 0.0
      %3420 = vmatprep.subr.mxu0 0.0
      %3421 = vmatpush2.msra.mxu0 0.0
      %3422 = vmatprep.subr.mxu0 0.0
      %3423 = vmatpush2.msra.mxu0 0.0
      %3424 = vmatprep.subr.mxu0 0.0
      %3425 = vmatpush2.msra.mxu0 0.0
      %3426 = vmatprep.mubr.f32.mxu0 0.0
      %3427 = vmatmul.mubr.f32.gmra.mxu0 %v3267
      %v3428 = vpop.f32.mrf.mxu0
      %v3429 = vadd.f32 0.0, %v3428
      %v3430 = vpop.f32.mrf.mxu0
      %3431 = vmatprep.mubr.f32.mxu0 0.0
      %3432 = vmatmul.mubr.f32.gmra.mxu0 %v3270
      %v3433 = vpop.f32.mrf.mxu0
      %v3434 = vadd.f32 0.0, %v3433
      %v3435 = vpop.f32.mrf.mxu0
      %3436 = vmatprep.mubr.f32.mxu0 0.0
      %3437 = vmatmul.mubr.f32.gmra.mxu0 %v3273
      %v3438 = vpop.f32.mrf.mxu0
      %v3439 = vadd.f32 0.0, %v3438
      %v3440 = vpop.f32.mrf.mxu0
      %3441 = vmatprep.mubr.f32.mxu0 0.0
      %3442 = vmatmul.mubr.f32.gmra.mxu0 %v3276
      %v3443 = vpop.f32.mrf.mxu0
      %v3444 = vadd.f32 0.0, %v3443
      %v3445 = vpop.f32.mrf.mxu0
      %3446 = vmatprep.mubr.f32.mxu0 0.0
      %3447 = vmatmul.mubr.f32.gmra.mxu0 %v3279
      %v3448 = vpop.f32.mrf.mxu0
      %v3449 = vadd.f32 0.0, %v3448
      %v3450 = vpop.f32.mrf.mxu0
      %3451 = vmatprep.mubr.f32.mxu0 0.0
      %3452 = vmatmul.mubr.f32.gmra.mxu0 %v3282
      %v3453 = vpop.f32.mrf.mxu0
      %v3454 = vadd.f32 0.0, %v3453
      %v3455 = vpop.f32.mrf.mxu0
      %3456 = vmatprep.mubr.f32.mxu0 0.0
      %3457 = vmatmul.mubr.f32.gmra.mxu0 %v3285
      %v3458 = vpop.f32.mrf.mxu0
      %v3459 = vadd.f32 0.0, %v3458
      %v3460 = vpop.f32.mrf.mxu0
      %3461 = vmatprep.mubr.f32.mxu0 0.0
      %3462 = vmatmul.mubr.f32.gmra.mxu0 %v3288
      %v3463 = vpop.f32.mrf.mxu0
      %v3464 = vadd.f32 0.0, %v3463
      %v3465 = vpop.f32.mrf.mxu0
      %3466 = vmatprep.mubr.f32.mxu0 0.0
      %3467 = vmatmul.mubr.f32.gmra.mxu0 %v3291
      %v3468 = vpop.f32.mrf.mxu0
      %v3469 = vadd.f32 0.0, %v3468
      %v3470 = vpop.f32.mrf.mxu0
      %3471 = vmatprep.mubr.f32.mxu0 0.0
      %3472 = vmatmul.mubr.f32.gmra.mxu0 %v3294
      %v3473 = vpop.f32.mrf.mxu0
      %v3474 = vadd.f32 0.0, %v3473
      %v3475 = vpop.f32.mrf.mxu0
      %3476 = vmatprep.mubr.f32.mxu0 0.0
      %3477 = vmatmul.mubr.f32.gmra.mxu0 %v3297
      %v3478 = vpop.f32.mrf.mxu0
      %v3479 = vadd.f32 0.0, %v3478
      %v3480 = vpop.f32.mrf.mxu0
      %3481 = vmatprep.mubr.f32.mxu0 0.0
      %3482 = vmatmul.mubr.f32.gmra.mxu0 %v3300
      %v3483 = vpop.f32.mrf.mxu0
      %v3484 = vadd.f32 0.0, %v3483
      %v3485 = vpop.f32.mrf.mxu0
      %3486 = vmatprep.mubr.f32.mxu0 0.0
      %3487 = vmatmul.mubr.f32.gmra.mxu0 %v3303
      %v3488 = vpop.f32.mrf.mxu0
      %v3489 = vadd.f32 0.0, %v3488
      %v3490 = vpop.f32.mrf.mxu0
      %3491 = vmatprep.mubr.f32.mxu0 0.0
      %3492 = vmatmul.mubr.f32.gmra.mxu0 %v3306
      %v3493 = vpop.f32.mrf.mxu0
      %v3494 = vadd.f32 0.0, %v3493
      %v3495 = vpop.f32.mrf.mxu0
      %3496 = vmatprep.mubr.f32.mxu0 0.0
      %3497 = vmatmul.mubr.f32.gmra.mxu0 %v3309
      %v3498 = vpop.f32.mrf.mxu0
      %v3499 = vadd.f32 0.0, %v3498
      %v3500 = vpop.f32.mrf.mxu0
      %3501 = vmatprep.mubr.f32.mxu0 0.0
      %3502 = vmatmul.mubr.f32.gmra.mxu0 %v3312
      %v3503 = vpop.f32.mrf.mxu0
      %v3504 = vadd.f32 0.0, %v3503
      %v3505 = vpop.f32.mrf.mxu0
      %3506 = vmatprep.mubr.f32.mxu0 0.0
      %3507 = vmatmul.mubr.f32.gmra.mxu0 %v3315
      %v3508 = vpop.f32.mrf.mxu0
      %v3509 = vadd.f32 0.0, %v3508
      %v3510 = vpop.f32.mrf.mxu0
      %3511 = vmatprep.mubr.f32.mxu0 0.0
      %3512 = vmatmul.mubr.f32.gmra.mxu0 %v3318
      %v3513 = vpop.f32.mrf.mxu0
      %v3514 = vadd.f32 0.0, %v3513
      %v3515 = vpop.f32.mrf.mxu0
      %3516 = vmatprep.mubr.f32.mxu0 0.0
      %3517 = vmatmul.mubr.f32.gmra.mxu0 %v3321
      %v3518 = vpop.f32.mrf.mxu0
      %v3519 = vadd.f32 0.0, %v3518
      %v3520 = vpop.f32.mrf.mxu0
      %3521 = vmatprep.mubr.f32.mxu0 0.0
      %3522 = vmatmul.mubr.f32.gmra.mxu0 %v3324
      %v3523 = vpop.f32.mrf.mxu0
      %v3524 = vadd.f32 0.0, %v3523
      %v3525 = vpop.f32.mrf.mxu0
      %3526 = vmatprep.mubr.f32.mxu0 0.0
      %3527 = vmatmul.mubr.f32.gmra.mxu0 %v3327
      %v3528 = vpop.f32.mrf.mxu0
      %v3529 = vadd.f32 0.0, %v3528
      %v3530 = vpop.f32.mrf.mxu0
      %3531 = vmatprep.mubr.f32.mxu0 0.0
      %3532 = vmatmul.mubr.f32.gmra.mxu0 %v3330
      %v3533 = vpop.f32.mrf.mxu0
      %v3534 = vadd.f32 0.0, %v3533
      %v3535 = vpop.f32.mrf.mxu0
      %3536 = vmatprep.mubr.f32.mxu0 0.0
      %3537 = vmatmul.mubr.f32.gmra.mxu0 %v3333
      %v3538 = vpop.f32.mrf.mxu0
      %v3539 = vadd.f32 0.0, %v3538
      %v3540 = vpop.f32.mrf.mxu0
      %3541 = vmatprep.mubr.f32.mxu0 0.0
      %3542 = vmatmul.mubr.f32.gmra.mxu0 %v3336
      %v3543 = vpop.f32.mrf.mxu0
      %v3544 = vadd.f32 0.0, %v3543
      %v3545 = vpop.f32.mrf.mxu0
      %3546 = vmatprep.mubr.f32.mxu0 0.0
      %3547 = vmatmul.mubr.f32.gmra.mxu0 %v3339
      %v3548 = vpop.f32.mrf.mxu0
      %v3549 = vadd.f32 0.0, %v3548
      %v3550 = vpop.f32.mrf.mxu0
      %3551 = vmatprep.mubr.f32.mxu0 0.0
      %3552 = vmatmul.mubr.f32.gmra.mxu0 %v3342
      %v3553 = vpop.f32.mrf.mxu0
      %v3554 = vadd.f32 0.0, %v3553
      %v3555 = vpop.f32.mrf.mxu0
      %3556 = vmatprep.mubr.f32.mxu0 0.0
      %3557 = vmatmul.mubr.f32.gmra.mxu0 %v3345
      %v3558 = vpop.f32.mrf.mxu0
      %v3559 = vadd.f32 0.0, %v3558
      %v3560 = vpop.f32.mrf.mxu0
      %3561 = vmatprep.mubr.f32.mxu0 0.0
      %3562 = vmatmul.mubr.f32.gmra.mxu0 %v3348
      %v3563 = vpop.f32.mrf.mxu0
      %v3564 = vadd.f32 0.0, %v3563
      %v3565 = vpop.f32.mrf.mxu0
      %3566 = vmatprep.mubr.f32.mxu0 0.0
      %3567 = vmatmul.mubr.f32.gmra.mxu0 %v3351
      %v3568 = vpop.f32.mrf.mxu0
      %v3569 = vadd.f32 0.0, %v3568
      %v3570 = vpop.f32.mrf.mxu0
      %3571 = vmatprep.mubr.f32.mxu0 0.0
      %3572 = vmatmul.mubr.f32.gmra.mxu0 %v3354
      %v3573 = vpop.f32.mrf.mxu0
      %v3574 = vadd.f32 0.0, %v3573
      %v3575 = vpop.f32.mrf.mxu0
      %3576 = vmatprep.mubr.f32.mxu0 0.0
      %3577 = vmatmul.mubr.f32.gmra.mxu0 %v3357
      %v3578 = vpop.f32.mrf.mxu0
      %v3579 = vadd.f32 0.0, %v3578
      %v3580 = vpop.f32.mrf.mxu0
      %3581 = vmatprep.mubr.f32.mxu0 0.0
      %3582 = vmatmul.mubr.f32.gmra.mxu0 %v3360
      %v3583 = vpop.f32.mrf.mxu0
      %v3584 = vadd.f32 0.0, %v3583
      %v3585 = vpop.f32.mrf.mxu0
      %3586 = vdwg.mxu0
      %v3587 = vadd.f32 %v2930, %v3429
      %v3588 = vadd.f32 %v2931, %v3434
      %v3589 = vadd.f32 %v2932, %v3439
      %v3590 = vadd.f32 %v2933, %v3444
      %v3591 = vadd.f32 %v2934, %v3449
      %v3592 = vadd.f32 %v2935, %v3454
      %v3593 = vadd.f32 %v2936, %v3459
      %v3594 = vadd.f32 %v2937, %v3464
      %v3595 = vadd.f32 %v2938, %v3469
      %v3596 = vadd.f32 %v2939, %v3474
      %v3597 = vadd.f32 %v2940, %v3479
      %v3598 = vadd.f32 %v2941, %v3484
      %v3599 = vadd.f32 %v2942, %v3489
      %v3600 = vadd.f32 %v2943, %v3494
      %v3601 = vadd.f32 %v2944, %v3499
      %v3602 = vadd.f32 %v2945, %v3504
      %v3603 = vadd.f32 %v2946, %v3509
      %v3604 = vadd.f32 %v2947, %v3514
      %v3605 = vadd.f32 %v2948, %v3519
      %v3606 = vadd.f32 %v2949, %v3524
      %v3607 = vadd.f32 %v2950, %v3529
      %v3608 = vadd.f32 %v2951, %v3534
      %v3609 = vadd.f32 %v2952, %v3539
      %v3610 = vadd.f32 %v2953, %v3544
      %v3611 = vadd.f32 %v2954, %v3549
      %v3612 = vadd.f32 %v2955, %v3554
      %v3613 = vadd.f32 %v2956, %v3559
      %v3614 = vadd.f32 %v2957, %v3564
      %v3615 = vadd.f32 %v2958, %v3569
      %v3616 = vadd.f32 %v2959, %v3574
      %v3617 = vadd.f32 %v2960, %v3579
      %v3618 = vadd.f32 %v2961, %v3584
      %3619 = vmatprep.subr.mxu0 0.0
      %3620 = vmatpush1.msra.mxu0 0.0
      %3621 = vmatprep.subr.mxu0 0.0
      %3622 = vmatpush1.msra.mxu0 0.0
      %3623 = vmatprep.subr.mxu0 0.0
      %3624 = vmatpush1.msra.mxu0 0.0
      %3625 = vmatprep.subr.mxu0 0.0
      %3626 = vmatpush1.msra.mxu0 0.0
      %3627 = vmatprep.subr.mxu0 0.0
      %3628 = vmatpush1.msra.mxu0 0.0
      %3629 = vmatprep.subr.mxu0 0.0
      %3630 = vmatpush1.msra.mxu0 0.0
      %3631 = vmatprep.subr.mxu0 0.0
      %3632 = vmatpush1.msra.mxu0 0.0
      %3633 = vmatprep.subr.mxu0 0.0
      %3634 = vmatpush1.msra.mxu0 0.0
      %3635 = vmatprep.subr.mxu0 0.0
      %3636 = vmatpush1.msra.mxu0 0.0
      %3637 = vmatprep.subr.mxu0 0.0
      %3638 = vmatpush1.msra.mxu0 0.0
      %3639 = vmatprep.subr.mxu0 0.0
      %3640 = vmatpush1.msra.mxu0 0.0
      %3641 = vmatprep.subr.mxu0 0.0
      %3642 = vmatpush1.msra.mxu0 0.0
      %3643 = vmatprep.subr.mxu0 0.0
      %3644 = vmatpush1.msra.mxu0 %v453
      %3645 = vmatprep.subr.mxu0 0.0
      %3646 = vmatpush1.msra.mxu0 %v452
      %3647 = vmatprep.subr.mxu0 0.0
      %3648 = vmatpush1.msra.mxu0 %v451
      %3649 = vmatprep.subr.mxu0 0.0
      %3650 = vmatpush1.msra.mxu0 %v450
      %3651 = vmatprep.subr.mxu0 0.0
      %3652 = vmatpush2.msra.mxu0 0.0
      %3653 = vmatprep.subr.mxu0 0.0
      %3654 = vmatpush2.msra.mxu0 0.0
      %3655 = vmatprep.subr.mxu0 0.0
      %3656 = vmatpush2.msra.mxu0 0.0
      %3657 = vmatprep.subr.mxu0 0.0
      %3658 = vmatpush2.msra.mxu0 0.0
      %3659 = vmatprep.subr.mxu0 0.0
      %3660 = vmatpush2.msra.mxu0 0.0
      %3661 = vmatprep.subr.mxu0 0.0
      %3662 = vmatpush2.msra.mxu0 0.0
      %3663 = vmatprep.subr.mxu0 0.0
      %3664 = vmatpush2.msra.mxu0 0.0
      %3665 = vmatprep.subr.mxu0 0.0
      %3666 = vmatpush2.msra.mxu0 0.0
      %3667 = vmatprep.subr.mxu0 0.0
      %3668 = vmatpush2.msra.mxu0 0.0
      %3669 = vmatprep.subr.mxu0 0.0
      %3670 = vmatpush2.msra.mxu0 0.0
      %3671 = vmatprep.subr.mxu0 0.0
      %3672 = vmatpush2.msra.mxu0 0.0
      %3673 = vmatprep.subr.mxu0 0.0
      %3674 = vmatpush2.msra.mxu0 0.0
      %3675 = vmatprep.subr.mxu0 0.0
      %3676 = vmatpush2.msra.mxu0 0.0
      %3677 = vmatprep.subr.mxu0 0.0
      %3678 = vmatpush2.msra.mxu0 0.0
      %3679 = vmatprep.subr.mxu0 0.0
      %3680 = vmatpush2.msra.mxu0 0.0
      %3681 = vmatprep.subr.mxu0 0.0
      %3682 = vmatpush2.msra.mxu0 0.0
      %3683 = vmatprep.mubr.f32.mxu0 0.0
      %3684 = vmatmul.mubr.f32.gmra.mxu0 %v3267
      %v3685 = vpop.f32.mrf.mxu0
      %v3686 = vadd.f32 0.0, %v3685
      %v3687 = vpop.f32.mrf.mxu0
      %3688 = vmatprep.mubr.f32.mxu0 0.0
      %3689 = vmatmul.mubr.f32.gmra.mxu0 %v3270
      %v3690 = vpop.f32.mrf.mxu0
      %v3691 = vadd.f32 0.0, %v3690
      %v3692 = vpop.f32.mrf.mxu0
      %3693 = vmatprep.mubr.f32.mxu0 0.0
      %3694 = vmatmul.mubr.f32.gmra.mxu0 %v3273
      %v3695 = vpop.f32.mrf.mxu0
      %v3696 = vadd.f32 0.0, %v3695
      %v3697 = vpop.f32.mrf.mxu0
      %3698 = vmatprep.mubr.f32.mxu0 0.0
      %3699 = vmatmul.mubr.f32.gmra.mxu0 %v3276
      %v3700 = vpop.f32.mrf.mxu0
      %v3701 = vadd.f32 0.0, %v3700
      %v3702 = vpop.f32.mrf.mxu0
      %3703 = vmatprep.mubr.f32.mxu0 0.0
      %3704 = vmatmul.mubr.f32.gmra.mxu0 %v3279
      %v3705 = vpop.f32.mrf.mxu0
      %v3706 = vadd.f32 0.0, %v3705
      %v3707 = vpop.f32.mrf.mxu0
      %3708 = vmatprep.mubr.f32.mxu0 0.0
      %3709 = vmatmul.mubr.f32.gmra.mxu0 %v3282
      %v3710 = vpop.f32.mrf.mxu0
      %v3711 = vadd.f32 0.0, %v3710
      %v3712 = vpop.f32.mrf.mxu0
      %3713 = vmatprep.mubr.f32.mxu0 0.0
      %3714 = vmatmul.mubr.f32.gmra.mxu0 %v3285
      %v3715 = vpop.f32.mrf.mxu0
      %v3716 = vadd.f32 0.0, %v3715
      %v3717 = vpop.f32.mrf.mxu0
      %3718 = vmatprep.mubr.f32.mxu0 0.0
      %3719 = vmatmul.mubr.f32.gmra.mxu0 %v3288
      %v3720 = vpop.f32.mrf.mxu0
      %v3721 = vadd.f32 0.0, %v3720
      %v3722 = vpop.f32.mrf.mxu0
      %3723 = vmatprep.mubr.f32.mxu0 0.0
      %3724 = vmatmul.mubr.f32.gmra.mxu0 %v3291
      %v3725 = vpop.f32.mrf.mxu0
      %v3726 = vadd.f32 0.0, %v3725
      %v3727 = vpop.f32.mrf.mxu0
      %3728 = vmatprep.mubr.f32.mxu0 0.0
      %3729 = vmatmul.mubr.f32.gmra.mxu0 %v3294
      %v3730 = vpop.f32.mrf.mxu0
      %v3731 = vadd.f32 0.0, %v3730
      %v3732 = vpop.f32.mrf.mxu0
      %3733 = vmatprep.mubr.f32.mxu0 0.0
      %3734 = vmatmul.mubr.f32.gmra.mxu0 %v3297
      %v3735 = vpop.f32.mrf.mxu0
      %v3736 = vadd.f32 0.0, %v3735
      %v3737 = vpop.f32.mrf.mxu0
      %3738 = vmatprep.mubr.f32.mxu0 0.0
      %3739 = vmatmul.mubr.f32.gmra.mxu0 %v3300
      %v3740 = vpop.f32.mrf.mxu0
      %v3741 = vadd.f32 0.0, %v3740
      %v3742 = vpop.f32.mrf.mxu0
      %3743 = vmatprep.mubr.f32.mxu0 0.0
      %3744 = vmatmul.mubr.f32.gmra.mxu0 %v3303
      %v3745 = vpop.f32.mrf.mxu0
      %v3746 = vadd.f32 0.0, %v3745
      %v3747 = vpop.f32.mrf.mxu0
      %3748 = vmatprep.mubr.f32.mxu0 0.0
      %3749 = vmatmul.mubr.f32.gmra.mxu0 %v3306
      %v3750 = vpop.f32.mrf.mxu0
      %v3751 = vadd.f32 0.0, %v3750
      %v3752 = vpop.f32.mrf.mxu0
      %3753 = vmatprep.mubr.f32.mxu0 0.0
      %3754 = vmatmul.mubr.f32.gmra.mxu0 %v3309
      %v3755 = vpop.f32.mrf.mxu0
      %v3756 = vadd.f32 0.0, %v3755
      %v3757 = vpop.f32.mrf.mxu0
      %3758 = vmatprep.mubr.f32.mxu0 0.0
      %3759 = vmatmul.mubr.f32.gmra.mxu0 %v3312
      %v3760 = vpop.f32.mrf.mxu0
      %v3761 = vadd.f32 0.0, %v3760
      %v3762 = vpop.f32.mrf.mxu0
      %3763 = vmatprep.mubr.f32.mxu0 0.0
      %3764 = vmatmul.mubr.f32.gmra.mxu0 %v3315
      %v3765 = vpop.f32.mrf.mxu0
      %v3766 = vadd.f32 0.0, %v3765
      %v3767 = vpop.f32.mrf.mxu0
      %3768 = vmatprep.mubr.f32.mxu0 0.0
      %3769 = vmatmul.mubr.f32.gmra.mxu0 %v3318
      %v3770 = vpop.f32.mrf.mxu0
      %v3771 = vadd.f32 0.0, %v3770
      %v3772 = vpop.f32.mrf.mxu0
      %3773 = vmatprep.mubr.f32.mxu0 0.0
      %3774 = vmatmul.mubr.f32.gmra.mxu0 %v3321
      %v3775 = vpop.f32.mrf.mxu0
      %v3776 = vadd.f32 0.0, %v3775
      %v3777 = vpop.f32.mrf.mxu0
      %3778 = vmatprep.mubr.f32.mxu0 0.0
      %3779 = vmatmul.mubr.f32.gmra.mxu0 %v3324
      %v3780 = vpop.f32.mrf.mxu0
      %v3781 = vadd.f32 0.0, %v3780
      %v3782 = vpop.f32.mrf.mxu0
      %3783 = vmatprep.mubr.f32.mxu0 0.0
      %3784 = vmatmul.mubr.f32.gmra.mxu0 %v3327
      %v3785 = vpop.f32.mrf.mxu0
      %v3786 = vadd.f32 0.0, %v3785
      %v3787 = vpop.f32.mrf.mxu0
      %3788 = vmatprep.mubr.f32.mxu0 0.0
      %3789 = vmatmul.mubr.f32.gmra.mxu0 %v3330
      %v3790 = vpop.f32.mrf.mxu0
      %v3791 = vadd.f32 0.0, %v3790
      %v3792 = vpop.f32.mrf.mxu0
      %3793 = vmatprep.mubr.f32.mxu0 0.0
      %3794 = vmatmul.mubr.f32.gmra.mxu0 %v3333
      %v3795 = vpop.f32.mrf.mxu0
      %v3796 = vadd.f32 0.0, %v3795
      %v3797 = vpop.f32.mrf.mxu0
      %3798 = vmatprep.mubr.f32.mxu0 0.0
      %3799 = vmatmul.mubr.f32.gmra.mxu0 %v3336
      %v3800 = vpop.f32.mrf.mxu0
      %v3801 = vadd.f32 0.0, %v3800
      %v3802 = vpop.f32.mrf.mxu0
      %3803 = vmatprep.mubr.f32.mxu0 0.0
      %3804 = vmatmul.mubr.f32.gmra.mxu0 %v3339
      %v3805 = vpop.f32.mrf.mxu0
      %v3806 = vadd.f32 0.0, %v3805
      %v3807 = vpop.f32.mrf.mxu0
      %3808 = vmatprep.mubr.f32.mxu0 0.0
      %3809 = vmatmul.mubr.f32.gmra.mxu0 %v3342
      %v3810 = vpop.f32.mrf.mxu0
      %v3811 = vadd.f32 0.0, %v3810
      %v3812 = vpop.f32.mrf.mxu0
      %3813 = vmatprep.mubr.f32.mxu0 0.0
      %3814 = vmatmul.mubr.f32.gmra.mxu0 %v3345
      %v3815 = vpop.f32.mrf.mxu0
      %v3816 = vadd.f32 0.0, %v3815
      %v3817 = vpop.f32.mrf.mxu0
      %3818 = vmatprep.mubr.f32.mxu0 0.0
      %3819 = vmatmul.mubr.f32.gmra.mxu0 %v3348
      %v3820 = vpop.f32.mrf.mxu0
      %v3821 = vadd.f32 0.0, %v3820
      %v3822 = vpop.f32.mrf.mxu0
      %3823 = vmatprep.mubr.f32.mxu0 0.0
      %3824 = vmatmul.mubr.f32.gmra.mxu0 %v3351
      %v3825 = vpop.f32.mrf.mxu0
      %v3826 = vadd.f32 0.0, %v3825
      %v3827 = vpop.f32.mrf.mxu0
      %3828 = vmatprep.mubr.f32.mxu0 0.0
      %3829 = vmatmul.mubr.f32.gmra.mxu0 %v3354
      %v3830 = vpop.f32.mrf.mxu0
      %v3831 = vadd.f32 0.0, %v3830
      %v3832 = vpop.f32.mrf.mxu0
      %3833 = vmatprep.mubr.f32.mxu0 0.0
      %3834 = vmatmul.mubr.f32.gmra.mxu0 %v3357
      %v3835 = vpop.f32.mrf.mxu0
      %v3836 = vadd.f32 0.0, %v3835
      %v3837 = vpop.f32.mrf.mxu0
      %3838 = vmatprep.mubr.f32.mxu0 0.0
      %3839 = vmatmul.mubr.f32.gmra.mxu0 %v3360
      %v3840 = vpop.f32.mrf.mxu0
      %v3841 = vadd.f32 0.0, %v3840
      %v3842 = vpop.f32.mrf.mxu0
      %3843 = vdwg.mxu0
      %v3844 = vmax.f32 %v3187, %v3686
      %v3845 = vmax.f32 %v3188, %v3691
      %v3846 = vmax.f32 %v3189, %v3696
      %v3847 = vmax.f32 %v3190, %v3701
      %v3848 = vmax.f32 %v3191, %v3706
      %v3849 = vmax.f32 %v3192, %v3711
      %v3850 = vmax.f32 %v3193, %v3716
      %v3851 = vmax.f32 %v3194, %v3721
      %v3852 = vmax.f32 %v3195, %v3726
      %v3853 = vmax.f32 %v3196, %v3731
      %v3854 = vmax.f32 %v3197, %v3736
      %v3855 = vmax.f32 %v3198, %v3741
      %v3856 = vmax.f32 %v3199, %v3746
      %v3857 = vmax.f32 %v3200, %v3751
      %v3858 = vmax.f32 %v3201, %v3756
      %v3859 = vmax.f32 %v3202, %v3761
      %v3860 = vmax.f32 %v3203, %v3766
      %v3861 = vmax.f32 %v3204, %v3771
      %v3862 = vmax.f32 %v3205, %v3776
      %v3863 = vmax.f32 %v3206, %v3781
      %v3864 = vmax.f32 %v3207, %v3786
      %v3865 = vmax.f32 %v3208, %v3791
      %v3866 = vmax.f32 %v3209, %v3796
      %v3867 = vmax.f32 %v3210, %v3801
      %v3868 = vmax.f32 %v3211, %v3806
      %v3869 = vmax.f32 %v3212, %v3811
      %v3870 = vmax.f32 %v3213, %v3816
      %v3871 = vmax.f32 %v3214, %v3821
      %v3872 = vmax.f32 %v3215, %v3826
      %v3873 = vmax.f32 %v3216, %v3831
      %v3874 = vmax.f32 %v3217, %v3836
      %v3875 = vmax.f32 %v3218, %v3841
      %v3879 = vrot.slane %v563, 1
      %v3880 = vrot.slane %v564, 1
      %v3881 = vsel %vm2459, %v3879, %v3880
      %v3882 = vrot.slane %v565, 1
      %v3883 = vsel %vm2459, %v3880, %v3882
      %v3886 = vmul.f32 %v418, %v2472
      %v3887 = vmul.f32 %v419, %v2474
      %v3888 = vmul.f32 %v420, %v2477
      %v3889 = vmul.f32 %v421, %v2479
      %v3890 = vmul.f32 %v422, %v2482
      %v3891 = vmul.f32 %v423, %v2484
      %v3892 = vmul.f32 %v424, %v2487
      %v3893 = vmul.f32 %v425, %v2489
      %v3894 = vmul.f32 %v426, %v2492
      %v3895 = vmul.f32 %v427, %v2494
      %v3896 = vmul.f32 %v428, %v2497
      %v3897 = vmul.f32 %v429, %v2499
      %v3898 = vmul.f32 %v430, %v2502
      %v3899 = vmul.f32 %v431, %v2504
      %v3900 = vmul.f32 %v432, %v2507
      %v3901 = vmul.f32 %v433, %v2509
      %v3902 = vmul.f32 %v434, %v2512
      %v3903 = vmul.f32 %v435, %v2514
      %v3904 = vmul.f32 %v436, %v2517
      %v3905 = vmul.f32 %v437, %v2519
      %v3906 = vmul.f32 %v438, %v2522
      %v3907 = vmul.f32 %v439, %v2524
      %v3908 = vmul.f32 %v440, %v2527
      %v3909 = vmul.f32 %v441, %v2529
      %v3910 = vmul.f32 %v442, %v2532
      %v3911 = vmul.f32 %v443, %v2534
      %v3912 = vmul.f32 %v444, %v2537
      %v3913 = vmul.f32 %v445, %v2539
      %v3914 = vmul.f32 %v446, %v3224
      %v3915 = vmul.f32 %v447, %v3226
      %v3916 = vmul.f32 %v448, %v3881
      %v3917 = vmul.f32 %v449, %v3883
      %s3918 = scalar_lea.vmem %s1, 160
      %v3919 = vld [vmem:[%s3918] sm:$0xff]
      %v3920 = vld [vmem:[%s3918 + $0x8] sm:$0xff]
      %v3921 = vld [vmem:[%s3918 + $0x10] sm:$0xff]
      %v3922 = vld [vmem:[%s3918 + $0x18] sm:$0xff]
      %v3924 = vsel %vm602, %v3886, 0
      %v3927 = vsel %vm602, %v3887, 0
      %v3930 = vsel %vm602, %v3888, 0
      %v3933 = vsel %vm602, %v3889, 0
      %v3936 = vsel %vm602, %v3890, 0
      %v3939 = vsel %vm602, %v3891, 0
      %v3942 = vsel %vm602, %v3892, 0
      %v3945 = vsel %vm602, %v3893, 0
      %v3948 = vsel %vm602, %v3894, 0
      %v3951 = vsel %vm602, %v3895, 0
      %v3954 = vsel %vm602, %v3896, 0
      %v3957 = vsel %vm602, %v3897, 0
      %v3960 = vsel %vm602, %v3898, 0
      %v3963 = vsel %vm602, %v3899, 0
      %v3966 = vsel %vm602, %v3900, 0
      %v3969 = vsel %vm602, %v3901, 0
      %v3972 = vsel %vm602, %v3902, 0
      %v3975 = vsel %vm602, %v3903, 0
      %v3978 = vsel %vm602, %v3904, 0
      %v3981 = vsel %vm602, %v3905, 0
      %v3984 = vsel %vm602, %v3906, 0
      %v3987 = vsel %vm602, %v3907, 0
      %v3990 = vsel %vm602, %v3908, 0
      %v3993 = vsel %vm602, %v3909, 0
      %v3996 = vsel %vm602, %v3910, 0
      %v3999 = vsel %vm602, %v3911, 0
      %v4002 = vsel %vm602, %v3912, 0
      %v4005 = vsel %vm602, %v3913, 0
      %v4008 = vsel %vm602, %v3914, 0
      %v4011 = vsel %vm602, %v3915, 0
      %v4014 = vsel %vm602, %v3916, 0
      %v4017 = vsel %vm602, %v3917, 0
      %4019 = vmatprep.subr.mxu0 0.0
      %4020 = vmatpush1.msra.mxu0 0.0
      %4021 = vmatprep.subr.mxu0 0.0
      %4022 = vmatpush1.msra.mxu0 0.0
      %4023 = vmatprep.subr.mxu0 0.0
      %4024 = vmatpush1.msra.mxu0 0.0
      %4025 = vmatprep.subr.mxu0 0.0
      %4026 = vmatpush1.msra.mxu0 0.0
      %4027 = vmatprep.subr.mxu0 0.0
      %4028 = vmatpush1.msra.mxu0 0.0
      %4029 = vmatprep.subr.mxu0 0.0
      %4030 = vmatpush1.msra.mxu0 0.0
      %4031 = vmatprep.subr.mxu0 0.0
      %4032 = vmatpush1.msra.mxu0 0.0
      %4033 = vmatprep.subr.mxu0 0.0
      %4034 = vmatpush1.msra.mxu0 0.0
      %4035 = vmatprep.subr.mxu0 0.0
      %4036 = vmatpush1.msra.mxu0 0.0
      %4037 = vmatprep.subr.mxu0 0.0
      %4038 = vmatpush1.msra.mxu0 0.0
      %4039 = vmatprep.subr.mxu0 0.0
      %4040 = vmatpush1.msra.mxu0 0.0
      %4041 = vmatprep.subr.mxu0 0.0
      %4042 = vmatpush1.msra.mxu0 0.0
      %4043 = vmatprep.subr.mxu0 0.0
      %4044 = vmatpush1.msra.mxu0 %v3922
      %4045 = vmatprep.subr.mxu0 0.0
      %4046 = vmatpush1.msra.mxu0 %v3921
      %4047 = vmatprep.subr.mxu0 0.0
      %4048 = vmatpush1.msra.mxu0 %v3920
      %4049 = vmatprep.subr.mxu0 0.0
      %4050 = vmatpush1.msra.mxu0 %v3919
      %4051 = vmatprep.subr.mxu0 0.0
      %4052 = vmatpush2.msra.mxu0 0.0
      %4053 = vmatprep.subr.mxu0 0.0
      %4054 = vmatpush2.msra.mxu0 0.0
      %4055 = vmatprep.subr.mxu0 0.0
      %4056 = vmatpush2.msra.mxu0 0.0
      %4057 = vmatprep.subr.mxu0 0.0
      %4058 = vmatpush2.msra.mxu0 0.0
      %4059 = vmatprep.subr.mxu0 0.0
      %4060 = vmatpush2.msra.mxu0 0.0
      %4061 = vmatprep.subr.mxu0 0.0
      %4062 = vmatpush2.msra.mxu0 0.0
      %4063 = vmatprep.subr.mxu0 0.0
      %4064 = vmatpush2.msra.mxu0 0.0
      %4065 = vmatprep.subr.mxu0 0.0
      %4066 = vmatpush2.msra.mxu0 0.0
      %4067 = vmatprep.subr.mxu0 0.0
      %4068 = vmatpush2.msra.mxu0 0.0
      %4069 = vmatprep.subr.mxu0 0.0
      %4070 = vmatpush2.msra.mxu0 0.0
      %4071 = vmatprep.subr.mxu0 0.0
      %4072 = vmatpush2.msra.mxu0 0.0
      %4073 = vmatprep.subr.mxu0 0.0
      %4074 = vmatpush2.msra.mxu0 0.0
      %4075 = vmatprep.subr.mxu0 0.0
      %4076 = vmatpush2.msra.mxu0 0.0
      %4077 = vmatprep.subr.mxu0 0.0
      %4078 = vmatpush2.msra.mxu0 0.0
      %4079 = vmatprep.subr.mxu0 0.0
      %4080 = vmatpush2.msra.mxu0 0.0
      %4081 = vmatprep.subr.mxu0 0.0
      %4082 = vmatpush2.msra.mxu0 0.0
      %4083 = vmatprep.mubr.f32.mxu0 0.0
      %4084 = vmatmul.mubr.f32.gmra.mxu0 %v3924
      %v4085 = vpop.f32.mrf.mxu0
      %v4086 = vadd.f32 0.0, %v4085
      %v4087 = vpop.f32.mrf.mxu0
      %4088 = vmatprep.mubr.f32.mxu0 0.0
      %4089 = vmatmul.mubr.f32.gmra.mxu0 %v3927
      %v4090 = vpop.f32.mrf.mxu0
      %v4091 = vadd.f32 0.0, %v4090
      %v4092 = vpop.f32.mrf.mxu0
      %4093 = vmatprep.mubr.f32.mxu0 0.0
      %4094 = vmatmul.mubr.f32.gmra.mxu0 %v3930
      %v4095 = vpop.f32.mrf.mxu0
      %v4096 = vadd.f32 0.0, %v4095
      %v4097 = vpop.f32.mrf.mxu0
      %4098 = vmatprep.mubr.f32.mxu0 0.0
      %4099 = vmatmul.mubr.f32.gmra.mxu0 %v3933
      %v4100 = vpop.f32.mrf.mxu0
      %v4101 = vadd.f32 0.0, %v4100
      %v4102 = vpop.f32.mrf.mxu0
      %4103 = vmatprep.mubr.f32.mxu0 0.0
      %4104 = vmatmul.mubr.f32.gmra.mxu0 %v3936
      %v4105 = vpop.f32.mrf.mxu0
      %v4106 = vadd.f32 0.0, %v4105
      %v4107 = vpop.f32.mrf.mxu0
      %4108 = vmatprep.mubr.f32.mxu0 0.0
      %4109 = vmatmul.mubr.f32.gmra.mxu0 %v3939
      %v4110 = vpop.f32.mrf.mxu0
      %v4111 = vadd.f32 0.0, %v4110
      %v4112 = vpop.f32.mrf.mxu0
      %4113 = vmatprep.mubr.f32.mxu0 0.0
      %4114 = vmatmul.mubr.f32.gmra.mxu0 %v3942
      %v4115 = vpop.f32.mrf.mxu0
      %v4116 = vadd.f32 0.0, %v4115
      %v4117 = vpop.f32.mrf.mxu0
      %4118 = vmatprep.mubr.f32.mxu0 0.0
      %4119 = vmatmul.mubr.f32.gmra.mxu0 %v3945
      %v4120 = vpop.f32.mrf.mxu0
      %v4121 = vadd.f32 0.0, %v4120
      %v4122 = vpop.f32.mrf.mxu0
      %4123 = vmatprep.mubr.f32.mxu0 0.0
      %4124 = vmatmul.mubr.f32.gmra.mxu0 %v3948
      %v4125 = vpop.f32.mrf.mxu0
      %v4126 = vadd.f32 0.0, %v4125
      %v4127 = vpop.f32.mrf.mxu0
      %4128 = vmatprep.mubr.f32.mxu0 0.0
      %4129 = vmatmul.mubr.f32.gmra.mxu0 %v3951
      %v4130 = vpop.f32.mrf.mxu0
      %v4131 = vadd.f32 0.0, %v4130
      %v4132 = vpop.f32.mrf.mxu0
      %4133 = vmatprep.mubr.f32.mxu0 0.0
      %4134 = vmatmul.mubr.f32.gmra.mxu0 %v3954
      %v4135 = vpop.f32.mrf.mxu0
      %v4136 = vadd.f32 0.0, %v4135
      %v4137 = vpop.f32.mrf.mxu0
      %4138 = vmatprep.mubr.f32.mxu0 0.0
      %4139 = vmatmul.mubr.f32.gmra.mxu0 %v3957
      %v4140 = vpop.f32.mrf.mxu0
      %v4141 = vadd.f32 0.0, %v4140
      %v4142 = vpop.f32.mrf.mxu0
      %4143 = vmatprep.mubr.f32.mxu0 0.0
      %4144 = vmatmul.mubr.f32.gmra.mxu0 %v3960
      %v4145 = vpop.f32.mrf.mxu0
      %v4146 = vadd.f32 0.0, %v4145
      %v4147 = vpop.f32.mrf.mxu0
      %4148 = vmatprep.mubr.f32.mxu0 0.0
      %4149 = vmatmul.mubr.f32.gmra.mxu0 %v3963
      %v4150 = vpop.f32.mrf.mxu0
      %v4151 = vadd.f32 0.0, %v4150
      %v4152 = vpop.f32.mrf.mxu0
      %4153 = vmatprep.mubr.f32.mxu0 0.0
      %4154 = vmatmul.mubr.f32.gmra.mxu0 %v3966
      %v4155 = vpop.f32.mrf.mxu0
      %v4156 = vadd.f32 0.0, %v4155
      %v4157 = vpop.f32.mrf.mxu0
      %4158 = vmatprep.mubr.f32.mxu0 0.0
      %4159 = vmatmul.mubr.f32.gmra.mxu0 %v3969
      %v4160 = vpop.f32.mrf.mxu0
      %v4161 = vadd.f32 0.0, %v4160
      %v4162 = vpop.f32.mrf.mxu0
      %4163 = vmatprep.mubr.f32.mxu0 0.0
      %4164 = vmatmul.mubr.f32.gmra.mxu0 %v3972
      %v4165 = vpop.f32.mrf.mxu0
      %v4166 = vadd.f32 0.0, %v4165
      %v4167 = vpop.f32.mrf.mxu0
      %4168 = vmatprep.mubr.f32.mxu0 0.0
      %4169 = vmatmul.mubr.f32.gmra.mxu0 %v3975
      %v4170 = vpop.f32.mrf.mxu0
      %v4171 = vadd.f32 0.0, %v4170
      %v4172 = vpop.f32.mrf.mxu0
      %4173 = vmatprep.mubr.f32.mxu0 0.0
      %4174 = vmatmul.mubr.f32.gmra.mxu0 %v3978
      %v4175 = vpop.f32.mrf.mxu0
      %v4176 = vadd.f32 0.0, %v4175
      %v4177 = vpop.f32.mrf.mxu0
      %4178 = vmatprep.mubr.f32.mxu0 0.0
      %4179 = vmatmul.mubr.f32.gmra.mxu0 %v3981
      %v4180 = vpop.f32.mrf.mxu0
      %v4181 = vadd.f32 0.0, %v4180
      %v4182 = vpop.f32.mrf.mxu0
      %4183 = vmatprep.mubr.f32.mxu0 0.0
      %4184 = vmatmul.mubr.f32.gmra.mxu0 %v3984
      %v4185 = vpop.f32.mrf.mxu0
      %v4186 = vadd.f32 0.0, %v4185
      %v4187 = vpop.f32.mrf.mxu0
      %4188 = vmatprep.mubr.f32.mxu0 0.0
      %4189 = vmatmul.mubr.f32.gmra.mxu0 %v3987
      %v4190 = vpop.f32.mrf.mxu0
      %v4191 = vadd.f32 0.0, %v4190
      %v4192 = vpop.f32.mrf.mxu0
      %4193 = vmatprep.mubr.f32.mxu0 0.0
      %4194 = vmatmul.mubr.f32.gmra.mxu0 %v3990
      %v4195 = vpop.f32.mrf.mxu0
      %v4196 = vadd.f32 0.0, %v4195
      %v4197 = vpop.f32.mrf.mxu0
      %4198 = vmatprep.mubr.f32.mxu0 0.0
      %4199 = vmatmul.mubr.f32.gmra.mxu0 %v3993
      %v4200 = vpop.f32.mrf.mxu0
      %v4201 = vadd.f32 0.0, %v4200
      %v4202 = vpop.f32.mrf.mxu0
      %4203 = vmatprep.mubr.f32.mxu0 0.0
      %4204 = vmatmul.mubr.f32.gmra.mxu0 %v3996
      %v4205 = vpop.f32.mrf.mxu0
      %v4206 = vadd.f32 0.0, %v4205
      %v4207 = vpop.f32.mrf.mxu0
      %4208 = vmatprep.mubr.f32.mxu0 0.0
      %4209 = vmatmul.mubr.f32.gmra.mxu0 %v3999
      %v4210 = vpop.f32.mrf.mxu0
      %v4211 = vadd.f32 0.0, %v4210
      %v4212 = vpop.f32.mrf.mxu0
      %4213 = vmatprep.mubr.f32.mxu0 0.0
      %4214 = vmatmul.mubr.f32.gmra.mxu0 %v4002
      %v4215 = vpop.f32.mrf.mxu0
      %v4216 = vadd.f32 0.0, %v4215
      %v4217 = vpop.f32.mrf.mxu0
      %4218 = vmatprep.mubr.f32.mxu0 0.0
      %4219 = vmatmul.mubr.f32.gmra.mxu0 %v4005
      %v4220 = vpop.f32.mrf.mxu0
      %v4221 = vadd.f32 0.0, %v4220
      %v4222 = vpop.f32.mrf.mxu0
      %4223 = vmatprep.mubr.f32.mxu0 0.0
      %4224 = vmatmul.mubr.f32.gmra.mxu0 %v4008
      %v4225 = vpop.f32.mrf.mxu0
      %v4226 = vadd.f32 0.0, %v4225
      %v4227 = vpop.f32.mrf.mxu0
      %4228 = vmatprep.mubr.f32.mxu0 0.0
      %4229 = vmatmul.mubr.f32.gmra.mxu0 %v4011
      %v4230 = vpop.f32.mrf.mxu0
      %v4231 = vadd.f32 0.0, %v4230
      %v4232 = vpop.f32.mrf.mxu0
      %4233 = vmatprep.mubr.f32.mxu0 0.0
      %4234 = vmatmul.mubr.f32.gmra.mxu0 %v4014
      %v4235 = vpop.f32.mrf.mxu0
      %v4236 = vadd.f32 0.0, %v4235
      %v4237 = vpop.f32.mrf.mxu0
      %4238 = vmatprep.mubr.f32.mxu0 0.0
      %4239 = vmatmul.mubr.f32.gmra.mxu0 %v4017
      %v4240 = vpop.f32.mrf.mxu0
      %v4241 = vadd.f32 0.0, %v4240
      %v4242 = vpop.f32.mrf.mxu0
      %4243 = vdwg.mxu0
      %v4244 = vadd.f32 %v3587, %v4086
      %v4245 = vadd.f32 %v3588, %v4091
      %v4246 = vadd.f32 %v3589, %v4096
      %v4247 = vadd.f32 %v3590, %v4101
      %v4248 = vadd.f32 %v3591, %v4106
      %v4249 = vadd.f32 %v3592, %v4111
      %v4250 = vadd.f32 %v3593, %v4116
      %v4251 = vadd.f32 %v3594, %v4121
      %v4252 = vadd.f32 %v3595, %v4126
      %v4253 = vadd.f32 %v3596, %v4131
      %v4254 = vadd.f32 %v3597, %v4136
      %v4255 = vadd.f32 %v3598, %v4141
      %v4256 = vadd.f32 %v3599, %v4146
      %v4257 = vadd.f32 %v3600, %v4151
      %v4258 = vadd.f32 %v3601, %v4156
      %v4259 = vadd.f32 %v3602, %v4161
      %v4260 = vadd.f32 %v3603, %v4166
      %v4261 = vadd.f32 %v3604, %v4171
      %v4262 = vadd.f32 %v3605, %v4176
      %v4263 = vadd.f32 %v3606, %v4181
      %v4264 = vadd.f32 %v3607, %v4186
      %v4265 = vadd.f32 %v3608, %v4191
      %v4266 = vadd.f32 %v3609, %v4196
      %v4267 = vadd.f32 %v3610, %v4201
      %v4268 = vadd.f32 %v3611, %v4206
      %v4269 = vadd.f32 %v3612, %v4211
      %v4270 = vadd.f32 %v3613, %v4216
      %v4271 = vadd.f32 %v3614, %v4221
      %v4272 = vadd.f32 %v3615, %v4226
      %v4273 = vadd.f32 %v3616, %v4231
      %v4274 = vadd.f32 %v3617, %v4236
      %v4275 = vadd.f32 %v3618, %v4241
      %4276 = vmatprep.subr.mxu0 0.0
      %4277 = vmatpush1.msra.mxu0 0.0
      %4278 = vmatprep.subr.mxu0 0.0
      %4279 = vmatpush1.msra.mxu0 0.0
      %4280 = vmatprep.subr.mxu0 0.0
      %4281 = vmatpush1.msra.mxu0 0.0
      %4282 = vmatprep.subr.mxu0 0.0
      %4283 = vmatpush1.msra.mxu0 0.0
      %4284 = vmatprep.subr.mxu0 0.0
      %4285 = vmatpush1.msra.mxu0 0.0
      %4286 = vmatprep.subr.mxu0 0.0
      %4287 = vmatpush1.msra.mxu0 0.0
      %4288 = vmatprep.subr.mxu0 0.0
      %4289 = vmatpush1.msra.mxu0 0.0
      %4290 = vmatprep.subr.mxu0 0.0
      %4291 = vmatpush1.msra.mxu0 0.0
      %4292 = vmatprep.subr.mxu0 0.0
      %4293 = vmatpush1.msra.mxu0 0.0
      %4294 = vmatprep.subr.mxu0 0.0
      %4295 = vmatpush1.msra.mxu0 0.0
      %4296 = vmatprep.subr.mxu0 0.0
      %4297 = vmatpush1.msra.mxu0 0.0
      %4298 = vmatprep.subr.mxu0 0.0
      %4299 = vmatpush1.msra.mxu0 0.0
      %4300 = vmatprep.subr.mxu0 0.0
      %4301 = vmatpush1.msra.mxu0 %v453
      %4302 = vmatprep.subr.mxu0 0.0
      %4303 = vmatpush1.msra.mxu0 %v452
      %4304 = vmatprep.subr.mxu0 0.0
      %4305 = vmatpush1.msra.mxu0 %v451
      %4306 = vmatprep.subr.mxu0 0.0
      %4307 = vmatpush1.msra.mxu0 %v450
      %4308 = vmatprep.subr.mxu0 0.0
      %4309 = vmatpush2.msra.mxu0 0.0
      %4310 = vmatprep.subr.mxu0 0.0
      %4311 = vmatpush2.msra.mxu0 0.0
      %4312 = vmatprep.subr.mxu0 0.0
      %4313 = vmatpush2.msra.mxu0 0.0
      %4314 = vmatprep.subr.mxu0 0.0
      %4315 = vmatpush2.msra.mxu0 0.0
      %4316 = vmatprep.subr.mxu0 0.0
      %4317 = vmatpush2.msra.mxu0 0.0
      %4318 = vmatprep.subr.mxu0 0.0
      %4319 = vmatpush2.msra.mxu0 0.0
      %4320 = vmatprep.subr.mxu0 0.0
      %4321 = vmatpush2.msra.mxu0 0.0
      %4322 = vmatprep.subr.mxu0 0.0
      %4323 = vmatpush2.msra.mxu0 0.0
      %4324 = vmatprep.subr.mxu0 0.0
      %4325 = vmatpush2.msra.mxu0 0.0
      %4326 = vmatprep.subr.mxu0 0.0
      %4327 = vmatpush2.msra.mxu0 0.0
      %4328 = vmatprep.subr.mxu0 0.0
      %4329 = vmatpush2.msra.mxu0 0.0
      %4330 = vmatprep.subr.mxu0 0.0
      %4331 = vmatpush2.msra.mxu0 0.0
      %4332 = vmatprep.subr.mxu0 0.0
      %4333 = vmatpush2.msra.mxu0 0.0
      %4334 = vmatprep.subr.mxu0 0.0
      %4335 = vmatpush2.msra.mxu0 0.0
      %4336 = vmatprep.subr.mxu0 0.0
      %4337 = vmatpush2.msra.mxu0 0.0
      %4338 = vmatprep.subr.mxu0 0.0
      %4339 = vmatpush2.msra.mxu0 0.0
      %4340 = vmatprep.mubr.f32.mxu0 0.0
      %4341 = vmatmul.mubr.f32.gmra.mxu0 %v3924
      %v4342 = vpop.f32.mrf.mxu0
      %v4343 = vadd.f32 0.0, %v4342
      %v4344 = vpop.f32.mrf.mxu0
      %4345 = vmatprep.mubr.f32.mxu0 0.0
      %4346 = vmatmul.mubr.f32.gmra.mxu0 %v3927
      %v4347 = vpop.f32.mrf.mxu0
      %v4348 = vadd.f32 0.0, %v4347
      %v4349 = vpop.f32.mrf.mxu0
      %4350 = vmatprep.mubr.f32.mxu0 0.0
      %4351 = vmatmul.mubr.f32.gmra.mxu0 %v3930
      %v4352 = vpop.f32.mrf.mxu0
      %v4353 = vadd.f32 0.0, %v4352
      %v4354 = vpop.f32.mrf.mxu0
      %4355 = vmatprep.mubr.f32.mxu0 0.0
      %4356 = vmatmul.mubr.f32.gmra.mxu0 %v3933
      %v4357 = vpop.f32.mrf.mxu0
      %v4358 = vadd.f32 0.0, %v4357
      %v4359 = vpop.f32.mrf.mxu0
      %4360 = vmatprep.mubr.f32.mxu0 0.0
      %4361 = vmatmul.mubr.f32.gmra.mxu0 %v3936
      %v4362 = vpop.f32.mrf.mxu0
      %v4363 = vadd.f32 0.0, %v4362
      %v4364 = vpop.f32.mrf.mxu0
      %4365 = vmatprep.mubr.f32.mxu0 0.0
      %4366 = vmatmul.mubr.f32.gmra.mxu0 %v3939
      %v4367 = vpop.f32.mrf.mxu0
      %v4368 = vadd.f32 0.0, %v4367
      %v4369 = vpop.f32.mrf.mxu0
      %4370 = vmatprep.mubr.f32.mxu0 0.0
      %4371 = vmatmul.mubr.f32.gmra.mxu0 %v3942
      %v4372 = vpop.f32.mrf.mxu0
      %v4373 = vadd.f32 0.0, %v4372
      %v4374 = vpop.f32.mrf.mxu0
      %4375 = vmatprep.mubr.f32.mxu0 0.0
      %4376 = vmatmul.mubr.f32.gmra.mxu0 %v3945
      %v4377 = vpop.f32.mrf.mxu0
      %v4378 = vadd.f32 0.0, %v4377
      %v4379 = vpop.f32.mrf.mxu0
      %4380 = vmatprep.mubr.f32.mxu0 0.0
      %4381 = vmatmul.mubr.f32.gmra.mxu0 %v3948
      %v4382 = vpop.f32.mrf.mxu0
      %v4383 = vadd.f32 0.0, %v4382
      %v4384 = vpop.f32.mrf.mxu0
      %4385 = vmatprep.mubr.f32.mxu0 0.0
      %4386 = vmatmul.mubr.f32.gmra.mxu0 %v3951
      %v4387 = vpop.f32.mrf.mxu0
      %v4388 = vadd.f32 0.0, %v4387
      %v4389 = vpop.f32.mrf.mxu0
      %4390 = vmatprep.mubr.f32.mxu0 0.0
      %4391 = vmatmul.mubr.f32.gmra.mxu0 %v3954
      %v4392 = vpop.f32.mrf.mxu0
      %v4393 = vadd.f32 0.0, %v4392
      %v4394 = vpop.f32.mrf.mxu0
      %4395 = vmatprep.mubr.f32.mxu0 0.0
      %4396 = vmatmul.mubr.f32.gmra.mxu0 %v3957
      %v4397 = vpop.f32.mrf.mxu0
      %v4398 = vadd.f32 0.0, %v4397
      %v4399 = vpop.f32.mrf.mxu0
      %4400 = vmatprep.mubr.f32.mxu0 0.0
      %4401 = vmatmul.mubr.f32.gmra.mxu0 %v3960
      %v4402 = vpop.f32.mrf.mxu0
      %v4403 = vadd.f32 0.0, %v4402
      %v4404 = vpop.f32.mrf.mxu0
      %4405 = vmatprep.mubr.f32.mxu0 0.0
      %4406 = vmatmul.mubr.f32.gmra.mxu0 %v3963
      %v4407 = vpop.f32.mrf.mxu0
      %v4408 = vadd.f32 0.0, %v4407
      %v4409 = vpop.f32.mrf.mxu0
      %4410 = vmatprep.mubr.f32.mxu0 0.0
      %4411 = vmatmul.mubr.f32.gmra.mxu0 %v3966
      %v4412 = vpop.f32.mrf.mxu0
      %v4413 = vadd.f32 0.0, %v4412
      %v4414 = vpop.f32.mrf.mxu0
      %4415 = vmatprep.mubr.f32.mxu0 0.0
      %4416 = vmatmul.mubr.f32.gmra.mxu0 %v3969
      %v4417 = vpop.f32.mrf.mxu0
      %v4418 = vadd.f32 0.0, %v4417
      %v4419 = vpop.f32.mrf.mxu0
      %4420 = vmatprep.mubr.f32.mxu0 0.0
      %4421 = vmatmul.mubr.f32.gmra.mxu0 %v3972
      %v4422 = vpop.f32.mrf.mxu0
      %v4423 = vadd.f32 0.0, %v4422
      %v4424 = vpop.f32.mrf.mxu0
      %4425 = vmatprep.mubr.f32.mxu0 0.0
      %4426 = vmatmul.mubr.f32.gmra.mxu0 %v3975
      %v4427 = vpop.f32.mrf.mxu0
      %v4428 = vadd.f32 0.0, %v4427
      %v4429 = vpop.f32.mrf.mxu0
      %4430 = vmatprep.mubr.f32.mxu0 0.0
      %4431 = vmatmul.mubr.f32.gmra.mxu0 %v3978
      %v4432 = vpop.f32.mrf.mxu0
      %v4433 = vadd.f32 0.0, %v4432
      %v4434 = vpop.f32.mrf.mxu0
      %4435 = vmatprep.mubr.f32.mxu0 0.0
      %4436 = vmatmul.mubr.f32.gmra.mxu0 %v3981
      %v4437 = vpop.f32.mrf.mxu0
      %v4438 = vadd.f32 0.0, %v4437
      %v4439 = vpop.f32.mrf.mxu0
      %4440 = vmatprep.mubr.f32.mxu0 0.0
      %4441 = vmatmul.mubr.f32.gmra.mxu0 %v3984
      %v4442 = vpop.f32.mrf.mxu0
      %v4443 = vadd.f32 0.0, %v4442
      %v4444 = vpop.f32.mrf.mxu0
      %4445 = vmatprep.mubr.f32.mxu0 0.0
      %4446 = vmatmul.mubr.f32.gmra.mxu0 %v3987
      %v4447 = vpop.f32.mrf.mxu0
      %v4448 = vadd.f32 0.0, %v4447
      %v4449 = vpop.f32.mrf.mxu0
      %4450 = vmatprep.mubr.f32.mxu0 0.0
      %4451 = vmatmul.mubr.f32.gmra.mxu0 %v3990
      %v4452 = vpop.f32.mrf.mxu0
      %v4453 = vadd.f32 0.0, %v4452
      %v4454 = vpop.f32.mrf.mxu0
      %4455 = vmatprep.mubr.f32.mxu0 0.0
      %4456 = vmatmul.mubr.f32.gmra.mxu0 %v3993
      %v4457 = vpop.f32.mrf.mxu0
      %v4458 = vadd.f32 0.0, %v4457
      %v4459 = vpop.f32.mrf.mxu0
      %4460 = vmatprep.mubr.f32.mxu0 0.0
      %4461 = vmatmul.mubr.f32.gmra.mxu0 %v3996
      %v4462 = vpop.f32.mrf.mxu0
      %v4463 = vadd.f32 0.0, %v4462
      %v4464 = vpop.f32.mrf.mxu0
      %4465 = vmatprep.mubr.f32.mxu0 0.0
      %4466 = vmatmul.mubr.f32.gmra.mxu0 %v3999
      %v4467 = vpop.f32.mrf.mxu0
      %v4468 = vadd.f32 0.0, %v4467
      %v4469 = vpop.f32.mrf.mxu0
      %4470 = vmatprep.mubr.f32.mxu0 0.0
      %4471 = vmatmul.mubr.f32.gmra.mxu0 %v4002
      %v4472 = vpop.f32.mrf.mxu0
      %v4473 = vadd.f32 0.0, %v4472
      %v4474 = vpop.f32.mrf.mxu0
      %4475 = vmatprep.mubr.f32.mxu0 0.0
      %4476 = vmatmul.mubr.f32.gmra.mxu0 %v4005
      %v4477 = vpop.f32.mrf.mxu0
      %v4478 = vadd.f32 0.0, %v4477
      %v4479 = vpop.f32.mrf.mxu0
      %4480 = vmatprep.mubr.f32.mxu0 0.0
      %4481 = vmatmul.mubr.f32.gmra.mxu0 %v4008
      %v4482 = vpop.f32.mrf.mxu0
      %v4483 = vadd.f32 0.0, %v4482
      %v4484 = vpop.f32.mrf.mxu0
      %4485 = vmatprep.mubr.f32.mxu0 0.0
      %4486 = vmatmul.mubr.f32.gmra.mxu0 %v4011
      %v4487 = vpop.f32.mrf.mxu0
      %v4488 = vadd.f32 0.0, %v4487
      %v4489 = vpop.f32.mrf.mxu0
      %4490 = vmatprep.mubr.f32.mxu0 0.0
      %4491 = vmatmul.mubr.f32.gmra.mxu0 %v4014
      %v4492 = vpop.f32.mrf.mxu0
      %v4493 = vadd.f32 0.0, %v4492
      %v4494 = vpop.f32.mrf.mxu0
      %4495 = vmatprep.mubr.f32.mxu0 0.0
      %4496 = vmatmul.mubr.f32.gmra.mxu0 %v4017
      %v4497 = vpop.f32.mrf.mxu0
      %v4498 = vadd.f32 0.0, %v4497
      %v4499 = vpop.f32.mrf.mxu0
      %4500 = vdwg.mxu0
      %v4501 = vmax.f32 %v3844, %v4343
      %v4502 = vmax.f32 %v3845, %v4348
      %v4503 = vmax.f32 %v3846, %v4353
      %v4504 = vmax.f32 %v3847, %v4358
      %v4505 = vmax.f32 %v3848, %v4363
      %v4506 = vmax.f32 %v3849, %v4368
      %v4507 = vmax.f32 %v3850, %v4373
      %v4508 = vmax.f32 %v3851, %v4378
      %v4509 = vmax.f32 %v3852, %v4383
      %v4510 = vmax.f32 %v3853, %v4388
      %v4511 = vmax.f32 %v3854, %v4393
      %v4512 = vmax.f32 %v3855, %v4398
      %v4513 = vmax.f32 %v3856, %v4403
      %v4514 = vmax.f32 %v3857, %v4408
      %v4515 = vmax.f32 %v3858, %v4413
      %v4516 = vmax.f32 %v3859, %v4418
      %v4517 = vmax.f32 %v3860, %v4423
      %v4518 = vmax.f32 %v3861, %v4428
      %v4519 = vmax.f32 %v3862, %v4433
      %v4520 = vmax.f32 %v3863, %v4438
      %v4521 = vmax.f32 %v3864, %v4443
      %v4522 = vmax.f32 %v3865, %v4448
      %v4523 = vmax.f32 %v3866, %v4453
      %v4524 = vmax.f32 %v3867, %v4458
      %v4525 = vmax.f32 %v3868, %v4463
      %v4526 = vmax.f32 %v3869, %v4468
      %v4527 = vmax.f32 %v3870, %v4473
      %v4528 = vmax.f32 %v3871, %v4478
      %v4529 = vmax.f32 %v3872, %v4483
      %v4530 = vmax.f32 %v3873, %v4488
      %v4531 = vmax.f32 %v3874, %v4493
      %v4532 = vmax.f32 %v3875, %v4498
      %vm4533 = vcmask 1045504
      %v4534 = vrot.slane %v512, 2
      %v4535 = vrot.slane %v513, 2
      %v4536 = vsel %vm4533, %v4534, %v4535
      %v4537 = vrot.slane %v514, 2
      %v4538 = vsel %vm4533, %v4535, %v4537
      %v4539 = vrot.slane %v515, 2
      %v4540 = vrot.slane %v516, 2
      %v4541 = vsel %vm4533, %v4539, %v4540
      %v4542 = vrot.slane %v517, 2
      %v4543 = vsel %vm4533, %v4540, %v4542
      %v4544 = vrot.slane %v518, 2
      %v4545 = vrot.slane %v519, 2
      %v4546 = vsel %vm4533, %v4544, %v4545
      %v4547 = vrot.slane %v520, 2
      %v4548 = vsel %vm4533, %v4545, %v4547
      %v4549 = vrot.slane %v521, 2
      %v4550 = vrot.slane %v522, 2
      %v4551 = vsel %vm4533, %v4549, %v4550
      %v4552 = vrot.slane %v523, 2
      %v4553 = vsel %vm4533, %v4550, %v4552
      %v4554 = vrot.slane %v524, 2
      %v4555 = vrot.slane %v525, 2
      %v4556 = vsel %vm4533, %v4554, %v4555
      %v4557 = vrot.slane %v526, 2
      %v4558 = vsel %vm4533, %v4555, %v4557
      %v4559 = vrot.slane %v527, 2
      %v4560 = vrot.slane %v528, 2
      %v4561 = vsel %vm4533, %v4559, %v4560
      %v4562 = vrot.slane %v529, 2
      %v4563 = vsel %vm4533, %v4560, %v4562
      %v4564 = vrot.slane %v530, 2
      %v4565 = vrot.slane %v531, 2
      %v4566 = vsel %vm4533, %v4564, %v4565
      %v4567 = vrot.slane %v532, 2
      %v4568 = vsel %vm4533, %v4565, %v4567
      %v4569 = vrot.slane %v533, 2
      %v4570 = vrot.slane %v534, 2
      %v4571 = vsel %vm4533, %v4569, %v4570
      %v4572 = vrot.slane %v535, 2
      %v4573 = vsel %vm4533, %v4570, %v4572
      %v4574 = vrot.slane %v536, 2
      %v4575 = vrot.slane %v537, 2
      %v4576 = vsel %vm4533, %v4574, %v4575
      %v4577 = vrot.slane %v538, 2
      %v4578 = vsel %vm4533, %v4575, %v4577
      %v4579 = vrot.slane %v539, 2
      %v4580 = vrot.slane %v540, 2
      %v4581 = vsel %vm4533, %v4579, %v4580
      %v4582 = vrot.slane %v541, 2
      %v4583 = vsel %vm4533, %v4580, %v4582
      %v4584 = vrot.slane %v542, 2
      %v4585 = vrot.slane %v543, 2
      %v4586 = vsel %vm4533, %v4584, %v4585
      %v4587 = vrot.slane %v544, 2
      %v4588 = vsel %vm4533, %v4585, %v4587
      %v4589 = vrot.slane %v545, 2
      %v4590 = vrot.slane %v546, 2
      %v4591 = vsel %vm4533, %v4589, %v4590
      %v4592 = vrot.slane %v547, 2
      %v4593 = vsel %vm4533, %v4590, %v4592
      %v4594 = vrot.slane %v548, 2
      %v4595 = vrot.slane %v549, 2
      %v4596 = vsel %vm4533, %v4594, %v4595
      %v4597 = vrot.slane %v550, 2
      %v4598 = vsel %vm4533, %v4595, %v4597
      %v4599 = vrot.slane %v551, 2
      %v4600 = vrot.slane %v552, 2
      %v4601 = vsel %vm4533, %v4599, %v4600
      %v4602 = vrot.slane %v553, 2
      %v4603 = vsel %vm4533, %v4600, %v4602
      %v4604 = vrot.slane %v554, 2
      %v4605 = vrot.slane %v555, 2
      %v4606 = vsel %vm4533, %v4604, %v4605
      %v4607 = vrot.slane %v556, 2
      %v4608 = vsel %vm4533, %v4605, %v4607
      %v4609 = vrot.slane %v557, 2
      %v4610 = vrot.slane %v558, 2
      %v4611 = vsel %vm4533, %v4609, %v4610
      %v4612 = vrot.slane %v559, 2
      %v4613 = vsel %vm4533, %v4610, %v4612
      %v4646 = vmul.f32 %v418, %v4536
      %v4647 = vmul.f32 %v419, %v4538
      %v4648 = vmul.f32 %v420, %v4541
      %v4649 = vmul.f32 %v421, %v4543
      %v4650 = vmul.f32 %v422, %v4546
      %v4651 = vmul.f32 %v423, %v4548
      %v4652 = vmul.f32 %v424, %v4551
      %v4653 = vmul.f32 %v425, %v4553
      %v4654 = vmul.f32 %v426, %v4556
      %v4655 = vmul.f32 %v427, %v4558
      %v4656 = vmul.f32 %v428, %v4561
      %v4657 = vmul.f32 %v429, %v4563
      %v4658 = vmul.f32 %v430, %v4566
      %v4659 = vmul.f32 %v431, %v4568
      %v4660 = vmul.f32 %v432, %v4571
      %v4661 = vmul.f32 %v433, %v4573
      %v4662 = vmul.f32 %v434, %v4576
      %v4663 = vmul.f32 %v435, %v4578
      %v4664 = vmul.f32 %v436, %v4581
      %v4665 = vmul.f32 %v437, %v4583
      %v4666 = vmul.f32 %v438, %v4586
      %v4667 = vmul.f32 %v439, %v4588
      %v4668 = vmul.f32 %v440, %v4591
      %v4669 = vmul.f32 %v441, %v4593
      %v4670 = vmul.f32 %v442, %v4596
      %v4671 = vmul.f32 %v443, %v4598
      %v4672 = vmul.f32 %v444, %v4601
      %v4673 = vmul.f32 %v445, %v4603
      %v4674 = vmul.f32 %v446, %v4606
      %v4675 = vmul.f32 %v447, %v4608
      %v4676 = vmul.f32 %v448, %v4611
      %v4677 = vmul.f32 %v449, %v4613
      %s4678 = scalar_lea.vmem %s1, 192
      %v4679 = vld [vmem:[%s4678] sm:$0xff]
      %v4680 = vld [vmem:[%s4678 + $0x8] sm:$0xff]
      %v4681 = vld [vmem:[%s4678 + $0x10] sm:$0xff]
      %v4682 = vld [vmem:[%s4678 + $0x18] sm:$0xff]
      %v4684 = vsel %vm602, %v4646, 0
      %v4687 = vsel %vm602, %v4647, 0
      %v4690 = vsel %vm602, %v4648, 0
      %v4693 = vsel %vm602, %v4649, 0
      %v4696 = vsel %vm602, %v4650, 0
      %v4699 = vsel %vm602, %v4651, 0
      %v4702 = vsel %vm602, %v4652, 0
      %v4705 = vsel %vm602, %v4653, 0
      %v4708 = vsel %vm602, %v4654, 0
      %v4711 = vsel %vm602, %v4655, 0
      %v4714 = vsel %vm602, %v4656, 0
      %v4717 = vsel %vm602, %v4657, 0
      %v4720 = vsel %vm602, %v4658, 0
      %v4723 = vsel %vm602, %v4659, 0
      %v4726 = vsel %vm602, %v4660, 0
      %v4729 = vsel %vm602, %v4661, 0
      %v4732 = vsel %vm602, %v4662, 0
      %v4735 = vsel %vm602, %v4663, 0
      %v4738 = vsel %vm602, %v4664, 0
      %v4741 = vsel %vm602, %v4665, 0
      %v4744 = vsel %vm602, %v4666, 0
      %v4747 = vsel %vm602, %v4667, 0
      %v4750 = vsel %vm602, %v4668, 0
      %v4753 = vsel %vm602, %v4669, 0
      %v4756 = vsel %vm602, %v4670, 0
      %v4759 = vsel %vm602, %v4671, 0
      %v4762 = vsel %vm602, %v4672, 0
      %v4765 = vsel %vm602, %v4673, 0
      %v4768 = vsel %vm602, %v4674, 0
      %v4771 = vsel %vm602, %v4675, 0
      %v4774 = vsel %vm602, %v4676, 0
      %v4777 = vsel %vm602, %v4677, 0
      %4779 = vmatprep.subr.mxu0 0.0
      %4780 = vmatpush1.msra.mxu0 0.0
      %4781 = vmatprep.subr.mxu0 0.0
      %4782 = vmatpush1.msra.mxu0 0.0
      %4783 = vmatprep.subr.mxu0 0.0
      %4784 = vmatpush1.msra.mxu0 0.0
      %4785 = vmatprep.subr.mxu0 0.0
      %4786 = vmatpush1.msra.mxu0 0.0
      %4787 = vmatprep.subr.mxu0 0.0
      %4788 = vmatpush1.msra.mxu0 0.0
      %4789 = vmatprep.subr.mxu0 0.0
      %4790 = vmatpush1.msra.mxu0 0.0
      %4791 = vmatprep.subr.mxu0 0.0
      %4792 = vmatpush1.msra.mxu0 0.0
      %4793 = vmatprep.subr.mxu0 0.0
      %4794 = vmatpush1.msra.mxu0 0.0
      %4795 = vmatprep.subr.mxu0 0.0
      %4796 = vmatpush1.msra.mxu0 0.0
      %4797 = vmatprep.subr.mxu0 0.0
      %4798 = vmatpush1.msra.mxu0 0.0
      %4799 = vmatprep.subr.mxu0 0.0
      %4800 = vmatpush1.msra.mxu0 0.0
      %4801 = vmatprep.subr.mxu0 0.0
      %4802 = vmatpush1.msra.mxu0 0.0
      %4803 = vmatprep.subr.mxu0 0.0
      %4804 = vmatpush1.msra.mxu0 %v4682
      %4805 = vmatprep.subr.mxu0 0.0
      %4806 = vmatpush1.msra.mxu0 %v4681
      %4807 = vmatprep.subr.mxu0 0.0
      %4808 = vmatpush1.msra.mxu0 %v4680
      %4809 = vmatprep.subr.mxu0 0.0
      %4810 = vmatpush1.msra.mxu0 %v4679
      %4811 = vmatprep.subr.mxu0 0.0
      %4812 = vmatpush2.msra.mxu0 0.0
      %4813 = vmatprep.subr.mxu0 0.0
      %4814 = vmatpush2.msra.mxu0 0.0
      %4815 = vmatprep.subr.mxu0 0.0
      %4816 = vmatpush2.msra.mxu0 0.0
      %4817 = vmatprep.subr.mxu0 0.0
      %4818 = vmatpush2.msra.mxu0 0.0
      %4819 = vmatprep.subr.mxu0 0.0
      %4820 = vmatpush2.msra.mxu0 0.0
      %4821 = vmatprep.subr.mxu0 0.0
      %4822 = vmatpush2.msra.mxu0 0.0
      %4823 = vmatprep.subr.mxu0 0.0
      %4824 = vmatpush2.msra.mxu0 0.0
      %4825 = vmatprep.subr.mxu0 0.0
      %4826 = vmatpush2.msra.mxu0 0.0
      %4827 = vmatprep.subr.mxu0 0.0
      %4828 = vmatpush2.msra.mxu0 0.0
      %4829 = vmatprep.subr.mxu0 0.0
      %4830 = vmatpush2.msra.mxu0 0.0
      %4831 = vmatprep.subr.mxu0 0.0
      %4832 = vmatpush2.msra.mxu0 0.0
      %4833 = vmatprep.subr.mxu0 0.0
      %4834 = vmatpush2.msra.mxu0 0.0
      %4835 = vmatprep.subr.mxu0 0.0
      %4836 = vmatpush2.msra.mxu0 0.0
      %4837 = vmatprep.subr.mxu0 0.0
      %4838 = vmatpush2.msra.mxu0 0.0
      %4839 = vmatprep.subr.mxu0 0.0
      %4840 = vmatpush2.msra.mxu0 0.0
      %4841 = vmatprep.subr.mxu0 0.0
      %4842 = vmatpush2.msra.mxu0 0.0
      %4843 = vmatprep.mubr.f32.mxu0 0.0
      %4844 = vmatmul.mubr.f32.gmra.mxu0 %v4684
      %v4845 = vpop.f32.mrf.mxu0
      %v4846 = vadd.f32 0.0, %v4845
      %v4847 = vpop.f32.mrf.mxu0
      %4848 = vmatprep.mubr.f32.mxu0 0.0
      %4849 = vmatmul.mubr.f32.gmra.mxu0 %v4687
      %v4850 = vpop.f32.mrf.mxu0
      %v4851 = vadd.f32 0.0, %v4850
      %v4852 = vpop.f32.mrf.mxu0
      %4853 = vmatprep.mubr.f32.mxu0 0.0
      %4854 = vmatmul.mubr.f32.gmra.mxu0 %v4690
      %v4855 = vpop.f32.mrf.mxu0
      %v4856 = vadd.f32 0.0, %v4855
      %v4857 = vpop.f32.mrf.mxu0
      %4858 = vmatprep.mubr.f32.mxu0 0.0
      %4859 = vmatmul.mubr.f32.gmra.mxu0 %v4693
      %v4860 = vpop.f32.mrf.mxu0
      %v4861 = vadd.f32 0.0, %v4860
      %v4862 = vpop.f32.mrf.mxu0
      %4863 = vmatprep.mubr.f32.mxu0 0.0
      %4864 = vmatmul.mubr.f32.gmra.mxu0 %v4696
      %v4865 = vpop.f32.mrf.mxu0
      %v4866 = vadd.f32 0.0, %v4865
      %v4867 = vpop.f32.mrf.mxu0
      %4868 = vmatprep.mubr.f32.mxu0 0.0
      %4869 = vmatmul.mubr.f32.gmra.mxu0 %v4699
      %v4870 = vpop.f32.mrf.mxu0
      %v4871 = vadd.f32 0.0, %v4870
      %v4872 = vpop.f32.mrf.mxu0
      %4873 = vmatprep.mubr.f32.mxu0 0.0
      %4874 = vmatmul.mubr.f32.gmra.mxu0 %v4702
      %v4875 = vpop.f32.mrf.mxu0
      %v4876 = vadd.f32 0.0, %v4875
      %v4877 = vpop.f32.mrf.mxu0
      %4878 = vmatprep.mubr.f32.mxu0 0.0
      %4879 = vmatmul.mubr.f32.gmra.mxu0 %v4705
      %v4880 = vpop.f32.mrf.mxu0
      %v4881 = vadd.f32 0.0, %v4880
      %v4882 = vpop.f32.mrf.mxu0
      %4883 = vmatprep.mubr.f32.mxu0 0.0
      %4884 = vmatmul.mubr.f32.gmra.mxu0 %v4708
      %v4885 = vpop.f32.mrf.mxu0
      %v4886 = vadd.f32 0.0, %v4885
      %v4887 = vpop.f32.mrf.mxu0
      %4888 = vmatprep.mubr.f32.mxu0 0.0
      %4889 = vmatmul.mubr.f32.gmra.mxu0 %v4711
      %v4890 = vpop.f32.mrf.mxu0
      %v4891 = vadd.f32 0.0, %v4890
      %v4892 = vpop.f32.mrf.mxu0
      %4893 = vmatprep.mubr.f32.mxu0 0.0
      %4894 = vmatmul.mubr.f32.gmra.mxu0 %v4714
      %v4895 = vpop.f32.mrf.mxu0
      %v4896 = vadd.f32 0.0, %v4895
      %v4897 = vpop.f32.mrf.mxu0
      %4898 = vmatprep.mubr.f32.mxu0 0.0
      %4899 = vmatmul.mubr.f32.gmra.mxu0 %v4717
      %v4900 = vpop.f32.mrf.mxu0
      %v4901 = vadd.f32 0.0, %v4900
      %v4902 = vpop.f32.mrf.mxu0
      %4903 = vmatprep.mubr.f32.mxu0 0.0
      %4904 = vmatmul.mubr.f32.gmra.mxu0 %v4720
      %v4905 = vpop.f32.mrf.mxu0
      %v4906 = vadd.f32 0.0, %v4905
      %v4907 = vpop.f32.mrf.mxu0
      %4908 = vmatprep.mubr.f32.mxu0 0.0
      %4909 = vmatmul.mubr.f32.gmra.mxu0 %v4723
      %v4910 = vpop.f32.mrf.mxu0
      %v4911 = vadd.f32 0.0, %v4910
      %v4912 = vpop.f32.mrf.mxu0
      %4913 = vmatprep.mubr.f32.mxu0 0.0
      %4914 = vmatmul.mubr.f32.gmra.mxu0 %v4726
      %v4915 = vpop.f32.mrf.mxu0
      %v4916 = vadd.f32 0.0, %v4915
      %v4917 = vpop.f32.mrf.mxu0
      %4918 = vmatprep.mubr.f32.mxu0 0.0
      %4919 = vmatmul.mubr.f32.gmra.mxu0 %v4729
      %v4920 = vpop.f32.mrf.mxu0
      %v4921 = vadd.f32 0.0, %v4920
      %v4922 = vpop.f32.mrf.mxu0
      %4923 = vmatprep.mubr.f32.mxu0 0.0
      %4924 = vmatmul.mubr.f32.gmra.mxu0 %v4732
      %v4925 = vpop.f32.mrf.mxu0
      %v4926 = vadd.f32 0.0, %v4925
      %v4927 = vpop.f32.mrf.mxu0
      %4928 = vmatprep.mubr.f32.mxu0 0.0
      %4929 = vmatmul.mubr.f32.gmra.mxu0 %v4735
      %v4930 = vpop.f32.mrf.mxu0
      %v4931 = vadd.f32 0.0, %v4930
      %v4932 = vpop.f32.mrf.mxu0
      %4933 = vmatprep.mubr.f32.mxu0 0.0
      %4934 = vmatmul.mubr.f32.gmra.mxu0 %v4738
      %v4935 = vpop.f32.mrf.mxu0
      %v4936 = vadd.f32 0.0, %v4935
      %v4937 = vpop.f32.mrf.mxu0
      %4938 = vmatprep.mubr.f32.mxu0 0.0
      %4939 = vmatmul.mubr.f32.gmra.mxu0 %v4741
      %v4940 = vpop.f32.mrf.mxu0
      %v4941 = vadd.f32 0.0, %v4940
      %v4942 = vpop.f32.mrf.mxu0
      %4943 = vmatprep.mubr.f32.mxu0 0.0
      %4944 = vmatmul.mubr.f32.gmra.mxu0 %v4744
      %v4945 = vpop.f32.mrf.mxu0
      %v4946 = vadd.f32 0.0, %v4945
      %v4947 = vpop.f32.mrf.mxu0
      %4948 = vmatprep.mubr.f32.mxu0 0.0
      %4949 = vmatmul.mubr.f32.gmra.mxu0 %v4747
      %v4950 = vpop.f32.mrf.mxu0
      %v4951 = vadd.f32 0.0, %v4950
      %v4952 = vpop.f32.mrf.mxu0
      %4953 = vmatprep.mubr.f32.mxu0 0.0
      %4954 = vmatmul.mubr.f32.gmra.mxu0 %v4750
      %v4955 = vpop.f32.mrf.mxu0
      %v4956 = vadd.f32 0.0, %v4955
      %v4957 = vpop.f32.mrf.mxu0
      %4958 = vmatprep.mubr.f32.mxu0 0.0
      %4959 = vmatmul.mubr.f32.gmra.mxu0 %v4753
      %v4960 = vpop.f32.mrf.mxu0
      %v4961 = vadd.f32 0.0, %v4960
      %v4962 = vpop.f32.mrf.mxu0
      %4963 = vmatprep.mubr.f32.mxu0 0.0
      %4964 = vmatmul.mubr.f32.gmra.mxu0 %v4756
      %v4965 = vpop.f32.mrf.mxu0
      %v4966 = vadd.f32 0.0, %v4965
      %v4967 = vpop.f32.mrf.mxu0
      %4968 = vmatprep.mubr.f32.mxu0 0.0
      %4969 = vmatmul.mubr.f32.gmra.mxu0 %v4759
      %v4970 = vpop.f32.mrf.mxu0
      %v4971 = vadd.f32 0.0, %v4970
      %v4972 = vpop.f32.mrf.mxu0
      %4973 = vmatprep.mubr.f32.mxu0 0.0
      %4974 = vmatmul.mubr.f32.gmra.mxu0 %v4762
      %v4975 = vpop.f32.mrf.mxu0
      %v4976 = vadd.f32 0.0, %v4975
      %v4977 = vpop.f32.mrf.mxu0
      %4978 = vmatprep.mubr.f32.mxu0 0.0
      %4979 = vmatmul.mubr.f32.gmra.mxu0 %v4765
      %v4980 = vpop.f32.mrf.mxu0
      %v4981 = vadd.f32 0.0, %v4980
      %v4982 = vpop.f32.mrf.mxu0
      %4983 = vmatprep.mubr.f32.mxu0 0.0
      %4984 = vmatmul.mubr.f32.gmra.mxu0 %v4768
      %v4985 = vpop.f32.mrf.mxu0
      %v4986 = vadd.f32 0.0, %v4985
      %v4987 = vpop.f32.mrf.mxu0
      %4988 = vmatprep.mubr.f32.mxu0 0.0
      %4989 = vmatmul.mubr.f32.gmra.mxu0 %v4771
      %v4990 = vpop.f32.mrf.mxu0
      %v4991 = vadd.f32 0.0, %v4990
      %v4992 = vpop.f32.mrf.mxu0
      %4993 = vmatprep.mubr.f32.mxu0 0.0
      %4994 = vmatmul.mubr.f32.gmra.mxu0 %v4774
      %v4995 = vpop.f32.mrf.mxu0
      %v4996 = vadd.f32 0.0, %v4995
      %v4997 = vpop.f32.mrf.mxu0
      %4998 = vmatprep.mubr.f32.mxu0 0.0
      %4999 = vmatmul.mubr.f32.gmra.mxu0 %v4777
      %v5000 = vpop.f32.mrf.mxu0
      %v5001 = vadd.f32 0.0, %v5000
      %v5002 = vpop.f32.mrf.mxu0
      %5003 = vdwg.mxu0
      %v5004 = vadd.f32 %v4244, %v4846
      %v5005 = vadd.f32 %v4245, %v4851
      %v5006 = vadd.f32 %v4246, %v4856
      %v5007 = vadd.f32 %v4247, %v4861
      %v5008 = vadd.f32 %v4248, %v4866
      %v5009 = vadd.f32 %v4249, %v4871
      %v5010 = vadd.f32 %v4250, %v4876
      %v5011 = vadd.f32 %v4251, %v4881
      %v5012 = vadd.f32 %v4252, %v4886
      %v5013 = vadd.f32 %v4253, %v4891
      %v5014 = vadd.f32 %v4254, %v4896
      %v5015 = vadd.f32 %v4255, %v4901
      %v5016 = vadd.f32 %v4256, %v4906
      %v5017 = vadd.f32 %v4257, %v4911
      %v5018 = vadd.f32 %v4258, %v4916
      %v5019 = vadd.f32 %v4259, %v4921
      %v5020 = vadd.f32 %v4260, %v4926
      %v5021 = vadd.f32 %v4261, %v4931
      %v5022 = vadd.f32 %v4262, %v4936
      %v5023 = vadd.f32 %v4263, %v4941
      %v5024 = vadd.f32 %v4264, %v4946
      %v5025 = vadd.f32 %v4265, %v4951
      %v5026 = vadd.f32 %v4266, %v4956
      %v5027 = vadd.f32 %v4267, %v4961
      %v5028 = vadd.f32 %v4268, %v4966
      %v5029 = vadd.f32 %v4269, %v4971
      %v5030 = vadd.f32 %v4270, %v4976
      %v5031 = vadd.f32 %v4271, %v4981
      %v5032 = vadd.f32 %v4272, %v4986
      %v5033 = vadd.f32 %v4273, %v4991
      %v5034 = vadd.f32 %v4274, %v4996
      %v5035 = vadd.f32 %v4275, %v5001
      %5036 = vmatprep.subr.mxu0 0.0
      %5037 = vmatpush1.msra.mxu0 0.0
      %5038 = vmatprep.subr.mxu0 0.0
      %5039 = vmatpush1.msra.mxu0 0.0
      %5040 = vmatprep.subr.mxu0 0.0
      %5041 = vmatpush1.msra.mxu0 0.0
      %5042 = vmatprep.subr.mxu0 0.0
      %5043 = vmatpush1.msra.mxu0 0.0
      %5044 = vmatprep.subr.mxu0 0.0
      %5045 = vmatpush1.msra.mxu0 0.0
      %5046 = vmatprep.subr.mxu0 0.0
      %5047 = vmatpush1.msra.mxu0 0.0
      %5048 = vmatprep.subr.mxu0 0.0
      %5049 = vmatpush1.msra.mxu0 0.0
      %5050 = vmatprep.subr.mxu0 0.0
      %5051 = vmatpush1.msra.mxu0 0.0
      %5052 = vmatprep.subr.mxu0 0.0
      %5053 = vmatpush1.msra.mxu0 0.0
      %5054 = vmatprep.subr.mxu0 0.0
      %5055 = vmatpush1.msra.mxu0 0.0
      %5056 = vmatprep.subr.mxu0 0.0
      %5057 = vmatpush1.msra.mxu0 0.0
      %5058 = vmatprep.subr.mxu0 0.0
      %5059 = vmatpush1.msra.mxu0 0.0
      %5060 = vmatprep.subr.mxu0 0.0
      %5061 = vmatpush1.msra.mxu0 %v453
      %5062 = vmatprep.subr.mxu0 0.0
      %5063 = vmatpush1.msra.mxu0 %v452
      %5064 = vmatprep.subr.mxu0 0.0
      %5065 = vmatpush1.msra.mxu0 %v451
      %5066 = vmatprep.subr.mxu0 0.0
      %5067 = vmatpush1.msra.mxu0 %v450
      %5068 = vmatprep.subr.mxu0 0.0
      %5069 = vmatpush2.msra.mxu0 0.0
      %5070 = vmatprep.subr.mxu0 0.0
      %5071 = vmatpush2.msra.mxu0 0.0
      %5072 = vmatprep.subr.mxu0 0.0
      %5073 = vmatpush2.msra.mxu0 0.0
      %5074 = vmatprep.subr.mxu0 0.0
      %5075 = vmatpush2.msra.mxu0 0.0
      %5076 = vmatprep.subr.mxu0 0.0
      %5077 = vmatpush2.msra.mxu0 0.0
      %5078 = vmatprep.subr.mxu0 0.0
      %5079 = vmatpush2.msra.mxu0 0.0
      %5080 = vmatprep.subr.mxu0 0.0
      %5081 = vmatpush2.msra.mxu0 0.0
      %5082 = vmatprep.subr.mxu0 0.0
      %5083 = vmatpush2.msra.mxu0 0.0
      %5084 = vmatprep.subr.mxu0 0.0
      %5085 = vmatpush2.msra.mxu0 0.0
      %5086 = vmatprep.subr.mxu0 0.0
      %5087 = vmatpush2.msra.mxu0 0.0
      %5088 = vmatprep.subr.mxu0 0.0
      %5089 = vmatpush2.msra.mxu0 0.0
      %5090 = vmatprep.subr.mxu0 0.0
      %5091 = vmatpush2.msra.mxu0 0.0
      %5092 = vmatprep.subr.mxu0 0.0
      %5093 = vmatpush2.msra.mxu0 0.0
      %5094 = vmatprep.subr.mxu0 0.0
      %5095 = vmatpush2.msra.mxu0 0.0
      %5096 = vmatprep.subr.mxu0 0.0
      %5097 = vmatpush2.msra.mxu0 0.0
      %5098 = vmatprep.subr.mxu0 0.0
      %5099 = vmatpush2.msra.mxu0 0.0
      %5100 = vmatprep.mubr.f32.mxu0 0.0
      %5101 = vmatmul.mubr.f32.gmra.mxu0 %v4684
      %v5102 = vpop.f32.mrf.mxu0
      %v5103 = vadd.f32 0.0, %v5102
      %v5104 = vpop.f32.mrf.mxu0
      %5105 = vmatprep.mubr.f32.mxu0 0.0
      %5106 = vmatmul.mubr.f32.gmra.mxu0 %v4687
      %v5107 = vpop.f32.mrf.mxu0
      %v5108 = vadd.f32 0.0, %v5107
      %v5109 = vpop.f32.mrf.mxu0
      %5110 = vmatprep.mubr.f32.mxu0 0.0
      %5111 = vmatmul.mubr.f32.gmra.mxu0 %v4690
      %v5112 = vpop.f32.mrf.mxu0
      %v5113 = vadd.f32 0.0, %v5112
      %v5114 = vpop.f32.mrf.mxu0
      %5115 = vmatprep.mubr.f32.mxu0 0.0
      %5116 = vmatmul.mubr.f32.gmra.mxu0 %v4693
      %v5117 = vpop.f32.mrf.mxu0
      %v5118 = vadd.f32 0.0, %v5117
      %v5119 = vpop.f32.mrf.mxu0
      %5120 = vmatprep.mubr.f32.mxu0 0.0
      %5121 = vmatmul.mubr.f32.gmra.mxu0 %v4696
      %v5122 = vpop.f32.mrf.mxu0
      %v5123 = vadd.f32 0.0, %v5122
      %v5124 = vpop.f32.mrf.mxu0
      %5125 = vmatprep.mubr.f32.mxu0 0.0
      %5126 = vmatmul.mubr.f32.gmra.mxu0 %v4699
      %v5127 = vpop.f32.mrf.mxu0
      %v5128 = vadd.f32 0.0, %v5127
      %v5129 = vpop.f32.mrf.mxu0
      %5130 = vmatprep.mubr.f32.mxu0 0.0
      %5131 = vmatmul.mubr.f32.gmra.mxu0 %v4702
      %v5132 = vpop.f32.mrf.mxu0
      %v5133 = vadd.f32 0.0, %v5132
      %v5134 = vpop.f32.mrf.mxu0
      %5135 = vmatprep.mubr.f32.mxu0 0.0
      %5136 = vmatmul.mubr.f32.gmra.mxu0 %v4705
      %v5137 = vpop.f32.mrf.mxu0
      %v5138 = vadd.f32 0.0, %v5137
      %v5139 = vpop.f32.mrf.mxu0
      %5140 = vmatprep.mubr.f32.mxu0 0.0
      %5141 = vmatmul.mubr.f32.gmra.mxu0 %v4708
      %v5142 = vpop.f32.mrf.mxu0
      %v5143 = vadd.f32 0.0, %v5142
      %v5144 = vpop.f32.mrf.mxu0
      %5145 = vmatprep.mubr.f32.mxu0 0.0
      %5146 = vmatmul.mubr.f32.gmra.mxu0 %v4711
      %v5147 = vpop.f32.mrf.mxu0
      %v5148 = vadd.f32 0.0, %v5147
      %v5149 = vpop.f32.mrf.mxu0
      %5150 = vmatprep.mubr.f32.mxu0 0.0
      %5151 = vmatmul.mubr.f32.gmra.mxu0 %v4714
      %v5152 = vpop.f32.mrf.mxu0
      %v5153 = vadd.f32 0.0, %v5152
      %v5154 = vpop.f32.mrf.mxu0
      %5155 = vmatprep.mubr.f32.mxu0 0.0
      %5156 = vmatmul.mubr.f32.gmra.mxu0 %v4717
      %v5157 = vpop.f32.mrf.mxu0
      %v5158 = vadd.f32 0.0, %v5157
      %v5159 = vpop.f32.mrf.mxu0
      %5160 = vmatprep.mubr.f32.mxu0 0.0
      %5161 = vmatmul.mubr.f32.gmra.mxu0 %v4720
      %v5162 = vpop.f32.mrf.mxu0
      %v5163 = vadd.f32 0.0, %v5162
      %v5164 = vpop.f32.mrf.mxu0
      %5165 = vmatprep.mubr.f32.mxu0 0.0
      %5166 = vmatmul.mubr.f32.gmra.mxu0 %v4723
      %v5167 = vpop.f32.mrf.mxu0
      %v5168 = vadd.f32 0.0, %v5167
      %v5169 = vpop.f32.mrf.mxu0
      %5170 = vmatprep.mubr.f32.mxu0 0.0
      %5171 = vmatmul.mubr.f32.gmra.mxu0 %v4726
      %v5172 = vpop.f32.mrf.mxu0
      %v5173 = vadd.f32 0.0, %v5172
      %v5174 = vpop.f32.mrf.mxu0
      %5175 = vmatprep.mubr.f32.mxu0 0.0
      %5176 = vmatmul.mubr.f32.gmra.mxu0 %v4729
      %v5177 = vpop.f32.mrf.mxu0
      %v5178 = vadd.f32 0.0, %v5177
      %v5179 = vpop.f32.mrf.mxu0
      %5180 = vmatprep.mubr.f32.mxu0 0.0
      %5181 = vmatmul.mubr.f32.gmra.mxu0 %v4732
      %v5182 = vpop.f32.mrf.mxu0
      %v5183 = vadd.f32 0.0, %v5182
      %v5184 = vpop.f32.mrf.mxu0
      %5185 = vmatprep.mubr.f32.mxu0 0.0
      %5186 = vmatmul.mubr.f32.gmra.mxu0 %v4735
      %v5187 = vpop.f32.mrf.mxu0
      %v5188 = vadd.f32 0.0, %v5187
      %v5189 = vpop.f32.mrf.mxu0
      %5190 = vmatprep.mubr.f32.mxu0 0.0
      %5191 = vmatmul.mubr.f32.gmra.mxu0 %v4738
      %v5192 = vpop.f32.mrf.mxu0
      %v5193 = vadd.f32 0.0, %v5192
      %v5194 = vpop.f32.mrf.mxu0
      %5195 = vmatprep.mubr.f32.mxu0 0.0
      %5196 = vmatmul.mubr.f32.gmra.mxu0 %v4741
      %v5197 = vpop.f32.mrf.mxu0
      %v5198 = vadd.f32 0.0, %v5197
      %v5199 = vpop.f32.mrf.mxu0
      %5200 = vmatprep.mubr.f32.mxu0 0.0
      %5201 = vmatmul.mubr.f32.gmra.mxu0 %v4744
      %v5202 = vpop.f32.mrf.mxu0
      %v5203 = vadd.f32 0.0, %v5202
      %v5204 = vpop.f32.mrf.mxu0
      %5205 = vmatprep.mubr.f32.mxu0 0.0
      %5206 = vmatmul.mubr.f32.gmra.mxu0 %v4747
      %v5207 = vpop.f32.mrf.mxu0
      %v5208 = vadd.f32 0.0, %v5207
      %v5209 = vpop.f32.mrf.mxu0
      %5210 = vmatprep.mubr.f32.mxu0 0.0
      %5211 = vmatmul.mubr.f32.gmra.mxu0 %v4750
      %v5212 = vpop.f32.mrf.mxu0
      %v5213 = vadd.f32 0.0, %v5212
      %v5214 = vpop.f32.mrf.mxu0
      %5215 = vmatprep.mubr.f32.mxu0 0.0
      %5216 = vmatmul.mubr.f32.gmra.mxu0 %v4753
      %v5217 = vpop.f32.mrf.mxu0
      %v5218 = vadd.f32 0.0, %v5217
      %v5219 = vpop.f32.mrf.mxu0
      %5220 = vmatprep.mubr.f32.mxu0 0.0
      %5221 = vmatmul.mubr.f32.gmra.mxu0 %v4756
      %v5222 = vpop.f32.mrf.mxu0
      %v5223 = vadd.f32 0.0, %v5222
      %v5224 = vpop.f32.mrf.mxu0
      %5225 = vmatprep.mubr.f32.mxu0 0.0
      %5226 = vmatmul.mubr.f32.gmra.mxu0 %v4759
      %v5227 = vpop.f32.mrf.mxu0
      %v5228 = vadd.f32 0.0, %v5227
      %v5229 = vpop.f32.mrf.mxu0
      %5230 = vmatprep.mubr.f32.mxu0 0.0
      %5231 = vmatmul.mubr.f32.gmra.mxu0 %v4762
      %v5232 = vpop.f32.mrf.mxu0
      %v5233 = vadd.f32 0.0, %v5232
      %v5234 = vpop.f32.mrf.mxu0
      %5235 = vmatprep.mubr.f32.mxu0 0.0
      %5236 = vmatmul.mubr.f32.gmra.mxu0 %v4765
      %v5237 = vpop.f32.mrf.mxu0
      %v5238 = vadd.f32 0.0, %v5237
      %v5239 = vpop.f32.mrf.mxu0
      %5240 = vmatprep.mubr.f32.mxu0 0.0
      %5241 = vmatmul.mubr.f32.gmra.mxu0 %v4768
      %v5242 = vpop.f32.mrf.mxu0
      %v5243 = vadd.f32 0.0, %v5242
      %v5244 = vpop.f32.mrf.mxu0
      %5245 = vmatprep.mubr.f32.mxu0 0.0
      %5246 = vmatmul.mubr.f32.gmra.mxu0 %v4771
      %v5247 = vpop.f32.mrf.mxu0
      %v5248 = vadd.f32 0.0, %v5247
      %v5249 = vpop.f32.mrf.mxu0
      %5250 = vmatprep.mubr.f32.mxu0 0.0
      %5251 = vmatmul.mubr.f32.gmra.mxu0 %v4774
      %v5252 = vpop.f32.mrf.mxu0
      %v5253 = vadd.f32 0.0, %v5252
      %v5254 = vpop.f32.mrf.mxu0
      %5255 = vmatprep.mubr.f32.mxu0 0.0
      %5256 = vmatmul.mubr.f32.gmra.mxu0 %v4777
      %v5257 = vpop.f32.mrf.mxu0
      %v5258 = vadd.f32 0.0, %v5257
      %v5259 = vpop.f32.mrf.mxu0
      %5260 = vdwg.mxu0
      %v5261 = vmax.f32 %v4501, %v5103
      %v5262 = vmax.f32 %v4502, %v5108
      %v5263 = vmax.f32 %v4503, %v5113
      %v5264 = vmax.f32 %v4504, %v5118
      %v5265 = vmax.f32 %v4505, %v5123
      %v5266 = vmax.f32 %v4506, %v5128
      %v5267 = vmax.f32 %v4507, %v5133
      %v5268 = vmax.f32 %v4508, %v5138
      %v5269 = vmax.f32 %v4509, %v5143
      %v5270 = vmax.f32 %v4510, %v5148
      %v5271 = vmax.f32 %v4511, %v5153
      %v5272 = vmax.f32 %v4512, %v5158
      %v5273 = vmax.f32 %v4513, %v5163
      %v5274 = vmax.f32 %v4514, %v5168
      %v5275 = vmax.f32 %v4515, %v5173
      %v5276 = vmax.f32 %v4516, %v5178
      %v5277 = vmax.f32 %v4517, %v5183
      %v5278 = vmax.f32 %v4518, %v5188
      %v5279 = vmax.f32 %v4519, %v5193
      %v5280 = vmax.f32 %v4520, %v5198
      %v5281 = vmax.f32 %v4521, %v5203
      %v5282 = vmax.f32 %v4522, %v5208
      %v5283 = vmax.f32 %v4523, %v5213
      %v5284 = vmax.f32 %v4524, %v5218
      %v5285 = vmax.f32 %v4525, %v5223
      %v5286 = vmax.f32 %v4526, %v5228
      %v5287 = vmax.f32 %v4527, %v5233
      %v5288 = vmax.f32 %v4528, %v5238
      %v5289 = vmax.f32 %v4529, %v5243
      %v5290 = vmax.f32 %v4530, %v5248
      %v5291 = vmax.f32 %v4531, %v5253
      %v5292 = vmax.f32 %v4532, %v5258
      %v5293 = vrot.slane %v560, 2
      %v5294 = vrot.slane %v561, 2
      %v5295 = vsel %vm4533, %v5293, %v5294
      %v5296 = vrot.slane %v562, 2
      %v5297 = vsel %vm4533, %v5294, %v5296
      %v5300 = vmul.f32 %v418, %v4541
      %v5301 = vmul.f32 %v419, %v4543
      %v5302 = vmul.f32 %v420, %v4546
      %v5303 = vmul.f32 %v421, %v4548
      %v5304 = vmul.f32 %v422, %v4551
      %v5305 = vmul.f32 %v423, %v4553
      %v5306 = vmul.f32 %v424, %v4556
      %v5307 = vmul.f32 %v425, %v4558
      %v5308 = vmul.f32 %v426, %v4561
      %v5309 = vmul.f32 %v427, %v4563
      %v5310 = vmul.f32 %v428, %v4566
      %v5311 = vmul.f32 %v429, %v4568
      %v5312 = vmul.f32 %v430, %v4571
      %v5313 = vmul.f32 %v431, %v4573
      %v5314 = vmul.f32 %v432, %v4576
      %v5315 = vmul.f32 %v433, %v4578
      %v5316 = vmul.f32 %v434, %v4581
      %v5317 = vmul.f32 %v435, %v4583
      %v5318 = vmul.f32 %v436, %v4586
      %v5319 = vmul.f32 %v437, %v4588
      %v5320 = vmul.f32 %v438, %v4591
      %v5321 = vmul.f32 %v439, %v4593
      %v5322 = vmul.f32 %v440, %v4596
      %v5323 = vmul.f32 %v441, %v4598
      %v5324 = vmul.f32 %v442, %v4601
      %v5325 = vmul.f32 %v443, %v4603
      %v5326 = vmul.f32 %v444, %v4606
      %v5327 = vmul.f32 %v445, %v4608
      %v5328 = vmul.f32 %v446, %v4611
      %v5329 = vmul.f32 %v447, %v4613
      %v5330 = vmul.f32 %v448, %v5295
      %v5331 = vmul.f32 %v449, %v5297
      %s5332 = scalar_lea.vmem %s1, 224
      %v5333 = vld [vmem:[%s5332] sm:$0xff]
      %v5334 = vld [vmem:[%s5332 + $0x8] sm:$0xff]
      %v5335 = vld [vmem:[%s5332 + $0x10] sm:$0xff]
      %v5336 = vld [vmem:[%s5332 + $0x18] sm:$0xff]
      %v5338 = vsel %vm602, %v5300, 0
      %v5341 = vsel %vm602, %v5301, 0
      %v5344 = vsel %vm602, %v5302, 0
      %v5347 = vsel %vm602, %v5303, 0
      %v5350 = vsel %vm602, %v5304, 0
      %v5353 = vsel %vm602, %v5305, 0
      %v5356 = vsel %vm602, %v5306, 0
      %v5359 = vsel %vm602, %v5307, 0
      %v5362 = vsel %vm602, %v5308, 0
      %v5365 = vsel %vm602, %v5309, 0
      %v5368 = vsel %vm602, %v5310, 0
      %v5371 = vsel %vm602, %v5311, 0
      %v5374 = vsel %vm602, %v5312, 0
      %v5377 = vsel %vm602, %v5313, 0
      %v5380 = vsel %vm602, %v5314, 0
      %v5383 = vsel %vm602, %v5315, 0
      %v5386 = vsel %vm602, %v5316, 0
      %v5389 = vsel %vm602, %v5317, 0
      %v5392 = vsel %vm602, %v5318, 0
      %v5395 = vsel %vm602, %v5319, 0
      %v5398 = vsel %vm602, %v5320, 0
      %v5401 = vsel %vm602, %v5321, 0
      %v5404 = vsel %vm602, %v5322, 0
      %v5407 = vsel %vm602, %v5323, 0
      %v5410 = vsel %vm602, %v5324, 0
      %v5413 = vsel %vm602, %v5325, 0
      %v5416 = vsel %vm602, %v5326, 0
      %v5419 = vsel %vm602, %v5327, 0
      %v5422 = vsel %vm602, %v5328, 0
      %v5425 = vsel %vm602, %v5329, 0
      %v5428 = vsel %vm602, %v5330, 0
      %v5431 = vsel %vm602, %v5331, 0
      %5433 = vmatprep.subr.mxu0 0.0
      %5434 = vmatpush1.msra.mxu0 0.0
      %5435 = vmatprep.subr.mxu0 0.0
      %5436 = vmatpush1.msra.mxu0 0.0
      %5437 = vmatprep.subr.mxu0 0.0
      %5438 = vmatpush1.msra.mxu0 0.0
      %5439 = vmatprep.subr.mxu0 0.0
      %5440 = vmatpush1.msra.mxu0 0.0
      %5441 = vmatprep.subr.mxu0 0.0
      %5442 = vmatpush1.msra.mxu0 0.0
      %5443 = vmatprep.subr.mxu0 0.0
      %5444 = vmatpush1.msra.mxu0 0.0
      %5445 = vmatprep.subr.mxu0 0.0
      %5446 = vmatpush1.msra.mxu0 0.0
      %5447 = vmatprep.subr.mxu0 0.0
      %5448 = vmatpush1.msra.mxu0 0.0
      %5449 = vmatprep.subr.mxu0 0.0
      %5450 = vmatpush1.msra.mxu0 0.0
      %5451 = vmatprep.subr.mxu0 0.0
      %5452 = vmatpush1.msra.mxu0 0.0
      %5453 = vmatprep.subr.mxu0 0.0
      %5454 = vmatpush1.msra.mxu0 0.0
      %5455 = vmatprep.subr.mxu0 0.0
      %5456 = vmatpush1.msra.mxu0 0.0
      %5457 = vmatprep.subr.mxu0 0.0
      %5458 = vmatpush1.msra.mxu0 %v5336
      %5459 = vmatprep.subr.mxu0 0.0
      %5460 = vmatpush1.msra.mxu0 %v5335
      %5461 = vmatprep.subr.mxu0 0.0
      %5462 = vmatpush1.msra.mxu0 %v5334
      %5463 = vmatprep.subr.mxu0 0.0
      %5464 = vmatpush1.msra.mxu0 %v5333
      %5465 = vmatprep.subr.mxu0 0.0
      %5466 = vmatpush2.msra.mxu0 0.0
      %5467 = vmatprep.subr.mxu0 0.0
      %5468 = vmatpush2.msra.mxu0 0.0
      %5469 = vmatprep.subr.mxu0 0.0
      %5470 = vmatpush2.msra.mxu0 0.0
      %5471 = vmatprep.subr.mxu0 0.0
      %5472 = vmatpush2.msra.mxu0 0.0
      %5473 = vmatprep.subr.mxu0 0.0
      %5474 = vmatpush2.msra.mxu0 0.0
      %5475 = vmatprep.subr.mxu0 0.0
      %5476 = vmatpush2.msra.mxu0 0.0
      %5477 = vmatprep.subr.mxu0 0.0
      %5478 = vmatpush2.msra.mxu0 0.0
      %5479 = vmatprep.subr.mxu0 0.0
      %5480 = vmatpush2.msra.mxu0 0.0
      %5481 = vmatprep.subr.mxu0 0.0
      %5482 = vmatpush2.msra.mxu0 0.0
      %5483 = vmatprep.subr.mxu0 0.0
      %5484 = vmatpush2.msra.mxu0 0.0
      %5485 = vmatprep.subr.mxu0 0.0
      %5486 = vmatpush2.msra.mxu0 0.0
      %5487 = vmatprep.subr.mxu0 0.0
      %5488 = vmatpush2.msra.mxu0 0.0
      %5489 = vmatprep.subr.mxu0 0.0
      %5490 = vmatpush2.msra.mxu0 0.0
      %5491 = vmatprep.subr.mxu0 0.0
      %5492 = vmatpush2.msra.mxu0 0.0
      %5493 = vmatprep.subr.mxu0 0.0
      %5494 = vmatpush2.msra.mxu0 0.0
      %5495 = vmatprep.subr.mxu0 0.0
      %5496 = vmatpush2.msra.mxu0 0.0
      %5497 = vmatprep.mubr.f32.mxu0 0.0
      %5498 = vmatmul.mubr.f32.gmra.mxu0 %v5338
      %v5499 = vpop.f32.mrf.mxu0
      %v5500 = vadd.f32 0.0, %v5499
      %v5501 = vpop.f32.mrf.mxu0
      %5502 = vmatprep.mubr.f32.mxu0 0.0
      %5503 = vmatmul.mubr.f32.gmra.mxu0 %v5341
      %v5504 = vpop.f32.mrf.mxu0
      %v5505 = vadd.f32 0.0, %v5504
      %v5506 = vpop.f32.mrf.mxu0
      %5507 = vmatprep.mubr.f32.mxu0 0.0
      %5508 = vmatmul.mubr.f32.gmra.mxu0 %v5344
      %v5509 = vpop.f32.mrf.mxu0
      %v5510 = vadd.f32 0.0, %v5509
      %v5511 = vpop.f32.mrf.mxu0
      %5512 = vmatprep.mubr.f32.mxu0 0.0
      %5513 = vmatmul.mubr.f32.gmra.mxu0 %v5347
      %v5514 = vpop.f32.mrf.mxu0
      %v5515 = vadd.f32 0.0, %v5514
      %v5516 = vpop.f32.mrf.mxu0
      %5517 = vmatprep.mubr.f32.mxu0 0.0
      %5518 = vmatmul.mubr.f32.gmra.mxu0 %v5350
      %v5519 = vpop.f32.mrf.mxu0
      %v5520 = vadd.f32 0.0, %v5519
      %v5521 = vpop.f32.mrf.mxu0
      %5522 = vmatprep.mubr.f32.mxu0 0.0
      %5523 = vmatmul.mubr.f32.gmra.mxu0 %v5353
      %v5524 = vpop.f32.mrf.mxu0
      %v5525 = vadd.f32 0.0, %v5524
      %v5526 = vpop.f32.mrf.mxu0
      %5527 = vmatprep.mubr.f32.mxu0 0.0
      %5528 = vmatmul.mubr.f32.gmra.mxu0 %v5356
      %v5529 = vpop.f32.mrf.mxu0
      %v5530 = vadd.f32 0.0, %v5529
      %v5531 = vpop.f32.mrf.mxu0
      %5532 = vmatprep.mubr.f32.mxu0 0.0
      %5533 = vmatmul.mubr.f32.gmra.mxu0 %v5359
      %v5534 = vpop.f32.mrf.mxu0
      %v5535 = vadd.f32 0.0, %v5534
      %v5536 = vpop.f32.mrf.mxu0
      %5537 = vmatprep.mubr.f32.mxu0 0.0
      %5538 = vmatmul.mubr.f32.gmra.mxu0 %v5362
      %v5539 = vpop.f32.mrf.mxu0
      %v5540 = vadd.f32 0.0, %v5539
      %v5541 = vpop.f32.mrf.mxu0
      %5542 = vmatprep.mubr.f32.mxu0 0.0
      %5543 = vmatmul.mubr.f32.gmra.mxu0 %v5365
      %v5544 = vpop.f32.mrf.mxu0
      %v5545 = vadd.f32 0.0, %v5544
      %v5546 = vpop.f32.mrf.mxu0
      %5547 = vmatprep.mubr.f32.mxu0 0.0
      %5548 = vmatmul.mubr.f32.gmra.mxu0 %v5368
      %v5549 = vpop.f32.mrf.mxu0
      %v5550 = vadd.f32 0.0, %v5549
      %v5551 = vpop.f32.mrf.mxu0
      %5552 = vmatprep.mubr.f32.mxu0 0.0
      %5553 = vmatmul.mubr.f32.gmra.mxu0 %v5371
      %v5554 = vpop.f32.mrf.mxu0
      %v5555 = vadd.f32 0.0, %v5554
      %v5556 = vpop.f32.mrf.mxu0
      %5557 = vmatprep.mubr.f32.mxu0 0.0
      %5558 = vmatmul.mubr.f32.gmra.mxu0 %v5374
      %v5559 = vpop.f32.mrf.mxu0
      %v5560 = vadd.f32 0.0, %v5559
      %v5561 = vpop.f32.mrf.mxu0
      %5562 = vmatprep.mubr.f32.mxu0 0.0
      %5563 = vmatmul.mubr.f32.gmra.mxu0 %v5377
      %v5564 = vpop.f32.mrf.mxu0
      %v5565 = vadd.f32 0.0, %v5564
      %v5566 = vpop.f32.mrf.mxu0
      %5567 = vmatprep.mubr.f32.mxu0 0.0
      %5568 = vmatmul.mubr.f32.gmra.mxu0 %v5380
      %v5569 = vpop.f32.mrf.mxu0
      %v5570 = vadd.f32 0.0, %v5569
      %v5571 = vpop.f32.mrf.mxu0
      %5572 = vmatprep.mubr.f32.mxu0 0.0
      %5573 = vmatmul.mubr.f32.gmra.mxu0 %v5383
      %v5574 = vpop.f32.mrf.mxu0
      %v5575 = vadd.f32 0.0, %v5574
      %v5576 = vpop.f32.mrf.mxu0
      %5577 = vmatprep.mubr.f32.mxu0 0.0
      %5578 = vmatmul.mubr.f32.gmra.mxu0 %v5386
      %v5579 = vpop.f32.mrf.mxu0
      %v5580 = vadd.f32 0.0, %v5579
      %v5581 = vpop.f32.mrf.mxu0
      %5582 = vmatprep.mubr.f32.mxu0 0.0
      %5583 = vmatmul.mubr.f32.gmra.mxu0 %v5389
      %v5584 = vpop.f32.mrf.mxu0
      %v5585 = vadd.f32 0.0, %v5584
      %v5586 = vpop.f32.mrf.mxu0
      %5587 = vmatprep.mubr.f32.mxu0 0.0
      %5588 = vmatmul.mubr.f32.gmra.mxu0 %v5392
      %v5589 = vpop.f32.mrf.mxu0
      %v5590 = vadd.f32 0.0, %v5589
      %v5591 = vpop.f32.mrf.mxu0
      %5592 = vmatprep.mubr.f32.mxu0 0.0
      %5593 = vmatmul.mubr.f32.gmra.mxu0 %v5395
      %v5594 = vpop.f32.mrf.mxu0
      %v5595 = vadd.f32 0.0, %v5594
      %v5596 = vpop.f32.mrf.mxu0
      %5597 = vmatprep.mubr.f32.mxu0 0.0
      %5598 = vmatmul.mubr.f32.gmra.mxu0 %v5398
      %v5599 = vpop.f32.mrf.mxu0
      %v5600 = vadd.f32 0.0, %v5599
      %v5601 = vpop.f32.mrf.mxu0
      %5602 = vmatprep.mubr.f32.mxu0 0.0
      %5603 = vmatmul.mubr.f32.gmra.mxu0 %v5401
      %v5604 = vpop.f32.mrf.mxu0
      %v5605 = vadd.f32 0.0, %v5604
      %v5606 = vpop.f32.mrf.mxu0
      %5607 = vmatprep.mubr.f32.mxu0 0.0
      %5608 = vmatmul.mubr.f32.gmra.mxu0 %v5404
      %v5609 = vpop.f32.mrf.mxu0
      %v5610 = vadd.f32 0.0, %v5609
      %v5611 = vpop.f32.mrf.mxu0
      %5612 = vmatprep.mubr.f32.mxu0 0.0
      %5613 = vmatmul.mubr.f32.gmra.mxu0 %v5407
      %v5614 = vpop.f32.mrf.mxu0
      %v5615 = vadd.f32 0.0, %v5614
      %v5616 = vpop.f32.mrf.mxu0
      %5617 = vmatprep.mubr.f32.mxu0 0.0
      %5618 = vmatmul.mubr.f32.gmra.mxu0 %v5410
      %v5619 = vpop.f32.mrf.mxu0
      %v5620 = vadd.f32 0.0, %v5619
      %v5621 = vpop.f32.mrf.mxu0
      %5622 = vmatprep.mubr.f32.mxu0 0.0
      %5623 = vmatmul.mubr.f32.gmra.mxu0 %v5413
      %v5624 = vpop.f32.mrf.mxu0
      %v5625 = vadd.f32 0.0, %v5624
      %v5626 = vpop.f32.mrf.mxu0
      %5627 = vmatprep.mubr.f32.mxu0 0.0
      %5628 = vmatmul.mubr.f32.gmra.mxu0 %v5416
      %v5629 = vpop.f32.mrf.mxu0
      %v5630 = vadd.f32 0.0, %v5629
      %v5631 = vpop.f32.mrf.mxu0
      %5632 = vmatprep.mubr.f32.mxu0 0.0
      %5633 = vmatmul.mubr.f32.gmra.mxu0 %v5419
      %v5634 = vpop.f32.mrf.mxu0
      %v5635 = vadd.f32 0.0, %v5634
      %v5636 = vpop.f32.mrf.mxu0
      %5637 = vmatprep.mubr.f32.mxu0 0.0
      %5638 = vmatmul.mubr.f32.gmra.mxu0 %v5422
      %v5639 = vpop.f32.mrf.mxu0
      %v5640 = vadd.f32 0.0, %v5639
      %v5641 = vpop.f32.mrf.mxu0
      %5642 = vmatprep.mubr.f32.mxu0 0.0
      %5643 = vmatmul.mubr.f32.gmra.mxu0 %v5425
      %v5644 = vpop.f32.mrf.mxu0
      %v5645 = vadd.f32 0.0, %v5644
      %v5646 = vpop.f32.mrf.mxu0
      %5647 = vmatprep.mubr.f32.mxu0 0.0
      %5648 = vmatmul.mubr.f32.gmra.mxu0 %v5428
      %v5649 = vpop.f32.mrf.mxu0
      %v5650 = vadd.f32 0.0, %v5649
      %v5651 = vpop.f32.mrf.mxu0
      %5652 = vmatprep.mubr.f32.mxu0 0.0
      %5653 = vmatmul.mubr.f32.gmra.mxu0 %v5431
      %v5654 = vpop.f32.mrf.mxu0
      %v5655 = vadd.f32 0.0, %v5654
      %v5656 = vpop.f32.mrf.mxu0
      %5657 = vdwg.mxu0
      %v5658 = vadd.f32 %v5004, %v5500
      %v5659 = vadd.f32 %v5005, %v5505
      %v5660 = vadd.f32 %v5006, %v5510
      %v5661 = vadd.f32 %v5007, %v5515
      %v5662 = vadd.f32 %v5008, %v5520
      %v5663 = vadd.f32 %v5009, %v5525
      %v5664 = vadd.f32 %v5010, %v5530
      %v5665 = vadd.f32 %v5011, %v5535
      %v5666 = vadd.f32 %v5012, %v5540
      %v5667 = vadd.f32 %v5013, %v5545
      %v5668 = vadd.f32 %v5014, %v5550
      %v5669 = vadd.f32 %v5015, %v5555
      %v5670 = vadd.f32 %v5016, %v5560
      %v5671 = vadd.f32 %v5017, %v5565
      %v5672 = vadd.f32 %v5018, %v5570
      %v5673 = vadd.f32 %v5019, %v5575
      %v5674 = vadd.f32 %v5020, %v5580
      %v5675 = vadd.f32 %v5021, %v5585
      %v5676 = vadd.f32 %v5022, %v5590
      %v5677 = vadd.f32 %v5023, %v5595
      %v5678 = vadd.f32 %v5024, %v5600
      %v5679 = vadd.f32 %v5025, %v5605
      %v5680 = vadd.f32 %v5026, %v5610
      %v5681 = vadd.f32 %v5027, %v5615
      %v5682 = vadd.f32 %v5028, %v5620
      %v5683 = vadd.f32 %v5029, %v5625
      %v5684 = vadd.f32 %v5030, %v5630
      %v5685 = vadd.f32 %v5031, %v5635
      %v5686 = vadd.f32 %v5032, %v5640
      %v5687 = vadd.f32 %v5033, %v5645
      %v5688 = vadd.f32 %v5034, %v5650
      %v5689 = vadd.f32 %v5035, %v5655
      %5690 = vmatprep.subr.mxu0 0.0
      %5691 = vmatpush1.msra.mxu0 0.0
      %5692 = vmatprep.subr.mxu0 0.0
      %5693 = vmatpush1.msra.mxu0 0.0
      %5694 = vmatprep.subr.mxu0 0.0
      %5695 = vmatpush1.msra.mxu0 0.0
      %5696 = vmatprep.subr.mxu0 0.0
      %5697 = vmatpush1.msra.mxu0 0.0
      %5698 = vmatprep.subr.mxu0 0.0
      %5699 = vmatpush1.msra.mxu0 0.0
      %5700 = vmatprep.subr.mxu0 0.0
      %5701 = vmatpush1.msra.mxu0 0.0
      %5702 = vmatprep.subr.mxu0 0.0
      %5703 = vmatpush1.msra.mxu0 0.0
      %5704 = vmatprep.subr.mxu0 0.0
      %5705 = vmatpush1.msra.mxu0 0.0
      %5706 = vmatprep.subr.mxu0 0.0
      %5707 = vmatpush1.msra.mxu0 0.0
      %5708 = vmatprep.subr.mxu0 0.0
      %5709 = vmatpush1.msra.mxu0 0.0
      %5710 = vmatprep.subr.mxu0 0.0
      %5711 = vmatpush1.msra.mxu0 0.0
      %5712 = vmatprep.subr.mxu0 0.0
      %5713 = vmatpush1.msra.mxu0 0.0
      %5714 = vmatprep.subr.mxu0 0.0
      %5715 = vmatpush1.msra.mxu0 %v453
      %5716 = vmatprep.subr.mxu0 0.0
      %5717 = vmatpush1.msra.mxu0 %v452
      %5718 = vmatprep.subr.mxu0 0.0
      %5719 = vmatpush1.msra.mxu0 %v451
      %5720 = vmatprep.subr.mxu0 0.0
      %5721 = vmatpush1.msra.mxu0 %v450
      %5722 = vmatprep.subr.mxu0 0.0
      %5723 = vmatpush2.msra.mxu0 0.0
      %5724 = vmatprep.subr.mxu0 0.0
      %5725 = vmatpush2.msra.mxu0 0.0
      %5726 = vmatprep.subr.mxu0 0.0
      %5727 = vmatpush2.msra.mxu0 0.0
      %5728 = vmatprep.subr.mxu0 0.0
      %5729 = vmatpush2.msra.mxu0 0.0
      %5730 = vmatprep.subr.mxu0 0.0
      %5731 = vmatpush2.msra.mxu0 0.0
      %5732 = vmatprep.subr.mxu0 0.0
      %5733 = vmatpush2.msra.mxu0 0.0
      %5734 = vmatprep.subr.mxu0 0.0
      %5735 = vmatpush2.msra.mxu0 0.0
      %5736 = vmatprep.subr.mxu0 0.0
      %5737 = vmatpush2.msra.mxu0 0.0
      %5738 = vmatprep.subr.mxu0 0.0
      %5739 = vmatpush2.msra.mxu0 0.0
      %5740 = vmatprep.subr.mxu0 0.0
      %5741 = vmatpush2.msra.mxu0 0.0
      %5742 = vmatprep.subr.mxu0 0.0
      %5743 = vmatpush2.msra.mxu0 0.0
      %5744 = vmatprep.subr.mxu0 0.0
      %5745 = vmatpush2.msra.mxu0 0.0
      %5746 = vmatprep.subr.mxu0 0.0
      %5747 = vmatpush2.msra.mxu0 0.0
      %5748 = vmatprep.subr.mxu0 0.0
      %5749 = vmatpush2.msra.mxu0 0.0
      %5750 = vmatprep.subr.mxu0 0.0
      %5751 = vmatpush2.msra.mxu0 0.0
      %5752 = vmatprep.subr.mxu0 0.0
      %5753 = vmatpush2.msra.mxu0 0.0
      %5754 = vmatprep.mubr.f32.mxu0 0.0
      %5755 = vmatmul.mubr.f32.gmra.mxu0 %v5338
      %v5756 = vpop.f32.mrf.mxu0
      %v5757 = vadd.f32 0.0, %v5756
      %v5758 = vpop.f32.mrf.mxu0
      %5759 = vmatprep.mubr.f32.mxu0 0.0
      %5760 = vmatmul.mubr.f32.gmra.mxu0 %v5341
      %v5761 = vpop.f32.mrf.mxu0
      %v5762 = vadd.f32 0.0, %v5761
      %v5763 = vpop.f32.mrf.mxu0
      %5764 = vmatprep.mubr.f32.mxu0 0.0
      %5765 = vmatmul.mubr.f32.gmra.mxu0 %v5344
      %v5766 = vpop.f32.mrf.mxu0
      %v5767 = vadd.f32 0.0, %v5766
      %v5768 = vpop.f32.mrf.mxu0
      %5769 = vmatprep.mubr.f32.mxu0 0.0
      %5770 = vmatmul.mubr.f32.gmra.mxu0 %v5347
      %v5771 = vpop.f32.mrf.mxu0
      %v5772 = vadd.f32 0.0, %v5771
      %v5773 = vpop.f32.mrf.mxu0
      %5774 = vmatprep.mubr.f32.mxu0 0.0
      %5775 = vmatmul.mubr.f32.gmra.mxu0 %v5350
      %v5776 = vpop.f32.mrf.mxu0
      %v5777 = vadd.f32 0.0, %v5776
      %v5778 = vpop.f32.mrf.mxu0
      %5779 = vmatprep.mubr.f32.mxu0 0.0
      %5780 = vmatmul.mubr.f32.gmra.mxu0 %v5353
      %v5781 = vpop.f32.mrf.mxu0
      %v5782 = vadd.f32 0.0, %v5781
      %v5783 = vpop.f32.mrf.mxu0
      %5784 = vmatprep.mubr.f32.mxu0 0.0
      %5785 = vmatmul.mubr.f32.gmra.mxu0 %v5356
      %v5786 = vpop.f32.mrf.mxu0
      %v5787 = vadd.f32 0.0, %v5786
      %v5788 = vpop.f32.mrf.mxu0
      %5789 = vmatprep.mubr.f32.mxu0 0.0
      %5790 = vmatmul.mubr.f32.gmra.mxu0 %v5359
      %v5791 = vpop.f32.mrf.mxu0
      %v5792 = vadd.f32 0.0, %v5791
      %v5793 = vpop.f32.mrf.mxu0
      %5794 = vmatprep.mubr.f32.mxu0 0.0
      %5795 = vmatmul.mubr.f32.gmra.mxu0 %v5362
      %v5796 = vpop.f32.mrf.mxu0
      %v5797 = vadd.f32 0.0, %v5796
      %v5798 = vpop.f32.mrf.mxu0
      %5799 = vmatprep.mubr.f32.mxu0 0.0
      %5800 = vmatmul.mubr.f32.gmra.mxu0 %v5365
      %v5801 = vpop.f32.mrf.mxu0
      %v5802 = vadd.f32 0.0, %v5801
      %v5803 = vpop.f32.mrf.mxu0
      %5804 = vmatprep.mubr.f32.mxu0 0.0
      %5805 = vmatmul.mubr.f32.gmra.mxu0 %v5368
      %v5806 = vpop.f32.mrf.mxu0
      %v5807 = vadd.f32 0.0, %v5806
      %v5808 = vpop.f32.mrf.mxu0
      %5809 = vmatprep.mubr.f32.mxu0 0.0
      %5810 = vmatmul.mubr.f32.gmra.mxu0 %v5371
      %v5811 = vpop.f32.mrf.mxu0
      %v5812 = vadd.f32 0.0, %v5811
      %v5813 = vpop.f32.mrf.mxu0
      %5814 = vmatprep.mubr.f32.mxu0 0.0
      %5815 = vmatmul.mubr.f32.gmra.mxu0 %v5374
      %v5816 = vpop.f32.mrf.mxu0
      %v5817 = vadd.f32 0.0, %v5816
      %v5818 = vpop.f32.mrf.mxu0
      %5819 = vmatprep.mubr.f32.mxu0 0.0
      %5820 = vmatmul.mubr.f32.gmra.mxu0 %v5377
      %v5821 = vpop.f32.mrf.mxu0
      %v5822 = vadd.f32 0.0, %v5821
      %v5823 = vpop.f32.mrf.mxu0
      %5824 = vmatprep.mubr.f32.mxu0 0.0
      %5825 = vmatmul.mubr.f32.gmra.mxu0 %v5380
      %v5826 = vpop.f32.mrf.mxu0
      %v5827 = vadd.f32 0.0, %v5826
      %v5828 = vpop.f32.mrf.mxu0
      %5829 = vmatprep.mubr.f32.mxu0 0.0
      %5830 = vmatmul.mubr.f32.gmra.mxu0 %v5383
      %v5831 = vpop.f32.mrf.mxu0
      %v5832 = vadd.f32 0.0, %v5831
      %v5833 = vpop.f32.mrf.mxu0
      %5834 = vmatprep.mubr.f32.mxu0 0.0
      %5835 = vmatmul.mubr.f32.gmra.mxu0 %v5386
      %v5836 = vpop.f32.mrf.mxu0
      %v5837 = vadd.f32 0.0, %v5836
      %v5838 = vpop.f32.mrf.mxu0
      %5839 = vmatprep.mubr.f32.mxu0 0.0
      %5840 = vmatmul.mubr.f32.gmra.mxu0 %v5389
      %v5841 = vpop.f32.mrf.mxu0
      %v5842 = vadd.f32 0.0, %v5841
      %v5843 = vpop.f32.mrf.mxu0
      %5844 = vmatprep.mubr.f32.mxu0 0.0
      %5845 = vmatmul.mubr.f32.gmra.mxu0 %v5392
      %v5846 = vpop.f32.mrf.mxu0
      %v5847 = vadd.f32 0.0, %v5846
      %v5848 = vpop.f32.mrf.mxu0
      %5849 = vmatprep.mubr.f32.mxu0 0.0
      %5850 = vmatmul.mubr.f32.gmra.mxu0 %v5395
      %v5851 = vpop.f32.mrf.mxu0
      %v5852 = vadd.f32 0.0, %v5851
      %v5853 = vpop.f32.mrf.mxu0
      %5854 = vmatprep.mubr.f32.mxu0 0.0
      %5855 = vmatmul.mubr.f32.gmra.mxu0 %v5398
      %v5856 = vpop.f32.mrf.mxu0
      %v5857 = vadd.f32 0.0, %v5856
      %v5858 = vpop.f32.mrf.mxu0
      %5859 = vmatprep.mubr.f32.mxu0 0.0
      %5860 = vmatmul.mubr.f32.gmra.mxu0 %v5401
      %v5861 = vpop.f32.mrf.mxu0
      %v5862 = vadd.f32 0.0, %v5861
      %v5863 = vpop.f32.mrf.mxu0
      %5864 = vmatprep.mubr.f32.mxu0 0.0
      %5865 = vmatmul.mubr.f32.gmra.mxu0 %v5404
      %v5866 = vpop.f32.mrf.mxu0
      %v5867 = vadd.f32 0.0, %v5866
      %v5868 = vpop.f32.mrf.mxu0
      %5869 = vmatprep.mubr.f32.mxu0 0.0
      %5870 = vmatmul.mubr.f32.gmra.mxu0 %v5407
      %v5871 = vpop.f32.mrf.mxu0
      %v5872 = vadd.f32 0.0, %v5871
      %v5873 = vpop.f32.mrf.mxu0
      %5874 = vmatprep.mubr.f32.mxu0 0.0
      %5875 = vmatmul.mubr.f32.gmra.mxu0 %v5410
      %v5876 = vpop.f32.mrf.mxu0
      %v5877 = vadd.f32 0.0, %v5876
      %v5878 = vpop.f32.mrf.mxu0
      %5879 = vmatprep.mubr.f32.mxu0 0.0
      %5880 = vmatmul.mubr.f32.gmra.mxu0 %v5413
      %v5881 = vpop.f32.mrf.mxu0
      %v5882 = vadd.f32 0.0, %v5881
      %v5883 = vpop.f32.mrf.mxu0
      %5884 = vmatprep.mubr.f32.mxu0 0.0
      %5885 = vmatmul.mubr.f32.gmra.mxu0 %v5416
      %v5886 = vpop.f32.mrf.mxu0
      %v5887 = vadd.f32 0.0, %v5886
      %v5888 = vpop.f32.mrf.mxu0
      %5889 = vmatprep.mubr.f32.mxu0 0.0
      %5890 = vmatmul.mubr.f32.gmra.mxu0 %v5419
      %v5891 = vpop.f32.mrf.mxu0
      %v5892 = vadd.f32 0.0, %v5891
      %v5893 = vpop.f32.mrf.mxu0
      %5894 = vmatprep.mubr.f32.mxu0 0.0
      %5895 = vmatmul.mubr.f32.gmra.mxu0 %v5422
      %v5896 = vpop.f32.mrf.mxu0
      %v5897 = vadd.f32 0.0, %v5896
      %v5898 = vpop.f32.mrf.mxu0
      %5899 = vmatprep.mubr.f32.mxu0 0.0
      %5900 = vmatmul.mubr.f32.gmra.mxu0 %v5425
      %v5901 = vpop.f32.mrf.mxu0
      %v5902 = vadd.f32 0.0, %v5901
      %v5903 = vpop.f32.mrf.mxu0
      %5904 = vmatprep.mubr.f32.mxu0 0.0
      %5905 = vmatmul.mubr.f32.gmra.mxu0 %v5428
      %v5906 = vpop.f32.mrf.mxu0
      %v5907 = vadd.f32 0.0, %v5906
      %v5908 = vpop.f32.mrf.mxu0
      %5909 = vmatprep.mubr.f32.mxu0 0.0
      %5910 = vmatmul.mubr.f32.gmra.mxu0 %v5431
      %v5911 = vpop.f32.mrf.mxu0
      %v5912 = vadd.f32 0.0, %v5911
      %v5913 = vpop.f32.mrf.mxu0
      %5914 = vdwg.mxu0
      %v5915 = vmax.f32 %v5261, %v5757
      %v5916 = vmax.f32 %v5262, %v5762
      %v5917 = vmax.f32 %v5263, %v5767
      %v5918 = vmax.f32 %v5264, %v5772
      %v5919 = vmax.f32 %v5265, %v5777
      %v5920 = vmax.f32 %v5266, %v5782
      %v5921 = vmax.f32 %v5267, %v5787
      %v5922 = vmax.f32 %v5268, %v5792
      %v5923 = vmax.f32 %v5269, %v5797
      %v5924 = vmax.f32 %v5270, %v5802
      %v5925 = vmax.f32 %v5271, %v5807
      %v5926 = vmax.f32 %v5272, %v5812
      %v5927 = vmax.f32 %v5273, %v5817
      %v5928 = vmax.f32 %v5274, %v5822
      %v5929 = vmax.f32 %v5275, %v5827
      %v5930 = vmax.f32 %v5276, %v5832
      %v5931 = vmax.f32 %v5277, %v5837
      %v5932 = vmax.f32 %v5278, %v5842
      %v5933 = vmax.f32 %v5279, %v5847
      %v5934 = vmax.f32 %v5280, %v5852
      %v5935 = vmax.f32 %v5281, %v5857
      %v5936 = vmax.f32 %v5282, %v5862
      %v5937 = vmax.f32 %v5283, %v5867
      %v5938 = vmax.f32 %v5284, %v5872
      %v5939 = vmax.f32 %v5285, %v5877
      %v5940 = vmax.f32 %v5286, %v5882
      %v5941 = vmax.f32 %v5287, %v5887
      %v5942 = vmax.f32 %v5288, %v5892
      %v5943 = vmax.f32 %v5289, %v5897
      %v5944 = vmax.f32 %v5290, %v5902
      %v5945 = vmax.f32 %v5291, %v5907
      %v5946 = vmax.f32 %v5292, %v5912
      %v5947 = vrot.slane %v563, 2
      %v5948 = vrot.slane %v564, 2
      %v5949 = vsel %vm4533, %v5947, %v5948
      %v5950 = vrot.slane %v565, 2
      %v5951 = vsel %vm4533, %v5948, %v5950
      %v5954 = vmul.f32 %v418, %v4546
      %v5955 = vmul.f32 %v419, %v4548
      %v5956 = vmul.f32 %v420, %v4551
      %v5957 = vmul.f32 %v421, %v4553
      %v5958 = vmul.f32 %v422, %v4556
      %v5959 = vmul.f32 %v423, %v4558
      %v5960 = vmul.f32 %v424, %v4561
      %v5961 = vmul.f32 %v425, %v4563
      %v5962 = vmul.f32 %v426, %v4566
      %v5963 = vmul.f32 %v427, %v4568
      %v5964 = vmul.f32 %v428, %v4571
      %v5965 = vmul.f32 %v429, %v4573
      %v5966 = vmul.f32 %v430, %v4576
      %v5967 = vmul.f32 %v431, %v4578
      %v5968 = vmul.f32 %v432, %v4581
      %v5969 = vmul.f32 %v433, %v4583
      %v5970 = vmul.f32 %v434, %v4586
      %v5971 = vmul.f32 %v435, %v4588
      %v5972 = vmul.f32 %v436, %v4591
      %v5973 = vmul.f32 %v437, %v4593
      %v5974 = vmul.f32 %v438, %v4596
      %v5975 = vmul.f32 %v439, %v4598
      %v5976 = vmul.f32 %v440, %v4601
      %v5977 = vmul.f32 %v441, %v4603
      %v5978 = vmul.f32 %v442, %v4606
      %v5979 = vmul.f32 %v443, %v4608
      %v5980 = vmul.f32 %v444, %v4611
      %v5981 = vmul.f32 %v445, %v4613
      %v5982 = vmul.f32 %v446, %v5295
      %v5983 = vmul.f32 %v447, %v5297
      %v5984 = vmul.f32 %v448, %v5949
      %v5985 = vmul.f32 %v449, %v5951
      %s5986 = scalar_lea.vmem %s1, 256
      %v5987 = vld [vmem:[%s5986] sm:$0xff]
      %v5988 = vld [vmem:[%s5986 + $0x8] sm:$0xff]
      %v5989 = vld [vmem:[%s5986 + $0x10] sm:$0xff]
      %v5990 = vld [vmem:[%s5986 + $0x18] sm:$0xff]
      %v5992 = vsel %vm602, %v5954, 0
      %v5995 = vsel %vm602, %v5955, 0
      %v5998 = vsel %vm602, %v5956, 0
      %v6001 = vsel %vm602, %v5957, 0
      %v6004 = vsel %vm602, %v5958, 0
      %v6007 = vsel %vm602, %v5959, 0
      %v6010 = vsel %vm602, %v5960, 0
      %v6013 = vsel %vm602, %v5961, 0
      %v6016 = vsel %vm602, %v5962, 0
      %v6019 = vsel %vm602, %v5963, 0
      %v6022 = vsel %vm602, %v5964, 0
      %v6025 = vsel %vm602, %v5965, 0
      %v6028 = vsel %vm602, %v5966, 0
      %v6031 = vsel %vm602, %v5967, 0
      %v6034 = vsel %vm602, %v5968, 0
      %v6037 = vsel %vm602, %v5969, 0
      %v6040 = vsel %vm602, %v5970, 0
      %v6043 = vsel %vm602, %v5971, 0
      %v6046 = vsel %vm602, %v5972, 0
      %v6049 = vsel %vm602, %v5973, 0
      %v6052 = vsel %vm602, %v5974, 0
      %v6055 = vsel %vm602, %v5975, 0
      %v6058 = vsel %vm602, %v5976, 0
      %v6061 = vsel %vm602, %v5977, 0
      %v6064 = vsel %vm602, %v5978, 0
      %v6067 = vsel %vm602, %v5979, 0
      %v6070 = vsel %vm602, %v5980, 0
      %v6073 = vsel %vm602, %v5981, 0
      %v6076 = vsel %vm602, %v5982, 0
      %v6079 = vsel %vm602, %v5983, 0
      %v6082 = vsel %vm602, %v5984, 0
      %v6085 = vsel %vm602, %v5985, 0
      %6087 = vmatprep.subr.mxu0 0.0
      %6088 = vmatpush1.msra.mxu0 0.0
      %6089 = vmatprep.subr.mxu0 0.0
      %6090 = vmatpush1.msra.mxu0 0.0
      %6091 = vmatprep.subr.mxu0 0.0
      %6092 = vmatpush1.msra.mxu0 0.0
      %6093 = vmatprep.subr.mxu0 0.0
      %6094 = vmatpush1.msra.mxu0 0.0
      %6095 = vmatprep.subr.mxu0 0.0
      %6096 = vmatpush1.msra.mxu0 0.0
      %6097 = vmatprep.subr.mxu0 0.0
      %6098 = vmatpush1.msra.mxu0 0.0
      %6099 = vmatprep.subr.mxu0 0.0
      %6100 = vmatpush1.msra.mxu0 0.0
      %6101 = vmatprep.subr.mxu0 0.0
      %6102 = vmatpush1.msra.mxu0 0.0
      %6103 = vmatprep.subr.mxu0 0.0
      %6104 = vmatpush1.msra.mxu0 0.0
      %6105 = vmatprep.subr.mxu0 0.0
      %6106 = vmatpush1.msra.mxu0 0.0
      %6107 = vmatprep.subr.mxu0 0.0
      %6108 = vmatpush1.msra.mxu0 0.0
      %6109 = vmatprep.subr.mxu0 0.0
      %6110 = vmatpush1.msra.mxu0 0.0
      %6111 = vmatprep.subr.mxu0 0.0
      %6112 = vmatpush1.msra.mxu0 %v5990
      %6113 = vmatprep.subr.mxu0 0.0
      %6114 = vmatpush1.msra.mxu0 %v5989
      %6115 = vmatprep.subr.mxu0 0.0
      %6116 = vmatpush1.msra.mxu0 %v5988
      %6117 = vmatprep.subr.mxu0 0.0
      %6118 = vmatpush1.msra.mxu0 %v5987
      %6119 = vmatprep.subr.mxu0 0.0
      %6120 = vmatpush2.msra.mxu0 0.0
      %6121 = vmatprep.subr.mxu0 0.0
      %6122 = vmatpush2.msra.mxu0 0.0
      %6123 = vmatprep.subr.mxu0 0.0
      %6124 = vmatpush2.msra.mxu0 0.0
      %6125 = vmatprep.subr.mxu0 0.0
      %6126 = vmatpush2.msra.mxu0 0.0
      %6127 = vmatprep.subr.mxu0 0.0
      %6128 = vmatpush2.msra.mxu0 0.0
      %6129 = vmatprep.subr.mxu0 0.0
      %6130 = vmatpush2.msra.mxu0 0.0
      %6131 = vmatprep.subr.mxu0 0.0
      %6132 = vmatpush2.msra.mxu0 0.0
      %6133 = vmatprep.subr.mxu0 0.0
      %6134 = vmatpush2.msra.mxu0 0.0
      %6135 = vmatprep.subr.mxu0 0.0
      %6136 = vmatpush2.msra.mxu0 0.0
      %6137 = vmatprep.subr.mxu0 0.0
      %6138 = vmatpush2.msra.mxu0 0.0
      %6139 = vmatprep.subr.mxu0 0.0
      %6140 = vmatpush2.msra.mxu0 0.0
      %6141 = vmatprep.subr.mxu0 0.0
      %6142 = vmatpush2.msra.mxu0 0.0
      %6143 = vmatprep.subr.mxu0 0.0
      %6144 = vmatpush2.msra.mxu0 0.0
      %6145 = vmatprep.subr.mxu0 0.0
      %6146 = vmatpush2.msra.mxu0 0.0
      %6147 = vmatprep.subr.mxu0 0.0
      %6148 = vmatpush2.msra.mxu0 0.0
      %6149 = vmatprep.subr.mxu0 0.0
      %6150 = vmatpush2.msra.mxu0 0.0
      %6151 = vmatprep.mubr.f32.mxu0 0.0
      %6152 = vmatmul.mubr.f32.gmra.mxu0 %v5992
      %v6153 = vpop.f32.mrf.mxu0
      %v6154 = vadd.f32 0.0, %v6153
      %v6155 = vpop.f32.mrf.mxu0
      %6156 = vmatprep.mubr.f32.mxu0 0.0
      %6157 = vmatmul.mubr.f32.gmra.mxu0 %v5995
      %v6158 = vpop.f32.mrf.mxu0
      %v6159 = vadd.f32 0.0, %v6158
      %v6160 = vpop.f32.mrf.mxu0
      %6161 = vmatprep.mubr.f32.mxu0 0.0
      %6162 = vmatmul.mubr.f32.gmra.mxu0 %v5998
      %v6163 = vpop.f32.mrf.mxu0
      %v6164 = vadd.f32 0.0, %v6163
      %v6165 = vpop.f32.mrf.mxu0
      %6166 = vmatprep.mubr.f32.mxu0 0.0
      %6167 = vmatmul.mubr.f32.gmra.mxu0 %v6001
      %v6168 = vpop.f32.mrf.mxu0
      %v6169 = vadd.f32 0.0, %v6168
      %v6170 = vpop.f32.mrf.mxu0
      %6171 = vmatprep.mubr.f32.mxu0 0.0
      %6172 = vmatmul.mubr.f32.gmra.mxu0 %v6004
      %v6173 = vpop.f32.mrf.mxu0
      %v6174 = vadd.f32 0.0, %v6173
      %v6175 = vpop.f32.mrf.mxu0
      %6176 = vmatprep.mubr.f32.mxu0 0.0
      %6177 = vmatmul.mubr.f32.gmra.mxu0 %v6007
      %v6178 = vpop.f32.mrf.mxu0
      %v6179 = vadd.f32 0.0, %v6178
      %v6180 = vpop.f32.mrf.mxu0
      %6181 = vmatprep.mubr.f32.mxu0 0.0
      %6182 = vmatmul.mubr.f32.gmra.mxu0 %v6010
      %v6183 = vpop.f32.mrf.mxu0
      %v6184 = vadd.f32 0.0, %v6183
      %v6185 = vpop.f32.mrf.mxu0
      %6186 = vmatprep.mubr.f32.mxu0 0.0
      %6187 = vmatmul.mubr.f32.gmra.mxu0 %v6013
      %v6188 = vpop.f32.mrf.mxu0
      %v6189 = vadd.f32 0.0, %v6188
      %v6190 = vpop.f32.mrf.mxu0
      %6191 = vmatprep.mubr.f32.mxu0 0.0
      %6192 = vmatmul.mubr.f32.gmra.mxu0 %v6016
      %v6193 = vpop.f32.mrf.mxu0
      %v6194 = vadd.f32 0.0, %v6193
      %v6195 = vpop.f32.mrf.mxu0
      %6196 = vmatprep.mubr.f32.mxu0 0.0
      %6197 = vmatmul.mubr.f32.gmra.mxu0 %v6019
      %v6198 = vpop.f32.mrf.mxu0
      %v6199 = vadd.f32 0.0, %v6198
      %v6200 = vpop.f32.mrf.mxu0
      %6201 = vmatprep.mubr.f32.mxu0 0.0
      %6202 = vmatmul.mubr.f32.gmra.mxu0 %v6022
      %v6203 = vpop.f32.mrf.mxu0
      %v6204 = vadd.f32 0.0, %v6203
      %v6205 = vpop.f32.mrf.mxu0
      %6206 = vmatprep.mubr.f32.mxu0 0.0
      %6207 = vmatmul.mubr.f32.gmra.mxu0 %v6025
      %v6208 = vpop.f32.mrf.mxu0
      %v6209 = vadd.f32 0.0, %v6208
      %v6210 = vpop.f32.mrf.mxu0
      %6211 = vmatprep.mubr.f32.mxu0 0.0
      %6212 = vmatmul.mubr.f32.gmra.mxu0 %v6028
      %v6213 = vpop.f32.mrf.mxu0
      %v6214 = vadd.f32 0.0, %v6213
      %v6215 = vpop.f32.mrf.mxu0
      %6216 = vmatprep.mubr.f32.mxu0 0.0
      %6217 = vmatmul.mubr.f32.gmra.mxu0 %v6031
      %v6218 = vpop.f32.mrf.mxu0
      %v6219 = vadd.f32 0.0, %v6218
      %v6220 = vpop.f32.mrf.mxu0
      %6221 = vmatprep.mubr.f32.mxu0 0.0
      %6222 = vmatmul.mubr.f32.gmra.mxu0 %v6034
      %v6223 = vpop.f32.mrf.mxu0
      %v6224 = vadd.f32 0.0, %v6223
      %v6225 = vpop.f32.mrf.mxu0
      %6226 = vmatprep.mubr.f32.mxu0 0.0
      %6227 = vmatmul.mubr.f32.gmra.mxu0 %v6037
      %v6228 = vpop.f32.mrf.mxu0
      %v6229 = vadd.f32 0.0, %v6228
      %v6230 = vpop.f32.mrf.mxu0
      %6231 = vmatprep.mubr.f32.mxu0 0.0
      %6232 = vmatmul.mubr.f32.gmra.mxu0 %v6040
      %v6233 = vpop.f32.mrf.mxu0
      %v6234 = vadd.f32 0.0, %v6233
      %v6235 = vpop.f32.mrf.mxu0
      %6236 = vmatprep.mubr.f32.mxu0 0.0
      %6237 = vmatmul.mubr.f32.gmra.mxu0 %v6043
      %v6238 = vpop.f32.mrf.mxu0
      %v6239 = vadd.f32 0.0, %v6238
      %v6240 = vpop.f32.mrf.mxu0
      %6241 = vmatprep.mubr.f32.mxu0 0.0
      %6242 = vmatmul.mubr.f32.gmra.mxu0 %v6046
      %v6243 = vpop.f32.mrf.mxu0
      %v6244 = vadd.f32 0.0, %v6243
      %v6245 = vpop.f32.mrf.mxu0
      %6246 = vmatprep.mubr.f32.mxu0 0.0
      %6247 = vmatmul.mubr.f32.gmra.mxu0 %v6049
      %v6248 = vpop.f32.mrf.mxu0
      %v6249 = vadd.f32 0.0, %v6248
      %v6250 = vpop.f32.mrf.mxu0
      %6251 = vmatprep.mubr.f32.mxu0 0.0
      %6252 = vmatmul.mubr.f32.gmra.mxu0 %v6052
      %v6253 = vpop.f32.mrf.mxu0
      %v6254 = vadd.f32 0.0, %v6253
      %v6255 = vpop.f32.mrf.mxu0
      %6256 = vmatprep.mubr.f32.mxu0 0.0
      %6257 = vmatmul.mubr.f32.gmra.mxu0 %v6055
      %v6258 = vpop.f32.mrf.mxu0
      %v6259 = vadd.f32 0.0, %v6258
      %v6260 = vpop.f32.mrf.mxu0
      %6261 = vmatprep.mubr.f32.mxu0 0.0
      %6262 = vmatmul.mubr.f32.gmra.mxu0 %v6058
      %v6263 = vpop.f32.mrf.mxu0
      %v6264 = vadd.f32 0.0, %v6263
      %v6265 = vpop.f32.mrf.mxu0
      %6266 = vmatprep.mubr.f32.mxu0 0.0
      %6267 = vmatmul.mubr.f32.gmra.mxu0 %v6061
      %v6268 = vpop.f32.mrf.mxu0
      %v6269 = vadd.f32 0.0, %v6268
      %v6270 = vpop.f32.mrf.mxu0
      %6271 = vmatprep.mubr.f32.mxu0 0.0
      %6272 = vmatmul.mubr.f32.gmra.mxu0 %v6064
      %v6273 = vpop.f32.mrf.mxu0
      %v6274 = vadd.f32 0.0, %v6273
      %v6275 = vpop.f32.mrf.mxu0
      %6276 = vmatprep.mubr.f32.mxu0 0.0
      %6277 = vmatmul.mubr.f32.gmra.mxu0 %v6067
      %v6278 = vpop.f32.mrf.mxu0
      %v6279 = vadd.f32 0.0, %v6278
      %v6280 = vpop.f32.mrf.mxu0
      %6281 = vmatprep.mubr.f32.mxu0 0.0
      %6282 = vmatmul.mubr.f32.gmra.mxu0 %v6070
      %v6283 = vpop.f32.mrf.mxu0
      %v6284 = vadd.f32 0.0, %v6283
      %v6285 = vpop.f32.mrf.mxu0
      %6286 = vmatprep.mubr.f32.mxu0 0.0
      %6287 = vmatmul.mubr.f32.gmra.mxu0 %v6073
      %v6288 = vpop.f32.mrf.mxu0
      %v6289 = vadd.f32 0.0, %v6288
      %v6290 = vpop.f32.mrf.mxu0
      %6291 = vmatprep.mubr.f32.mxu0 0.0
      %6292 = vmatmul.mubr.f32.gmra.mxu0 %v6076
      %v6293 = vpop.f32.mrf.mxu0
      %v6294 = vadd.f32 0.0, %v6293
      %v6295 = vpop.f32.mrf.mxu0
      %6296 = vmatprep.mubr.f32.mxu0 0.0
      %6297 = vmatmul.mubr.f32.gmra.mxu0 %v6079
      %v6298 = vpop.f32.mrf.mxu0
      %v6299 = vadd.f32 0.0, %v6298
      %v6300 = vpop.f32.mrf.mxu0
      %6301 = vmatprep.mubr.f32.mxu0 0.0
      %6302 = vmatmul.mubr.f32.gmra.mxu0 %v6082
      %v6303 = vpop.f32.mrf.mxu0
      %v6304 = vadd.f32 0.0, %v6303
      %v6305 = vpop.f32.mrf.mxu0
      %6306 = vmatprep.mubr.f32.mxu0 0.0
      %6307 = vmatmul.mubr.f32.gmra.mxu0 %v6085
      %v6308 = vpop.f32.mrf.mxu0
      %v6309 = vadd.f32 0.0, %v6308
      %v6310 = vpop.f32.mrf.mxu0
      %6311 = vdwg.mxu0
      %v6312 = vadd.f32 %v5658, %v6154
      %v6313 = vadd.f32 %v5659, %v6159
      %v6314 = vadd.f32 %v5660, %v6164
      %v6315 = vadd.f32 %v5661, %v6169
      %v6316 = vadd.f32 %v5662, %v6174
      %v6317 = vadd.f32 %v5663, %v6179
      %v6318 = vadd.f32 %v5664, %v6184
      %v6319 = vadd.f32 %v5665, %v6189
      %v6320 = vadd.f32 %v5666, %v6194
      %v6321 = vadd.f32 %v5667, %v6199
      %v6322 = vadd.f32 %v5668, %v6204
      %v6323 = vadd.f32 %v5669, %v6209
      %v6324 = vadd.f32 %v5670, %v6214
      %v6325 = vadd.f32 %v5671, %v6219
      %v6326 = vadd.f32 %v5672, %v6224
      %v6327 = vadd.f32 %v5673, %v6229
      %v6328 = vadd.f32 %v5674, %v6234
      %v6329 = vadd.f32 %v5675, %v6239
      %v6330 = vadd.f32 %v5676, %v6244
      %v6331 = vadd.f32 %v5677, %v6249
      %v6332 = vadd.f32 %v5678, %v6254
      %v6333 = vadd.f32 %v5679, %v6259
      %v6334 = vadd.f32 %v5680, %v6264
      %v6335 = vadd.f32 %v5681, %v6269
      %v6336 = vadd.f32 %v5682, %v6274
      %v6337 = vadd.f32 %v5683, %v6279
      %v6338 = vadd.f32 %v5684, %v6284
      %v6339 = vadd.f32 %v5685, %v6289
      %v6340 = vadd.f32 %v5686, %v6294
      %v6341 = vadd.f32 %v5687, %v6299
      %v6342 = vadd.f32 %v5688, %v6304
      %v6343 = vadd.f32 %v5689, %v6309
      %6344 = vmatprep.subr.mxu0 0.0
      %6345 = vmatpush1.msra.mxu0 0.0
      %6346 = vmatprep.subr.mxu0 0.0
      %6347 = vmatpush1.msra.mxu0 0.0
      %6348 = vmatprep.subr.mxu0 0.0
      %6349 = vmatpush1.msra.mxu0 0.0
      %6350 = vmatprep.subr.mxu0 0.0
      %6351 = vmatpush1.msra.mxu0 0.0
      %6352 = vmatprep.subr.mxu0 0.0
      %6353 = vmatpush1.msra.mxu0 0.0
      %6354 = vmatprep.subr.mxu0 0.0
      %6355 = vmatpush1.msra.mxu0 0.0
      %6356 = vmatprep.subr.mxu0 0.0
      %6357 = vmatpush1.msra.mxu0 0.0
      %6358 = vmatprep.subr.mxu0 0.0
      %6359 = vmatpush1.msra.mxu0 0.0
      %6360 = vmatprep.subr.mxu0 0.0
      %6361 = vmatpush1.msra.mxu0 0.0
      %6362 = vmatprep.subr.mxu0 0.0
      %6363 = vmatpush1.msra.mxu0 0.0
      %6364 = vmatprep.subr.mxu0 0.0
      %6365 = vmatpush1.msra.mxu0 0.0
      %6366 = vmatprep.subr.mxu0 0.0
      %6367 = vmatpush1.msra.mxu0 0.0
      %6368 = vmatprep.subr.mxu0 0.0
      %6369 = vmatpush1.msra.mxu0 %v453
      %6370 = vmatprep.subr.mxu0 0.0
      %6371 = vmatpush1.msra.mxu0 %v452
      %6372 = vmatprep.subr.mxu0 0.0
      %6373 = vmatpush1.msra.mxu0 %v451
      %6374 = vmatprep.subr.mxu0 0.0
      %6375 = vmatpush1.msra.mxu0 %v450
      %6376 = vmatprep.subr.mxu0 0.0
      %6377 = vmatpush2.msra.mxu0 0.0
      %6378 = vmatprep.subr.mxu0 0.0
      %6379 = vmatpush2.msra.mxu0 0.0
      %6380 = vmatprep.subr.mxu0 0.0
      %6381 = vmatpush2.msra.mxu0 0.0
      %6382 = vmatprep.subr.mxu0 0.0
      %6383 = vmatpush2.msra.mxu0 0.0
      %6384 = vmatprep.subr.mxu0 0.0
      %6385 = vmatpush2.msra.mxu0 0.0
      %6386 = vmatprep.subr.mxu0 0.0
      %6387 = vmatpush2.msra.mxu0 0.0
      %6388 = vmatprep.subr.mxu0 0.0
      %6389 = vmatpush2.msra.mxu0 0.0
      %6390 = vmatprep.subr.mxu0 0.0
      %6391 = vmatpush2.msra.mxu0 0.0
      %6392 = vmatprep.subr.mxu0 0.0
      %6393 = vmatpush2.msra.mxu0 0.0
      %6394 = vmatprep.subr.mxu0 0.0
      %6395 = vmatpush2.msra.mxu0 0.0
      %6396 = vmatprep.subr.mxu0 0.0
      %6397 = vmatpush2.msra.mxu0 0.0
      %6398 = vmatprep.subr.mxu0 0.0
      %6399 = vmatpush2.msra.mxu0 0.0
      %6400 = vmatprep.subr.mxu0 0.0
      %6401 = vmatpush2.msra.mxu0 0.0
      %6402 = vmatprep.subr.mxu0 0.0
      %6403 = vmatpush2.msra.mxu0 0.0
      %6404 = vmatprep.subr.mxu0 0.0
      %6405 = vmatpush2.msra.mxu0 0.0
      %6406 = vmatprep.subr.mxu0 0.0
      %6407 = vmatpush2.msra.mxu0 0.0
      %6408 = vmatprep.mubr.f32.mxu0 0.0
      %6409 = vmatmul.mubr.f32.gmra.mxu0 %v5992
      %v6410 = vpop.f32.mrf.mxu0
      %v6411 = vadd.f32 0.0, %v6410
      %v6412 = vpop.f32.mrf.mxu0
      %6413 = vmatprep.mubr.f32.mxu0 0.0
      %6414 = vmatmul.mubr.f32.gmra.mxu0 %v5995
      %v6415 = vpop.f32.mrf.mxu0
      %v6416 = vadd.f32 0.0, %v6415
      %v6417 = vpop.f32.mrf.mxu0
      %6418 = vmatprep.mubr.f32.mxu0 0.0
      %6419 = vmatmul.mubr.f32.gmra.mxu0 %v5998
      %v6420 = vpop.f32.mrf.mxu0
      %v6421 = vadd.f32 0.0, %v6420
      %v6422 = vpop.f32.mrf.mxu0
      %6423 = vmatprep.mubr.f32.mxu0 0.0
      %6424 = vmatmul.mubr.f32.gmra.mxu0 %v6001
      %v6425 = vpop.f32.mrf.mxu0
      %v6426 = vadd.f32 0.0, %v6425
      %v6427 = vpop.f32.mrf.mxu0
      %6428 = vmatprep.mubr.f32.mxu0 0.0
      %6429 = vmatmul.mubr.f32.gmra.mxu0 %v6004
      %v6430 = vpop.f32.mrf.mxu0
      %v6431 = vadd.f32 0.0, %v6430
      %v6432 = vpop.f32.mrf.mxu0
      %6433 = vmatprep.mubr.f32.mxu0 0.0
      %6434 = vmatmul.mubr.f32.gmra.mxu0 %v6007
      %v6435 = vpop.f32.mrf.mxu0
      %v6436 = vadd.f32 0.0, %v6435
      %v6437 = vpop.f32.mrf.mxu0
      %6438 = vmatprep.mubr.f32.mxu0 0.0
      %6439 = vmatmul.mubr.f32.gmra.mxu0 %v6010
      %v6440 = vpop.f32.mrf.mxu0
      %v6441 = vadd.f32 0.0, %v6440
      %v6442 = vpop.f32.mrf.mxu0
      %6443 = vmatprep.mubr.f32.mxu0 0.0
      %6444 = vmatmul.mubr.f32.gmra.mxu0 %v6013
      %v6445 = vpop.f32.mrf.mxu0
      %v6446 = vadd.f32 0.0, %v6445
      %v6447 = vpop.f32.mrf.mxu0
      %6448 = vmatprep.mubr.f32.mxu0 0.0
      %6449 = vmatmul.mubr.f32.gmra.mxu0 %v6016
      %v6450 = vpop.f32.mrf.mxu0
      %v6451 = vadd.f32 0.0, %v6450
      %v6452 = vpop.f32.mrf.mxu0
      %6453 = vmatprep.mubr.f32.mxu0 0.0
      %6454 = vmatmul.mubr.f32.gmra.mxu0 %v6019
      %v6455 = vpop.f32.mrf.mxu0
      %v6456 = vadd.f32 0.0, %v6455
      %v6457 = vpop.f32.mrf.mxu0
      %6458 = vmatprep.mubr.f32.mxu0 0.0
      %6459 = vmatmul.mubr.f32.gmra.mxu0 %v6022
      %v6460 = vpop.f32.mrf.mxu0
      %v6461 = vadd.f32 0.0, %v6460
      %v6462 = vpop.f32.mrf.mxu0
      %6463 = vmatprep.mubr.f32.mxu0 0.0
      %6464 = vmatmul.mubr.f32.gmra.mxu0 %v6025
      %v6465 = vpop.f32.mrf.mxu0
      %v6466 = vadd.f32 0.0, %v6465
      %v6467 = vpop.f32.mrf.mxu0
      %6468 = vmatprep.mubr.f32.mxu0 0.0
      %6469 = vmatmul.mubr.f32.gmra.mxu0 %v6028
      %v6470 = vpop.f32.mrf.mxu0
      %v6471 = vadd.f32 0.0, %v6470
      %v6472 = vpop.f32.mrf.mxu0
      %6473 = vmatprep.mubr.f32.mxu0 0.0
      %6474 = vmatmul.mubr.f32.gmra.mxu0 %v6031
      %v6475 = vpop.f32.mrf.mxu0
      %v6476 = vadd.f32 0.0, %v6475
      %v6477 = vpop.f32.mrf.mxu0
      %6478 = vmatprep.mubr.f32.mxu0 0.0
      %6479 = vmatmul.mubr.f32.gmra.mxu0 %v6034
      %v6480 = vpop.f32.mrf.mxu0
      %v6481 = vadd.f32 0.0, %v6480
      %v6482 = vpop.f32.mrf.mxu0
      %6483 = vmatprep.mubr.f32.mxu0 0.0
      %6484 = vmatmul.mubr.f32.gmra.mxu0 %v6037
      %v6485 = vpop.f32.mrf.mxu0
      %v6486 = vadd.f32 0.0, %v6485
      %v6487 = vpop.f32.mrf.mxu0
      %6488 = vmatprep.mubr.f32.mxu0 0.0
      %6489 = vmatmul.mubr.f32.gmra.mxu0 %v6040
      %v6490 = vpop.f32.mrf.mxu0
      %v6491 = vadd.f32 0.0, %v6490
      %v6492 = vpop.f32.mrf.mxu0
      %6493 = vmatprep.mubr.f32.mxu0 0.0
      %6494 = vmatmul.mubr.f32.gmra.mxu0 %v6043
      %v6495 = vpop.f32.mrf.mxu0
      %v6496 = vadd.f32 0.0, %v6495
      %v6497 = vpop.f32.mrf.mxu0
      %6498 = vmatprep.mubr.f32.mxu0 0.0
      %6499 = vmatmul.mubr.f32.gmra.mxu0 %v6046
      %v6500 = vpop.f32.mrf.mxu0
      %v6501 = vadd.f32 0.0, %v6500
      %v6502 = vpop.f32.mrf.mxu0
      %6503 = vmatprep.mubr.f32.mxu0 0.0
      %6504 = vmatmul.mubr.f32.gmra.mxu0 %v6049
      %v6505 = vpop.f32.mrf.mxu0
      %v6506 = vadd.f32 0.0, %v6505
      %v6507 = vpop.f32.mrf.mxu0
      %6508 = vmatprep.mubr.f32.mxu0 0.0
      %6509 = vmatmul.mubr.f32.gmra.mxu0 %v6052
      %v6510 = vpop.f32.mrf.mxu0
      %v6511 = vadd.f32 0.0, %v6510
      %v6512 = vpop.f32.mrf.mxu0
      %6513 = vmatprep.mubr.f32.mxu0 0.0
      %6514 = vmatmul.mubr.f32.gmra.mxu0 %v6055
      %v6515 = vpop.f32.mrf.mxu0
      %v6516 = vadd.f32 0.0, %v6515
      %v6517 = vpop.f32.mrf.mxu0
      %6518 = vmatprep.mubr.f32.mxu0 0.0
      %6519 = vmatmul.mubr.f32.gmra.mxu0 %v6058
      %v6520 = vpop.f32.mrf.mxu0
      %v6521 = vadd.f32 0.0, %v6520
      %v6522 = vpop.f32.mrf.mxu0
      %6523 = vmatprep.mubr.f32.mxu0 0.0
      %6524 = vmatmul.mubr.f32.gmra.mxu0 %v6061
      %v6525 = vpop.f32.mrf.mxu0
      %v6526 = vadd.f32 0.0, %v6525
      %v6527 = vpop.f32.mrf.mxu0
      %6528 = vmatprep.mubr.f32.mxu0 0.0
      %6529 = vmatmul.mubr.f32.gmra.mxu0 %v6064
      %v6530 = vpop.f32.mrf.mxu0
      %v6531 = vadd.f32 0.0, %v6530
      %v6532 = vpop.f32.mrf.mxu0
      %6533 = vmatprep.mubr.f32.mxu0 0.0
      %6534 = vmatmul.mubr.f32.gmra.mxu0 %v6067
      %v6535 = vpop.f32.mrf.mxu0
      %v6536 = vadd.f32 0.0, %v6535
      %v6537 = vpop.f32.mrf.mxu0
      %6538 = vmatprep.mubr.f32.mxu0 0.0
      %6539 = vmatmul.mubr.f32.gmra.mxu0 %v6070
      %v6540 = vpop.f32.mrf.mxu0
      %v6541 = vadd.f32 0.0, %v6540
      %v6542 = vpop.f32.mrf.mxu0
      %6543 = vmatprep.mubr.f32.mxu0 0.0
      %6544 = vmatmul.mubr.f32.gmra.mxu0 %v6073
      %v6545 = vpop.f32.mrf.mxu0
      %v6546 = vadd.f32 0.0, %v6545
      %v6547 = vpop.f32.mrf.mxu0
      %6548 = vmatprep.mubr.f32.mxu0 0.0
      %6549 = vmatmul.mubr.f32.gmra.mxu0 %v6076
      %v6550 = vpop.f32.mrf.mxu0
      %v6551 = vadd.f32 0.0, %v6550
      %v6552 = vpop.f32.mrf.mxu0
      %6553 = vmatprep.mubr.f32.mxu0 0.0
      %6554 = vmatmul.mubr.f32.gmra.mxu0 %v6079
      %v6555 = vpop.f32.mrf.mxu0
      %v6556 = vadd.f32 0.0, %v6555
      %v6557 = vpop.f32.mrf.mxu0
      %6558 = vmatprep.mubr.f32.mxu0 0.0
      %6559 = vmatmul.mubr.f32.gmra.mxu0 %v6082
      %v6560 = vpop.f32.mrf.mxu0
      %v6561 = vadd.f32 0.0, %v6560
      %v6562 = vpop.f32.mrf.mxu0
      %6563 = vmatprep.mubr.f32.mxu0 0.0
      %6564 = vmatmul.mubr.f32.gmra.mxu0 %v6085
      %v6565 = vpop.f32.mrf.mxu0
      %v6566 = vadd.f32 0.0, %v6565
      %v6567 = vpop.f32.mrf.mxu0
      %6568 = vdwg.mxu0
      %v6569 = vmax.f32 %v5915, %v6411
      %v6570 = vmax.f32 %v5916, %v6416
      %v6571 = vmax.f32 %v5917, %v6421
      %v6572 = vmax.f32 %v5918, %v6426
      %v6573 = vmax.f32 %v5919, %v6431
      %v6574 = vmax.f32 %v5920, %v6436
      %v6575 = vmax.f32 %v5921, %v6441
      %v6576 = vmax.f32 %v5922, %v6446
      %v6577 = vmax.f32 %v5923, %v6451
      %v6578 = vmax.f32 %v5924, %v6456
      %v6579 = vmax.f32 %v5925, %v6461
      %v6580 = vmax.f32 %v5926, %v6466
      %v6581 = vmax.f32 %v5927, %v6471
      %v6582 = vmax.f32 %v5928, %v6476
      %v6583 = vmax.f32 %v5929, %v6481
      %v6584 = vmax.f32 %v5930, %v6486
      %v6585 = vmax.f32 %v5931, %v6491
      %v6586 = vmax.f32 %v5932, %v6496
      %v6587 = vmax.f32 %v5933, %v6501
      %v6588 = vmax.f32 %v5934, %v6506
      %v6589 = vmax.f32 %v5935, %v6511
      %v6590 = vmax.f32 %v5936, %v6516
      %v6591 = vmax.f32 %v5937, %v6521
      %v6592 = vmax.f32 %v5938, %v6526
      %v6593 = vmax.f32 %v5939, %v6531
      %v6594 = vmax.f32 %v5940, %v6536
      %v6595 = vmax.f32 %v5941, %v6541
      %v6596 = vmax.f32 %v5942, %v6546
      %v6597 = vmax.f32 %v5943, %v6551
      %v6598 = vmax.f32 %v5944, %v6556
      %v6599 = vmax.f32 %v5945, %v6561
      %v6600 = vmax.f32 %v5946, %v6566
      %vm6601 = vcmask 31744
      %v6603 = vsel %vm6601, %v6569, 0
      %v6606 = vsel %vm6601, %v6570, 0
      %v6609 = vsel %vm6601, %v6571, 0
      %v6612 = vsel %vm6601, %v6572, 0
      %v6615 = vsel %vm6601, %v6573, 0
      %v6618 = vsel %vm6601, %v6574, 0
      %v6621 = vsel %vm6601, %v6575, 0
      %v6624 = vsel %vm6601, %v6576, 0
      %v6627 = vsel %vm6601, %v6577, 0
      %v6630 = vsel %vm6601, %v6578, 0
      %v6633 = vsel %vm6601, %v6579, 0
      %v6636 = vsel %vm6601, %v6580, 0
      %v6639 = vsel %vm6601, %v6581, 0
      %v6642 = vsel %vm6601, %v6582, 0
      %v6645 = vsel %vm6601, %v6583, 0
      %v6648 = vsel %vm6601, %v6584, 0
      %v6651 = vsel %vm6601, %v6585, 0
      %v6654 = vsel %vm6601, %v6586, 0
      %v6657 = vsel %vm6601, %v6587, 0
      %v6660 = vsel %vm6601, %v6588, 0
      %v6663 = vsel %vm6601, %v6589, 0
      %v6666 = vsel %vm6601, %v6590, 0
      %v6669 = vsel %vm6601, %v6591, 0
      %v6672 = vsel %vm6601, %v6592, 0
      %v6675 = vsel %vm6601, %v6593, 0
      %v6678 = vsel %vm6601, %v6594, 0
      %v6681 = vsel %vm6601, %v6595, 0
      %v6684 = vsel %vm6601, %v6596, 0
      %v6687 = vsel %vm6601, %v6597, 0
      %v6690 = vsel %vm6601, %v6598, 0
      %v6693 = vsel %vm6601, %v6599, 0
      %v6696 = vsel %vm6601, %v6600, 0
      %vm6698 = vcmask 1043456
      %v6700 = vsel %vm6698, %v454, 0
      %6702 = vmatprep.subr.mxu0 0.0
      %6703 = vmatpush1.msra.mxu0 0.0
      %6704 = vmatprep.subr.mxu0 0.0
      %6705 = vmatpush1.msra.mxu0 0.0
      %6706 = vmatprep.subr.mxu0 0.0
      %6707 = vmatpush1.msra.mxu0 0.0
      %6708 = vmatprep.subr.mxu0 0.0
      %6709 = vmatpush1.msra.mxu0 0.0
      %6710 = vmatprep.subr.mxu0 0.0
      %6711 = vmatpush1.msra.mxu0 0.0
      %6712 = vmatprep.subr.mxu0 0.0
      %6713 = vmatpush1.msra.mxu0 0.0
      %6714 = vmatprep.subr.mxu0 0.0
      %6715 = vmatpush1.msra.mxu0 0.0
      %6716 = vmatprep.subr.mxu0 0.0
      %6717 = vmatpush1.msra.mxu0 0.0
      %6718 = vmatprep.subr.mxu0 0.0
      %6719 = vmatpush1.msra.mxu0 0.0
      %6720 = vmatprep.subr.mxu0 0.0
      %6721 = vmatpush1.msra.mxu0 0.0
      %6722 = vmatprep.subr.mxu0 0.0
      %6723 = vmatpush1.msra.mxu0 0.0
      %6724 = vmatprep.subr.mxu0 0.0
      %6725 = vmatpush1.msra.mxu0 0.0
      %6726 = vmatprep.subr.mxu0 0.0
      %6727 = vmatpush1.msra.mxu0 0.0
      %6728 = vmatprep.subr.mxu0 0.0
      %6729 = vmatpush1.msra.mxu0 0.0
      %6730 = vmatprep.subr.mxu0 0.0
      %6731 = vmatpush1.msra.mxu0 0.0
      %6732 = vmatprep.subr.mxu0 0.0
      %6733 = vmatpush1.msra.mxu0 %v6700
      %6734 = vmatprep.subr.mxu0 0.0
      %6735 = vmatpush2.msra.mxu0 0.0
      %6736 = vmatprep.subr.mxu0 0.0
      %6737 = vmatpush2.msra.mxu0 0.0
      %6738 = vmatprep.subr.mxu0 0.0
      %6739 = vmatpush2.msra.mxu0 0.0
      %6740 = vmatprep.subr.mxu0 0.0
      %6741 = vmatpush2.msra.mxu0 0.0
      %6742 = vmatprep.subr.mxu0 0.0
      %6743 = vmatpush2.msra.mxu0 0.0
      %6744 = vmatprep.subr.mxu0 0.0
      %6745 = vmatpush2.msra.mxu0 0.0
      %6746 = vmatprep.subr.mxu0 0.0
      %6747 = vmatpush2.msra.mxu0 0.0
      %6748 = vmatprep.subr.mxu0 0.0
      %6749 = vmatpush2.msra.mxu0 0.0
      %6750 = vmatprep.subr.mxu0 0.0
      %6751 = vmatpush2.msra.mxu0 0.0
      %6752 = vmatprep.subr.mxu0 0.0
      %6753 = vmatpush2.msra.mxu0 0.0
      %6754 = vmatprep.subr.mxu0 0.0
      %6755 = vmatpush2.msra.mxu0 0.0
      %6756 = vmatprep.subr.mxu0 0.0
      %6757 = vmatpush2.msra.mxu0 0.0
      %6758 = vmatprep.subr.mxu0 0.0
      %6759 = vmatpush2.msra.mxu0 0.0
      %6760 = vmatprep.subr.mxu0 0.0
      %6761 = vmatpush2.msra.mxu0 0.0
      %6762 = vmatprep.subr.mxu0 0.0
      %6763 = vmatpush2.msra.mxu0 0.0
      %6764 = vmatprep.subr.mxu0 0.0
      %6765 = vmatpush2.msra.mxu0 0.0
      %6766 = vmatprep.mubr.f32.mxu0 0.0
      %6767 = vmatmul.mubr.f32.gmra.mxu0 %v6603
      %v6768 = vpop.f32.mrf.mxu0
      %v6769 = vadd.f32 0.0, %v6768
      %v6770 = vpop.f32.mrf.mxu0
      %6771 = vmatprep.mubr.f32.mxu0 0.0
      %6772 = vmatmul.mubr.f32.gmra.mxu0 %v6606
      %v6773 = vpop.f32.mrf.mxu0
      %v6774 = vadd.f32 0.0, %v6773
      %v6775 = vpop.f32.mrf.mxu0
      %6776 = vmatprep.mubr.f32.mxu0 0.0
      %6777 = vmatmul.mubr.f32.gmra.mxu0 %v6609
      %v6778 = vpop.f32.mrf.mxu0
      %v6779 = vadd.f32 0.0, %v6778
      %v6780 = vpop.f32.mrf.mxu0
      %6781 = vmatprep.mubr.f32.mxu0 0.0
      %6782 = vmatmul.mubr.f32.gmra.mxu0 %v6612
      %v6783 = vpop.f32.mrf.mxu0
      %v6784 = vadd.f32 0.0, %v6783
      %v6785 = vpop.f32.mrf.mxu0
      %6786 = vmatprep.mubr.f32.mxu0 0.0
      %6787 = vmatmul.mubr.f32.gmra.mxu0 %v6615
      %v6788 = vpop.f32.mrf.mxu0
      %v6789 = vadd.f32 0.0, %v6788
      %v6790 = vpop.f32.mrf.mxu0
      %6791 = vmatprep.mubr.f32.mxu0 0.0
      %6792 = vmatmul.mubr.f32.gmra.mxu0 %v6618
      %v6793 = vpop.f32.mrf.mxu0
      %v6794 = vadd.f32 0.0, %v6793
      %v6795 = vpop.f32.mrf.mxu0
      %6796 = vmatprep.mubr.f32.mxu0 0.0
      %6797 = vmatmul.mubr.f32.gmra.mxu0 %v6621
      %v6798 = vpop.f32.mrf.mxu0
      %v6799 = vadd.f32 0.0, %v6798
      %v6800 = vpop.f32.mrf.mxu0
      %6801 = vmatprep.mubr.f32.mxu0 0.0
      %6802 = vmatmul.mubr.f32.gmra.mxu0 %v6624
      %v6803 = vpop.f32.mrf.mxu0
      %v6804 = vadd.f32 0.0, %v6803
      %v6805 = vpop.f32.mrf.mxu0
      %6806 = vmatprep.mubr.f32.mxu0 0.0
      %6807 = vmatmul.mubr.f32.gmra.mxu0 %v6627
      %v6808 = vpop.f32.mrf.mxu0
      %v6809 = vadd.f32 0.0, %v6808
      %v6810 = vpop.f32.mrf.mxu0
      %6811 = vmatprep.mubr.f32.mxu0 0.0
      %6812 = vmatmul.mubr.f32.gmra.mxu0 %v6630
      %v6813 = vpop.f32.mrf.mxu0
      %v6814 = vadd.f32 0.0, %v6813
      %v6815 = vpop.f32.mrf.mxu0
      %6816 = vmatprep.mubr.f32.mxu0 0.0
      %6817 = vmatmul.mubr.f32.gmra.mxu0 %v6633
      %v6818 = vpop.f32.mrf.mxu0
      %v6819 = vadd.f32 0.0, %v6818
      %v6820 = vpop.f32.mrf.mxu0
      %6821 = vmatprep.mubr.f32.mxu0 0.0
      %6822 = vmatmul.mubr.f32.gmra.mxu0 %v6636
      %v6823 = vpop.f32.mrf.mxu0
      %v6824 = vadd.f32 0.0, %v6823
      %v6825 = vpop.f32.mrf.mxu0
      %6826 = vmatprep.mubr.f32.mxu0 0.0
      %6827 = vmatmul.mubr.f32.gmra.mxu0 %v6639
      %v6828 = vpop.f32.mrf.mxu0
      %v6829 = vadd.f32 0.0, %v6828
      %v6830 = vpop.f32.mrf.mxu0
      %6831 = vmatprep.mubr.f32.mxu0 0.0
      %6832 = vmatmul.mubr.f32.gmra.mxu0 %v6642
      %v6833 = vpop.f32.mrf.mxu0
      %v6834 = vadd.f32 0.0, %v6833
      %v6835 = vpop.f32.mrf.mxu0
      %6836 = vmatprep.mubr.f32.mxu0 0.0
      %6837 = vmatmul.mubr.f32.gmra.mxu0 %v6645
      %v6838 = vpop.f32.mrf.mxu0
      %v6839 = vadd.f32 0.0, %v6838
      %v6840 = vpop.f32.mrf.mxu0
      %6841 = vmatprep.mubr.f32.mxu0 0.0
      %6842 = vmatmul.mubr.f32.gmra.mxu0 %v6648
      %v6843 = vpop.f32.mrf.mxu0
      %v6844 = vadd.f32 0.0, %v6843
      %v6845 = vpop.f32.mrf.mxu0
      %6846 = vmatprep.mubr.f32.mxu0 0.0
      %6847 = vmatmul.mubr.f32.gmra.mxu0 %v6651
      %v6848 = vpop.f32.mrf.mxu0
      %v6849 = vadd.f32 0.0, %v6848
      %v6850 = vpop.f32.mrf.mxu0
      %6851 = vmatprep.mubr.f32.mxu0 0.0
      %6852 = vmatmul.mubr.f32.gmra.mxu0 %v6654
      %v6853 = vpop.f32.mrf.mxu0
      %v6854 = vadd.f32 0.0, %v6853
      %v6855 = vpop.f32.mrf.mxu0
      %6856 = vmatprep.mubr.f32.mxu0 0.0
      %6857 = vmatmul.mubr.f32.gmra.mxu0 %v6657
      %v6858 = vpop.f32.mrf.mxu0
      %v6859 = vadd.f32 0.0, %v6858
      %v6860 = vpop.f32.mrf.mxu0
      %6861 = vmatprep.mubr.f32.mxu0 0.0
      %6862 = vmatmul.mubr.f32.gmra.mxu0 %v6660
      %v6863 = vpop.f32.mrf.mxu0
      %v6864 = vadd.f32 0.0, %v6863
      %v6865 = vpop.f32.mrf.mxu0
      %6866 = vmatprep.mubr.f32.mxu0 0.0
      %6867 = vmatmul.mubr.f32.gmra.mxu0 %v6663
      %v6868 = vpop.f32.mrf.mxu0
      %v6869 = vadd.f32 0.0, %v6868
      %v6870 = vpop.f32.mrf.mxu0
      %6871 = vmatprep.mubr.f32.mxu0 0.0
      %6872 = vmatmul.mubr.f32.gmra.mxu0 %v6666
      %v6873 = vpop.f32.mrf.mxu0
      %v6874 = vadd.f32 0.0, %v6873
      %v6875 = vpop.f32.mrf.mxu0
      %6876 = vmatprep.mubr.f32.mxu0 0.0
      %6877 = vmatmul.mubr.f32.gmra.mxu0 %v6669
      %v6878 = vpop.f32.mrf.mxu0
      %v6879 = vadd.f32 0.0, %v6878
      %v6880 = vpop.f32.mrf.mxu0
      %6881 = vmatprep.mubr.f32.mxu0 0.0
      %6882 = vmatmul.mubr.f32.gmra.mxu0 %v6672
      %v6883 = vpop.f32.mrf.mxu0
      %v6884 = vadd.f32 0.0, %v6883
      %v6885 = vpop.f32.mrf.mxu0
      %6886 = vmatprep.mubr.f32.mxu0 0.0
      %6887 = vmatmul.mubr.f32.gmra.mxu0 %v6675
      %v6888 = vpop.f32.mrf.mxu0
      %v6889 = vadd.f32 0.0, %v6888
      %v6890 = vpop.f32.mrf.mxu0
      %6891 = vmatprep.mubr.f32.mxu0 0.0
      %6892 = vmatmul.mubr.f32.gmra.mxu0 %v6678
      %v6893 = vpop.f32.mrf.mxu0
      %v6894 = vadd.f32 0.0, %v6893
      %v6895 = vpop.f32.mrf.mxu0
      %6896 = vmatprep.mubr.f32.mxu0 0.0
      %6897 = vmatmul.mubr.f32.gmra.mxu0 %v6681
      %v6898 = vpop.f32.mrf.mxu0
      %v6899 = vadd.f32 0.0, %v6898
      %v6900 = vpop.f32.mrf.mxu0
      %6901 = vmatprep.mubr.f32.mxu0 0.0
      %6902 = vmatmul.mubr.f32.gmra.mxu0 %v6684
      %v6903 = vpop.f32.mrf.mxu0
      %v6904 = vadd.f32 0.0, %v6903
      %v6905 = vpop.f32.mrf.mxu0
      %6906 = vmatprep.mubr.f32.mxu0 0.0
      %6907 = vmatmul.mubr.f32.gmra.mxu0 %v6687
      %v6908 = vpop.f32.mrf.mxu0
      %v6909 = vadd.f32 0.0, %v6908
      %v6910 = vpop.f32.mrf.mxu0
      %6911 = vmatprep.mubr.f32.mxu0 0.0
      %6912 = vmatmul.mubr.f32.gmra.mxu0 %v6690
      %v6913 = vpop.f32.mrf.mxu0
      %v6914 = vadd.f32 0.0, %v6913
      %v6915 = vpop.f32.mrf.mxu0
      %6916 = vmatprep.mubr.f32.mxu0 0.0
      %6917 = vmatmul.mubr.f32.gmra.mxu0 %v6693
      %v6918 = vpop.f32.mrf.mxu0
      %v6919 = vadd.f32 0.0, %v6918
      %v6920 = vpop.f32.mrf.mxu0
      %6921 = vmatprep.mubr.f32.mxu0 0.0
      %6922 = vmatmul.mubr.f32.gmra.mxu0 %v6696
      %v6923 = vpop.f32.mrf.mxu0
      %v6924 = vadd.f32 0.0, %v6923
      %v6925 = vpop.f32.mrf.mxu0
      %6926 = vdwg.mxu0
      %v6927 = vsub.f32 %v6312, %v6769
      %v6928 = vsub.f32 %v6313, %v6774
      %v6929 = vsub.f32 %v6314, %v6779
      %v6930 = vsub.f32 %v6315, %v6784
      %v6931 = vsub.f32 %v6316, %v6789
      %v6932 = vsub.f32 %v6317, %v6794
      %v6933 = vsub.f32 %v6318, %v6799
      %v6934 = vsub.f32 %v6319, %v6804
      %v6935 = vsub.f32 %v6320, %v6809
      %v6936 = vsub.f32 %v6321, %v6814
      %v6937 = vsub.f32 %v6322, %v6819
      %v6938 = vsub.f32 %v6323, %v6824
      %v6939 = vsub.f32 %v6324, %v6829
      %v6940 = vsub.f32 %v6325, %v6834
      %v6941 = vsub.f32 %v6326, %v6839
      %v6942 = vsub.f32 %v6327, %v6844
      %v6943 = vsub.f32 %v6328, %v6849
      %v6944 = vsub.f32 %v6329, %v6854
      %v6945 = vsub.f32 %v6330, %v6859
      %v6946 = vsub.f32 %v6331, %v6864
      %v6947 = vsub.f32 %v6332, %v6869
      %v6948 = vsub.f32 %v6333, %v6874
      %v6949 = vsub.f32 %v6334, %v6879
      %v6950 = vsub.f32 %v6335, %v6884
      %v6951 = vsub.f32 %v6336, %v6889
      %v6952 = vsub.f32 %v6337, %v6894
      %v6953 = vsub.f32 %v6338, %v6899
      %v6954 = vsub.f32 %v6339, %v6904
      %v6955 = vsub.f32 %v6340, %v6909
      %v6956 = vsub.f32 %v6341, %v6914
      %v6957 = vsub.f32 %v6342, %v6919
      %v6958 = vsub.f32 %v6343, %v6924
      %v6959 = vmul.f32 %v6927, 1.442695
      %v6960 = vpow.pop %v6959
      %v6961 = vmul.f32 %v6928, 1.442695
      %v6962 = vpow.pop %v6961
      %v6963 = vmul.f32 %v6929, 1.442695
      %v6964 = vpow.pop %v6963
      %v6965 = vmul.f32 %v6930, 1.442695
      %v6966 = vpow.pop %v6965
      %v6967 = vmul.f32 %v6931, 1.442695
      %v6968 = vpow.pop %v6967
      %v6969 = vmul.f32 %v6932, 1.442695
      %v6970 = vpow.pop %v6969
      %v6971 = vmul.f32 %v6933, 1.442695
      %v6972 = vpow.pop %v6971
      %v6973 = vmul.f32 %v6934, 1.442695
      %v6974 = vpow.pop %v6973
      %v6975 = vmul.f32 %v6935, 1.442695
      %v6976 = vpow.pop %v6975
      %v6977 = vmul.f32 %v6936, 1.442695
      %v6978 = vpow.pop %v6977
      %v6979 = vmul.f32 %v6937, 1.442695
      %v6980 = vpow.pop %v6979
      %v6981 = vmul.f32 %v6938, 1.442695
      %v6982 = vpow.pop %v6981
      %v6983 = vmul.f32 %v6939, 1.442695
      %v6984 = vpow.pop %v6983
      %v6985 = vmul.f32 %v6940, 1.442695
      %v6986 = vpow.pop %v6985
      %v6987 = vmul.f32 %v6941, 1.442695
      %v6988 = vpow.pop %v6987
      %v6989 = vmul.f32 %v6942, 1.442695
      %v6990 = vpow.pop %v6989
      %v6991 = vmul.f32 %v6943, 1.442695
      %v6992 = vpow.pop %v6991
      %v6993 = vmul.f32 %v6944, 1.442695
      %v6994 = vpow.pop %v6993
      %v6995 = vmul.f32 %v6945, 1.442695
      %v6996 = vpow.pop %v6995
      %v6997 = vmul.f32 %v6946, 1.442695
      %v6998 = vpow.pop %v6997
      %v6999 = vmul.f32 %v6947, 1.442695
      %v7000 = vpow.pop %v6999
      %v7001 = vmul.f32 %v6948, 1.442695
      %v7002 = vpow.pop %v7001
      %v7003 = vmul.f32 %v6949, 1.442695
      %v7004 = vpow.pop %v7003
      %v7005 = vmul.f32 %v6950, 1.442695
      %v7006 = vpow.pop %v7005
      %v7007 = vmul.f32 %v6951, 1.442695
      %v7008 = vpow.pop %v7007
      %v7009 = vmul.f32 %v6952, 1.442695
      %v7010 = vpow.pop %v7009
      %v7011 = vmul.f32 %v6953, 1.442695
      %v7012 = vpow.pop %v7011
      %v7013 = vmul.f32 %v6954, 1.442695
      %v7014 = vpow.pop %v7013
      %v7015 = vmul.f32 %v6955, 1.442695
      %v7016 = vpow.pop %v7015
      %v7017 = vmul.f32 %v6956, 1.442695
      %v7018 = vpow.pop %v7017
      %v7019 = vmul.f32 %v6957, 1.442695
      %v7020 = vpow.pop %v7019
      %v7021 = vmul.f32 %v6958, 1.442695
      %v7022 = vpow.pop %v7021
      %v7023 = vld [vmem:[%s3] sm:$0xff]
      %v7024 = vld [vmem:[%s3 + $0x8] sm:$0xff]
      %v7025 = vld [vmem:[%s3 + $0x10] sm:$0xff]
      %v7026 = vld [vmem:[%s3 + $0x18] sm:$0xff]
      %v7027 = vld [vmem:[%s3 + $0x20] sm:$0xf]
      %vm7028 = vcmask 293888
      %v7030 = vsel %vm7028, %v6960, 0
      %v7033 = vsel %vm7028, %v6962, 0
      %v7036 = vsel %vm7028, %v6964, 0
      %v7039 = vsel %vm7028, %v6966, 0
      %v7042 = vsel %vm7028, %v6968, 0
      %v7045 = vsel %vm7028, %v6970, 0
      %v7048 = vsel %vm7028, %v6972, 0
      %v7051 = vsel %vm7028, %v6974, 0
      %v7054 = vsel %vm7028, %v6976, 0
      %v7057 = vsel %vm7028, %v6978, 0
      %v7060 = vsel %vm7028, %v6980, 0
      %v7063 = vsel %vm7028, %v6982, 0
      %v7066 = vsel %vm7028, %v6984, 0
      %v7069 = vsel %vm7028, %v6986, 0
      %v7072 = vsel %vm7028, %v6988, 0
      %v7075 = vsel %vm7028, %v6990, 0
      %v7078 = vsel %vm7028, %v6992, 0
      %v7081 = vsel %vm7028, %v6994, 0
      %v7084 = vsel %vm7028, %v6996, 0
      %v7087 = vsel %vm7028, %v6998, 0
      %v7090 = vsel %vm7028, %v7000, 0
      %v7093 = vsel %vm7028, %v7002, 0
      %v7096 = vsel %vm7028, %v7004, 0
      %v7099 = vsel %vm7028, %v7006, 0
      %v7102 = vsel %vm7028, %v7008, 0
      %v7105 = vsel %vm7028, %v7010, 0
      %v7108 = vsel %vm7028, %v7012, 0
      %v7111 = vsel %vm7028, %v7014, 0
      %v7114 = vsel %vm7028, %v7016, 0
      %v7117 = vsel %vm7028, %v7018, 0
      %v7120 = vsel %vm7028, %v7020, 0
      %v7123 = vsel %vm7028, %v7022, 0
      %v7126 = vsel %vm6698, %v7027, 0
      %7128 = vmatprep.subr.mxu0 0.0
      %7129 = vmatpush1.msra.mxu0 0.0
      %7130 = vmatprep.subr.mxu0 0.0
      %7131 = vmatpush1.msra.mxu0 0.0
      %7132 = vmatprep.subr.mxu0 0.0
      %7133 = vmatpush1.msra.mxu0 0.0
      %7134 = vmatprep.subr.mxu0 0.0
      %7135 = vmatpush1.msra.mxu0 0.0
      %7136 = vmatprep.subr.mxu0 0.0
      %7137 = vmatpush1.msra.mxu0 0.0
      %7138 = vmatprep.subr.mxu0 0.0
      %7139 = vmatpush1.msra.mxu0 0.0
      %7140 = vmatprep.subr.mxu0 0.0
      %7141 = vmatpush1.msra.mxu0 0.0
      %7142 = vmatprep.subr.mxu0 0.0
      %7143 = vmatpush1.msra.mxu0 0.0
      %7144 = vmatprep.subr.mxu0 0.0
      %7145 = vmatpush1.msra.mxu0 0.0
      %7146 = vmatprep.subr.mxu0 0.0
      %7147 = vmatpush1.msra.mxu0 0.0
      %7148 = vmatprep.subr.mxu0 0.0
      %7149 = vmatpush1.msra.mxu0 0.0
      %7150 = vmatprep.subr.mxu0 0.0
      %7151 = vmatpush1.msra.mxu0 %v7126
      %7152 = vmatprep.subr.mxu0 0.0
      %7153 = vmatpush1.msra.mxu0 %v7026
      %7154 = vmatprep.subr.mxu0 0.0
      %7155 = vmatpush1.msra.mxu0 %v7025
      %7156 = vmatprep.subr.mxu0 0.0
      %7157 = vmatpush1.msra.mxu0 %v7024
      %7158 = vmatprep.subr.mxu0 0.0
      %7159 = vmatpush1.msra.mxu0 %v7023
      %7160 = vmatprep.subr.mxu0 0.0
      %7161 = vmatpush2.msra.mxu0 0.0
      %7162 = vmatprep.subr.mxu0 0.0
      %7163 = vmatpush2.msra.mxu0 0.0
      %7164 = vmatprep.subr.mxu0 0.0
      %7165 = vmatpush2.msra.mxu0 0.0
      %7166 = vmatprep.subr.mxu0 0.0
      %7167 = vmatpush2.msra.mxu0 0.0
      %7168 = vmatprep.subr.mxu0 0.0
      %7169 = vmatpush2.msra.mxu0 0.0
      %7170 = vmatprep.subr.mxu0 0.0
      %7171 = vmatpush2.msra.mxu0 0.0
      %7172 = vmatprep.subr.mxu0 0.0
      %7173 = vmatpush2.msra.mxu0 0.0
      %7174 = vmatprep.subr.mxu0 0.0
      %7175 = vmatpush2.msra.mxu0 0.0
      %7176 = vmatprep.subr.mxu0 0.0
      %7177 = vmatpush2.msra.mxu0 0.0
      %7178 = vmatprep.subr.mxu0 0.0
      %7179 = vmatpush2.msra.mxu0 0.0
      %7180 = vmatprep.subr.mxu0 0.0
      %7181 = vmatpush2.msra.mxu0 0.0
      %7182 = vmatprep.subr.mxu0 0.0
      %7183 = vmatpush2.msra.mxu0 0.0
      %7184 = vmatprep.subr.mxu0 0.0
      %7185 = vmatpush2.msra.mxu0 0.0
      %7186 = vmatprep.subr.mxu0 0.0
      %7187 = vmatpush2.msra.mxu0 0.0
      %7188 = vmatprep.subr.mxu0 0.0
      %7189 = vmatpush2.msra.mxu0 0.0
      %7190 = vmatprep.subr.mxu0 0.0
      %7191 = vmatpush2.msra.mxu0 0.0
      %7192 = vmatprep.mubr.f32.mxu0 0.0
      %7193 = vmatmul.mubr.f32.gmra.mxu0 %v7030
      %v7194 = vpop.f32.mrf.mxu0
      %v7195 = vadd.f32 0.0, %v7194
      %v7196 = vpop.f32.mrf.mxu0
      %7197 = vmatprep.mubr.f32.mxu0 0.0
      %7198 = vmatmul.mubr.f32.gmra.mxu0 %v7033
      %v7199 = vpop.f32.mrf.mxu0
      %v7200 = vadd.f32 0.0, %v7199
      %v7201 = vpop.f32.mrf.mxu0
      %7202 = vmatprep.mubr.f32.mxu0 0.0
      %7203 = vmatmul.mubr.f32.gmra.mxu0 %v7036
      %v7204 = vpop.f32.mrf.mxu0
      %v7205 = vadd.f32 0.0, %v7204
      %v7206 = vpop.f32.mrf.mxu0
      %7207 = vmatprep.mubr.f32.mxu0 0.0
      %7208 = vmatmul.mubr.f32.gmra.mxu0 %v7039
      %v7209 = vpop.f32.mrf.mxu0
      %v7210 = vadd.f32 0.0, %v7209
      %v7211 = vpop.f32.mrf.mxu0
      %7212 = vmatprep.mubr.f32.mxu0 0.0
      %7213 = vmatmul.mubr.f32.gmra.mxu0 %v7042
      %v7214 = vpop.f32.mrf.mxu0
      %v7215 = vadd.f32 0.0, %v7214
      %v7216 = vpop.f32.mrf.mxu0
      %7217 = vmatprep.mubr.f32.mxu0 0.0
      %7218 = vmatmul.mubr.f32.gmra.mxu0 %v7045
      %v7219 = vpop.f32.mrf.mxu0
      %v7220 = vadd.f32 0.0, %v7219
      %v7221 = vpop.f32.mrf.mxu0
      %7222 = vmatprep.mubr.f32.mxu0 0.0
      %7223 = vmatmul.mubr.f32.gmra.mxu0 %v7048
      %v7224 = vpop.f32.mrf.mxu0
      %v7225 = vadd.f32 0.0, %v7224
      %v7226 = vpop.f32.mrf.mxu0
      %7227 = vmatprep.mubr.f32.mxu0 0.0
      %7228 = vmatmul.mubr.f32.gmra.mxu0 %v7051
      %v7229 = vpop.f32.mrf.mxu0
      %v7230 = vadd.f32 0.0, %v7229
      %v7231 = vpop.f32.mrf.mxu0
      %7232 = vmatprep.mubr.f32.mxu0 0.0
      %7233 = vmatmul.mubr.f32.gmra.mxu0 %v7054
      %v7234 = vpop.f32.mrf.mxu0
      %v7235 = vadd.f32 0.0, %v7234
      %v7236 = vpop.f32.mrf.mxu0
      %7237 = vmatprep.mubr.f32.mxu0 0.0
      %7238 = vmatmul.mubr.f32.gmra.mxu0 %v7057
      %v7239 = vpop.f32.mrf.mxu0
      %v7240 = vadd.f32 0.0, %v7239
      %v7241 = vpop.f32.mrf.mxu0
      %7242 = vmatprep.mubr.f32.mxu0 0.0
      %7243 = vmatmul.mubr.f32.gmra.mxu0 %v7060
      %v7244 = vpop.f32.mrf.mxu0
      %v7245 = vadd.f32 0.0, %v7244
      %v7246 = vpop.f32.mrf.mxu0
      %7247 = vmatprep.mubr.f32.mxu0 0.0
      %7248 = vmatmul.mubr.f32.gmra.mxu0 %v7063
      %v7249 = vpop.f32.mrf.mxu0
      %v7250 = vadd.f32 0.0, %v7249
      %v7251 = vpop.f32.mrf.mxu0
      %7252 = vmatprep.mubr.f32.mxu0 0.0
      %7253 = vmatmul.mubr.f32.gmra.mxu0 %v7066
      %v7254 = vpop.f32.mrf.mxu0
      %v7255 = vadd.f32 0.0, %v7254
      %v7256 = vpop.f32.mrf.mxu0
      %7257 = vmatprep.mubr.f32.mxu0 0.0
      %7258 = vmatmul.mubr.f32.gmra.mxu0 %v7069
      %v7259 = vpop.f32.mrf.mxu0
      %v7260 = vadd.f32 0.0, %v7259
      %v7261 = vpop.f32.mrf.mxu0
      %7262 = vmatprep.mubr.f32.mxu0 0.0
      %7263 = vmatmul.mubr.f32.gmra.mxu0 %v7072
      %v7264 = vpop.f32.mrf.mxu0
      %v7265 = vadd.f32 0.0, %v7264
      %v7266 = vpop.f32.mrf.mxu0
      %7267 = vmatprep.mubr.f32.mxu0 0.0
      %7268 = vmatmul.mubr.f32.gmra.mxu0 %v7075
      %v7269 = vpop.f32.mrf.mxu0
      %v7270 = vadd.f32 0.0, %v7269
      %v7271 = vpop.f32.mrf.mxu0
      %7272 = vmatprep.mubr.f32.mxu0 0.0
      %7273 = vmatmul.mubr.f32.gmra.mxu0 %v7078
      %v7274 = vpop.f32.mrf.mxu0
      %v7275 = vadd.f32 0.0, %v7274
      %v7276 = vpop.f32.mrf.mxu0
      %7277 = vmatprep.mubr.f32.mxu0 0.0
      %7278 = vmatmul.mubr.f32.gmra.mxu0 %v7081
      %v7279 = vpop.f32.mrf.mxu0
      %v7280 = vadd.f32 0.0, %v7279
      %v7281 = vpop.f32.mrf.mxu0
      %7282 = vmatprep.mubr.f32.mxu0 0.0
      %7283 = vmatmul.mubr.f32.gmra.mxu0 %v7084
      %v7284 = vpop.f32.mrf.mxu0
      %v7285 = vadd.f32 0.0, %v7284
      %v7286 = vpop.f32.mrf.mxu0
      %7287 = vmatprep.mubr.f32.mxu0 0.0
      %7288 = vmatmul.mubr.f32.gmra.mxu0 %v7087
      %v7289 = vpop.f32.mrf.mxu0
      %v7290 = vadd.f32 0.0, %v7289
      %v7291 = vpop.f32.mrf.mxu0
      %7292 = vmatprep.mubr.f32.mxu0 0.0
      %7293 = vmatmul.mubr.f32.gmra.mxu0 %v7090
      %v7294 = vpop.f32.mrf.mxu0
      %v7295 = vadd.f32 0.0, %v7294
      %v7296 = vpop.f32.mrf.mxu0
      %7297 = vmatprep.mubr.f32.mxu0 0.0
      %7298 = vmatmul.mubr.f32.gmra.mxu0 %v7093
      %v7299 = vpop.f32.mrf.mxu0
      %v7300 = vadd.f32 0.0, %v7299
      %v7301 = vpop.f32.mrf.mxu0
      %7302 = vmatprep.mubr.f32.mxu0 0.0
      %7303 = vmatmul.mubr.f32.gmra.mxu0 %v7096
      %v7304 = vpop.f32.mrf.mxu0
      %v7305 = vadd.f32 0.0, %v7304
      %v7306 = vpop.f32.mrf.mxu0
      %7307 = vmatprep.mubr.f32.mxu0 0.0
      %7308 = vmatmul.mubr.f32.gmra.mxu0 %v7099
      %v7309 = vpop.f32.mrf.mxu0
      %v7310 = vadd.f32 0.0, %v7309
      %v7311 = vpop.f32.mrf.mxu0
      %7312 = vmatprep.mubr.f32.mxu0 0.0
      %7313 = vmatmul.mubr.f32.gmra.mxu0 %v7102
      %v7314 = vpop.f32.mrf.mxu0
      %v7315 = vadd.f32 0.0, %v7314
      %v7316 = vpop.f32.mrf.mxu0
      %7317 = vmatprep.mubr.f32.mxu0 0.0
      %7318 = vmatmul.mubr.f32.gmra.mxu0 %v7105
      %v7319 = vpop.f32.mrf.mxu0
      %v7320 = vadd.f32 0.0, %v7319
      %v7321 = vpop.f32.mrf.mxu0
      %7322 = vmatprep.mubr.f32.mxu0 0.0
      %7323 = vmatmul.mubr.f32.gmra.mxu0 %v7108
      %v7324 = vpop.f32.mrf.mxu0
      %v7325 = vadd.f32 0.0, %v7324
      %v7326 = vpop.f32.mrf.mxu0
      %7327 = vmatprep.mubr.f32.mxu0 0.0
      %7328 = vmatmul.mubr.f32.gmra.mxu0 %v7111
      %v7329 = vpop.f32.mrf.mxu0
      %v7330 = vadd.f32 0.0, %v7329
      %v7331 = vpop.f32.mrf.mxu0
      %7332 = vmatprep.mubr.f32.mxu0 0.0
      %7333 = vmatmul.mubr.f32.gmra.mxu0 %v7114
      %v7334 = vpop.f32.mrf.mxu0
      %v7335 = vadd.f32 0.0, %v7334
      %v7336 = vpop.f32.mrf.mxu0
      %7337 = vmatprep.mubr.f32.mxu0 0.0
      %7338 = vmatmul.mubr.f32.gmra.mxu0 %v7117
      %v7339 = vpop.f32.mrf.mxu0
      %v7340 = vadd.f32 0.0, %v7339
      %v7341 = vpop.f32.mrf.mxu0
      %7342 = vmatprep.mubr.f32.mxu0 0.0
      %7343 = vmatmul.mubr.f32.gmra.mxu0 %v7120
      %v7344 = vpop.f32.mrf.mxu0
      %v7345 = vadd.f32 0.0, %v7344
      %v7346 = vpop.f32.mrf.mxu0
      %7347 = vmatprep.mubr.f32.mxu0 0.0
      %7348 = vmatmul.mubr.f32.gmra.mxu0 %v7123
      %v7349 = vpop.f32.mrf.mxu0
      %v7350 = vadd.f32 0.0, %v7349
      %v7351 = vpop.f32.mrf.mxu0
      %7352 = vdwg.mxu0
      %v7353 = vrcp.pop %v7195
      %v7354 = vrcp.pop %v7200
      %v7355 = vrcp.pop %v7205
      %v7356 = vrcp.pop %v7210
      %v7357 = vrcp.pop %v7215
      %v7358 = vrcp.pop %v7220
      %v7359 = vrcp.pop %v7225
      %v7360 = vrcp.pop %v7230
      %v7361 = vrcp.pop %v7235
      %v7362 = vrcp.pop %v7240
      %v7363 = vrcp.pop %v7245
      %v7364 = vrcp.pop %v7250
      %v7365 = vrcp.pop %v7255
      %v7366 = vrcp.pop %v7260
      %v7367 = vrcp.pop %v7265
      %v7368 = vrcp.pop %v7270
      %v7369 = vrcp.pop %v7275
      %v7370 = vrcp.pop %v7280
      %v7371 = vrcp.pop %v7285
      %v7372 = vrcp.pop %v7290
      %v7373 = vrcp.pop %v7295
      %v7374 = vrcp.pop %v7300
      %v7375 = vrcp.pop %v7305
      %v7376 = vrcp.pop %v7310
      %v7377 = vrcp.pop %v7315
      %v7378 = vrcp.pop %v7320
      %v7379 = vrcp.pop %v7325
      %v7380 = vrcp.pop %v7330
      %v7381 = vrcp.pop %v7335
      %v7382 = vrcp.pop %v7340
      %v7383 = vrcp.pop %v7345
      %v7384 = vrcp.pop %v7350
      %v7386 = vsel %vm6601, %v7353, 0
      %v7389 = vsel %vm6601, %v7354, 0
      %v7392 = vsel %vm6601, %v7355, 0
      %v7395 = vsel %vm6601, %v7356, 0
      %v7398 = vsel %vm6601, %v7357, 0
      %v7401 = vsel %vm6601, %v7358, 0
      %v7404 = vsel %vm6601, %v7359, 0
      %v7407 = vsel %vm6601, %v7360, 0
      %v7410 = vsel %vm6601, %v7361, 0
      %v7413 = vsel %vm6601, %v7362, 0
      %v7416 = vsel %vm6601, %v7363, 0
      %v7419 = vsel %vm6601, %v7364, 0
      %v7422 = vsel %vm6601, %v7365, 0
      %v7425 = vsel %vm6601, %v7366, 0
      %v7428 = vsel %vm6601, %v7367, 0
      %v7431 = vsel %vm6601, %v7368, 0
      %v7434 = vsel %vm6601, %v7369, 0
      %v7437 = vsel %vm6601, %v7370, 0
      %v7440 = vsel %vm6601, %v7371, 0
      %v7443 = vsel %vm6601, %v7372, 0
      %v7446 = vsel %vm6601, %v7373, 0
      %v7449 = vsel %vm6601, %v7374, 0
      %v7452 = vsel %vm6601, %v7375, 0
      %v7455 = vsel %vm6601, %v7376, 0
      %v7458 = vsel %vm6601, %v7377, 0
      %v7461 = vsel %vm6601, %v7378, 0
      %v7464 = vsel %vm6601, %v7379, 0
      %v7467 = vsel %vm6601, %v7380, 0
      %v7470 = vsel %vm6601, %v7381, 0
      %v7473 = vsel %vm6601, %v7382, 0
      %v7476 = vsel %vm6601, %v7383, 0
      %v7479 = vsel %vm6601, %v7384, 0
      %7481 = vmatprep.subr.mxu0 0.0
      %7482 = vmatpush1.msra.mxu0 0.0
      %7483 = vmatprep.subr.mxu0 0.0
      %7484 = vmatpush1.msra.mxu0 0.0
      %7485 = vmatprep.subr.mxu0 0.0
      %7486 = vmatpush1.msra.mxu0 0.0
      %7487 = vmatprep.subr.mxu0 0.0
      %7488 = vmatpush1.msra.mxu0 0.0
      %7489 = vmatprep.subr.mxu0 0.0
      %7490 = vmatpush1.msra.mxu0 0.0
      %7491 = vmatprep.subr.mxu0 0.0
      %7492 = vmatpush1.msra.mxu0 0.0
      %7493 = vmatprep.subr.mxu0 0.0
      %7494 = vmatpush1.msra.mxu0 0.0
      %7495 = vmatprep.subr.mxu0 0.0
      %7496 = vmatpush1.msra.mxu0 0.0
      %7497 = vmatprep.subr.mxu0 0.0
      %7498 = vmatpush1.msra.mxu0 0.0
      %7499 = vmatprep.subr.mxu0 0.0
      %7500 = vmatpush1.msra.mxu0 0.0
      %7501 = vmatprep.subr.mxu0 0.0
      %7502 = vmatpush1.msra.mxu0 0.0
      %7503 = vmatprep.subr.mxu0 0.0
      %7504 = vmatpush1.msra.mxu0 0.0
      %7505 = vmatprep.subr.mxu0 0.0
      %7506 = vmatpush1.msra.mxu0 0.0
      %7507 = vmatprep.subr.mxu0 0.0
      %7508 = vmatpush1.msra.mxu0 0.0
      %7509 = vmatprep.subr.mxu0 0.0
      %7510 = vmatpush1.msra.mxu0 0.0
      %7511 = vmatprep.subr.mxu0 0.0
      %7512 = vmatpush1.msra.mxu0 %v6700
      %7513 = vmatprep.subr.mxu0 0.0
      %7514 = vmatpush2.msra.mxu0 0.0
      %7515 = vmatprep.subr.mxu0 0.0
      %7516 = vmatpush2.msra.mxu0 0.0
      %7517 = vmatprep.subr.mxu0 0.0
      %7518 = vmatpush2.msra.mxu0 0.0
      %7519 = vmatprep.subr.mxu0 0.0
      %7520 = vmatpush2.msra.mxu0 0.0
      %7521 = vmatprep.subr.mxu0 0.0
      %7522 = vmatpush2.msra.mxu0 0.0
      %7523 = vmatprep.subr.mxu0 0.0
      %7524 = vmatpush2.msra.mxu0 0.0
      %7525 = vmatprep.subr.mxu0 0.0
      %7526 = vmatpush2.msra.mxu0 0.0
      %7527 = vmatprep.subr.mxu0 0.0
      %7528 = vmatpush2.msra.mxu0 0.0
      %7529 = vmatprep.subr.mxu0 0.0
      %7530 = vmatpush2.msra.mxu0 0.0
      %7531 = vmatprep.subr.mxu0 0.0
      %7532 = vmatpush2.msra.mxu0 0.0
      %7533 = vmatprep.subr.mxu0 0.0
      %7534 = vmatpush2.msra.mxu0 0.0
      %7535 = vmatprep.subr.mxu0 0.0
      %7536 = vmatpush2.msra.mxu0 0.0
      %7537 = vmatprep.subr.mxu0 0.0
      %7538 = vmatpush2.msra.mxu0 0.0
      %7539 = vmatprep.subr.mxu0 0.0
      %7540 = vmatpush2.msra.mxu0 0.0
      %7541 = vmatprep.subr.mxu0 0.0
      %7542 = vmatpush2.msra.mxu0 0.0
      %7543 = vmatprep.subr.mxu0 0.0
      %7544 = vmatpush2.msra.mxu0 0.0
      %7545 = vmatprep.mubr.f32.mxu0 0.0
      %7546 = vmatmul.mubr.f32.gmra.mxu0 %v7386
      %v7547 = vpop.f32.mrf.mxu0
      %v7548 = vadd.f32 0.0, %v7547
      %v7549 = vpop.f32.mrf.mxu0
      %7550 = vmatprep.mubr.f32.mxu0 0.0
      %7551 = vmatmul.mubr.f32.gmra.mxu0 %v7389
      %v7552 = vpop.f32.mrf.mxu0
      %v7553 = vadd.f32 0.0, %v7552
      %v7554 = vpop.f32.mrf.mxu0
      %7555 = vmatprep.mubr.f32.mxu0 0.0
      %7556 = vmatmul.mubr.f32.gmra.mxu0 %v7392
      %v7557 = vpop.f32.mrf.mxu0
      %v7558 = vadd.f32 0.0, %v7557
      %v7559 = vpop.f32.mrf.mxu0
      %7560 = vmatprep.mubr.f32.mxu0 0.0
      %7561 = vmatmul.mubr.f32.gmra.mxu0 %v7395
      %v7562 = vpop.f32.mrf.mxu0
      %v7563 = vadd.f32 0.0, %v7562
      %v7564 = vpop.f32.mrf.mxu0
      %7565 = vmatprep.mubr.f32.mxu0 0.0
      %7566 = vmatmul.mubr.f32.gmra.mxu0 %v7398
      %v7567 = vpop.f32.mrf.mxu0
      %v7568 = vadd.f32 0.0, %v7567
      %v7569 = vpop.f32.mrf.mxu0
      %7570 = vmatprep.mubr.f32.mxu0 0.0
      %7571 = vmatmul.mubr.f32.gmra.mxu0 %v7401
      %v7572 = vpop.f32.mrf.mxu0
      %v7573 = vadd.f32 0.0, %v7572
      %v7574 = vpop.f32.mrf.mxu0
      %7575 = vmatprep.mubr.f32.mxu0 0.0
      %7576 = vmatmul.mubr.f32.gmra.mxu0 %v7404
      %v7577 = vpop.f32.mrf.mxu0
      %v7578 = vadd.f32 0.0, %v7577
      %v7579 = vpop.f32.mrf.mxu0
      %7580 = vmatprep.mubr.f32.mxu0 0.0
      %7581 = vmatmul.mubr.f32.gmra.mxu0 %v7407
      %v7582 = vpop.f32.mrf.mxu0
      %v7583 = vadd.f32 0.0, %v7582
      %v7584 = vpop.f32.mrf.mxu0
      %7585 = vmatprep.mubr.f32.mxu0 0.0
      %7586 = vmatmul.mubr.f32.gmra.mxu0 %v7410
      %v7587 = vpop.f32.mrf.mxu0
      %v7588 = vadd.f32 0.0, %v7587
      %v7589 = vpop.f32.mrf.mxu0
      %7590 = vmatprep.mubr.f32.mxu0 0.0
      %7591 = vmatmul.mubr.f32.gmra.mxu0 %v7413
      %v7592 = vpop.f32.mrf.mxu0
      %v7593 = vadd.f32 0.0, %v7592
      %v7594 = vpop.f32.mrf.mxu0
      %7595 = vmatprep.mubr.f32.mxu0 0.0
      %7596 = vmatmul.mubr.f32.gmra.mxu0 %v7416
      %v7597 = vpop.f32.mrf.mxu0
      %v7598 = vadd.f32 0.0, %v7597
      %v7599 = vpop.f32.mrf.mxu0
      %7600 = vmatprep.mubr.f32.mxu0 0.0
      %7601 = vmatmul.mubr.f32.gmra.mxu0 %v7419
      %v7602 = vpop.f32.mrf.mxu0
      %v7603 = vadd.f32 0.0, %v7602
      %v7604 = vpop.f32.mrf.mxu0
      %7605 = vmatprep.mubr.f32.mxu0 0.0
      %7606 = vmatmul.mubr.f32.gmra.mxu0 %v7422
      %v7607 = vpop.f32.mrf.mxu0
      %v7608 = vadd.f32 0.0, %v7607
      %v7609 = vpop.f32.mrf.mxu0
      %7610 = vmatprep.mubr.f32.mxu0 0.0
      %7611 = vmatmul.mubr.f32.gmra.mxu0 %v7425
      %v7612 = vpop.f32.mrf.mxu0
      %v7613 = vadd.f32 0.0, %v7612
      %v7614 = vpop.f32.mrf.mxu0
      %7615 = vmatprep.mubr.f32.mxu0 0.0
      %7616 = vmatmul.mubr.f32.gmra.mxu0 %v7428
      %v7617 = vpop.f32.mrf.mxu0
      %v7618 = vadd.f32 0.0, %v7617
      %v7619 = vpop.f32.mrf.mxu0
      %7620 = vmatprep.mubr.f32.mxu0 0.0
      %7621 = vmatmul.mubr.f32.gmra.mxu0 %v7431
      %v7622 = vpop.f32.mrf.mxu0
      %v7623 = vadd.f32 0.0, %v7622
      %v7624 = vpop.f32.mrf.mxu0
      %7625 = vmatprep.mubr.f32.mxu0 0.0
      %7626 = vmatmul.mubr.f32.gmra.mxu0 %v7434
      %v7627 = vpop.f32.mrf.mxu0
      %v7628 = vadd.f32 0.0, %v7627
      %v7629 = vpop.f32.mrf.mxu0
      %7630 = vmatprep.mubr.f32.mxu0 0.0
      %7631 = vmatmul.mubr.f32.gmra.mxu0 %v7437
      %v7632 = vpop.f32.mrf.mxu0
      %v7633 = vadd.f32 0.0, %v7632
      %v7634 = vpop.f32.mrf.mxu0
      %7635 = vmatprep.mubr.f32.mxu0 0.0
      %7636 = vmatmul.mubr.f32.gmra.mxu0 %v7440
      %v7637 = vpop.f32.mrf.mxu0
      %v7638 = vadd.f32 0.0, %v7637
      %v7639 = vpop.f32.mrf.mxu0
      %7640 = vmatprep.mubr.f32.mxu0 0.0
      %7641 = vmatmul.mubr.f32.gmra.mxu0 %v7443
      %v7642 = vpop.f32.mrf.mxu0
      %v7643 = vadd.f32 0.0, %v7642
      %v7644 = vpop.f32.mrf.mxu0
      %7645 = vmatprep.mubr.f32.mxu0 0.0
      %7646 = vmatmul.mubr.f32.gmra.mxu0 %v7446
      %v7647 = vpop.f32.mrf.mxu0
      %v7648 = vadd.f32 0.0, %v7647
      %v7649 = vpop.f32.mrf.mxu0
      %7650 = vmatprep.mubr.f32.mxu0 0.0
      %7651 = vmatmul.mubr.f32.gmra.mxu0 %v7449
      %v7652 = vpop.f32.mrf.mxu0
      %v7653 = vadd.f32 0.0, %v7652
      %v7654 = vpop.f32.mrf.mxu0
      %7655 = vmatprep.mubr.f32.mxu0 0.0
      %7656 = vmatmul.mubr.f32.gmra.mxu0 %v7452
      %v7657 = vpop.f32.mrf.mxu0
      %v7658 = vadd.f32 0.0, %v7657
      %v7659 = vpop.f32.mrf.mxu0
      %7660 = vmatprep.mubr.f32.mxu0 0.0
      %7661 = vmatmul.mubr.f32.gmra.mxu0 %v7455
      %v7662 = vpop.f32.mrf.mxu0
      %v7663 = vadd.f32 0.0, %v7662
      %v7664 = vpop.f32.mrf.mxu0
      %7665 = vmatprep.mubr.f32.mxu0 0.0
      %7666 = vmatmul.mubr.f32.gmra.mxu0 %v7458
      %v7667 = vpop.f32.mrf.mxu0
      %v7668 = vadd.f32 0.0, %v7667
      %v7669 = vpop.f32.mrf.mxu0
      %7670 = vmatprep.mubr.f32.mxu0 0.0
      %7671 = vmatmul.mubr.f32.gmra.mxu0 %v7461
      %v7672 = vpop.f32.mrf.mxu0
      %v7673 = vadd.f32 0.0, %v7672
      %v7674 = vpop.f32.mrf.mxu0
      %7675 = vmatprep.mubr.f32.mxu0 0.0
      %7676 = vmatmul.mubr.f32.gmra.mxu0 %v7464
      %v7677 = vpop.f32.mrf.mxu0
      %v7678 = vadd.f32 0.0, %v7677
      %v7679 = vpop.f32.mrf.mxu0
      %7680 = vmatprep.mubr.f32.mxu0 0.0
      %7681 = vmatmul.mubr.f32.gmra.mxu0 %v7467
      %v7682 = vpop.f32.mrf.mxu0
      %v7683 = vadd.f32 0.0, %v7682
      %v7684 = vpop.f32.mrf.mxu0
      %7685 = vmatprep.mubr.f32.mxu0 0.0
      %7686 = vmatmul.mubr.f32.gmra.mxu0 %v7470
      %v7687 = vpop.f32.mrf.mxu0
      %v7688 = vadd.f32 0.0, %v7687
      %v7689 = vpop.f32.mrf.mxu0
      %7690 = vmatprep.mubr.f32.mxu0 0.0
      %7691 = vmatmul.mubr.f32.gmra.mxu0 %v7473
      %v7692 = vpop.f32.mrf.mxu0
      %v7693 = vadd.f32 0.0, %v7692
      %v7694 = vpop.f32.mrf.mxu0
      %7695 = vmatprep.mubr.f32.mxu0 0.0
      %7696 = vmatmul.mubr.f32.gmra.mxu0 %v7476
      %v7697 = vpop.f32.mrf.mxu0
      %v7698 = vadd.f32 0.0, %v7697
      %v7699 = vpop.f32.mrf.mxu0
      %7700 = vmatprep.mubr.f32.mxu0 0.0
      %7701 = vmatmul.mubr.f32.gmra.mxu0 %v7479
      %v7702 = vpop.f32.mrf.mxu0
      %v7703 = vadd.f32 0.0, %v7702
      %v7704 = vpop.f32.mrf.mxu0
      %7705 = vdwg.mxu0
      %v7706 = vmul.f32 %v6960, %v7548
      %v7707 = vmul.f32 %v6962, %v7553
      %v7708 = vmul.f32 %v6964, %v7558
      %v7709 = vmul.f32 %v6966, %v7563
      %v7710 = vmul.f32 %v6968, %v7568
      %v7711 = vmul.f32 %v6970, %v7573
      %v7712 = vmul.f32 %v6972, %v7578
      %v7713 = vmul.f32 %v6974, %v7583
      %v7714 = vmul.f32 %v6976, %v7588
      %v7715 = vmul.f32 %v6978, %v7593
      %v7716 = vmul.f32 %v6980, %v7598
      %v7717 = vmul.f32 %v6982, %v7603
      %v7718 = vmul.f32 %v6984, %v7608
      %v7719 = vmul.f32 %v6986, %v7613
      %v7720 = vmul.f32 %v6988, %v7618
      %v7721 = vmul.f32 %v6990, %v7623
      %v7722 = vmul.f32 %v6992, %v7628
      %v7723 = vmul.f32 %v6994, %v7633
      %v7724 = vmul.f32 %v6996, %v7638
      %v7725 = vmul.f32 %v6998, %v7643
      %v7726 = vmul.f32 %v7000, %v7648
      %v7727 = vmul.f32 %v7002, %v7653
      %v7728 = vmul.f32 %v7004, %v7658
      %v7729 = vmul.f32 %v7006, %v7663
      %v7730 = vmul.f32 %v7008, %v7668
      %v7731 = vmul.f32 %v7010, %v7673
      %v7732 = vmul.f32 %v7012, %v7678
      %v7733 = vmul.f32 %v7014, %v7683
      %v7734 = vmul.f32 %v7016, %v7688
      %v7735 = vmul.f32 %v7018, %v7693
      %v7736 = vmul.f32 %v7020, %v7698
      %v7737 = vmul.f32 %v7022, %v7703
      %s7738 = smul.addr %s455, 4
      %s7739 = scalar_lea.vmem %s374, %s7738
      %v7740 = vld [vmem:[%s7739] sm:$0xf]
      %v7741 = vld [vmem:[%s7739 + $0x4] sm:$0xf]
      %v7742 = vld [vmem:[%s7739 + $0x8] sm:$0x1]
      %v7743 = vld [vmem:[%s7739 + $0xc] sm:$0xf]
      %v7744 = vld [vmem:[%s7739 + $0x10] sm:$0xf]
      %v7745 = vld [vmem:[%s7739 + $0x14] sm:$0x1]
      %v7746 = vld [vmem:[%s7739 + $0x18] sm:$0xf]
      %v7747 = vld [vmem:[%s7739 + $0x1c] sm:$0xf]
      %v7748 = vld [vmem:[%s7739 + $0x20] sm:$0x1]
      %v7749 = vld [vmem:[%s7739 + $0x24] sm:$0xf]
      %v7750 = vld [vmem:[%s7739 + $0x28] sm:$0xf]
      %v7751 = vld [vmem:[%s7739 + $0x2c] sm:$0x1]
      %v7752 = vld [vmem:[%s7739 + $0x30] sm:$0xf]
      %v7753 = vld [vmem:[%s7739 + $0x34] sm:$0xf]
      %v7754 = vld [vmem:[%s7739 + $0x38] sm:$0x1]
      %v7755 = vld [vmem:[%s7739 + $0x3c] sm:$0xf]
      %v7756 = vld [vmem:[%s7739 + $0x40] sm:$0xf]
      %v7757 = vld [vmem:[%s7739 + $0x44] sm:$0x1]
      %v7758 = vld [vmem:[%s7739 + $0x48] sm:$0xf]
      %v7759 = vld [vmem:[%s7739 + $0x4c] sm:$0xf]
      %v7760 = vld [vmem:[%s7739 + $0x50] sm:$0x1]
      %v7761 = vld [vmem:[%s7739 + $0x54] sm:$0xf]
      %v7762 = vld [vmem:[%s7739 + $0x58] sm:$0xf]
      %v7763 = vld [vmem:[%s7739 + $0x5c] sm:$0x1]
      %v7764 = vld [vmem:[%s7739 + $0x60] sm:$0xf]
      %v7765 = vld [vmem:[%s7739 + $0x64] sm:$0xf]
      %v7766 = vld [vmem:[%s7739 + $0x68] sm:$0x1]
      %v7767 = vld [vmem:[%s7739 + $0x6c] sm:$0xf]
      %v7768 = vld [vmem:[%s7739 + $0x70] sm:$0xf]
      %v7769 = vld [vmem:[%s7739 + $0x74] sm:$0x1]
      %v7770 = vld [vmem:[%s7739 + $0x78] sm:$0xf]
      %v7771 = vld [vmem:[%s7739 + $0x7c] sm:$0xf]
      %v7772 = vld [vmem:[%s7739 + $0x80] sm:$0x1]
      %v7773 = vld [vmem:[%s7739 + $0x84] sm:$0xf]
      %v7774 = vld [vmem:[%s7739 + $0x88] sm:$0xf]
      %v7775 = vld [vmem:[%s7739 + $0x8c] sm:$0x1]
      %v7776 = vld [vmem:[%s7739 + $0x90] sm:$0xf]
      %v7777 = vld [vmem:[%s7739 + $0x94] sm:$0xf]
      %v7778 = vld [vmem:[%s7739 + $0x98] sm:$0x1]
      %v7779 = vld [vmem:[%s7739 + $0x9c] sm:$0xf]
      %v7780 = vld [vmem:[%s7739 + $0xa0] sm:$0xf]
      %v7781 = vld [vmem:[%s7739 + $0xa4] sm:$0x1]
      %v7782 = vld [vmem:[%s7739 + $0xa8] sm:$0xf]
      %v7783 = vld [vmem:[%s7739 + $0xac] sm:$0xf]
      %v7784 = vld [vmem:[%s7739 + $0xb0] sm:$0x1]
      %v7785 = vld [vmem:[%s7739 + $0xb4] sm:$0xf]
      %v7786 = vld [vmem:[%s7739 + $0xb8] sm:$0xf]
      %v7787 = vld [vmem:[%s7739 + $0xbc] sm:$0x1]
      %v7788 = vld [vmem:[%s7739 + $0xc0] sm:$0xf]
      %v7789 = vld [vmem:[%s7739 + $0xc4] sm:$0xf]
      %v7790 = vld [vmem:[%s7739 + $0xc8] sm:$0x1]
      %v7791 = vld [vmem:[%s7739 + $0xcc] sm:$0xf]
      %v7792 = vld [vmem:[%s7739 + $0xd0] sm:$0xf]
      %v7793 = vld [vmem:[%s7739 + $0xd4] sm:$0x1]
      %v7794 = vunpack.c.l.bf16 %v7740
      %v7795 = vunpack.c.l.bf16 %v7741
      %v7796 = vunpack.c.l.bf16 %v7742
      %v7797 = vunpack.c.l.bf16 %v7743
      %v7798 = vunpack.c.l.bf16 %v7744
      %v7799 = vunpack.c.l.bf16 %v7745
      %v7800 = vunpack.c.l.bf16 %v7746
      %v7801 = vunpack.c.l.bf16 %v7747
      %v7802 = vunpack.c.l.bf16 %v7748
      %v7803 = vunpack.c.l.bf16 %v7749
      %v7804 = vunpack.c.l.bf16 %v7750
      %v7805 = vunpack.c.l.bf16 %v7751
      %v7806 = vunpack.c.l.bf16 %v7752
      %v7807 = vunpack.c.l.bf16 %v7753
      %v7808 = vunpack.c.l.bf16 %v7754
      %v7809 = vunpack.c.l.bf16 %v7755
      %v7810 = vunpack.c.l.bf16 %v7756
      %v7811 = vunpack.c.l.bf16 %v7757
      %v7812 = vunpack.c.l.bf16 %v7758
      %v7813 = vunpack.c.l.bf16 %v7759
      %v7814 = vunpack.c.l.bf16 %v7760
      %v7815 = vunpack.c.l.bf16 %v7761
      %v7816 = vunpack.c.l.bf16 %v7762
      %v7817 = vunpack.c.l.bf16 %v7763
      %v7818 = vunpack.c.l.bf16 %v7764
      %v7819 = vunpack.c.l.bf16 %v7765
      %v7820 = vunpack.c.l.bf16 %v7766
      %v7821 = vunpack.c.l.bf16 %v7767
      %v7822 = vunpack.c.l.bf16 %v7768
      %v7823 = vunpack.c.l.bf16 %v7769
      %v7824 = vunpack.c.l.bf16 %v7770
      %v7825 = vunpack.c.l.bf16 %v7771
      %v7826 = vunpack.c.l.bf16 %v7772
      %v7827 = vunpack.c.l.bf16 %v7773
      %v7828 = vunpack.c.l.bf16 %v7774
      %v7829 = vunpack.c.l.bf16 %v7775
      %v7830 = vunpack.c.l.bf16 %v7776
      %v7831 = vunpack.c.l.bf16 %v7777
      %v7832 = vunpack.c.l.bf16 %v7778
      %v7833 = vunpack.c.l.bf16 %v7779
      %v7834 = vunpack.c.l.bf16 %v7780
      %v7835 = vunpack.c.l.bf16 %v7781
      %v7836 = vunpack.c.l.bf16 %v7782
      %v7837 = vunpack.c.l.bf16 %v7783
      %v7838 = vunpack.c.l.bf16 %v7784
      %v7839 = vunpack.c.l.bf16 %v7785
      %v7840 = vunpack.c.l.bf16 %v7786
      %v7841 = vunpack.c.l.bf16 %v7787
      %v7842 = vunpack.c.l.bf16 %v7788
      %v7843 = vunpack.c.l.bf16 %v7789
      %v7844 = vunpack.c.l.bf16 %v7790
      %v7845 = vunpack.c.l.bf16 %v7791
      %v7846 = vunpack.c.l.bf16 %v7792
      %v7847 = vunpack.c.l.bf16 %v7793
      %v7848 = vld [vmem:[%s4] sm:$0xff]
      %v7849 = vld [vmem:[%s4 + $0x8] sm:$0xff]
      %v7850 = vld [vmem:[%s4 + $0x10] sm:$0xff]
      %v7851 = vld [vmem:[%s4 + $0x18] sm:$0xff]
      %v7852 = vld [vmem:[%s4 + $0x20] sm:$0xf]
      %v7854 = vsel %vm7028, %v7706, 0
      %v7857 = vsel %vm7028, %v7707, 0
      %v7860 = vsel %vm7028, %v7708, 0
      %v7863 = vsel %vm7028, %v7709, 0
      %v7866 = vsel %vm7028, %v7710, 0
      %v7869 = vsel %vm7028, %v7711, 0
      %v7872 = vsel %vm7028, %v7712, 0
      %v7875 = vsel %vm7028, %v7713, 0
      %v7878 = vsel %vm7028, %v7714, 0
      %v7881 = vsel %vm7028, %v7715, 0
      %v7884 = vsel %vm7028, %v7716, 0
      %v7887 = vsel %vm7028, %v7717, 0
      %v7890 = vsel %vm7028, %v7718, 0
      %v7893 = vsel %vm7028, %v7719, 0
      %v7896 = vsel %vm7028, %v7720, 0
      %v7899 = vsel %vm7028, %v7721, 0
      %v7902 = vsel %vm7028, %v7722, 0
      %v7905 = vsel %vm7028, %v7723, 0
      %v7908 = vsel %vm7028, %v7724, 0
      %v7911 = vsel %vm7028, %v7725, 0
      %v7914 = vsel %vm7028, %v7726, 0
      %v7917 = vsel %vm7028, %v7727, 0
      %v7920 = vsel %vm7028, %v7728, 0
      %v7923 = vsel %vm7028, %v7729, 0
      %v7926 = vsel %vm7028, %v7730, 0
      %v7929 = vsel %vm7028, %v7731, 0
      %v7932 = vsel %vm7028, %v7732, 0
      %v7935 = vsel %vm7028, %v7733, 0
      %v7938 = vsel %vm7028, %v7734, 0
      %v7941 = vsel %vm7028, %v7735, 0
      %v7944 = vsel %vm7028, %v7736, 0
      %v7947 = vsel %vm7028, %v7737, 0
      %v7950 = vsel %vm6698, %v7852, 0
      %7952 = vmatprep.subr.mxu0 0.0
      %7953 = vmatpush1.msra.mxu0 0.0
      %7954 = vmatprep.subr.mxu0 0.0
      %7955 = vmatpush1.msra.mxu0 0.0
      %7956 = vmatprep.subr.mxu0 0.0
      %7957 = vmatpush1.msra.mxu0 0.0
      %7958 = vmatprep.subr.mxu0 0.0
      %7959 = vmatpush1.msra.mxu0 0.0
      %7960 = vmatprep.subr.mxu0 0.0
      %7961 = vmatpush1.msra.mxu0 0.0
      %7962 = vmatprep.subr.mxu0 0.0
      %7963 = vmatpush1.msra.mxu0 0.0
      %7964 = vmatprep.subr.mxu0 0.0
      %7965 = vmatpush1.msra.mxu0 0.0
      %7966 = vmatprep.subr.mxu0 0.0
      %7967 = vmatpush1.msra.mxu0 0.0
      %7968 = vmatprep.subr.mxu0 0.0
      %7969 = vmatpush1.msra.mxu0 0.0
      %7970 = vmatprep.subr.mxu0 0.0
      %7971 = vmatpush1.msra.mxu0 0.0
      %7972 = vmatprep.subr.mxu0 0.0
      %7973 = vmatpush1.msra.mxu0 0.0
      %7974 = vmatprep.subr.mxu0 0.0
      %7975 = vmatpush1.msra.mxu0 %v7950
      %7976 = vmatprep.subr.mxu0 0.0
      %7977 = vmatpush1.msra.mxu0 %v7851
      %7978 = vmatprep.subr.mxu0 0.0
      %7979 = vmatpush1.msra.mxu0 %v7850
      %7980 = vmatprep.subr.mxu0 0.0
      %7981 = vmatpush1.msra.mxu0 %v7849
      %7982 = vmatprep.subr.mxu0 0.0
      %7983 = vmatpush1.msra.mxu0 %v7848
      %7984 = vmatprep.subr.mxu0 0.0
      %7985 = vmatpush2.msra.mxu0 0.0
      %7986 = vmatprep.subr.mxu0 0.0
      %7987 = vmatpush2.msra.mxu0 0.0
      %7988 = vmatprep.subr.mxu0 0.0
      %7989 = vmatpush2.msra.mxu0 0.0
      %7990 = vmatprep.subr.mxu0 0.0
      %7991 = vmatpush2.msra.mxu0 0.0
      %7992 = vmatprep.subr.mxu0 0.0
      %7993 = vmatpush2.msra.mxu0 0.0
      %7994 = vmatprep.subr.mxu0 0.0
      %7995 = vmatpush2.msra.mxu0 0.0
      %7996 = vmatprep.subr.mxu0 0.0
      %7997 = vmatpush2.msra.mxu0 0.0
      %7998 = vmatprep.subr.mxu0 0.0
      %7999 = vmatpush2.msra.mxu0 0.0
      %8000 = vmatprep.subr.mxu0 0.0
      %8001 = vmatpush2.msra.mxu0 0.0
      %8002 = vmatprep.subr.mxu0 0.0
      %8003 = vmatpush2.msra.mxu0 0.0
      %8004 = vmatprep.subr.mxu0 0.0
      %8005 = vmatpush2.msra.mxu0 0.0
      %8006 = vmatprep.subr.mxu0 0.0
      %8007 = vmatpush2.msra.mxu0 0.0
      %8008 = vmatprep.subr.mxu0 0.0
      %8009 = vmatpush2.msra.mxu0 0.0
      %8010 = vmatprep.subr.mxu0 0.0
      %8011 = vmatpush2.msra.mxu0 0.0
      %8012 = vmatprep.subr.mxu0 0.0
      %8013 = vmatpush2.msra.mxu0 0.0
      %8014 = vmatprep.subr.mxu0 0.0
      %8015 = vmatpush2.msra.mxu0 0.0
      %8016 = vmatprep.mubr.f32.mxu0 0.0
      %8017 = vmatmul.mubr.f32.gmra.mxu0 %v7854
      %v8018 = vpop.f32.mrf.mxu0
      %v8019 = vadd.f32 0.0, %v8018
      %v8020 = vpop.f32.mrf.mxu0
      %8021 = vmatprep.mubr.f32.mxu0 0.0
      %8022 = vmatmul.mubr.f32.gmra.mxu0 %v7857
      %v8023 = vpop.f32.mrf.mxu0
      %v8024 = vadd.f32 0.0, %v8023
      %v8025 = vpop.f32.mrf.mxu0
      %8026 = vmatprep.mubr.f32.mxu0 0.0
      %8027 = vmatmul.mubr.f32.gmra.mxu0 %v7860
      %v8028 = vpop.f32.mrf.mxu0
      %v8029 = vadd.f32 0.0, %v8028
      %v8030 = vpop.f32.mrf.mxu0
      %8031 = vmatprep.mubr.f32.mxu0 0.0
      %8032 = vmatmul.mubr.f32.gmra.mxu0 %v7863
      %v8033 = vpop.f32.mrf.mxu0
      %v8034 = vadd.f32 0.0, %v8033
      %v8035 = vpop.f32.mrf.mxu0
      %8036 = vmatprep.mubr.f32.mxu0 0.0
      %8037 = vmatmul.mubr.f32.gmra.mxu0 %v7866
      %v8038 = vpop.f32.mrf.mxu0
      %v8039 = vadd.f32 0.0, %v8038
      %v8040 = vpop.f32.mrf.mxu0
      %8041 = vmatprep.mubr.f32.mxu0 0.0
      %8042 = vmatmul.mubr.f32.gmra.mxu0 %v7869
      %v8043 = vpop.f32.mrf.mxu0
      %v8044 = vadd.f32 0.0, %v8043
      %v8045 = vpop.f32.mrf.mxu0
      %8046 = vmatprep.mubr.f32.mxu0 0.0
      %8047 = vmatmul.mubr.f32.gmra.mxu0 %v7872
      %v8048 = vpop.f32.mrf.mxu0
      %v8049 = vadd.f32 0.0, %v8048
      %v8050 = vpop.f32.mrf.mxu0
      %8051 = vmatprep.mubr.f32.mxu0 0.0
      %8052 = vmatmul.mubr.f32.gmra.mxu0 %v7875
      %v8053 = vpop.f32.mrf.mxu0
      %v8054 = vadd.f32 0.0, %v8053
      %v8055 = vpop.f32.mrf.mxu0
      %8056 = vmatprep.mubr.f32.mxu0 0.0
      %8057 = vmatmul.mubr.f32.gmra.mxu0 %v7878
      %v8058 = vpop.f32.mrf.mxu0
      %v8059 = vadd.f32 0.0, %v8058
      %v8060 = vpop.f32.mrf.mxu0
      %8061 = vmatprep.mubr.f32.mxu0 0.0
      %8062 = vmatmul.mubr.f32.gmra.mxu0 %v7881
      %v8063 = vpop.f32.mrf.mxu0
      %v8064 = vadd.f32 0.0, %v8063
      %v8065 = vpop.f32.mrf.mxu0
      %8066 = vmatprep.mubr.f32.mxu0 0.0
      %8067 = vmatmul.mubr.f32.gmra.mxu0 %v7884
      %v8068 = vpop.f32.mrf.mxu0
      %v8069 = vadd.f32 0.0, %v8068
      %v8070 = vpop.f32.mrf.mxu0
      %8071 = vmatprep.mubr.f32.mxu0 0.0
      %8072 = vmatmul.mubr.f32.gmra.mxu0 %v7887
      %v8073 = vpop.f32.mrf.mxu0
      %v8074 = vadd.f32 0.0, %v8073
      %v8075 = vpop.f32.mrf.mxu0
      %8076 = vmatprep.mubr.f32.mxu0 0.0
      %8077 = vmatmul.mubr.f32.gmra.mxu0 %v7890
      %v8078 = vpop.f32.mrf.mxu0
      %v8079 = vadd.f32 0.0, %v8078
      %v8080 = vpop.f32.mrf.mxu0
      %8081 = vmatprep.mubr.f32.mxu0 0.0
      %8082 = vmatmul.mubr.f32.gmra.mxu0 %v7893
      %v8083 = vpop.f32.mrf.mxu0
      %v8084 = vadd.f32 0.0, %v8083
      %v8085 = vpop.f32.mrf.mxu0
      %8086 = vmatprep.mubr.f32.mxu0 0.0
      %8087 = vmatmul.mubr.f32.gmra.mxu0 %v7896
      %v8088 = vpop.f32.mrf.mxu0
      %v8089 = vadd.f32 0.0, %v8088
      %v8090 = vpop.f32.mrf.mxu0
      %8091 = vmatprep.mubr.f32.mxu0 0.0
      %8092 = vmatmul.mubr.f32.gmra.mxu0 %v7899
      %v8093 = vpop.f32.mrf.mxu0
      %v8094 = vadd.f32 0.0, %v8093
      %v8095 = vpop.f32.mrf.mxu0
      %8096 = vmatprep.mubr.f32.mxu0 0.0
      %8097 = vmatmul.mubr.f32.gmra.mxu0 %v7902
      %v8098 = vpop.f32.mrf.mxu0
      %v8099 = vadd.f32 0.0, %v8098
      %v8100 = vpop.f32.mrf.mxu0
      %8101 = vmatprep.mubr.f32.mxu0 0.0
      %8102 = vmatmul.mubr.f32.gmra.mxu0 %v7905
      %v8103 = vpop.f32.mrf.mxu0
      %v8104 = vadd.f32 0.0, %v8103
      %v8105 = vpop.f32.mrf.mxu0
      %8106 = vmatprep.mubr.f32.mxu0 0.0
      %8107 = vmatmul.mubr.f32.gmra.mxu0 %v7908
      %v8108 = vpop.f32.mrf.mxu0
      %v8109 = vadd.f32 0.0, %v8108
      %v8110 = vpop.f32.mrf.mxu0
      %8111 = vmatprep.mubr.f32.mxu0 0.0
      %8112 = vmatmul.mubr.f32.gmra.mxu0 %v7911
      %v8113 = vpop.f32.mrf.mxu0
      %v8114 = vadd.f32 0.0, %v8113
      %v8115 = vpop.f32.mrf.mxu0
      %8116 = vmatprep.mubr.f32.mxu0 0.0
      %8117 = vmatmul.mubr.f32.gmra.mxu0 %v7914
      %v8118 = vpop.f32.mrf.mxu0
      %v8119 = vadd.f32 0.0, %v8118
      %v8120 = vpop.f32.mrf.mxu0
      %8121 = vmatprep.mubr.f32.mxu0 0.0
      %8122 = vmatmul.mubr.f32.gmra.mxu0 %v7917
      %v8123 = vpop.f32.mrf.mxu0
      %v8124 = vadd.f32 0.0, %v8123
      %v8125 = vpop.f32.mrf.mxu0
      %8126 = vmatprep.mubr.f32.mxu0 0.0
      %8127 = vmatmul.mubr.f32.gmra.mxu0 %v7920
      %v8128 = vpop.f32.mrf.mxu0
      %v8129 = vadd.f32 0.0, %v8128
      %v8130 = vpop.f32.mrf.mxu0
      %8131 = vmatprep.mubr.f32.mxu0 0.0
      %8132 = vmatmul.mubr.f32.gmra.mxu0 %v7923
      %v8133 = vpop.f32.mrf.mxu0
      %v8134 = vadd.f32 0.0, %v8133
      %v8135 = vpop.f32.mrf.mxu0
      %8136 = vmatprep.mubr.f32.mxu0 0.0
      %8137 = vmatmul.mubr.f32.gmra.mxu0 %v7926
      %v8138 = vpop.f32.mrf.mxu0
      %v8139 = vadd.f32 0.0, %v8138
      %v8140 = vpop.f32.mrf.mxu0
      %8141 = vmatprep.mubr.f32.mxu0 0.0
      %8142 = vmatmul.mubr.f32.gmra.mxu0 %v7929
      %v8143 = vpop.f32.mrf.mxu0
      %v8144 = vadd.f32 0.0, %v8143
      %v8145 = vpop.f32.mrf.mxu0
      %8146 = vmatprep.mubr.f32.mxu0 0.0
      %8147 = vmatmul.mubr.f32.gmra.mxu0 %v7932
      %v8148 = vpop.f32.mrf.mxu0
      %v8149 = vadd.f32 0.0, %v8148
      %v8150 = vpop.f32.mrf.mxu0
      %8151 = vmatprep.mubr.f32.mxu0 0.0
      %8152 = vmatmul.mubr.f32.gmra.mxu0 %v7935
      %v8153 = vpop.f32.mrf.mxu0
      %v8154 = vadd.f32 0.0, %v8153
      %v8155 = vpop.f32.mrf.mxu0
      %8156 = vmatprep.mubr.f32.mxu0 0.0
      %8157 = vmatmul.mubr.f32.gmra.mxu0 %v7938
      %v8158 = vpop.f32.mrf.mxu0
      %v8159 = vadd.f32 0.0, %v8158
      %v8160 = vpop.f32.mrf.mxu0
      %8161 = vmatprep.mubr.f32.mxu0 0.0
      %8162 = vmatmul.mubr.f32.gmra.mxu0 %v7941
      %v8163 = vpop.f32.mrf.mxu0
      %v8164 = vadd.f32 0.0, %v8163
      %v8165 = vpop.f32.mrf.mxu0
      %8166 = vmatprep.mubr.f32.mxu0 0.0
      %8167 = vmatmul.mubr.f32.gmra.mxu0 %v7944
      %v8168 = vpop.f32.mrf.mxu0
      %v8169 = vadd.f32 0.0, %v8168
      %v8170 = vpop.f32.mrf.mxu0
      %8171 = vmatprep.mubr.f32.mxu0 0.0
      %8172 = vmatmul.mubr.f32.gmra.mxu0 %v7947
      %v8173 = vpop.f32.mrf.mxu0
      %v8174 = vadd.f32 0.0, %v8173
      %v8175 = vpop.f32.mrf.mxu0
      %8176 = vdwg.mxu0
      %v8177 = vmul.f32 %v8019, %v7794
      %v8178 = vmul.f32 %v8024, %v7795
      %v8179 = vmul.f32 %v8029, %v7797
      %v8180 = vmul.f32 %v8034, %v7798
      %v8181 = vmul.f32 %v8039, %v7800
      %v8182 = vmul.f32 %v8044, %v7801
      %v8183 = vmul.f32 %v8049, %v7803
      %v8184 = vmul.f32 %v8054, %v7804
      %v8185 = vmul.f32 %v8059, %v7806
      %v8186 = vmul.f32 %v8064, %v7807
      %v8187 = vmul.f32 %v8069, %v7809
      %v8188 = vmul.f32 %v8074, %v7810
      %v8189 = vmul.f32 %v8079, %v7812
      %v8190 = vmul.f32 %v8084, %v7813
      %v8191 = vmul.f32 %v8089, %v7815
      %v8192 = vmul.f32 %v8094, %v7816
      %v8193 = vmul.f32 %v8099, %v7818
      %v8194 = vmul.f32 %v8104, %v7819
      %v8195 = vmul.f32 %v8109, %v7821
      %v8196 = vmul.f32 %v8114, %v7822
      %v8197 = vmul.f32 %v8119, %v7824
      %v8198 = vmul.f32 %v8124, %v7825
      %v8199 = vmul.f32 %v8129, %v7827
      %v8200 = vmul.f32 %v8134, %v7828
      %v8201 = vmul.f32 %v8139, %v7830
      %v8202 = vmul.f32 %v8144, %v7831
      %v8203 = vmul.f32 %v8149, %v7833
      %v8204 = vmul.f32 %v8154, %v7834
      %v8205 = vmul.f32 %v8159, %v7836
      %v8206 = vmul.f32 %v8164, %v7837
      %v8207 = vmul.f32 %v8169, %v7839
      %v8208 = vmul.f32 %v8174, %v7840
      %s8209 = scalar_lea.vmem %s4, 40
      %v8210 = vld [vmem:[%s8209] sm:$0xff]
      %v8211 = vld [vmem:[%s8209 + $0x8] sm:$0xff]
      %v8212 = vld [vmem:[%s8209 + $0x10] sm:$0xff]
      %v8213 = vld [vmem:[%s8209 + $0x18] sm:$0xff]
      %v8214 = vld [vmem:[%s8209 + $0x20] sm:$0xf]
      %v8216 = vsel %vm6698, %v8214, 0
      %8218 = vmatprep.subr.mxu0 0.0
      %8219 = vmatpush1.msra.mxu0 0.0
      %8220 = vmatprep.subr.mxu0 0.0
      %8221 = vmatpush1.msra.mxu0 0.0
      %8222 = vmatprep.subr.mxu0 0.0
      %8223 = vmatpush1.msra.mxu0 0.0
      %8224 = vmatprep.subr.mxu0 0.0
      %8225 = vmatpush1.msra.mxu0 0.0
      %8226 = vmatprep.subr.mxu0 0.0
      %8227 = vmatpush1.msra.mxu0 0.0
      %8228 = vmatprep.subr.mxu0 0.0
      %8229 = vmatpush1.msra.mxu0 0.0
      %8230 = vmatprep.subr.mxu0 0.0
      %8231 = vmatpush1.msra.mxu0 0.0
      %8232 = vmatprep.subr.mxu0 0.0
      %8233 = vmatpush1.msra.mxu0 0.0
      %8234 = vmatprep.subr.mxu0 0.0
      %8235 = vmatpush1.msra.mxu0 0.0
      %8236 = vmatprep.subr.mxu0 0.0
      %8237 = vmatpush1.msra.mxu0 0.0
      %8238 = vmatprep.subr.mxu0 0.0
      %8239 = vmatpush1.msra.mxu0 0.0
      %8240 = vmatprep.subr.mxu0 0.0
      %8241 = vmatpush1.msra.mxu0 %v8216
      %8242 = vmatprep.subr.mxu0 0.0
      %8243 = vmatpush1.msra.mxu0 %v8213
      %8244 = vmatprep.subr.mxu0 0.0
      %8245 = vmatpush1.msra.mxu0 %v8212
      %8246 = vmatprep.subr.mxu0 0.0
      %8247 = vmatpush1.msra.mxu0 %v8211
      %8248 = vmatprep.subr.mxu0 0.0
      %8249 = vmatpush1.msra.mxu0 %v8210
      %8250 = vmatprep.subr.mxu0 0.0
      %8251 = vmatpush2.msra.mxu0 0.0
      %8252 = vmatprep.subr.mxu0 0.0
      %8253 = vmatpush2.msra.mxu0 0.0
      %8254 = vmatprep.subr.mxu0 0.0
      %8255 = vmatpush2.msra.mxu0 0.0
      %8256 = vmatprep.subr.mxu0 0.0
      %8257 = vmatpush2.msra.mxu0 0.0
      %8258 = vmatprep.subr.mxu0 0.0
      %8259 = vmatpush2.msra.mxu0 0.0
      %8260 = vmatprep.subr.mxu0 0.0
      %8261 = vmatpush2.msra.mxu0 0.0
      %8262 = vmatprep.subr.mxu0 0.0
      %8263 = vmatpush2.msra.mxu0 0.0
      %8264 = vmatprep.subr.mxu0 0.0
      %8265 = vmatpush2.msra.mxu0 0.0
      %8266 = vmatprep.subr.mxu0 0.0
      %8267 = vmatpush2.msra.mxu0 0.0
      %8268 = vmatprep.subr.mxu0 0.0
      %8269 = vmatpush2.msra.mxu0 0.0
      %8270 = vmatprep.subr.mxu0 0.0
      %8271 = vmatpush2.msra.mxu0 0.0
      %8272 = vmatprep.subr.mxu0 0.0
      %8273 = vmatpush2.msra.mxu0 0.0
      %8274 = vmatprep.subr.mxu0 0.0
      %8275 = vmatpush2.msra.mxu0 0.0
      %8276 = vmatprep.subr.mxu0 0.0
      %8277 = vmatpush2.msra.mxu0 0.0
      %8278 = vmatprep.subr.mxu0 0.0
      %8279 = vmatpush2.msra.mxu0 0.0
      %8280 = vmatprep.subr.mxu0 0.0
      %8281 = vmatpush2.msra.mxu0 0.0
      %8282 = vmatprep.mubr.f32.mxu0 0.0
      %8283 = vmatmul.mubr.f32.gmra.mxu0 %v7854
      %v8284 = vpop.f32.mrf.mxu0
      %v8285 = vadd.f32 0.0, %v8284
      %v8286 = vpop.f32.mrf.mxu0
      %8287 = vmatprep.mubr.f32.mxu0 0.0
      %8288 = vmatmul.mubr.f32.gmra.mxu0 %v7857
      %v8289 = vpop.f32.mrf.mxu0
      %v8290 = vadd.f32 0.0, %v8289
      %v8291 = vpop.f32.mrf.mxu0
      %8292 = vmatprep.mubr.f32.mxu0 0.0
      %8293 = vmatmul.mubr.f32.gmra.mxu0 %v7860
      %v8294 = vpop.f32.mrf.mxu0
      %v8295 = vadd.f32 0.0, %v8294
      %v8296 = vpop.f32.mrf.mxu0
      %8297 = vmatprep.mubr.f32.mxu0 0.0
      %8298 = vmatmul.mubr.f32.gmra.mxu0 %v7863
      %v8299 = vpop.f32.mrf.mxu0
      %v8300 = vadd.f32 0.0, %v8299
      %v8301 = vpop.f32.mrf.mxu0
      %8302 = vmatprep.mubr.f32.mxu0 0.0
      %8303 = vmatmul.mubr.f32.gmra.mxu0 %v7866
      %v8304 = vpop.f32.mrf.mxu0
      %v8305 = vadd.f32 0.0, %v8304
      %v8306 = vpop.f32.mrf.mxu0
      %8307 = vmatprep.mubr.f32.mxu0 0.0
      %8308 = vmatmul.mubr.f32.gmra.mxu0 %v7869
      %v8309 = vpop.f32.mrf.mxu0
      %v8310 = vadd.f32 0.0, %v8309
      %v8311 = vpop.f32.mrf.mxu0
      %8312 = vmatprep.mubr.f32.mxu0 0.0
      %8313 = vmatmul.mubr.f32.gmra.mxu0 %v7872
      %v8314 = vpop.f32.mrf.mxu0
      %v8315 = vadd.f32 0.0, %v8314
      %v8316 = vpop.f32.mrf.mxu0
      %8317 = vmatprep.mubr.f32.mxu0 0.0
      %8318 = vmatmul.mubr.f32.gmra.mxu0 %v7875
      %v8319 = vpop.f32.mrf.mxu0
      %v8320 = vadd.f32 0.0, %v8319
      %v8321 = vpop.f32.mrf.mxu0
      %8322 = vmatprep.mubr.f32.mxu0 0.0
      %8323 = vmatmul.mubr.f32.gmra.mxu0 %v7878
      %v8324 = vpop.f32.mrf.mxu0
      %v8325 = vadd.f32 0.0, %v8324
      %v8326 = vpop.f32.mrf.mxu0
      %8327 = vmatprep.mubr.f32.mxu0 0.0
      %8328 = vmatmul.mubr.f32.gmra.mxu0 %v7881
      %v8329 = vpop.f32.mrf.mxu0
      %v8330 = vadd.f32 0.0, %v8329
      %v8331 = vpop.f32.mrf.mxu0
      %8332 = vmatprep.mubr.f32.mxu0 0.0
      %8333 = vmatmul.mubr.f32.gmra.mxu0 %v7884
      %v8334 = vpop.f32.mrf.mxu0
      %v8335 = vadd.f32 0.0, %v8334
      %v8336 = vpop.f32.mrf.mxu0
      %8337 = vmatprep.mubr.f32.mxu0 0.0
      %8338 = vmatmul.mubr.f32.gmra.mxu0 %v7887
      %v8339 = vpop.f32.mrf.mxu0
      %v8340 = vadd.f32 0.0, %v8339
      %v8341 = vpop.f32.mrf.mxu0
      %8342 = vmatprep.mubr.f32.mxu0 0.0
      %8343 = vmatmul.mubr.f32.gmra.mxu0 %v7890
      %v8344 = vpop.f32.mrf.mxu0
      %v8345 = vadd.f32 0.0, %v8344
      %v8346 = vpop.f32.mrf.mxu0
      %8347 = vmatprep.mubr.f32.mxu0 0.0
      %8348 = vmatmul.mubr.f32.gmra.mxu0 %v7893
      %v8349 = vpop.f32.mrf.mxu0
      %v8350 = vadd.f32 0.0, %v8349
      %v8351 = vpop.f32.mrf.mxu0
      %8352 = vmatprep.mubr.f32.mxu0 0.0
      %8353 = vmatmul.mubr.f32.gmra.mxu0 %v7896
      %v8354 = vpop.f32.mrf.mxu0
      %v8355 = vadd.f32 0.0, %v8354
      %v8356 = vpop.f32.mrf.mxu0
      %8357 = vmatprep.mubr.f32.mxu0 0.0
      %8358 = vmatmul.mubr.f32.gmra.mxu0 %v7899
      %v8359 = vpop.f32.mrf.mxu0
      %v8360 = vadd.f32 0.0, %v8359
      %v8361 = vpop.f32.mrf.mxu0
      %8362 = vmatprep.mubr.f32.mxu0 0.0
      %8363 = vmatmul.mubr.f32.gmra.mxu0 %v7902
      %v8364 = vpop.f32.mrf.mxu0
      %v8365 = vadd.f32 0.0, %v8364
      %v8366 = vpop.f32.mrf.mxu0
      %8367 = vmatprep.mubr.f32.mxu0 0.0
      %8368 = vmatmul.mubr.f32.gmra.mxu0 %v7905
      %v8369 = vpop.f32.mrf.mxu0
      %v8370 = vadd.f32 0.0, %v8369
      %v8371 = vpop.f32.mrf.mxu0
      %8372 = vmatprep.mubr.f32.mxu0 0.0
      %8373 = vmatmul.mubr.f32.gmra.mxu0 %v7908
      %v8374 = vpop.f32.mrf.mxu0
      %v8375 = vadd.f32 0.0, %v8374
      %v8376 = vpop.f32.mrf.mxu0
      %8377 = vmatprep.mubr.f32.mxu0 0.0
      %8378 = vmatmul.mubr.f32.gmra.mxu0 %v7911
      %v8379 = vpop.f32.mrf.mxu0
      %v8380 = vadd.f32 0.0, %v8379
      %v8381 = vpop.f32.mrf.mxu0
      %8382 = vmatprep.mubr.f32.mxu0 0.0
      %8383 = vmatmul.mubr.f32.gmra.mxu0 %v7914
      %v8384 = vpop.f32.mrf.mxu0
      %v8385 = vadd.f32 0.0, %v8384
      %v8386 = vpop.f32.mrf.mxu0
      %8387 = vmatprep.mubr.f32.mxu0 0.0
      %8388 = vmatmul.mubr.f32.gmra.mxu0 %v7917
      %v8389 = vpop.f32.mrf.mxu0
      %v8390 = vadd.f32 0.0, %v8389
      %v8391 = vpop.f32.mrf.mxu0
      %8392 = vmatprep.mubr.f32.mxu0 0.0
      %8393 = vmatmul.mubr.f32.gmra.mxu0 %v7920
      %v8394 = vpop.f32.mrf.mxu0
      %v8395 = vadd.f32 0.0, %v8394
      %v8396 = vpop.f32.mrf.mxu0
      %8397 = vmatprep.mubr.f32.mxu0 0.0
      %8398 = vmatmul.mubr.f32.gmra.mxu0 %v7923
      %v8399 = vpop.f32.mrf.mxu0
      %v8400 = vadd.f32 0.0, %v8399
      %v8401 = vpop.f32.mrf.mxu0
      %8402 = vmatprep.mubr.f32.mxu0 0.0
      %8403 = vmatmul.mubr.f32.gmra.mxu0 %v7926
      %v8404 = vpop.f32.mrf.mxu0
      %v8405 = vadd.f32 0.0, %v8404
      %v8406 = vpop.f32.mrf.mxu0
      %8407 = vmatprep.mubr.f32.mxu0 0.0
      %8408 = vmatmul.mubr.f32.gmra.mxu0 %v7929
      %v8409 = vpop.f32.mrf.mxu0
      %v8410 = vadd.f32 0.0, %v8409
      %v8411 = vpop.f32.mrf.mxu0
      %8412 = vmatprep.mubr.f32.mxu0 0.0
      %8413 = vmatmul.mubr.f32.gmra.mxu0 %v7932
      %v8414 = vpop.f32.mrf.mxu0
      %v8415 = vadd.f32 0.0, %v8414
      %v8416 = vpop.f32.mrf.mxu0
      %8417 = vmatprep.mubr.f32.mxu0 0.0
      %8418 = vmatmul.mubr.f32.gmra.mxu0 %v7935
      %v8419 = vpop.f32.mrf.mxu0
      %v8420 = vadd.f32 0.0, %v8419
      %v8421 = vpop.f32.mrf.mxu0
      %8422 = vmatprep.mubr.f32.mxu0 0.0
      %8423 = vmatmul.mubr.f32.gmra.mxu0 %v7938
      %v8424 = vpop.f32.mrf.mxu0
      %v8425 = vadd.f32 0.0, %v8424
      %v8426 = vpop.f32.mrf.mxu0
      %8427 = vmatprep.mubr.f32.mxu0 0.0
      %8428 = vmatmul.mubr.f32.gmra.mxu0 %v7941
      %v8429 = vpop.f32.mrf.mxu0
      %v8430 = vadd.f32 0.0, %v8429
      %v8431 = vpop.f32.mrf.mxu0
      %8432 = vmatprep.mubr.f32.mxu0 0.0
      %8433 = vmatmul.mubr.f32.gmra.mxu0 %v7944
      %v8434 = vpop.f32.mrf.mxu0
      %v8435 = vadd.f32 0.0, %v8434
      %v8436 = vpop.f32.mrf.mxu0
      %8437 = vmatprep.mubr.f32.mxu0 0.0
      %8438 = vmatmul.mubr.f32.gmra.mxu0 %v7947
      %v8439 = vpop.f32.mrf.mxu0
      %v8440 = vadd.f32 0.0, %v8439
      %v8441 = vpop.f32.mrf.mxu0
      %8442 = vdwg.mxu0
      %v8443 = vmul.f32 %v8285, %v7797
      %v8444 = vmul.f32 %v8290, %v7798
      %v8445 = vmul.f32 %v8295, %v7800
      %v8446 = vmul.f32 %v8300, %v7801
      %v8447 = vmul.f32 %v8305, %v7803
      %v8448 = vmul.f32 %v8310, %v7804
      %v8449 = vmul.f32 %v8315, %v7806
      %v8450 = vmul.f32 %v8320, %v7807
      %v8451 = vmul.f32 %v8325, %v7809
      %v8452 = vmul.f32 %v8330, %v7810
      %v8453 = vmul.f32 %v8335, %v7812
      %v8454 = vmul.f32 %v8340, %v7813
      %v8455 = vmul.f32 %v8345, %v7815
      %v8456 = vmul.f32 %v8350, %v7816
      %v8457 = vmul.f32 %v8355, %v7818
      %v8458 = vmul.f32 %v8360, %v7819
      %v8459 = vmul.f32 %v8365, %v7821
      %v8460 = vmul.f32 %v8370, %v7822
      %v8461 = vmul.f32 %v8375, %v7824
      %v8462 = vmul.f32 %v8380, %v7825
      %v8463 = vmul.f32 %v8385, %v7827
      %v8464 = vmul.f32 %v8390, %v7828
      %v8465 = vmul.f32 %v8395, %v7830
      %v8466 = vmul.f32 %v8400, %v7831
      %v8467 = vmul.f32 %v8405, %v7833
      %v8468 = vmul.f32 %v8410, %v7834
      %v8469 = vmul.f32 %v8415, %v7836
      %v8470 = vmul.f32 %v8420, %v7837
      %v8471 = vmul.f32 %v8425, %v7839
      %v8472 = vmul.f32 %v8430, %v7840
      %v8473 = vmul.f32 %v8435, %v7842
      %v8474 = vmul.f32 %v8440, %v7843
      %v8475 = vadd.f32 %v8177, %v8443
      %v8476 = vadd.f32 %v8178, %v8444
      %v8477 = vadd.f32 %v8179, %v8445
      %v8478 = vadd.f32 %v8180, %v8446
      %v8479 = vadd.f32 %v8181, %v8447
      %v8480 = vadd.f32 %v8182, %v8448
      %v8481 = vadd.f32 %v8183, %v8449
      %v8482 = vadd.f32 %v8184, %v8450
      %v8483 = vadd.f32 %v8185, %v8451
      %v8484 = vadd.f32 %v8186, %v8452
      %v8485 = vadd.f32 %v8187, %v8453
      %v8486 = vadd.f32 %v8188, %v8454
      %v8487 = vadd.f32 %v8189, %v8455
      %v8488 = vadd.f32 %v8190, %v8456
      %v8489 = vadd.f32 %v8191, %v8457
      %v8490 = vadd.f32 %v8192, %v8458
      %v8491 = vadd.f32 %v8193, %v8459
      %v8492 = vadd.f32 %v8194, %v8460
      %v8493 = vadd.f32 %v8195, %v8461
      %v8494 = vadd.f32 %v8196, %v8462
      %v8495 = vadd.f32 %v8197, %v8463
      %v8496 = vadd.f32 %v8198, %v8464
      %v8497 = vadd.f32 %v8199, %v8465
      %v8498 = vadd.f32 %v8200, %v8466
      %v8499 = vadd.f32 %v8201, %v8467
      %v8500 = vadd.f32 %v8202, %v8468
      %v8501 = vadd.f32 %v8203, %v8469
      %v8502 = vadd.f32 %v8204, %v8470
      %v8503 = vadd.f32 %v8205, %v8471
      %v8504 = vadd.f32 %v8206, %v8472
      %v8505 = vadd.f32 %v8207, %v8473
      %v8506 = vadd.f32 %v8208, %v8474
      %s8507 = scalar_lea.vmem %s4, 80
      %v8508 = vld [vmem:[%s8507] sm:$0xff]
      %v8509 = vld [vmem:[%s8507 + $0x8] sm:$0xff]
      %v8510 = vld [vmem:[%s8507 + $0x10] sm:$0xff]
      %v8511 = vld [vmem:[%s8507 + $0x18] sm:$0xff]
      %v8512 = vld [vmem:[%s8507 + $0x20] sm:$0xf]
      %v8514 = vsel %vm6698, %v8512, 0
      %8516 = vmatprep.subr.mxu0 0.0
      %8517 = vmatpush1.msra.mxu0 0.0
      %8518 = vmatprep.subr.mxu0 0.0
      %8519 = vmatpush1.msra.mxu0 0.0
      %8520 = vmatprep.subr.mxu0 0.0
      %8521 = vmatpush1.msra.mxu0 0.0
      %8522 = vmatprep.subr.mxu0 0.0
      %8523 = vmatpush1.msra.mxu0 0.0
      %8524 = vmatprep.subr.mxu0 0.0
      %8525 = vmatpush1.msra.mxu0 0.0
      %8526 = vmatprep.subr.mxu0 0.0
      %8527 = vmatpush1.msra.mxu0 0.0
      %8528 = vmatprep.subr.mxu0 0.0
      %8529 = vmatpush1.msra.mxu0 0.0
      %8530 = vmatprep.subr.mxu0 0.0
      %8531 = vmatpush1.msra.mxu0 0.0
      %8532 = vmatprep.subr.mxu0 0.0
      %8533 = vmatpush1.msra.mxu0 0.0
      %8534 = vmatprep.subr.mxu0 0.0
      %8535 = vmatpush1.msra.mxu0 0.0
      %8536 = vmatprep.subr.mxu0 0.0
      %8537 = vmatpush1.msra.mxu0 0.0
      %8538 = vmatprep.subr.mxu0 0.0
      %8539 = vmatpush1.msra.mxu0 %v8514
      %8540 = vmatprep.subr.mxu0 0.0
      %8541 = vmatpush1.msra.mxu0 %v8511
      %8542 = vmatprep.subr.mxu0 0.0
      %8543 = vmatpush1.msra.mxu0 %v8510
      %8544 = vmatprep.subr.mxu0 0.0
      %8545 = vmatpush1.msra.mxu0 %v8509
      %8546 = vmatprep.subr.mxu0 0.0
      %8547 = vmatpush1.msra.mxu0 %v8508
      %8548 = vmatprep.subr.mxu0 0.0
      %8549 = vmatpush2.msra.mxu0 0.0
      %8550 = vmatprep.subr.mxu0 0.0
      %8551 = vmatpush2.msra.mxu0 0.0
      %8552 = vmatprep.subr.mxu0 0.0
      %8553 = vmatpush2.msra.mxu0 0.0
      %8554 = vmatprep.subr.mxu0 0.0
      %8555 = vmatpush2.msra.mxu0 0.0
      %8556 = vmatprep.subr.mxu0 0.0
      %8557 = vmatpush2.msra.mxu0 0.0
      %8558 = vmatprep.subr.mxu0 0.0
      %8559 = vmatpush2.msra.mxu0 0.0
      %8560 = vmatprep.subr.mxu0 0.0
      %8561 = vmatpush2.msra.mxu0 0.0
      %8562 = vmatprep.subr.mxu0 0.0
      %8563 = vmatpush2.msra.mxu0 0.0
      %8564 = vmatprep.subr.mxu0 0.0
      %8565 = vmatpush2.msra.mxu0 0.0
      %8566 = vmatprep.subr.mxu0 0.0
      %8567 = vmatpush2.msra.mxu0 0.0
      %8568 = vmatprep.subr.mxu0 0.0
      %8569 = vmatpush2.msra.mxu0 0.0
      %8570 = vmatprep.subr.mxu0 0.0
      %8571 = vmatpush2.msra.mxu0 0.0
      %8572 = vmatprep.subr.mxu0 0.0
      %8573 = vmatpush2.msra.mxu0 0.0
      %8574 = vmatprep.subr.mxu0 0.0
      %8575 = vmatpush2.msra.mxu0 0.0
      %8576 = vmatprep.subr.mxu0 0.0
      %8577 = vmatpush2.msra.mxu0 0.0
      %8578 = vmatprep.subr.mxu0 0.0
      %8579 = vmatpush2.msra.mxu0 0.0
      %8580 = vmatprep.mubr.f32.mxu0 0.0
      %8581 = vmatmul.mubr.f32.gmra.mxu0 %v7854
      %v8582 = vpop.f32.mrf.mxu0
      %v8583 = vadd.f32 0.0, %v8582
      %v8584 = vpop.f32.mrf.mxu0
      %8585 = vmatprep.mubr.f32.mxu0 0.0
      %8586 = vmatmul.mubr.f32.gmra.mxu0 %v7857
      %v8587 = vpop.f32.mrf.mxu0
      %v8588 = vadd.f32 0.0, %v8587
      %v8589 = vpop.f32.mrf.mxu0
      %8590 = vmatprep.mubr.f32.mxu0 0.0
      %8591 = vmatmul.mubr.f32.gmra.mxu0 %v7860
      %v8592 = vpop.f32.mrf.mxu0
      %v8593 = vadd.f32 0.0, %v8592
      %v8594 = vpop.f32.mrf.mxu0
      %8595 = vmatprep.mubr.f32.mxu0 0.0
      %8596 = vmatmul.mubr.f32.gmra.mxu0 %v7863
      %v8597 = vpop.f32.mrf.mxu0
      %v8598 = vadd.f32 0.0, %v8597
      %v8599 = vpop.f32.mrf.mxu0
      %8600 = vmatprep.mubr.f32.mxu0 0.0
      %8601 = vmatmul.mubr.f32.gmra.mxu0 %v7866
      %v8602 = vpop.f32.mrf.mxu0
      %v8603 = vadd.f32 0.0, %v8602
      %v8604 = vpop.f32.mrf.mxu0
      %8605 = vmatprep.mubr.f32.mxu0 0.0
      %8606 = vmatmul.mubr.f32.gmra.mxu0 %v7869
      %v8607 = vpop.f32.mrf.mxu0
      %v8608 = vadd.f32 0.0, %v8607
      %v8609 = vpop.f32.mrf.mxu0
      %8610 = vmatprep.mubr.f32.mxu0 0.0
      %8611 = vmatmul.mubr.f32.gmra.mxu0 %v7872
      %v8612 = vpop.f32.mrf.mxu0
      %v8613 = vadd.f32 0.0, %v8612
      %v8614 = vpop.f32.mrf.mxu0
      %8615 = vmatprep.mubr.f32.mxu0 0.0
      %8616 = vmatmul.mubr.f32.gmra.mxu0 %v7875
      %v8617 = vpop.f32.mrf.mxu0
      %v8618 = vadd.f32 0.0, %v8617
      %v8619 = vpop.f32.mrf.mxu0
      %8620 = vmatprep.mubr.f32.mxu0 0.0
      %8621 = vmatmul.mubr.f32.gmra.mxu0 %v7878
      %v8622 = vpop.f32.mrf.mxu0
      %v8623 = vadd.f32 0.0, %v8622
      %v8624 = vpop.f32.mrf.mxu0
      %8625 = vmatprep.mubr.f32.mxu0 0.0
      %8626 = vmatmul.mubr.f32.gmra.mxu0 %v7881
      %v8627 = vpop.f32.mrf.mxu0
      %v8628 = vadd.f32 0.0, %v8627
      %v8629 = vpop.f32.mrf.mxu0
      %8630 = vmatprep.mubr.f32.mxu0 0.0
      %8631 = vmatmul.mubr.f32.gmra.mxu0 %v7884
      %v8632 = vpop.f32.mrf.mxu0
      %v8633 = vadd.f32 0.0, %v8632
      %v8634 = vpop.f32.mrf.mxu0
      %8635 = vmatprep.mubr.f32.mxu0 0.0
      %8636 = vmatmul.mubr.f32.gmra.mxu0 %v7887
      %v8637 = vpop.f32.mrf.mxu0
      %v8638 = vadd.f32 0.0, %v8637
      %v8639 = vpop.f32.mrf.mxu0
      %8640 = vmatprep.mubr.f32.mxu0 0.0
      %8641 = vmatmul.mubr.f32.gmra.mxu0 %v7890
      %v8642 = vpop.f32.mrf.mxu0
      %v8643 = vadd.f32 0.0, %v8642
      %v8644 = vpop.f32.mrf.mxu0
      %8645 = vmatprep.mubr.f32.mxu0 0.0
      %8646 = vmatmul.mubr.f32.gmra.mxu0 %v7893
      %v8647 = vpop.f32.mrf.mxu0
      %v8648 = vadd.f32 0.0, %v8647
      %v8649 = vpop.f32.mrf.mxu0
      %8650 = vmatprep.mubr.f32.mxu0 0.0
      %8651 = vmatmul.mubr.f32.gmra.mxu0 %v7896
      %v8652 = vpop.f32.mrf.mxu0
      %v8653 = vadd.f32 0.0, %v8652
      %v8654 = vpop.f32.mrf.mxu0
      %8655 = vmatprep.mubr.f32.mxu0 0.0
      %8656 = vmatmul.mubr.f32.gmra.mxu0 %v7899
      %v8657 = vpop.f32.mrf.mxu0
      %v8658 = vadd.f32 0.0, %v8657
      %v8659 = vpop.f32.mrf.mxu0
      %8660 = vmatprep.mubr.f32.mxu0 0.0
      %8661 = vmatmul.mubr.f32.gmra.mxu0 %v7902
      %v8662 = vpop.f32.mrf.mxu0
      %v8663 = vadd.f32 0.0, %v8662
      %v8664 = vpop.f32.mrf.mxu0
      %8665 = vmatprep.mubr.f32.mxu0 0.0
      %8666 = vmatmul.mubr.f32.gmra.mxu0 %v7905
      %v8667 = vpop.f32.mrf.mxu0
      %v8668 = vadd.f32 0.0, %v8667
      %v8669 = vpop.f32.mrf.mxu0
      %8670 = vmatprep.mubr.f32.mxu0 0.0
      %8671 = vmatmul.mubr.f32.gmra.mxu0 %v7908
      %v8672 = vpop.f32.mrf.mxu0
      %v8673 = vadd.f32 0.0, %v8672
      %v8674 = vpop.f32.mrf.mxu0
      %8675 = vmatprep.mubr.f32.mxu0 0.0
      %8676 = vmatmul.mubr.f32.gmra.mxu0 %v7911
      %v8677 = vpop.f32.mrf.mxu0
      %v8678 = vadd.f32 0.0, %v8677
      %v8679 = vpop.f32.mrf.mxu0
      %8680 = vmatprep.mubr.f32.mxu0 0.0
      %8681 = vmatmul.mubr.f32.gmra.mxu0 %v7914
      %v8682 = vpop.f32.mrf.mxu0
      %v8683 = vadd.f32 0.0, %v8682
      %v8684 = vpop.f32.mrf.mxu0
      %8685 = vmatprep.mubr.f32.mxu0 0.0
      %8686 = vmatmul.mubr.f32.gmra.mxu0 %v7917
      %v8687 = vpop.f32.mrf.mxu0
      %v8688 = vadd.f32 0.0, %v8687
      %v8689 = vpop.f32.mrf.mxu0
      %8690 = vmatprep.mubr.f32.mxu0 0.0
      %8691 = vmatmul.mubr.f32.gmra.mxu0 %v7920
      %v8692 = vpop.f32.mrf.mxu0
      %v8693 = vadd.f32 0.0, %v8692
      %v8694 = vpop.f32.mrf.mxu0
      %8695 = vmatprep.mubr.f32.mxu0 0.0
      %8696 = vmatmul.mubr.f32.gmra.mxu0 %v7923
      %v8697 = vpop.f32.mrf.mxu0
      %v8698 = vadd.f32 0.0, %v8697
      %v8699 = vpop.f32.mrf.mxu0
      %8700 = vmatprep.mubr.f32.mxu0 0.0
      %8701 = vmatmul.mubr.f32.gmra.mxu0 %v7926
      %v8702 = vpop.f32.mrf.mxu0
      %v8703 = vadd.f32 0.0, %v8702
      %v8704 = vpop.f32.mrf.mxu0
      %8705 = vmatprep.mubr.f32.mxu0 0.0
      %8706 = vmatmul.mubr.f32.gmra.mxu0 %v7929
      %v8707 = vpop.f32.mrf.mxu0
      %v8708 = vadd.f32 0.0, %v8707
      %v8709 = vpop.f32.mrf.mxu0
      %8710 = vmatprep.mubr.f32.mxu0 0.0
      %8711 = vmatmul.mubr.f32.gmra.mxu0 %v7932
      %v8712 = vpop.f32.mrf.mxu0
      %v8713 = vadd.f32 0.0, %v8712
      %v8714 = vpop.f32.mrf.mxu0
      %8715 = vmatprep.mubr.f32.mxu0 0.0
      %8716 = vmatmul.mubr.f32.gmra.mxu0 %v7935
      %v8717 = vpop.f32.mrf.mxu0
      %v8718 = vadd.f32 0.0, %v8717
      %v8719 = vpop.f32.mrf.mxu0
      %8720 = vmatprep.mubr.f32.mxu0 0.0
      %8721 = vmatmul.mubr.f32.gmra.mxu0 %v7938
      %v8722 = vpop.f32.mrf.mxu0
      %v8723 = vadd.f32 0.0, %v8722
      %v8724 = vpop.f32.mrf.mxu0
      %8725 = vmatprep.mubr.f32.mxu0 0.0
      %8726 = vmatmul.mubr.f32.gmra.mxu0 %v7941
      %v8727 = vpop.f32.mrf.mxu0
      %v8728 = vadd.f32 0.0, %v8727
      %v8729 = vpop.f32.mrf.mxu0
      %8730 = vmatprep.mubr.f32.mxu0 0.0
      %8731 = vmatmul.mubr.f32.gmra.mxu0 %v7944
      %v8732 = vpop.f32.mrf.mxu0
      %v8733 = vadd.f32 0.0, %v8732
      %v8734 = vpop.f32.mrf.mxu0
      %8735 = vmatprep.mubr.f32.mxu0 0.0
      %8736 = vmatmul.mubr.f32.gmra.mxu0 %v7947
      %v8737 = vpop.f32.mrf.mxu0
      %v8738 = vadd.f32 0.0, %v8737
      %v8739 = vpop.f32.mrf.mxu0
      %8740 = vdwg.mxu0
      %v8741 = vmul.f32 %v8583, %v7800
      %v8742 = vmul.f32 %v8588, %v7801
      %v8743 = vmul.f32 %v8593, %v7803
      %v8744 = vmul.f32 %v8598, %v7804
      %v8745 = vmul.f32 %v8603, %v7806
      %v8746 = vmul.f32 %v8608, %v7807
      %v8747 = vmul.f32 %v8613, %v7809
      %v8748 = vmul.f32 %v8618, %v7810
      %v8749 = vmul.f32 %v8623, %v7812
      %v8750 = vmul.f32 %v8628, %v7813
      %v8751 = vmul.f32 %v8633, %v7815
      %v8752 = vmul.f32 %v8638, %v7816
      %v8753 = vmul.f32 %v8643, %v7818
      %v8754 = vmul.f32 %v8648, %v7819
      %v8755 = vmul.f32 %v8653, %v7821
      %v8756 = vmul.f32 %v8658, %v7822
      %v8757 = vmul.f32 %v8663, %v7824
      %v8758 = vmul.f32 %v8668, %v7825
      %v8759 = vmul.f32 %v8673, %v7827
      %v8760 = vmul.f32 %v8678, %v7828
      %v8761 = vmul.f32 %v8683, %v7830
      %v8762 = vmul.f32 %v8688, %v7831
      %v8763 = vmul.f32 %v8693, %v7833
      %v8764 = vmul.f32 %v8698, %v7834
      %v8765 = vmul.f32 %v8703, %v7836
      %v8766 = vmul.f32 %v8708, %v7837
      %v8767 = vmul.f32 %v8713, %v7839
      %v8768 = vmul.f32 %v8718, %v7840
      %v8769 = vmul.f32 %v8723, %v7842
      %v8770 = vmul.f32 %v8728, %v7843
      %v8771 = vmul.f32 %v8733, %v7845
      %v8772 = vmul.f32 %v8738, %v7846
      %v8773 = vadd.f32 %v8475, %v8741
      %v8774 = vadd.f32 %v8476, %v8742
      %v8775 = vadd.f32 %v8477, %v8743
      %v8776 = vadd.f32 %v8478, %v8744
      %v8777 = vadd.f32 %v8479, %v8745
      %v8778 = vadd.f32 %v8480, %v8746
      %v8779 = vadd.f32 %v8481, %v8747
      %v8780 = vadd.f32 %v8482, %v8748
      %v8781 = vadd.f32 %v8483, %v8749
      %v8782 = vadd.f32 %v8484, %v8750
      %v8783 = vadd.f32 %v8485, %v8751
      %v8784 = vadd.f32 %v8486, %v8752
      %v8785 = vadd.f32 %v8487, %v8753
      %v8786 = vadd.f32 %v8488, %v8754
      %v8787 = vadd.f32 %v8489, %v8755
      %v8788 = vadd.f32 %v8490, %v8756
      %v8789 = vadd.f32 %v8491, %v8757
      %v8790 = vadd.f32 %v8492, %v8758
      %v8791 = vadd.f32 %v8493, %v8759
      %v8792 = vadd.f32 %v8494, %v8760
      %v8793 = vadd.f32 %v8495, %v8761
      %v8794 = vadd.f32 %v8496, %v8762
      %v8795 = vadd.f32 %v8497, %v8763
      %v8796 = vadd.f32 %v8498, %v8764
      %v8797 = vadd.f32 %v8499, %v8765
      %v8798 = vadd.f32 %v8500, %v8766
      %v8799 = vadd.f32 %v8501, %v8767
      %v8800 = vadd.f32 %v8502, %v8768
      %v8801 = vadd.f32 %v8503, %v8769
      %v8802 = vadd.f32 %v8504, %v8770
      %v8803 = vadd.f32 %v8505, %v8771
      %v8804 = vadd.f32 %v8506, %v8772
      %v8853 = vrot.slane %v7794, 1
      %v8854 = vrot.slane %v7795, 1
      %v8855 = vsel %vm2459, %v8853, %v8854
      %v8856 = vrot.slane %v7796, 1
      %v8857 = vsel %vm2459, %v8854, %v8856
      %v8858 = vrot.slane %v7797, 1
      %v8859 = vrot.slane %v7798, 1
      %v8860 = vsel %vm2459, %v8858, %v8859
      %v8861 = vrot.slane %v7799, 1
      %v8862 = vsel %vm2459, %v8859, %v8861
      %v8863 = vrot.slane %v7800, 1
      %v8864 = vrot.slane %v7801, 1
      %v8865 = vsel %vm2459, %v8863, %v8864
      %v8866 = vrot.slane %v7802, 1
      %v8867 = vsel %vm2459, %v8864, %v8866
      %v8868 = vrot.slane %v7803, 1
      %v8869 = vrot.slane %v7804, 1
      %v8870 = vsel %vm2459, %v8868, %v8869
      %v8871 = vrot.slane %v7805, 1
      %v8872 = vsel %vm2459, %v8869, %v8871
      %v8873 = vrot.slane %v7806, 1
      %v8874 = vrot.slane %v7807, 1
      %v8875 = vsel %vm2459, %v8873, %v8874
      %v8876 = vrot.slane %v7808, 1
      %v8877 = vsel %vm2459, %v8874, %v8876
      %v8878 = vrot.slane %v7809, 1
      %v8879 = vrot.slane %v7810, 1
      %v8880 = vsel %vm2459, %v8878, %v8879
      %v8881 = vrot.slane %v7811, 1
      %v8882 = vsel %vm2459, %v8879, %v8881
      %v8883 = vrot.slane %v7812, 1
      %v8884 = vrot.slane %v7813, 1
      %v8885 = vsel %vm2459, %v8883, %v8884
      %v8886 = vrot.slane %v7814, 1
      %v8887 = vsel %vm2459, %v8884, %v8886
      %v8888 = vrot.slane %v7815, 1
      %v8889 = vrot.slane %v7816, 1
      %v8890 = vsel %vm2459, %v8888, %v8889
      %v8891 = vrot.slane %v7817, 1
      %v8892 = vsel %vm2459, %v8889, %v8891
      %v8893 = vrot.slane %v7818, 1
      %v8894 = vrot.slane %v7819, 1
      %v8895 = vsel %vm2459, %v8893, %v8894
      %v8896 = vrot.slane %v7820, 1
      %v8897 = vsel %vm2459, %v8894, %v8896
      %v8898 = vrot.slane %v7821, 1
      %v8899 = vrot.slane %v7822, 1
      %v8900 = vsel %vm2459, %v8898, %v8899
      %v8901 = vrot.slane %v7823, 1
      %v8902 = vsel %vm2459, %v8899, %v8901
      %v8903 = vrot.slane %v7824, 1
      %v8904 = vrot.slane %v7825, 1
      %v8905 = vsel %vm2459, %v8903, %v8904
      %v8906 = vrot.slane %v7826, 1
      %v8907 = vsel %vm2459, %v8904, %v8906
      %v8908 = vrot.slane %v7827, 1
      %v8909 = vrot.slane %v7828, 1
      %v8910 = vsel %vm2459, %v8908, %v8909
      %v8911 = vrot.slane %v7829, 1
      %v8912 = vsel %vm2459, %v8909, %v8911
      %v8913 = vrot.slane %v7830, 1
      %v8914 = vrot.slane %v7831, 1
      %v8915 = vsel %vm2459, %v8913, %v8914
      %v8916 = vrot.slane %v7832, 1
      %v8917 = vsel %vm2459, %v8914, %v8916
      %v8918 = vrot.slane %v7833, 1
      %v8919 = vrot.slane %v7834, 1
      %v8920 = vsel %vm2459, %v8918, %v8919
      %v8921 = vrot.slane %v7835, 1
      %v8922 = vsel %vm2459, %v8919, %v8921
      %v8923 = vrot.slane %v7836, 1
      %v8924 = vrot.slane %v7837, 1
      %v8925 = vsel %vm2459, %v8923, %v8924
      %v8926 = vrot.slane %v7838, 1
      %v8927 = vsel %vm2459, %v8924, %v8926
      %v8928 = vrot.slane %v7839, 1
      %v8929 = vrot.slane %v7840, 1
      %v8930 = vsel %vm2459, %v8928, %v8929
      %v8931 = vrot.slane %v7841, 1
      %v8932 = vsel %vm2459, %v8929, %v8931
      %s8965 = scalar_lea.vmem %s4, 120
      %v8966 = vld [vmem:[%s8965] sm:$0xff]
      %v8967 = vld [vmem:[%s8965 + $0x8] sm:$0xff]
      %v8968 = vld [vmem:[%s8965 + $0x10] sm:$0xff]
      %v8969 = vld [vmem:[%s8965 + $0x18] sm:$0xff]
      %v8970 = vld [vmem:[%s8965 + $0x20] sm:$0xf]
      %v8972 = vsel %vm6698, %v8970, 0
      %8974 = vmatprep.subr.mxu0 0.0
      %8975 = vmatpush1.msra.mxu0 0.0
      %8976 = vmatprep.subr.mxu0 0.0
      %8977 = vmatpush1.msra.mxu0 0.0
      %8978 = vmatprep.subr.mxu0 0.0
      %8979 = vmatpush1.msra.mxu0 0.0
      %8980 = vmatprep.subr.mxu0 0.0
      %8981 = vmatpush1.msra.mxu0 0.0
      %8982 = vmatprep.subr.mxu0 0.0
      %8983 = vmatpush1.msra.mxu0 0.0
      %8984 = vmatprep.subr.mxu0 0.0
      %8985 = vmatpush1.msra.mxu0 0.0
      %8986 = vmatprep.subr.mxu0 0.0
      %8987 = vmatpush1.msra.mxu0 0.0
      %8988 = vmatprep.subr.mxu0 0.0
      %8989 = vmatpush1.msra.mxu0 0.0
      %8990 = vmatprep.subr.mxu0 0.0
      %8991 = vmatpush1.msra.mxu0 0.0
      %8992 = vmatprep.subr.mxu0 0.0
      %8993 = vmatpush1.msra.mxu0 0.0
      %8994 = vmatprep.subr.mxu0 0.0
      %8995 = vmatpush1.msra.mxu0 0.0
      %8996 = vmatprep.subr.mxu0 0.0
      %8997 = vmatpush1.msra.mxu0 %v8972
      %8998 = vmatprep.subr.mxu0 0.0
      %8999 = vmatpush1.msra.mxu0 %v8969
      %9000 = vmatprep.subr.mxu0 0.0
      %9001 = vmatpush1.msra.mxu0 %v8968
      %9002 = vmatprep.subr.mxu0 0.0
      %9003 = vmatpush1.msra.mxu0 %v8967
      %9004 = vmatprep.subr.mxu0 0.0
      %9005 = vmatpush1.msra.mxu0 %v8966
      %9006 = vmatprep.subr.mxu0 0.0
      %9007 = vmatpush2.msra.mxu0 0.0
      %9008 = vmatprep.subr.mxu0 0.0
      %9009 = vmatpush2.msra.mxu0 0.0
      %9010 = vmatprep.subr.mxu0 0.0
      %9011 = vmatpush2.msra.mxu0 0.0
      %9012 = vmatprep.subr.mxu0 0.0
      %9013 = vmatpush2.msra.mxu0 0.0
      %9014 = vmatprep.subr.mxu0 0.0
      %9015 = vmatpush2.msra.mxu0 0.0
      %9016 = vmatprep.subr.mxu0 0.0
      %9017 = vmatpush2.msra.mxu0 0.0
      %9018 = vmatprep.subr.mxu0 0.0
      %9019 = vmatpush2.msra.mxu0 0.0
      %9020 = vmatprep.subr.mxu0 0.0
      %9021 = vmatpush2.msra.mxu0 0.0
      %9022 = vmatprep.subr.mxu0 0.0
      %9023 = vmatpush2.msra.mxu0 0.0
      %9024 = vmatprep.subr.mxu0 0.0
      %9025 = vmatpush2.msra.mxu0 0.0
      %9026 = vmatprep.subr.mxu0 0.0
      %9027 = vmatpush2.msra.mxu0 0.0
      %9028 = vmatprep.subr.mxu0 0.0
      %9029 = vmatpush2.msra.mxu0 0.0
      %9030 = vmatprep.subr.mxu0 0.0
      %9031 = vmatpush2.msra.mxu0 0.0
      %9032 = vmatprep.subr.mxu0 0.0
      %9033 = vmatpush2.msra.mxu0 0.0
      %9034 = vmatprep.subr.mxu0 0.0
      %9035 = vmatpush2.msra.mxu0 0.0
      %9036 = vmatprep.subr.mxu0 0.0
      %9037 = vmatpush2.msra.mxu0 0.0
      %9038 = vmatprep.mubr.f32.mxu0 0.0
      %9039 = vmatmul.mubr.f32.gmra.mxu0 %v7854
      %v9040 = vpop.f32.mrf.mxu0
      %v9041 = vadd.f32 0.0, %v9040
      %v9042 = vpop.f32.mrf.mxu0
      %9043 = vmatprep.mubr.f32.mxu0 0.0
      %9044 = vmatmul.mubr.f32.gmra.mxu0 %v7857
      %v9045 = vpop.f32.mrf.mxu0
      %v9046 = vadd.f32 0.0, %v9045
      %v9047 = vpop.f32.mrf.mxu0
      %9048 = vmatprep.mubr.f32.mxu0 0.0
      %9049 = vmatmul.mubr.f32.gmra.mxu0 %v7860
      %v9050 = vpop.f32.mrf.mxu0
      %v9051 = vadd.f32 0.0, %v9050
      %v9052 = vpop.f32.mrf.mxu0
      %9053 = vmatprep.mubr.f32.mxu0 0.0
      %9054 = vmatmul.mubr.f32.gmra.mxu0 %v7863
      %v9055 = vpop.f32.mrf.mxu0
      %v9056 = vadd.f32 0.0, %v9055
      %v9057 = vpop.f32.mrf.mxu0
      %9058 = vmatprep.mubr.f32.mxu0 0.0
      %9059 = vmatmul.mubr.f32.gmra.mxu0 %v7866
      %v9060 = vpop.f32.mrf.mxu0
      %v9061 = vadd.f32 0.0, %v9060
      %v9062 = vpop.f32.mrf.mxu0
      %9063 = vmatprep.mubr.f32.mxu0 0.0
      %9064 = vmatmul.mubr.f32.gmra.mxu0 %v7869
      %v9065 = vpop.f32.mrf.mxu0
      %v9066 = vadd.f32 0.0, %v9065
      %v9067 = vpop.f32.mrf.mxu0
      %9068 = vmatprep.mubr.f32.mxu0 0.0
      %9069 = vmatmul.mubr.f32.gmra.mxu0 %v7872
      %v9070 = vpop.f32.mrf.mxu0
      %v9071 = vadd.f32 0.0, %v9070
      %v9072 = vpop.f32.mrf.mxu0
      %9073 = vmatprep.mubr.f32.mxu0 0.0
      %9074 = vmatmul.mubr.f32.gmra.mxu0 %v7875
      %v9075 = vpop.f32.mrf.mxu0
      %v9076 = vadd.f32 0.0, %v9075
      %v9077 = vpop.f32.mrf.mxu0
      %9078 = vmatprep.mubr.f32.mxu0 0.0
      %9079 = vmatmul.mubr.f32.gmra.mxu0 %v7878
      %v9080 = vpop.f32.mrf.mxu0
      %v9081 = vadd.f32 0.0, %v9080
      %v9082 = vpop.f32.mrf.mxu0
      %9083 = vmatprep.mubr.f32.mxu0 0.0
      %9084 = vmatmul.mubr.f32.gmra.mxu0 %v7881
      %v9085 = vpop.f32.mrf.mxu0
      %v9086 = vadd.f32 0.0, %v9085
      %v9087 = vpop.f32.mrf.mxu0
      %9088 = vmatprep.mubr.f32.mxu0 0.0
      %9089 = vmatmul.mubr.f32.gmra.mxu0 %v7884
      %v9090 = vpop.f32.mrf.mxu0
      %v9091 = vadd.f32 0.0, %v9090
      %v9092 = vpop.f32.mrf.mxu0
      %9093 = vmatprep.mubr.f32.mxu0 0.0
      %9094 = vmatmul.mubr.f32.gmra.mxu0 %v7887
      %v9095 = vpop.f32.mrf.mxu0
      %v9096 = vadd.f32 0.0, %v9095
      %v9097 = vpop.f32.mrf.mxu0
      %9098 = vmatprep.mubr.f32.mxu0 0.0
      %9099 = vmatmul.mubr.f32.gmra.mxu0 %v7890
      %v9100 = vpop.f32.mrf.mxu0
      %v9101 = vadd.f32 0.0, %v9100
      %v9102 = vpop.f32.mrf.mxu0
      %9103 = vmatprep.mubr.f32.mxu0 0.0
      %9104 = vmatmul.mubr.f32.gmra.mxu0 %v7893
      %v9105 = vpop.f32.mrf.mxu0
      %v9106 = vadd.f32 0.0, %v9105
      %v9107 = vpop.f32.mrf.mxu0
      %9108 = vmatprep.mubr.f32.mxu0 0.0
      %9109 = vmatmul.mubr.f32.gmra.mxu0 %v7896
      %v9110 = vpop.f32.mrf.mxu0
      %v9111 = vadd.f32 0.0, %v9110
      %v9112 = vpop.f32.mrf.mxu0
      %9113 = vmatprep.mubr.f32.mxu0 0.0
      %9114 = vmatmul.mubr.f32.gmra.mxu0 %v7899
      %v9115 = vpop.f32.mrf.mxu0
      %v9116 = vadd.f32 0.0, %v9115
      %v9117 = vpop.f32.mrf.mxu0
      %9118 = vmatprep.mubr.f32.mxu0 0.0
      %9119 = vmatmul.mubr.f32.gmra.mxu0 %v7902
      %v9120 = vpop.f32.mrf.mxu0
      %v9121 = vadd.f32 0.0, %v9120
      %v9122 = vpop.f32.mrf.mxu0
      %9123 = vmatprep.mubr.f32.mxu0 0.0
      %9124 = vmatmul.mubr.f32.gmra.mxu0 %v7905
      %v9125 = vpop.f32.mrf.mxu0
      %v9126 = vadd.f32 0.0, %v9125
      %v9127 = vpop.f32.mrf.mxu0
      %9128 = vmatprep.mubr.f32.mxu0 0.0
      %9129 = vmatmul.mubr.f32.gmra.mxu0 %v7908
      %v9130 = vpop.f32.mrf.mxu0
      %v9131 = vadd.f32 0.0, %v9130
      %v9132 = vpop.f32.mrf.mxu0
      %9133 = vmatprep.mubr.f32.mxu0 0.0
      %9134 = vmatmul.mubr.f32.gmra.mxu0 %v7911
      %v9135 = vpop.f32.mrf.mxu0
      %v9136 = vadd.f32 0.0, %v9135
      %v9137 = vpop.f32.mrf.mxu0
      %9138 = vmatprep.mubr.f32.mxu0 0.0
      %9139 = vmatmul.mubr.f32.gmra.mxu0 %v7914
      %v9140 = vpop.f32.mrf.mxu0
      %v9141 = vadd.f32 0.0, %v9140
      %v9142 = vpop.f32.mrf.mxu0
      %9143 = vmatprep.mubr.f32.mxu0 0.0
      %9144 = vmatmul.mubr.f32.gmra.mxu0 %v7917
      %v9145 = vpop.f32.mrf.mxu0
      %v9146 = vadd.f32 0.0, %v9145
      %v9147 = vpop.f32.mrf.mxu0
      %9148 = vmatprep.mubr.f32.mxu0 0.0
      %9149 = vmatmul.mubr.f32.gmra.mxu0 %v7920
      %v9150 = vpop.f32.mrf.mxu0
      %v9151 = vadd.f32 0.0, %v9150
      %v9152 = vpop.f32.mrf.mxu0
      %9153 = vmatprep.mubr.f32.mxu0 0.0
      %9154 = vmatmul.mubr.f32.gmra.mxu0 %v7923
      %v9155 = vpop.f32.mrf.mxu0
      %v9156 = vadd.f32 0.0, %v9155
      %v9157 = vpop.f32.mrf.mxu0
      %9158 = vmatprep.mubr.f32.mxu0 0.0
      %9159 = vmatmul.mubr.f32.gmra.mxu0 %v7926
      %v9160 = vpop.f32.mrf.mxu0
      %v9161 = vadd.f32 0.0, %v9160
      %v9162 = vpop.f32.mrf.mxu0
      %9163 = vmatprep.mubr.f32.mxu0 0.0
      %9164 = vmatmul.mubr.f32.gmra.mxu0 %v7929
      %v9165 = vpop.f32.mrf.mxu0
      %v9166 = vadd.f32 0.0, %v9165
      %v9167 = vpop.f32.mrf.mxu0
      %9168 = vmatprep.mubr.f32.mxu0 0.0
      %9169 = vmatmul.mubr.f32.gmra.mxu0 %v7932
      %v9170 = vpop.f32.mrf.mxu0
      %v9171 = vadd.f32 0.0, %v9170
      %v9172 = vpop.f32.mrf.mxu0
      %9173 = vmatprep.mubr.f32.mxu0 0.0
      %9174 = vmatmul.mubr.f32.gmra.mxu0 %v7935
      %v9175 = vpop.f32.mrf.mxu0
      %v9176 = vadd.f32 0.0, %v9175
      %v9177 = vpop.f32.mrf.mxu0
      %9178 = vmatprep.mubr.f32.mxu0 0.0
      %9179 = vmatmul.mubr.f32.gmra.mxu0 %v7938
      %v9180 = vpop.f32.mrf.mxu0
      %v9181 = vadd.f32 0.0, %v9180
      %v9182 = vpop.f32.mrf.mxu0
      %9183 = vmatprep.mubr.f32.mxu0 0.0
      %9184 = vmatmul.mubr.f32.gmra.mxu0 %v7941
      %v9185 = vpop.f32.mrf.mxu0
      %v9186 = vadd.f32 0.0, %v9185
      %v9187 = vpop.f32.mrf.mxu0
      %9188 = vmatprep.mubr.f32.mxu0 0.0
      %9189 = vmatmul.mubr.f32.gmra.mxu0 %v7944
      %v9190 = vpop.f32.mrf.mxu0
      %v9191 = vadd.f32 0.0, %v9190
      %v9192 = vpop.f32.mrf.mxu0
      %9193 = vmatprep.mubr.f32.mxu0 0.0
      %9194 = vmatmul.mubr.f32.gmra.mxu0 %v7947
      %v9195 = vpop.f32.mrf.mxu0
      %v9196 = vadd.f32 0.0, %v9195
      %v9197 = vpop.f32.mrf.mxu0
      %9198 = vdwg.mxu0
      %v9199 = vmul.f32 %v9041, %v8855
      %v9200 = vmul.f32 %v9046, %v8857
      %v9201 = vmul.f32 %v9051, %v8860
      %v9202 = vmul.f32 %v9056, %v8862
      %v9203 = vmul.f32 %v9061, %v8865
      %v9204 = vmul.f32 %v9066, %v8867
      %v9205 = vmul.f32 %v9071, %v8870
      %v9206 = vmul.f32 %v9076, %v8872
      %v9207 = vmul.f32 %v9081, %v8875
      %v9208 = vmul.f32 %v9086, %v8877
      %v9209 = vmul.f32 %v9091, %v8880
      %v9210 = vmul.f32 %v9096, %v8882
      %v9211 = vmul.f32 %v9101, %v8885
      %v9212 = vmul.f32 %v9106, %v8887
      %v9213 = vmul.f32 %v9111, %v8890
      %v9214 = vmul.f32 %v9116, %v8892
      %v9215 = vmul.f32 %v9121, %v8895
      %v9216 = vmul.f32 %v9126, %v8897
      %v9217 = vmul.f32 %v9131, %v8900
      %v9218 = vmul.f32 %v9136, %v8902
      %v9219 = vmul.f32 %v9141, %v8905
      %v9220 = vmul.f32 %v9146, %v8907
      %v9221 = vmul.f32 %v9151, %v8910
      %v9222 = vmul.f32 %v9156, %v8912
      %v9223 = vmul.f32 %v9161, %v8915
      %v9224 = vmul.f32 %v9166, %v8917
      %v9225 = vmul.f32 %v9171, %v8920
      %v9226 = vmul.f32 %v9176, %v8922
      %v9227 = vmul.f32 %v9181, %v8925
      %v9228 = vmul.f32 %v9186, %v8927
      %v9229 = vmul.f32 %v9191, %v8930
      %v9230 = vmul.f32 %v9196, %v8932
      %v9231 = vadd.f32 %v8773, %v9199
      %v9232 = vadd.f32 %v8774, %v9200
      %v9233 = vadd.f32 %v8775, %v9201
      %v9234 = vadd.f32 %v8776, %v9202
      %v9235 = vadd.f32 %v8777, %v9203
      %v9236 = vadd.f32 %v8778, %v9204
      %v9237 = vadd.f32 %v8779, %v9205
      %v9238 = vadd.f32 %v8780, %v9206
      %v9239 = vadd.f32 %v8781, %v9207
      %v9240 = vadd.f32 %v8782, %v9208
      %v9241 = vadd.f32 %v8783, %v9209
      %v9242 = vadd.f32 %v8784, %v9210
      %v9243 = vadd.f32 %v8785, %v9211
      %v9244 = vadd.f32 %v8786, %v9212
      %v9245 = vadd.f32 %v8787, %v9213
      %v9246 = vadd.f32 %v8788, %v9214
      %v9247 = vadd.f32 %v8789, %v9215
      %v9248 = vadd.f32 %v8790, %v9216
      %v9249 = vadd.f32 %v8791, %v9217
      %v9250 = vadd.f32 %v8792, %v9218
      %v9251 = vadd.f32 %v8793, %v9219
      %v9252 = vadd.f32 %v8794, %v9220
      %v9253 = vadd.f32 %v8795, %v9221
      %v9254 = vadd.f32 %v8796, %v9222
      %v9255 = vadd.f32 %v8797, %v9223
      %v9256 = vadd.f32 %v8798, %v9224
      %v9257 = vadd.f32 %v8799, %v9225
      %v9258 = vadd.f32 %v8800, %v9226
      %v9259 = vadd.f32 %v8801, %v9227
      %v9260 = vadd.f32 %v8802, %v9228
      %v9261 = vadd.f32 %v8803, %v9229
      %v9262 = vadd.f32 %v8804, %v9230
      %v9266 = vrot.slane %v7842, 1
      %v9267 = vrot.slane %v7843, 1
      %v9268 = vsel %vm2459, %v9266, %v9267
      %v9269 = vrot.slane %v7844, 1
      %v9270 = vsel %vm2459, %v9267, %v9269
      %s9273 = scalar_lea.vmem %s4, 160
      %v9274 = vld [vmem:[%s9273] sm:$0xff]
      %v9275 = vld [vmem:[%s9273 + $0x8] sm:$0xff]
      %v9276 = vld [vmem:[%s9273 + $0x10] sm:$0xff]
      %v9277 = vld [vmem:[%s9273 + $0x18] sm:$0xff]
      %v9278 = vld [vmem:[%s9273 + $0x20] sm:$0xf]
      %v9280 = vsel %vm6698, %v9278, 0
      %9282 = vmatprep.subr.mxu0 0.0
      %9283 = vmatpush1.msra.mxu0 0.0
      %9284 = vmatprep.subr.mxu0 0.0
      %9285 = vmatpush1.msra.mxu0 0.0
      %9286 = vmatprep.subr.mxu0 0.0
      %9287 = vmatpush1.msra.mxu0 0.0
      %9288 = vmatprep.subr.mxu0 0.0
      %9289 = vmatpush1.msra.mxu0 0.0
      %9290 = vmatprep.subr.mxu0 0.0
      %9291 = vmatpush1.msra.mxu0 0.0
      %9292 = vmatprep.subr.mxu0 0.0
      %9293 = vmatpush1.msra.mxu0 0.0
      %9294 = vmatprep.subr.mxu0 0.0
      %9295 = vmatpush1.msra.mxu0 0.0
      %9296 = vmatprep.subr.mxu0 0.0
      %9297 = vmatpush1.msra.mxu0 0.0
      %9298 = vmatprep.subr.mxu0 0.0
      %9299 = vmatpush1.msra.mxu0 0.0
      %9300 = vmatprep.subr.mxu0 0.0
      %9301 = vmatpush1.msra.mxu0 0.0
      %9302 = vmatprep.subr.mxu0 0.0
      %9303 = vmatpush1.msra.mxu0 0.0
      %9304 = vmatprep.subr.mxu0 0.0
      %9305 = vmatpush1.msra.mxu0 %v9280
      %9306 = vmatprep.subr.mxu0 0.0
      %9307 = vmatpush1.msra.mxu0 %v9277
      %9308 = vmatprep.subr.mxu0 0.0
      %9309 = vmatpush1.msra.mxu0 %v9276
      %9310 = vmatprep.subr.mxu0 0.0
      %9311 = vmatpush1.msra.mxu0 %v9275
      %9312 = vmatprep.subr.mxu0 0.0
      %9313 = vmatpush1.msra.mxu0 %v9274
      %9314 = vmatprep.subr.mxu0 0.0
      %9315 = vmatpush2.msra.mxu0 0.0
      %9316 = vmatprep.subr.mxu0 0.0
      %9317 = vmatpush2.msra.mxu0 0.0
      %9318 = vmatprep.subr.mxu0 0.0
      %9319 = vmatpush2.msra.mxu0 0.0
      %9320 = vmatprep.subr.mxu0 0.0
      %9321 = vmatpush2.msra.mxu0 0.0
      %9322 = vmatprep.subr.mxu0 0.0
      %9323 = vmatpush2.msra.mxu0 0.0
      %9324 = vmatprep.subr.mxu0 0.0
      %9325 = vmatpush2.msra.mxu0 0.0
      %9326 = vmatprep.subr.mxu0 0.0
      %9327 = vmatpush2.msra.mxu0 0.0
      %9328 = vmatprep.subr.mxu0 0.0
      %9329 = vmatpush2.msra.mxu0 0.0
      %9330 = vmatprep.subr.mxu0 0.0
      %9331 = vmatpush2.msra.mxu0 0.0
      %9332 = vmatprep.subr.mxu0 0.0
      %9333 = vmatpush2.msra.mxu0 0.0
      %9334 = vmatprep.subr.mxu0 0.0
      %9335 = vmatpush2.msra.mxu0 0.0
      %9336 = vmatprep.subr.mxu0 0.0
      %9337 = vmatpush2.msra.mxu0 0.0
      %9338 = vmatprep.subr.mxu0 0.0
      %9339 = vmatpush2.msra.mxu0 0.0
      %9340 = vmatprep.subr.mxu0 0.0
      %9341 = vmatpush2.msra.mxu0 0.0
      %9342 = vmatprep.subr.mxu0 0.0
      %9343 = vmatpush2.msra.mxu0 0.0
      %9344 = vmatprep.subr.mxu0 0.0
      %9345 = vmatpush2.msra.mxu0 0.0
      %9346 = vmatprep.mubr.f32.mxu0 0.0
      %9347 = vmatmul.mubr.f32.gmra.mxu0 %v7854
      %v9348 = vpop.f32.mrf.mxu0
      %v9349 = vadd.f32 0.0, %v9348
      %v9350 = vpop.f32.mrf.mxu0
      %9351 = vmatprep.mubr.f32.mxu0 0.0
      %9352 = vmatmul.mubr.f32.gmra.mxu0 %v7857
      %v9353 = vpop.f32.mrf.mxu0
      %v9354 = vadd.f32 0.0, %v9353
      %v9355 = vpop.f32.mrf.mxu0
      %9356 = vmatprep.mubr.f32.mxu0 0.0
      %9357 = vmatmul.mubr.f32.gmra.mxu0 %v7860
      %v9358 = vpop.f32.mrf.mxu0
      %v9359 = vadd.f32 0.0, %v9358
      %v9360 = vpop.f32.mrf.mxu0
      %9361 = vmatprep.mubr.f32.mxu0 0.0
      %9362 = vmatmul.mubr.f32.gmra.mxu0 %v7863
      %v9363 = vpop.f32.mrf.mxu0
      %v9364 = vadd.f32 0.0, %v9363
      %v9365 = vpop.f32.mrf.mxu0
      %9366 = vmatprep.mubr.f32.mxu0 0.0
      %9367 = vmatmul.mubr.f32.gmra.mxu0 %v7866
      %v9368 = vpop.f32.mrf.mxu0
      %v9369 = vadd.f32 0.0, %v9368
      %v9370 = vpop.f32.mrf.mxu0
      %9371 = vmatprep.mubr.f32.mxu0 0.0
      %9372 = vmatmul.mubr.f32.gmra.mxu0 %v7869
      %v9373 = vpop.f32.mrf.mxu0
      %v9374 = vadd.f32 0.0, %v9373
      %v9375 = vpop.f32.mrf.mxu0
      %9376 = vmatprep.mubr.f32.mxu0 0.0
      %9377 = vmatmul.mubr.f32.gmra.mxu0 %v7872
      %v9378 = vpop.f32.mrf.mxu0
      %v9379 = vadd.f32 0.0, %v9378
      %v9380 = vpop.f32.mrf.mxu0
      %9381 = vmatprep.mubr.f32.mxu0 0.0
      %9382 = vmatmul.mubr.f32.gmra.mxu0 %v7875
      %v9383 = vpop.f32.mrf.mxu0
      %v9384 = vadd.f32 0.0, %v9383
      %v9385 = vpop.f32.mrf.mxu0
      %9386 = vmatprep.mubr.f32.mxu0 0.0
      %9387 = vmatmul.mubr.f32.gmra.mxu0 %v7878
      %v9388 = vpop.f32.mrf.mxu0
      %v9389 = vadd.f32 0.0, %v9388
      %v9390 = vpop.f32.mrf.mxu0
      %9391 = vmatprep.mubr.f32.mxu0 0.0
      %9392 = vmatmul.mubr.f32.gmra.mxu0 %v7881
      %v9393 = vpop.f32.mrf.mxu0
      %v9394 = vadd.f32 0.0, %v9393
      %v9395 = vpop.f32.mrf.mxu0
      %9396 = vmatprep.mubr.f32.mxu0 0.0
      %9397 = vmatmul.mubr.f32.gmra.mxu0 %v7884
      %v9398 = vpop.f32.mrf.mxu0
      %v9399 = vadd.f32 0.0, %v9398
      %v9400 = vpop.f32.mrf.mxu0
      %9401 = vmatprep.mubr.f32.mxu0 0.0
      %9402 = vmatmul.mubr.f32.gmra.mxu0 %v7887
      %v9403 = vpop.f32.mrf.mxu0
      %v9404 = vadd.f32 0.0, %v9403
      %v9405 = vpop.f32.mrf.mxu0
      %9406 = vmatprep.mubr.f32.mxu0 0.0
      %9407 = vmatmul.mubr.f32.gmra.mxu0 %v7890
      %v9408 = vpop.f32.mrf.mxu0
      %v9409 = vadd.f32 0.0, %v9408
      %v9410 = vpop.f32.mrf.mxu0
      %9411 = vmatprep.mubr.f32.mxu0 0.0
      %9412 = vmatmul.mubr.f32.gmra.mxu0 %v7893
      %v9413 = vpop.f32.mrf.mxu0
      %v9414 = vadd.f32 0.0, %v9413
      %v9415 = vpop.f32.mrf.mxu0
      %9416 = vmatprep.mubr.f32.mxu0 0.0
      %9417 = vmatmul.mubr.f32.gmra.mxu0 %v7896
      %v9418 = vpop.f32.mrf.mxu0
      %v9419 = vadd.f32 0.0, %v9418
      %v9420 = vpop.f32.mrf.mxu0
      %9421 = vmatprep.mubr.f32.mxu0 0.0
      %9422 = vmatmul.mubr.f32.gmra.mxu0 %v7899
      %v9423 = vpop.f32.mrf.mxu0
      %v9424 = vadd.f32 0.0, %v9423
      %v9425 = vpop.f32.mrf.mxu0
      %9426 = vmatprep.mubr.f32.mxu0 0.0
      %9427 = vmatmul.mubr.f32.gmra.mxu0 %v7902
      %v9428 = vpop.f32.mrf.mxu0
      %v9429 = vadd.f32 0.0, %v9428
      %v9430 = vpop.f32.mrf.mxu0
      %9431 = vmatprep.mubr.f32.mxu0 0.0
      %9432 = vmatmul.mubr.f32.gmra.mxu0 %v7905
      %v9433 = vpop.f32.mrf.mxu0
      %v9434 = vadd.f32 0.0, %v9433
      %v9435 = vpop.f32.mrf.mxu0
      %9436 = vmatprep.mubr.f32.mxu0 0.0
      %9437 = vmatmul.mubr.f32.gmra.mxu0 %v7908
      %v9438 = vpop.f32.mrf.mxu0
      %v9439 = vadd.f32 0.0, %v9438
      %v9440 = vpop.f32.mrf.mxu0
      %9441 = vmatprep.mubr.f32.mxu0 0.0
      %9442 = vmatmul.mubr.f32.gmra.mxu0 %v7911
      %v9443 = vpop.f32.mrf.mxu0
      %v9444 = vadd.f32 0.0, %v9443
      %v9445 = vpop.f32.mrf.mxu0
      %9446 = vmatprep.mubr.f32.mxu0 0.0
      %9447 = vmatmul.mubr.f32.gmra.mxu0 %v7914
      %v9448 = vpop.f32.mrf.mxu0
      %v9449 = vadd.f32 0.0, %v9448
      %v9450 = vpop.f32.mrf.mxu0
      %9451 = vmatprep.mubr.f32.mxu0 0.0
      %9452 = vmatmul.mubr.f32.gmra.mxu0 %v7917
      %v9453 = vpop.f32.mrf.mxu0
      %v9454 = vadd.f32 0.0, %v9453
      %v9455 = vpop.f32.mrf.mxu0
      %9456 = vmatprep.mubr.f32.mxu0 0.0
      %9457 = vmatmul.mubr.f32.gmra.mxu0 %v7920
      %v9458 = vpop.f32.mrf.mxu0
      %v9459 = vadd.f32 0.0, %v9458
      %v9460 = vpop.f32.mrf.mxu0
      %9461 = vmatprep.mubr.f32.mxu0 0.0
      %9462 = vmatmul.mubr.f32.gmra.mxu0 %v7923
      %v9463 = vpop.f32.mrf.mxu0
      %v9464 = vadd.f32 0.0, %v9463
      %v9465 = vpop.f32.mrf.mxu0
      %9466 = vmatprep.mubr.f32.mxu0 0.0
      %9467 = vmatmul.mubr.f32.gmra.mxu0 %v7926
      %v9468 = vpop.f32.mrf.mxu0
      %v9469 = vadd.f32 0.0, %v9468
      %v9470 = vpop.f32.mrf.mxu0
      %9471 = vmatprep.mubr.f32.mxu0 0.0
      %9472 = vmatmul.mubr.f32.gmra.mxu0 %v7929
      %v9473 = vpop.f32.mrf.mxu0
      %v9474 = vadd.f32 0.0, %v9473
      %v9475 = vpop.f32.mrf.mxu0
      %9476 = vmatprep.mubr.f32.mxu0 0.0
      %9477 = vmatmul.mubr.f32.gmra.mxu0 %v7932
      %v9478 = vpop.f32.mrf.mxu0
      %v9479 = vadd.f32 0.0, %v9478
      %v9480 = vpop.f32.mrf.mxu0
      %9481 = vmatprep.mubr.f32.mxu0 0.0
      %9482 = vmatmul.mubr.f32.gmra.mxu0 %v7935
      %v9483 = vpop.f32.mrf.mxu0
      %v9484 = vadd.f32 0.0, %v9483
      %v9485 = vpop.f32.mrf.mxu0
      %9486 = vmatprep.mubr.f32.mxu0 0.0
      %9487 = vmatmul.mubr.f32.gmra.mxu0 %v7938
      %v9488 = vpop.f32.mrf.mxu0
      %v9489 = vadd.f32 0.0, %v9488
      %v9490 = vpop.f32.mrf.mxu0
      %9491 = vmatprep.mubr.f32.mxu0 0.0
      %9492 = vmatmul.mubr.f32.gmra.mxu0 %v7941
      %v9493 = vpop.f32.mrf.mxu0
      %v9494 = vadd.f32 0.0, %v9493
      %v9495 = vpop.f32.mrf.mxu0
      %9496 = vmatprep.mubr.f32.mxu0 0.0
      %9497 = vmatmul.mubr.f32.gmra.mxu0 %v7944
      %v9498 = vpop.f32.mrf.mxu0
      %v9499 = vadd.f32 0.0, %v9498
      %v9500 = vpop.f32.mrf.mxu0
      %9501 = vmatprep.mubr.f32.mxu0 0.0
      %9502 = vmatmul.mubr.f32.gmra.mxu0 %v7947
      %v9503 = vpop.f32.mrf.mxu0
      %v9504 = vadd.f32 0.0, %v9503
      %v9505 = vpop.f32.mrf.mxu0
      %9506 = vdwg.mxu0
      %v9507 = vmul.f32 %v9349, %v8860
      %v9508 = vmul.f32 %v9354, %v8862
      %v9509 = vmul.f32 %v9359, %v8865
      %v9510 = vmul.f32 %v9364, %v8867
      %v9511 = vmul.f32 %v9369, %v8870
      %v9512 = vmul.f32 %v9374, %v8872
      %v9513 = vmul.f32 %v9379, %v8875
      %v9514 = vmul.f32 %v9384, %v8877
      %v9515 = vmul.f32 %v9389, %v8880
      %v9516 = vmul.f32 %v9394, %v8882
      %v9517 = vmul.f32 %v9399, %v8885
      %v9518 = vmul.f32 %v9404, %v8887
      %v9519 = vmul.f32 %v9409, %v8890
      %v9520 = vmul.f32 %v9414, %v8892
      %v9521 = vmul.f32 %v9419, %v8895
      %v9522 = vmul.f32 %v9424, %v8897
      %v9523 = vmul.f32 %v9429, %v8900
      %v9524 = vmul.f32 %v9434, %v8902
      %v9525 = vmul.f32 %v9439, %v8905
      %v9526 = vmul.f32 %v9444, %v8907
      %v9527 = vmul.f32 %v9449, %v8910
      %v9528 = vmul.f32 %v9454, %v8912
      %v9529 = vmul.f32 %v9459, %v8915
      %v9530 = vmul.f32 %v9464, %v8917
      %v9531 = vmul.f32 %v9469, %v8920
      %v9532 = vmul.f32 %v9474, %v8922
      %v9533 = vmul.f32 %v9479, %v8925
      %v9534 = vmul.f32 %v9484, %v8927
      %v9535 = vmul.f32 %v9489, %v8930
      %v9536 = vmul.f32 %v9494, %v8932
      %v9537 = vmul.f32 %v9499, %v9268
      %v9538 = vmul.f32 %v9504, %v9270
      %v9539 = vadd.f32 %v9231, %v9507
      %v9540 = vadd.f32 %v9232, %v9508
      %v9541 = vadd.f32 %v9233, %v9509
      %v9542 = vadd.f32 %v9234, %v9510
      %v9543 = vadd.f32 %v9235, %v9511
      %v9544 = vadd.f32 %v9236, %v9512
      %v9545 = vadd.f32 %v9237, %v9513
      %v9546 = vadd.f32 %v9238, %v9514
      %v9547 = vadd.f32 %v9239, %v9515
      %v9548 = vadd.f32 %v9240, %v9516
      %v9549 = vadd.f32 %v9241, %v9517
      %v9550 = vadd.f32 %v9242, %v9518
      %v9551 = vadd.f32 %v9243, %v9519
      %v9552 = vadd.f32 %v9244, %v9520
      %v9553 = vadd.f32 %v9245, %v9521
      %v9554 = vadd.f32 %v9246, %v9522
      %v9555 = vadd.f32 %v9247, %v9523
      %v9556 = vadd.f32 %v9248, %v9524
      %v9557 = vadd.f32 %v9249, %v9525
      %v9558 = vadd.f32 %v9250, %v9526
      %v9559 = vadd.f32 %v9251, %v9527
      %v9560 = vadd.f32 %v9252, %v9528
      %v9561 = vadd.f32 %v9253, %v9529
      %v9562 = vadd.f32 %v9254, %v9530
      %v9563 = vadd.f32 %v9255, %v9531
      %v9564 = vadd.f32 %v9256, %v9532
      %v9565 = vadd.f32 %v9257, %v9533
      %v9566 = vadd.f32 %v9258, %v9534
      %v9567 = vadd.f32 %v9259, %v9535
      %v9568 = vadd.f32 %v9260, %v9536
      %v9569 = vadd.f32 %v9261, %v9537
      %v9570 = vadd.f32 %v9262, %v9538
      %v9574 = vrot.slane %v7845, 1
      %v9575 = vrot.slane %v7846, 1
      %v9576 = vsel %vm2459, %v9574, %v9575
      %v9577 = vrot.slane %v7847, 1
      %v9578 = vsel %vm2459, %v9575, %v9577
      %s9581 = scalar_lea.vmem %s4, 200
      %v9582 = vld [vmem:[%s9581] sm:$0xff]
      %v9583 = vld [vmem:[%s9581 + $0x8] sm:$0xff]
      %v9584 = vld [vmem:[%s9581 + $0x10] sm:$0xff]
      %v9585 = vld [vmem:[%s9581 + $0x18] sm:$0xff]
      %v9586 = vld [vmem:[%s9581 + $0x20] sm:$0xf]
      %v9588 = vsel %vm6698, %v9586, 0
      %9590 = vmatprep.subr.mxu0 0.0
      %9591 = vmatpush1.msra.mxu0 0.0
      %9592 = vmatprep.subr.mxu0 0.0
      %9593 = vmatpush1.msra.mxu0 0.0
      %9594 = vmatprep.subr.mxu0 0.0
      %9595 = vmatpush1.msra.mxu0 0.0
      %9596 = vmatprep.subr.mxu0 0.0
      %9597 = vmatpush1.msra.mxu0 0.0
      %9598 = vmatprep.subr.mxu0 0.0
      %9599 = vmatpush1.msra.mxu0 0.0
      %9600 = vmatprep.subr.mxu0 0.0
      %9601 = vmatpush1.msra.mxu0 0.0
      %9602 = vmatprep.subr.mxu0 0.0
      %9603 = vmatpush1.msra.mxu0 0.0
      %9604 = vmatprep.subr.mxu0 0.0
      %9605 = vmatpush1.msra.mxu0 0.0
      %9606 = vmatprep.subr.mxu0 0.0
      %9607 = vmatpush1.msra.mxu0 0.0
      %9608 = vmatprep.subr.mxu0 0.0
      %9609 = vmatpush1.msra.mxu0 0.0
      %9610 = vmatprep.subr.mxu0 0.0
      %9611 = vmatpush1.msra.mxu0 0.0
      %9612 = vmatprep.subr.mxu0 0.0
      %9613 = vmatpush1.msra.mxu0 %v9588
      %9614 = vmatprep.subr.mxu0 0.0
      %9615 = vmatpush1.msra.mxu0 %v9585
      %9616 = vmatprep.subr.mxu0 0.0
      %9617 = vmatpush1.msra.mxu0 %v9584
      %9618 = vmatprep.subr.mxu0 0.0
      %9619 = vmatpush1.msra.mxu0 %v9583
      %9620 = vmatprep.subr.mxu0 0.0
      %9621 = vmatpush1.msra.mxu0 %v9582
      %9622 = vmatprep.subr.mxu0 0.0
      %9623 = vmatpush2.msra.mxu0 0.0
      %9624 = vmatprep.subr.mxu0 0.0
      %9625 = vmatpush2.msra.mxu0 0.0
      %9626 = vmatprep.subr.mxu0 0.0
      %9627 = vmatpush2.msra.mxu0 0.0
      %9628 = vmatprep.subr.mxu0 0.0
      %9629 = vmatpush2.msra.mxu0 0.0
      %9630 = vmatprep.subr.mxu0 0.0
      %9631 = vmatpush2.msra.mxu0 0.0
      %9632 = vmatprep.subr.mxu0 0.0
      %9633 = vmatpush2.msra.mxu0 0.0
      %9634 = vmatprep.subr.mxu0 0.0
      %9635 = vmatpush2.msra.mxu0 0.0
      %9636 = vmatprep.subr.mxu0 0.0
      %9637 = vmatpush2.msra.mxu0 0.0
      %9638 = vmatprep.subr.mxu0 0.0
      %9639 = vmatpush2.msra.mxu0 0.0
      %9640 = vmatprep.subr.mxu0 0.0
      %9641 = vmatpush2.msra.mxu0 0.0
      %9642 = vmatprep.subr.mxu0 0.0
      %9643 = vmatpush2.msra.mxu0 0.0
      %9644 = vmatprep.subr.mxu0 0.0
      %9645 = vmatpush2.msra.mxu0 0.0
      %9646 = vmatprep.subr.mxu0 0.0
      %9647 = vmatpush2.msra.mxu0 0.0
      %9648 = vmatprep.subr.mxu0 0.0
      %9649 = vmatpush2.msra.mxu0 0.0
      %9650 = vmatprep.subr.mxu0 0.0
      %9651 = vmatpush2.msra.mxu0 0.0
      %9652 = vmatprep.subr.mxu0 0.0
      %9653 = vmatpush2.msra.mxu0 0.0
      %9654 = vmatprep.mubr.f32.mxu0 0.0
      %9655 = vmatmul.mubr.f32.gmra.mxu0 %v7854
      %v9656 = vpop.f32.mrf.mxu0
      %v9657 = vadd.f32 0.0, %v9656
      %v9658 = vpop.f32.mrf.mxu0
      %9659 = vmatprep.mubr.f32.mxu0 0.0
      %9660 = vmatmul.mubr.f32.gmra.mxu0 %v7857
      %v9661 = vpop.f32.mrf.mxu0
      %v9662 = vadd.f32 0.0, %v9661
      %v9663 = vpop.f32.mrf.mxu0
      %9664 = vmatprep.mubr.f32.mxu0 0.0
      %9665 = vmatmul.mubr.f32.gmra.mxu0 %v7860
      %v9666 = vpop.f32.mrf.mxu0
      %v9667 = vadd.f32 0.0, %v9666
      %v9668 = vpop.f32.mrf.mxu0
      %9669 = vmatprep.mubr.f32.mxu0 0.0
      %9670 = vmatmul.mubr.f32.gmra.mxu0 %v7863
      %v9671 = vpop.f32.mrf.mxu0
      %v9672 = vadd.f32 0.0, %v9671
      %v9673 = vpop.f32.mrf.mxu0
      %9674 = vmatprep.mubr.f32.mxu0 0.0
      %9675 = vmatmul.mubr.f32.gmra.mxu0 %v7866
      %v9676 = vpop.f32.mrf.mxu0
      %v9677 = vadd.f32 0.0, %v9676
      %v9678 = vpop.f32.mrf.mxu0
      %9679 = vmatprep.mubr.f32.mxu0 0.0
      %9680 = vmatmul.mubr.f32.gmra.mxu0 %v7869
      %v9681 = vpop.f32.mrf.mxu0
      %v9682 = vadd.f32 0.0, %v9681
      %v9683 = vpop.f32.mrf.mxu0
      %9684 = vmatprep.mubr.f32.mxu0 0.0
      %9685 = vmatmul.mubr.f32.gmra.mxu0 %v7872
      %v9686 = vpop.f32.mrf.mxu0
      %v9687 = vadd.f32 0.0, %v9686
      %v9688 = vpop.f32.mrf.mxu0
      %9689 = vmatprep.mubr.f32.mxu0 0.0
      %9690 = vmatmul.mubr.f32.gmra.mxu0 %v7875
      %v9691 = vpop.f32.mrf.mxu0
      %v9692 = vadd.f32 0.0, %v9691
      %v9693 = vpop.f32.mrf.mxu0
      %9694 = vmatprep.mubr.f32.mxu0 0.0
      %9695 = vmatmul.mubr.f32.gmra.mxu0 %v7878
      %v9696 = vpop.f32.mrf.mxu0
      %v9697 = vadd.f32 0.0, %v9696
      %v9698 = vpop.f32.mrf.mxu0
      %9699 = vmatprep.mubr.f32.mxu0 0.0
      %9700 = vmatmul.mubr.f32.gmra.mxu0 %v7881
      %v9701 = vpop.f32.mrf.mxu0
      %v9702 = vadd.f32 0.0, %v9701
      %v9703 = vpop.f32.mrf.mxu0
      %9704 = vmatprep.mubr.f32.mxu0 0.0
      %9705 = vmatmul.mubr.f32.gmra.mxu0 %v7884
      %v9706 = vpop.f32.mrf.mxu0
      %v9707 = vadd.f32 0.0, %v9706
      %v9708 = vpop.f32.mrf.mxu0
      %9709 = vmatprep.mubr.f32.mxu0 0.0
      %9710 = vmatmul.mubr.f32.gmra.mxu0 %v7887
      %v9711 = vpop.f32.mrf.mxu0
      %v9712 = vadd.f32 0.0, %v9711
      %v9713 = vpop.f32.mrf.mxu0
      %9714 = vmatprep.mubr.f32.mxu0 0.0
      %9715 = vmatmul.mubr.f32.gmra.mxu0 %v7890
      %v9716 = vpop.f32.mrf.mxu0
      %v9717 = vadd.f32 0.0, %v9716
      %v9718 = vpop.f32.mrf.mxu0
      %9719 = vmatprep.mubr.f32.mxu0 0.0
      %9720 = vmatmul.mubr.f32.gmra.mxu0 %v7893
      %v9721 = vpop.f32.mrf.mxu0
      %v9722 = vadd.f32 0.0, %v9721
      %v9723 = vpop.f32.mrf.mxu0
      %9724 = vmatprep.mubr.f32.mxu0 0.0
      %9725 = vmatmul.mubr.f32.gmra.mxu0 %v7896
      %v9726 = vpop.f32.mrf.mxu0
      %v9727 = vadd.f32 0.0, %v9726
      %v9728 = vpop.f32.mrf.mxu0
      %9729 = vmatprep.mubr.f32.mxu0 0.0
      %9730 = vmatmul.mubr.f32.gmra.mxu0 %v7899
      %v9731 = vpop.f32.mrf.mxu0
      %v9732 = vadd.f32 0.0, %v9731
      %v9733 = vpop.f32.mrf.mxu0
      %9734 = vmatprep.mubr.f32.mxu0 0.0
      %9735 = vmatmul.mubr.f32.gmra.mxu0 %v7902
      %v9736 = vpop.f32.mrf.mxu0
      %v9737 = vadd.f32 0.0, %v9736
      %v9738 = vpop.f32.mrf.mxu0
      %9739 = vmatprep.mubr.f32.mxu0 0.0
      %9740 = vmatmul.mubr.f32.gmra.mxu0 %v7905
      %v9741 = vpop.f32.mrf.mxu0
      %v9742 = vadd.f32 0.0, %v9741
      %v9743 = vpop.f32.mrf.mxu0
      %9744 = vmatprep.mubr.f32.mxu0 0.0
      %9745 = vmatmul.mubr.f32.gmra.mxu0 %v7908
      %v9746 = vpop.f32.mrf.mxu0
      %v9747 = vadd.f32 0.0, %v9746
      %v9748 = vpop.f32.mrf.mxu0
      %9749 = vmatprep.mubr.f32.mxu0 0.0
      %9750 = vmatmul.mubr.f32.gmra.mxu0 %v7911
      %v9751 = vpop.f32.mrf.mxu0
      %v9752 = vadd.f32 0.0, %v9751
      %v9753 = vpop.f32.mrf.mxu0
      %9754 = vmatprep.mubr.f32.mxu0 0.0
      %9755 = vmatmul.mubr.f32.gmra.mxu0 %v7914
      %v9756 = vpop.f32.mrf.mxu0
      %v9757 = vadd.f32 0.0, %v9756
      %v9758 = vpop.f32.mrf.mxu0
      %9759 = vmatprep.mubr.f32.mxu0 0.0
      %9760 = vmatmul.mubr.f32.gmra.mxu0 %v7917
      %v9761 = vpop.f32.mrf.mxu0
      %v9762 = vadd.f32 0.0, %v9761
      %v9763 = vpop.f32.mrf.mxu0
      %9764 = vmatprep.mubr.f32.mxu0 0.0
      %9765 = vmatmul.mubr.f32.gmra.mxu0 %v7920
      %v9766 = vpop.f32.mrf.mxu0
      %v9767 = vadd.f32 0.0, %v9766
      %v9768 = vpop.f32.mrf.mxu0
      %9769 = vmatprep.mubr.f32.mxu0 0.0
      %9770 = vmatmul.mubr.f32.gmra.mxu0 %v7923
      %v9771 = vpop.f32.mrf.mxu0
      %v9772 = vadd.f32 0.0, %v9771
      %v9773 = vpop.f32.mrf.mxu0
      %9774 = vmatprep.mubr.f32.mxu0 0.0
      %9775 = vmatmul.mubr.f32.gmra.mxu0 %v7926
      %v9776 = vpop.f32.mrf.mxu0
      %v9777 = vadd.f32 0.0, %v9776
      %v9778 = vpop.f32.mrf.mxu0
      %9779 = vmatprep.mubr.f32.mxu0 0.0
      %9780 = vmatmul.mubr.f32.gmra.mxu0 %v7929
      %v9781 = vpop.f32.mrf.mxu0
      %v9782 = vadd.f32 0.0, %v9781
      %v9783 = vpop.f32.mrf.mxu0
      %9784 = vmatprep.mubr.f32.mxu0 0.0
      %9785 = vmatmul.mubr.f32.gmra.mxu0 %v7932
      %v9786 = vpop.f32.mrf.mxu0
      %v9787 = vadd.f32 0.0, %v9786
      %v9788 = vpop.f32.mrf.mxu0
      %9789 = vmatprep.mubr.f32.mxu0 0.0
      %9790 = vmatmul.mubr.f32.gmra.mxu0 %v7935
      %v9791 = vpop.f32.mrf.mxu0
      %v9792 = vadd.f32 0.0, %v9791
      %v9793 = vpop.f32.mrf.mxu0
      %9794 = vmatprep.mubr.f32.mxu0 0.0
      %9795 = vmatmul.mubr.f32.gmra.mxu0 %v7938
      %v9796 = vpop.f32.mrf.mxu0
      %v9797 = vadd.f32 0.0, %v9796
      %v9798 = vpop.f32.mrf.mxu0
      %9799 = vmatprep.mubr.f32.mxu0 0.0
      %9800 = vmatmul.mubr.f32.gmra.mxu0 %v7941
      %v9801 = vpop.f32.mrf.mxu0
      %v9802 = vadd.f32 0.0, %v9801
      %v9803 = vpop.f32.mrf.mxu0
      %9804 = vmatprep.mubr.f32.mxu0 0.0
      %9805 = vmatmul.mubr.f32.gmra.mxu0 %v7944
      %v9806 = vpop.f32.mrf.mxu0
      %v9807 = vadd.f32 0.0, %v9806
      %v9808 = vpop.f32.mrf.mxu0
      %9809 = vmatprep.mubr.f32.mxu0 0.0
      %9810 = vmatmul.mubr.f32.gmra.mxu0 %v7947
      %v9811 = vpop.f32.mrf.mxu0
      %v9812 = vadd.f32 0.0, %v9811
      %v9813 = vpop.f32.mrf.mxu0
      %9814 = vdwg.mxu0
      %v9815 = vmul.f32 %v9657, %v8865
      %v9816 = vmul.f32 %v9662, %v8867
      %v9817 = vmul.f32 %v9667, %v8870
      %v9818 = vmul.f32 %v9672, %v8872
      %v9819 = vmul.f32 %v9677, %v8875
      %v9820 = vmul.f32 %v9682, %v8877
      %v9821 = vmul.f32 %v9687, %v8880
      %v9822 = vmul.f32 %v9692, %v8882
      %v9823 = vmul.f32 %v9697, %v8885
      %v9824 = vmul.f32 %v9702, %v8887
      %v9825 = vmul.f32 %v9707, %v8890
      %v9826 = vmul.f32 %v9712, %v8892
      %v9827 = vmul.f32 %v9717, %v8895
      %v9828 = vmul.f32 %v9722, %v8897
      %v9829 = vmul.f32 %v9727, %v8900
      %v9830 = vmul.f32 %v9732, %v8902
      %v9831 = vmul.f32 %v9737, %v8905
      %v9832 = vmul.f32 %v9742, %v8907
      %v9833 = vmul.f32 %v9747, %v8910
      %v9834 = vmul.f32 %v9752, %v8912
      %v9835 = vmul.f32 %v9757, %v8915
      %v9836 = vmul.f32 %v9762, %v8917
      %v9837 = vmul.f32 %v9767, %v8920
      %v9838 = vmul.f32 %v9772, %v8922
      %v9839 = vmul.f32 %v9777, %v8925
      %v9840 = vmul.f32 %v9782, %v8927
      %v9841 = vmul.f32 %v9787, %v8930
      %v9842 = vmul.f32 %v9792, %v8932
      %v9843 = vmul.f32 %v9797, %v9268
      %v9844 = vmul.f32 %v9802, %v9270
      %v9845 = vmul.f32 %v9807, %v9576
      %v9846 = vmul.f32 %v9812, %v9578
      %v9847 = vadd.f32 %v9539, %v9815
      %v9848 = vadd.f32 %v9540, %v9816
      %v9849 = vadd.f32 %v9541, %v9817
      %v9850 = vadd.f32 %v9542, %v9818
      %v9851 = vadd.f32 %v9543, %v9819
      %v9852 = vadd.f32 %v9544, %v9820
      %v9853 = vadd.f32 %v9545, %v9821
      %v9854 = vadd.f32 %v9546, %v9822
      %v9855 = vadd.f32 %v9547, %v9823
      %v9856 = vadd.f32 %v9548, %v9824
      %v9857 = vadd.f32 %v9549, %v9825
      %v9858 = vadd.f32 %v9550, %v9826
      %v9859 = vadd.f32 %v9551, %v9827
      %v9860 = vadd.f32 %v9552, %v9828
      %v9861 = vadd.f32 %v9553, %v9829
      %v9862 = vadd.f32 %v9554, %v9830
      %v9863 = vadd.f32 %v9555, %v9831
      %v9864 = vadd.f32 %v9556, %v9832
      %v9865 = vadd.f32 %v9557, %v9833
      %v9866 = vadd.f32 %v9558, %v9834
      %v9867 = vadd.f32 %v9559, %v9835
      %v9868 = vadd.f32 %v9560, %v9836
      %v9869 = vadd.f32 %v9561, %v9837
      %v9870 = vadd.f32 %v9562, %v9838
      %v9871 = vadd.f32 %v9563, %v9839
      %v9872 = vadd.f32 %v9564, %v9840
      %v9873 = vadd.f32 %v9565, %v9841
      %v9874 = vadd.f32 %v9566, %v9842
      %v9875 = vadd.f32 %v9567, %v9843
      %v9876 = vadd.f32 %v9568, %v9844
      %v9877 = vadd.f32 %v9569, %v9845
      %v9878 = vadd.f32 %v9570, %v9846
      %v9879 = vrot.slane %v7794, 2
      %v9880 = vrot.slane %v7795, 2
      %v9881 = vsel %vm4533, %v9879, %v9880
      %v9882 = vrot.slane %v7796, 2
      %v9883 = vsel %vm4533, %v9880, %v9882
      %v9884 = vrot.slane %v7797, 2
      %v9885 = vrot.slane %v7798, 2
      %v9886 = vsel %vm4533, %v9884, %v9885
      %v9887 = vrot.slane %v7799, 2
      %v9888 = vsel %vm4533, %v9885, %v9887
      %v9889 = vrot.slane %v7800, 2
      %v9890 = vrot.slane %v7801, 2
      %v9891 = vsel %vm4533, %v9889, %v9890
      %v9892 = vrot.slane %v7802, 2
      %v9893 = vsel %vm4533, %v9890, %v9892
      %v9894 = vrot.slane %v7803, 2
      %v9895 = vrot.slane %v7804, 2
      %v9896 = vsel %vm4533, %v9894, %v9895
      %v9897 = vrot.slane %v7805, 2
      %v9898 = vsel %vm4533, %v9895, %v9897
      %v9899 = vrot.slane %v7806, 2
      %v9900 = vrot.slane %v7807, 2
      %v9901 = vsel %vm4533, %v9899, %v9900
      %v9902 = vrot.slane %v7808, 2
      %v9903 = vsel %vm4533, %v9900, %v9902
      %v9904 = vrot.slane %v7809, 2
      %v9905 = vrot.slane %v7810, 2
      %v9906 = vsel %vm4533, %v9904, %v9905
      %v9907 = vrot.slane %v7811, 2
      %v9908 = vsel %vm4533, %v9905, %v9907
      %v9909 = vrot.slane %v7812, 2
      %v9910 = vrot.slane %v7813, 2
      %v9911 = vsel %vm4533, %v9909, %v9910
      %v9912 = vrot.slane %v7814, 2
      %v9913 = vsel %vm4533, %v9910, %v9912
      %v9914 = vrot.slane %v7815, 2
      %v9915 = vrot.slane %v7816, 2
      %v9916 = vsel %vm4533, %v9914, %v9915
      %v9917 = vrot.slane %v7817, 2
      %v9918 = vsel %vm4533, %v9915, %v9917
      %v9919 = vrot.slane %v7818, 2
      %v9920 = vrot.slane %v7819, 2
      %v9921 = vsel %vm4533, %v9919, %v9920
      %v9922 = vrot.slane %v7820, 2
      %v9923 = vsel %vm4533, %v9920, %v9922
      %v9924 = vrot.slane %v7821, 2
      %v9925 = vrot.slane %v7822, 2
      %v9926 = vsel %vm4533, %v9924, %v9925
      %v9927 = vrot.slane %v7823, 2
      %v9928 = vsel %vm4533, %v9925, %v9927
      %v9929 = vrot.slane %v7824, 2
      %v9930 = vrot.slane %v7825, 2
      %v9931 = vsel %vm4533, %v9929, %v9930
      %v9932 = vrot.slane %v7826, 2
      %v9933 = vsel %vm4533, %v9930, %v9932
      %v9934 = vrot.slane %v7827, 2
      %v9935 = vrot.slane %v7828, 2
      %v9936 = vsel %vm4533, %v9934, %v9935
      %v9937 = vrot.slane %v7829, 2
      %v9938 = vsel %vm4533, %v9935, %v9937
      %v9939 = vrot.slane %v7830, 2
      %v9940 = vrot.slane %v7831, 2
      %v9941 = vsel %vm4533, %v9939, %v9940
      %v9942 = vrot.slane %v7832, 2
      %v9943 = vsel %vm4533, %v9940, %v9942
      %v9944 = vrot.slane %v7833, 2
      %v9945 = vrot.slane %v7834, 2
      %v9946 = vsel %vm4533, %v9944, %v9945
      %v9947 = vrot.slane %v7835, 2
      %v9948 = vsel %vm4533, %v9945, %v9947
      %v9949 = vrot.slane %v7836, 2
      %v9950 = vrot.slane %v7837, 2
      %v9951 = vsel %vm4533, %v9949, %v9950
      %v9952 = vrot.slane %v7838, 2
      %v9953 = vsel %vm4533, %v9950, %v9952
      %v9954 = vrot.slane %v7839, 2
      %v9955 = vrot.slane %v7840, 2
      %v9956 = vsel %vm4533, %v9954, %v9955
      %v9957 = vrot.slane %v7841, 2
      %v9958 = vsel %vm4533, %v9955, %v9957
      %s9991 = scalar_lea.vmem %s4, 240
      %v9992 = vld [vmem:[%s9991] sm:$0xff]
      %v9993 = vld [vmem:[%s9991 + $0x8] sm:$0xff]
      %v9994 = vld [vmem:[%s9991 + $0x10] sm:$0xff]
      %v9995 = vld [vmem:[%s9991 + $0x18] sm:$0xff]
      %v9996 = vld [vmem:[%s9991 + $0x20] sm:$0xf]
      %v9998 = vsel %vm6698, %v9996, 0
      %10000 = vmatprep.subr.mxu0 0.0
      %10001 = vmatpush1.msra.mxu0 0.0
      %10002 = vmatprep.subr.mxu0 0.0
      %10003 = vmatpush1.msra.mxu0 0.0
      %10004 = vmatprep.subr.mxu0 0.0
      %10005 = vmatpush1.msra.mxu0 0.0
      %10006 = vmatprep.subr.mxu0 0.0
      %10007 = vmatpush1.msra.mxu0 0.0
      %10008 = vmatprep.subr.mxu0 0.0
      %10009 = vmatpush1.msra.mxu0 0.0
      %10010 = vmatprep.subr.mxu0 0.0
      %10011 = vmatpush1.msra.mxu0 0.0
      %10012 = vmatprep.subr.mxu0 0.0
      %10013 = vmatpush1.msra.mxu0 0.0
      %10014 = vmatprep.subr.mxu0 0.0
      %10015 = vmatpush1.msra.mxu0 0.0
      %10016 = vmatprep.subr.mxu0 0.0
      %10017 = vmatpush1.msra.mxu0 0.0
      %10018 = vmatprep.subr.mxu0 0.0
      %10019 = vmatpush1.msra.mxu0 0.0
      %10020 = vmatprep.subr.mxu0 0.0
      %10021 = vmatpush1.msra.mxu0 0.0
      %10022 = vmatprep.subr.mxu0 0.0
      %10023 = vmatpush1.msra.mxu0 %v9998
      %10024 = vmatprep.subr.mxu0 0.0
      %10025 = vmatpush1.msra.mxu0 %v9995
      %10026 = vmatprep.subr.mxu0 0.0
      %10027 = vmatpush1.msra.mxu0 %v9994
      %10028 = vmatprep.subr.mxu0 0.0
      %10029 = vmatpush1.msra.mxu0 %v9993
      %10030 = vmatprep.subr.mxu0 0.0
      %10031 = vmatpush1.msra.mxu0 %v9992
      %10032 = vmatprep.subr.mxu0 0.0
      %10033 = vmatpush2.msra.mxu0 0.0
      %10034 = vmatprep.subr.mxu0 0.0
      %10035 = vmatpush2.msra.mxu0 0.0
      %10036 = vmatprep.subr.mxu0 0.0
      %10037 = vmatpush2.msra.mxu0 0.0
      %10038 = vmatprep.subr.mxu0 0.0
      %10039 = vmatpush2.msra.mxu0 0.0
      %10040 = vmatprep.subr.mxu0 0.0
      %10041 = vmatpush2.msra.mxu0 0.0
      %10042 = vmatprep.subr.mxu0 0.0
      %10043 = vmatpush2.msra.mxu0 0.0
      %10044 = vmatprep.subr.mxu0 0.0
      %10045 = vmatpush2.msra.mxu0 0.0
      %10046 = vmatprep.subr.mxu0 0.0
      %10047 = vmatpush2.msra.mxu0 0.0
      %10048 = vmatprep.subr.mxu0 0.0
      %10049 = vmatpush2.msra.mxu0 0.0
      %10050 = vmatprep.subr.mxu0 0.0
      %10051 = vmatpush2.msra.mxu0 0.0
      %10052 = vmatprep.subr.mxu0 0.0
      %10053 = vmatpush2.msra.mxu0 0.0
      %10054 = vmatprep.subr.mxu0 0.0
      %10055 = vmatpush2.msra.mxu0 0.0
      %10056 = vmatprep.subr.mxu0 0.0
      %10057 = vmatpush2.msra.mxu0 0.0
      %10058 = vmatprep.subr.mxu0 0.0
      %10059 = vmatpush2.msra.mxu0 0.0
      %10060 = vmatprep.subr.mxu0 0.0
      %10061 = vmatpush2.msra.mxu0 0.0
      %10062 = vmatprep.subr.mxu0 0.0
      %10063 = vmatpush2.msra.mxu0 0.0
      %10064 = vmatprep.mubr.f32.mxu0 0.0
      %10065 = vmatmul.mubr.f32.gmra.mxu0 %v7854
      %v10066 = vpop.f32.mrf.mxu0
      %v10067 = vadd.f32 0.0, %v10066
      %v10068 = vpop.f32.mrf.mxu0
      %10069 = vmatprep.mubr.f32.mxu0 0.0
      %10070 = vmatmul.mubr.f32.gmra.mxu0 %v7857
      %v10071 = vpop.f32.mrf.mxu0
      %v10072 = vadd.f32 0.0, %v10071
      %v10073 = vpop.f32.mrf.mxu0
      %10074 = vmatprep.mubr.f32.mxu0 0.0
      %10075 = vmatmul.mubr.f32.gmra.mxu0 %v7860
      %v10076 = vpop.f32.mrf.mxu0
      %v10077 = vadd.f32 0.0, %v10076
      %v10078 = vpop.f32.mrf.mxu0
      %10079 = vmatprep.mubr.f32.mxu0 0.0
      %10080 = vmatmul.mubr.f32.gmra.mxu0 %v7863
      %v10081 = vpop.f32.mrf.mxu0
      %v10082 = vadd.f32 0.0, %v10081
      %v10083 = vpop.f32.mrf.mxu0
      %10084 = vmatprep.mubr.f32.mxu0 0.0
      %10085 = vmatmul.mubr.f32.gmra.mxu0 %v7866
      %v10086 = vpop.f32.mrf.mxu0
      %v10087 = vadd.f32 0.0, %v10086
      %v10088 = vpop.f32.mrf.mxu0
      %10089 = vmatprep.mubr.f32.mxu0 0.0
      %10090 = vmatmul.mubr.f32.gmra.mxu0 %v7869
      %v10091 = vpop.f32.mrf.mxu0
      %v10092 = vadd.f32 0.0, %v10091
      %v10093 = vpop.f32.mrf.mxu0
      %10094 = vmatprep.mubr.f32.mxu0 0.0
      %10095 = vmatmul.mubr.f32.gmra.mxu0 %v7872
      %v10096 = vpop.f32.mrf.mxu0
      %v10097 = vadd.f32 0.0, %v10096
      %v10098 = vpop.f32.mrf.mxu0
      %10099 = vmatprep.mubr.f32.mxu0 0.0
      %10100 = vmatmul.mubr.f32.gmra.mxu0 %v7875
      %v10101 = vpop.f32.mrf.mxu0
      %v10102 = vadd.f32 0.0, %v10101
      %v10103 = vpop.f32.mrf.mxu0
      %10104 = vmatprep.mubr.f32.mxu0 0.0
      %10105 = vmatmul.mubr.f32.gmra.mxu0 %v7878
      %v10106 = vpop.f32.mrf.mxu0
      %v10107 = vadd.f32 0.0, %v10106
      %v10108 = vpop.f32.mrf.mxu0
      %10109 = vmatprep.mubr.f32.mxu0 0.0
      %10110 = vmatmul.mubr.f32.gmra.mxu0 %v7881
      %v10111 = vpop.f32.mrf.mxu0
      %v10112 = vadd.f32 0.0, %v10111
      %v10113 = vpop.f32.mrf.mxu0
      %10114 = vmatprep.mubr.f32.mxu0 0.0
      %10115 = vmatmul.mubr.f32.gmra.mxu0 %v7884
      %v10116 = vpop.f32.mrf.mxu0
      %v10117 = vadd.f32 0.0, %v10116
      %v10118 = vpop.f32.mrf.mxu0
      %10119 = vmatprep.mubr.f32.mxu0 0.0
      %10120 = vmatmul.mubr.f32.gmra.mxu0 %v7887
      %v10121 = vpop.f32.mrf.mxu0
      %v10122 = vadd.f32 0.0, %v10121
      %v10123 = vpop.f32.mrf.mxu0
      %10124 = vmatprep.mubr.f32.mxu0 0.0
      %10125 = vmatmul.mubr.f32.gmra.mxu0 %v7890
      %v10126 = vpop.f32.mrf.mxu0
      %v10127 = vadd.f32 0.0, %v10126
      %v10128 = vpop.f32.mrf.mxu0
      %10129 = vmatprep.mubr.f32.mxu0 0.0
      %10130 = vmatmul.mubr.f32.gmra.mxu0 %v7893
      %v10131 = vpop.f32.mrf.mxu0
      %v10132 = vadd.f32 0.0, %v10131
      %v10133 = vpop.f32.mrf.mxu0
      %10134 = vmatprep.mubr.f32.mxu0 0.0
      %10135 = vmatmul.mubr.f32.gmra.mxu0 %v7896
      %v10136 = vpop.f32.mrf.mxu0
      %v10137 = vadd.f32 0.0, %v10136
      %v10138 = vpop.f32.mrf.mxu0
      %10139 = vmatprep.mubr.f32.mxu0 0.0
      %10140 = vmatmul.mubr.f32.gmra.mxu0 %v7899
      %v10141 = vpop.f32.mrf.mxu0
      %v10142 = vadd.f32 0.0, %v10141
      %v10143 = vpop.f32.mrf.mxu0
      %10144 = vmatprep.mubr.f32.mxu0 0.0
      %10145 = vmatmul.mubr.f32.gmra.mxu0 %v7902
      %v10146 = vpop.f32.mrf.mxu0
      %v10147 = vadd.f32 0.0, %v10146
      %v10148 = vpop.f32.mrf.mxu0
      %10149 = vmatprep.mubr.f32.mxu0 0.0
      %10150 = vmatmul.mubr.f32.gmra.mxu0 %v7905
      %v10151 = vpop.f32.mrf.mxu0
      %v10152 = vadd.f32 0.0, %v10151
      %v10153 = vpop.f32.mrf.mxu0
      %10154 = vmatprep.mubr.f32.mxu0 0.0
      %10155 = vmatmul.mubr.f32.gmra.mxu0 %v7908
      %v10156 = vpop.f32.mrf.mxu0
      %v10157 = vadd.f32 0.0, %v10156
      %v10158 = vpop.f32.mrf.mxu0
      %10159 = vmatprep.mubr.f32.mxu0 0.0
      %10160 = vmatmul.mubr.f32.gmra.mxu0 %v7911
      %v10161 = vpop.f32.mrf.mxu0
      %v10162 = vadd.f32 0.0, %v10161
      %v10163 = vpop.f32.mrf.mxu0
      %10164 = vmatprep.mubr.f32.mxu0 0.0
      %10165 = vmatmul.mubr.f32.gmra.mxu0 %v7914
      %v10166 = vpop.f32.mrf.mxu0
      %v10167 = vadd.f32 0.0, %v10166
      %v10168 = vpop.f32.mrf.mxu0
      %10169 = vmatprep.mubr.f32.mxu0 0.0
      %10170 = vmatmul.mubr.f32.gmra.mxu0 %v7917
      %v10171 = vpop.f32.mrf.mxu0
      %v10172 = vadd.f32 0.0, %v10171
      %v10173 = vpop.f32.mrf.mxu0
      %10174 = vmatprep.mubr.f32.mxu0 0.0
      %10175 = vmatmul.mubr.f32.gmra.mxu0 %v7920
      %v10176 = vpop.f32.mrf.mxu0
      %v10177 = vadd.f32 0.0, %v10176
      %v10178 = vpop.f32.mrf.mxu0
      %10179 = vmatprep.mubr.f32.mxu0 0.0
      %10180 = vmatmul.mubr.f32.gmra.mxu0 %v7923
      %v10181 = vpop.f32.mrf.mxu0
      %v10182 = vadd.f32 0.0, %v10181
      %v10183 = vpop.f32.mrf.mxu0
      %10184 = vmatprep.mubr.f32.mxu0 0.0
      %10185 = vmatmul.mubr.f32.gmra.mxu0 %v7926
      %v10186 = vpop.f32.mrf.mxu0
      %v10187 = vadd.f32 0.0, %v10186
      %v10188 = vpop.f32.mrf.mxu0
      %10189 = vmatprep.mubr.f32.mxu0 0.0
      %10190 = vmatmul.mubr.f32.gmra.mxu0 %v7929
      %v10191 = vpop.f32.mrf.mxu0
      %v10192 = vadd.f32 0.0, %v10191
      %v10193 = vpop.f32.mrf.mxu0
      %10194 = vmatprep.mubr.f32.mxu0 0.0
      %10195 = vmatmul.mubr.f32.gmra.mxu0 %v7932
      %v10196 = vpop.f32.mrf.mxu0
      %v10197 = vadd.f32 0.0, %v10196
      %v10198 = vpop.f32.mrf.mxu0
      %10199 = vmatprep.mubr.f32.mxu0 0.0
      %10200 = vmatmul.mubr.f32.gmra.mxu0 %v7935
      %v10201 = vpop.f32.mrf.mxu0
      %v10202 = vadd.f32 0.0, %v10201
      %v10203 = vpop.f32.mrf.mxu0
      %10204 = vmatprep.mubr.f32.mxu0 0.0
      %10205 = vmatmul.mubr.f32.gmra.mxu0 %v7938
      %v10206 = vpop.f32.mrf.mxu0
      %v10207 = vadd.f32 0.0, %v10206
      %v10208 = vpop.f32.mrf.mxu0
      %10209 = vmatprep.mubr.f32.mxu0 0.0
      %10210 = vmatmul.mubr.f32.gmra.mxu0 %v7941
      %v10211 = vpop.f32.mrf.mxu0
      %v10212 = vadd.f32 0.0, %v10211
      %v10213 = vpop.f32.mrf.mxu0
      %10214 = vmatprep.mubr.f32.mxu0 0.0
      %10215 = vmatmul.mubr.f32.gmra.mxu0 %v7944
      %v10216 = vpop.f32.mrf.mxu0
      %v10217 = vadd.f32 0.0, %v10216
      %v10218 = vpop.f32.mrf.mxu0
      %10219 = vmatprep.mubr.f32.mxu0 0.0
      %10220 = vmatmul.mubr.f32.gmra.mxu0 %v7947
      %v10221 = vpop.f32.mrf.mxu0
      %v10222 = vadd.f32 0.0, %v10221
      %v10223 = vpop.f32.mrf.mxu0
      %10224 = vdwg.mxu0
      %v10225 = vmul.f32 %v10067, %v9881
      %v10226 = vmul.f32 %v10072, %v9883
      %v10227 = vmul.f32 %v10077, %v9886
      %v10228 = vmul.f32 %v10082, %v9888
      %v10229 = vmul.f32 %v10087, %v9891
      %v10230 = vmul.f32 %v10092, %v9893
      %v10231 = vmul.f32 %v10097, %v9896
      %v10232 = vmul.f32 %v10102, %v9898
      %v10233 = vmul.f32 %v10107, %v9901
      %v10234 = vmul.f32 %v10112, %v9903
      %v10235 = vmul.f32 %v10117, %v9906
      %v10236 = vmul.f32 %v10122, %v9908
      %v10237 = vmul.f32 %v10127, %v9911
      %v10238 = vmul.f32 %v10132, %v9913
      %v10239 = vmul.f32 %v10137, %v9916
      %v10240 = vmul.f32 %v10142, %v9918
      %v10241 = vmul.f32 %v10147, %v9921
      %v10242 = vmul.f32 %v10152, %v9923
      %v10243 = vmul.f32 %v10157, %v9926
      %v10244 = vmul.f32 %v10162, %v9928
      %v10245 = vmul.f32 %v10167, %v9931
      %v10246 = vmul.f32 %v10172, %v9933
      %v10247 = vmul.f32 %v10177, %v9936
      %v10248 = vmul.f32 %v10182, %v9938
      %v10249 = vmul.f32 %v10187, %v9941
      %v10250 = vmul.f32 %v10192, %v9943
      %v10251 = vmul.f32 %v10197, %v9946
      %v10252 = vmul.f32 %v10202, %v9948
      %v10253 = vmul.f32 %v10207, %v9951
      %v10254 = vmul.f32 %v10212, %v9953
      %v10255 = vmul.f32 %v10217, %v9956
      %v10256 = vmul.f32 %v10222, %v9958
      %v10257 = vadd.f32 %v9847, %v10225
      %v10258 = vadd.f32 %v9848, %v10226
      %v10259 = vadd.f32 %v9849, %v10227
      %v10260 = vadd.f32 %v9850, %v10228
      %v10261 = vadd.f32 %v9851, %v10229
      %v10262 = vadd.f32 %v9852, %v10230
      %v10263 = vadd.f32 %v9853, %v10231
      %v10264 = vadd.f32 %v9854, %v10232
      %v10265 = vadd.f32 %v9855, %v10233
      %v10266 = vadd.f32 %v9856, %v10234
      %v10267 = vadd.f32 %v9857, %v10235
      %v10268 = vadd.f32 %v9858, %v10236
      %v10269 = vadd.f32 %v9859, %v10237
      %v10270 = vadd.f32 %v9860, %v10238
      %v10271 = vadd.f32 %v9861, %v10239
      %v10272 = vadd.f32 %v9862, %v10240
      %v10273 = vadd.f32 %v9863, %v10241
      %v10274 = vadd.f32 %v9864, %v10242
      %v10275 = vadd.f32 %v9865, %v10243
      %v10276 = vadd.f32 %v9866, %v10244
      %v10277 = vadd.f32 %v9867, %v10245
      %v10278 = vadd.f32 %v9868, %v10246
      %v10279 = vadd.f32 %v9869, %v10247
      %v10280 = vadd.f32 %v9870, %v10248
      %v10281 = vadd.f32 %v9871, %v10249
      %v10282 = vadd.f32 %v9872, %v10250
      %v10283 = vadd.f32 %v9873, %v10251
      %v10284 = vadd.f32 %v9874, %v10252
      %v10285 = vadd.f32 %v9875, %v10253
      %v10286 = vadd.f32 %v9876, %v10254
      %v10287 = vadd.f32 %v9877, %v10255
      %v10288 = vadd.f32 %v9878, %v10256
      %v10289 = vrot.slane %v7842, 2
      %v10290 = vrot.slane %v7843, 2
      %v10291 = vsel %vm4533, %v10289, %v10290
      %v10292 = vrot.slane %v7844, 2
      %v10293 = vsel %vm4533, %v10290, %v10292
      %s10296 = scalar_lea.vmem %s4, 280
      %v10297 = vld [vmem:[%s10296] sm:$0xff]
      %v10298 = vld [vmem:[%s10296 + $0x8] sm:$0xff]
      %v10299 = vld [vmem:[%s10296 + $0x10] sm:$0xff]
      %v10300 = vld [vmem:[%s10296 + $0x18] sm:$0xff]
      %v10301 = vld [vmem:[%s10296 + $0x20] sm:$0xf]
      %v10303 = vsel %vm6698, %v10301, 0
      %10305 = vmatprep.subr.mxu0 0.0
      %10306 = vmatpush1.msra.mxu0 0.0
      %10307 = vmatprep.subr.mxu0 0.0
      %10308 = vmatpush1.msra.mxu0 0.0
      %10309 = vmatprep.subr.mxu0 0.0
      %10310 = vmatpush1.msra.mxu0 0.0
      %10311 = vmatprep.subr.mxu0 0.0
      %10312 = vmatpush1.msra.mxu0 0.0
      %10313 = vmatprep.subr.mxu0 0.0
      %10314 = vmatpush1.msra.mxu0 0.0
      %10315 = vmatprep.subr.mxu0 0.0
      %10316 = vmatpush1.msra.mxu0 0.0
      %10317 = vmatprep.subr.mxu0 0.0
      %10318 = vmatpush1.msra.mxu0 0.0
      %10319 = vmatprep.subr.mxu0 0.0
      %10320 = vmatpush1.msra.mxu0 0.0
      %10321 = vmatprep.subr.mxu0 0.0
      %10322 = vmatpush1.msra.mxu0 0.0
      %10323 = vmatprep.subr.mxu0 0.0
      %10324 = vmatpush1.msra.mxu0 0.0
      %10325 = vmatprep.subr.mxu0 0.0
      %10326 = vmatpush1.msra.mxu0 0.0
      %10327 = vmatprep.subr.mxu0 0.0
      %10328 = vmatpush1.msra.mxu0 %v10303
      %10329 = vmatprep.subr.mxu0 0.0
      %10330 = vmatpush1.msra.mxu0 %v10300
      %10331 = vmatprep.subr.mxu0 0.0
      %10332 = vmatpush1.msra.mxu0 %v10299
      %10333 = vmatprep.subr.mxu0 0.0
      %10334 = vmatpush1.msra.mxu0 %v10298
      %10335 = vmatprep.subr.mxu0 0.0
      %10336 = vmatpush1.msra.mxu0 %v10297
      %10337 = vmatprep.subr.mxu0 0.0
      %10338 = vmatpush2.msra.mxu0 0.0
      %10339 = vmatprep.subr.mxu0 0.0
      %10340 = vmatpush2.msra.mxu0 0.0
      %10341 = vmatprep.subr.mxu0 0.0
      %10342 = vmatpush2.msra.mxu0 0.0
      %10343 = vmatprep.subr.mxu0 0.0
      %10344 = vmatpush2.msra.mxu0 0.0
      %10345 = vmatprep.subr.mxu0 0.0
      %10346 = vmatpush2.msra.mxu0 0.0
      %10347 = vmatprep.subr.mxu0 0.0
      %10348 = vmatpush2.msra.mxu0 0.0
      %10349 = vmatprep.subr.mxu0 0.0
      %10350 = vmatpush2.msra.mxu0 0.0
      %10351 = vmatprep.subr.mxu0 0.0
      %10352 = vmatpush2.msra.mxu0 0.0
      %10353 = vmatprep.subr.mxu0 0.0
      %10354 = vmatpush2.msra.mxu0 0.0
      %10355 = vmatprep.subr.mxu0 0.0
      %10356 = vmatpush2.msra.mxu0 0.0
      %10357 = vmatprep.subr.mxu0 0.0
      %10358 = vmatpush2.msra.mxu0 0.0
      %10359 = vmatprep.subr.mxu0 0.0
      %10360 = vmatpush2.msra.mxu0 0.0
      %10361 = vmatprep.subr.mxu0 0.0
      %10362 = vmatpush2.msra.mxu0 0.0
      %10363 = vmatprep.subr.mxu0 0.0
      %10364 = vmatpush2.msra.mxu0 0.0
      %10365 = vmatprep.subr.mxu0 0.0
      %10366 = vmatpush2.msra.mxu0 0.0
      %10367 = vmatprep.subr.mxu0 0.0
      %10368 = vmatpush2.msra.mxu0 0.0
      %10369 = vmatprep.mubr.f32.mxu0 0.0
      %10370 = vmatmul.mubr.f32.gmra.mxu0 %v7854
      %v10371 = vpop.f32.mrf.mxu0
      %v10372 = vadd.f32 0.0, %v10371
      %v10373 = vpop.f32.mrf.mxu0
      %10374 = vmatprep.mubr.f32.mxu0 0.0
      %10375 = vmatmul.mubr.f32.gmra.mxu0 %v7857
      %v10376 = vpop.f32.mrf.mxu0
      %v10377 = vadd.f32 0.0, %v10376
      %v10378 = vpop.f32.mrf.mxu0
      %10379 = vmatprep.mubr.f32.mxu0 0.0
      %10380 = vmatmul.mubr.f32.gmra.mxu0 %v7860
      %v10381 = vpop.f32.mrf.mxu0
      %v10382 = vadd.f32 0.0, %v10381
      %v10383 = vpop.f32.mrf.mxu0
      %10384 = vmatprep.mubr.f32.mxu0 0.0
      %10385 = vmatmul.mubr.f32.gmra.mxu0 %v7863
      %v10386 = vpop.f32.mrf.mxu0
      %v10387 = vadd.f32 0.0, %v10386
      %v10388 = vpop.f32.mrf.mxu0
      %10389 = vmatprep.mubr.f32.mxu0 0.0
      %10390 = vmatmul.mubr.f32.gmra.mxu0 %v7866
      %v10391 = vpop.f32.mrf.mxu0
      %v10392 = vadd.f32 0.0, %v10391
      %v10393 = vpop.f32.mrf.mxu0
      %10394 = vmatprep.mubr.f32.mxu0 0.0
      %10395 = vmatmul.mubr.f32.gmra.mxu0 %v7869
      %v10396 = vpop.f32.mrf.mxu0
      %v10397 = vadd.f32 0.0, %v10396
      %v10398 = vpop.f32.mrf.mxu0
      %10399 = vmatprep.mubr.f32.mxu0 0.0
      %10400 = vmatmul.mubr.f32.gmra.mxu0 %v7872
      %v10401 = vpop.f32.mrf.mxu0
      %v10402 = vadd.f32 0.0, %v10401
      %v10403 = vpop.f32.mrf.mxu0
      %10404 = vmatprep.mubr.f32.mxu0 0.0
      %10405 = vmatmul.mubr.f32.gmra.mxu0 %v7875
      %v10406 = vpop.f32.mrf.mxu0
      %v10407 = vadd.f32 0.0, %v10406
      %v10408 = vpop.f32.mrf.mxu0
      %10409 = vmatprep.mubr.f32.mxu0 0.0
      %10410 = vmatmul.mubr.f32.gmra.mxu0 %v7878
      %v10411 = vpop.f32.mrf.mxu0
      %v10412 = vadd.f32 0.0, %v10411
      %v10413 = vpop.f32.mrf.mxu0
      %10414 = vmatprep.mubr.f32.mxu0 0.0
      %10415 = vmatmul.mubr.f32.gmra.mxu0 %v7881
      %v10416 = vpop.f32.mrf.mxu0
      %v10417 = vadd.f32 0.0, %v10416
      %v10418 = vpop.f32.mrf.mxu0
      %10419 = vmatprep.mubr.f32.mxu0 0.0
      %10420 = vmatmul.mubr.f32.gmra.mxu0 %v7884
      %v10421 = vpop.f32.mrf.mxu0
      %v10422 = vadd.f32 0.0, %v10421
      %v10423 = vpop.f32.mrf.mxu0
      %10424 = vmatprep.mubr.f32.mxu0 0.0
      %10425 = vmatmul.mubr.f32.gmra.mxu0 %v7887
      %v10426 = vpop.f32.mrf.mxu0
      %v10427 = vadd.f32 0.0, %v10426
      %v10428 = vpop.f32.mrf.mxu0
      %10429 = vmatprep.mubr.f32.mxu0 0.0
      %10430 = vmatmul.mubr.f32.gmra.mxu0 %v7890
      %v10431 = vpop.f32.mrf.mxu0
      %v10432 = vadd.f32 0.0, %v10431
      %v10433 = vpop.f32.mrf.mxu0
      %10434 = vmatprep.mubr.f32.mxu0 0.0
      %10435 = vmatmul.mubr.f32.gmra.mxu0 %v7893
      %v10436 = vpop.f32.mrf.mxu0
      %v10437 = vadd.f32 0.0, %v10436
      %v10438 = vpop.f32.mrf.mxu0
      %10439 = vmatprep.mubr.f32.mxu0 0.0
      %10440 = vmatmul.mubr.f32.gmra.mxu0 %v7896
      %v10441 = vpop.f32.mrf.mxu0
      %v10442 = vadd.f32 0.0, %v10441
      %v10443 = vpop.f32.mrf.mxu0
      %10444 = vmatprep.mubr.f32.mxu0 0.0
      %10445 = vmatmul.mubr.f32.gmra.mxu0 %v7899
      %v10446 = vpop.f32.mrf.mxu0
      %v10447 = vadd.f32 0.0, %v10446
      %v10448 = vpop.f32.mrf.mxu0
      %10449 = vmatprep.mubr.f32.mxu0 0.0
      %10450 = vmatmul.mubr.f32.gmra.mxu0 %v7902
      %v10451 = vpop.f32.mrf.mxu0
      %v10452 = vadd.f32 0.0, %v10451
      %v10453 = vpop.f32.mrf.mxu0
      %10454 = vmatprep.mubr.f32.mxu0 0.0
      %10455 = vmatmul.mubr.f32.gmra.mxu0 %v7905
      %v10456 = vpop.f32.mrf.mxu0
      %v10457 = vadd.f32 0.0, %v10456
      %v10458 = vpop.f32.mrf.mxu0
      %10459 = vmatprep.mubr.f32.mxu0 0.0
      %10460 = vmatmul.mubr.f32.gmra.mxu0 %v7908
      %v10461 = vpop.f32.mrf.mxu0
      %v10462 = vadd.f32 0.0, %v10461
      %v10463 = vpop.f32.mrf.mxu0
      %10464 = vmatprep.mubr.f32.mxu0 0.0
      %10465 = vmatmul.mubr.f32.gmra.mxu0 %v7911
      %v10466 = vpop.f32.mrf.mxu0
      %v10467 = vadd.f32 0.0, %v10466
      %v10468 = vpop.f32.mrf.mxu0
      %10469 = vmatprep.mubr.f32.mxu0 0.0
      %10470 = vmatmul.mubr.f32.gmra.mxu0 %v7914
      %v10471 = vpop.f32.mrf.mxu0
      %v10472 = vadd.f32 0.0, %v10471
      %v10473 = vpop.f32.mrf.mxu0
      %10474 = vmatprep.mubr.f32.mxu0 0.0
      %10475 = vmatmul.mubr.f32.gmra.mxu0 %v7917
      %v10476 = vpop.f32.mrf.mxu0
      %v10477 = vadd.f32 0.0, %v10476
      %v10478 = vpop.f32.mrf.mxu0
      %10479 = vmatprep.mubr.f32.mxu0 0.0
      %10480 = vmatmul.mubr.f32.gmra.mxu0 %v7920
      %v10481 = vpop.f32.mrf.mxu0
      %v10482 = vadd.f32 0.0, %v10481
      %v10483 = vpop.f32.mrf.mxu0
      %10484 = vmatprep.mubr.f32.mxu0 0.0
      %10485 = vmatmul.mubr.f32.gmra.mxu0 %v7923
      %v10486 = vpop.f32.mrf.mxu0
      %v10487 = vadd.f32 0.0, %v10486
      %v10488 = vpop.f32.mrf.mxu0
      %10489 = vmatprep.mubr.f32.mxu0 0.0
      %10490 = vmatmul.mubr.f32.gmra.mxu0 %v7926
      %v10491 = vpop.f32.mrf.mxu0
      %v10492 = vadd.f32 0.0, %v10491
      %v10493 = vpop.f32.mrf.mxu0
      %10494 = vmatprep.mubr.f32.mxu0 0.0
      %10495 = vmatmul.mubr.f32.gmra.mxu0 %v7929
      %v10496 = vpop.f32.mrf.mxu0
      %v10497 = vadd.f32 0.0, %v10496
      %v10498 = vpop.f32.mrf.mxu0
      %10499 = vmatprep.mubr.f32.mxu0 0.0
      %10500 = vmatmul.mubr.f32.gmra.mxu0 %v7932
      %v10501 = vpop.f32.mrf.mxu0
      %v10502 = vadd.f32 0.0, %v10501
      %v10503 = vpop.f32.mrf.mxu0
      %10504 = vmatprep.mubr.f32.mxu0 0.0
      %10505 = vmatmul.mubr.f32.gmra.mxu0 %v7935
      %v10506 = vpop.f32.mrf.mxu0
      %v10507 = vadd.f32 0.0, %v10506
      %v10508 = vpop.f32.mrf.mxu0
      %10509 = vmatprep.mubr.f32.mxu0 0.0
      %10510 = vmatmul.mubr.f32.gmra.mxu0 %v7938
      %v10511 = vpop.f32.mrf.mxu0
      %v10512 = vadd.f32 0.0, %v10511
      %v10513 = vpop.f32.mrf.mxu0
      %10514 = vmatprep.mubr.f32.mxu0 0.0
      %10515 = vmatmul.mubr.f32.gmra.mxu0 %v7941
      %v10516 = vpop.f32.mrf.mxu0
      %v10517 = vadd.f32 0.0, %v10516
      %v10518 = vpop.f32.mrf.mxu0
      %10519 = vmatprep.mubr.f32.mxu0 0.0
      %10520 = vmatmul.mubr.f32.gmra.mxu0 %v7944
      %v10521 = vpop.f32.mrf.mxu0
      %v10522 = vadd.f32 0.0, %v10521
      %v10523 = vpop.f32.mrf.mxu0
      %10524 = vmatprep.mubr.f32.mxu0 0.0
      %10525 = vmatmul.mubr.f32.gmra.mxu0 %v7947
      %v10526 = vpop.f32.mrf.mxu0
      %v10527 = vadd.f32 0.0, %v10526
      %v10528 = vpop.f32.mrf.mxu0
      %10529 = vdwg.mxu0
      %v10530 = vmul.f32 %v10372, %v9886
      %v10531 = vmul.f32 %v10377, %v9888
      %v10532 = vmul.f32 %v10382, %v9891
      %v10533 = vmul.f32 %v10387, %v9893
      %v10534 = vmul.f32 %v10392, %v9896
      %v10535 = vmul.f32 %v10397, %v9898
      %v10536 = vmul.f32 %v10402, %v9901
      %v10537 = vmul.f32 %v10407, %v9903
      %v10538 = vmul.f32 %v10412, %v9906
      %v10539 = vmul.f32 %v10417, %v9908
      %v10540 = vmul.f32 %v10422, %v9911
      %v10541 = vmul.f32 %v10427, %v9913
      %v10542 = vmul.f32 %v10432, %v9916
      %v10543 = vmul.f32 %v10437, %v9918
      %v10544 = vmul.f32 %v10442, %v9921
      %v10545 = vmul.f32 %v10447, %v9923
      %v10546 = vmul.f32 %v10452, %v9926
      %v10547 = vmul.f32 %v10457, %v9928
      %v10548 = vmul.f32 %v10462, %v9931
      %v10549 = vmul.f32 %v10467, %v9933
      %v10550 = vmul.f32 %v10472, %v9936
      %v10551 = vmul.f32 %v10477, %v9938
      %v10552 = vmul.f32 %v10482, %v9941
      %v10553 = vmul.f32 %v10487, %v9943
      %v10554 = vmul.f32 %v10492, %v9946
      %v10555 = vmul.f32 %v10497, %v9948
      %v10556 = vmul.f32 %v10502, %v9951
      %v10557 = vmul.f32 %v10507, %v9953
      %v10558 = vmul.f32 %v10512, %v9956
      %v10559 = vmul.f32 %v10517, %v9958
      %v10560 = vmul.f32 %v10522, %v10291
      %v10561 = vmul.f32 %v10527, %v10293
      %v10562 = vadd.f32 %v10257, %v10530
      %v10563 = vadd.f32 %v10258, %v10531
      %v10564 = vadd.f32 %v10259, %v10532
      %v10565 = vadd.f32 %v10260, %v10533
      %v10566 = vadd.f32 %v10261, %v10534
      %v10567 = vadd.f32 %v10262, %v10535
      %v10568 = vadd.f32 %v10263, %v10536
      %v10569 = vadd.f32 %v10264, %v10537
      %v10570 = vadd.f32 %v10265, %v10538
      %v10571 = vadd.f32 %v10266, %v10539
      %v10572 = vadd.f32 %v10267, %v10540
      %v10573 = vadd.f32 %v10268, %v10541
      %v10574 = vadd.f32 %v10269, %v10542
      %v10575 = vadd.f32 %v10270, %v10543
      %v10576 = vadd.f32 %v10271, %v10544
      %v10577 = vadd.f32 %v10272, %v10545
      %v10578 = vadd.f32 %v10273, %v10546
      %v10579 = vadd.f32 %v10274, %v10547
      %v10580 = vadd.f32 %v10275, %v10548
      %v10581 = vadd.f32 %v10276, %v10549
      %v10582 = vadd.f32 %v10277, %v10550
      %v10583 = vadd.f32 %v10278, %v10551
      %v10584 = vadd.f32 %v10279, %v10552
      %v10585 = vadd.f32 %v10280, %v10553
      %v10586 = vadd.f32 %v10281, %v10554
      %v10587 = vadd.f32 %v10282, %v10555
      %v10588 = vadd.f32 %v10283, %v10556
      %v10589 = vadd.f32 %v10284, %v10557
      %v10590 = vadd.f32 %v10285, %v10558
      %v10591 = vadd.f32 %v10286, %v10559
      %v10592 = vadd.f32 %v10287, %v10560
      %v10593 = vadd.f32 %v10288, %v10561
      %v10594 = vrot.slane %v7845, 2
      %v10595 = vrot.slane %v7846, 2
      %v10596 = vsel %vm4533, %v10594, %v10595
      %v10597 = vrot.slane %v7847, 2
      %v10598 = vsel %vm4533, %v10595, %v10597
      %s10601 = scalar_lea.vmem %s4, 320
      %v10602 = vld [vmem:[%s10601] sm:$0xff]
      %v10603 = vld [vmem:[%s10601 + $0x8] sm:$0xff]
      %v10604 = vld [vmem:[%s10601 + $0x10] sm:$0xff]
      %v10605 = vld [vmem:[%s10601 + $0x18] sm:$0xff]
      %v10606 = vld [vmem:[%s10601 + $0x20] sm:$0xf]
      %v10608 = vsel %vm6698, %v10606, 0
      %10610 = vmatprep.subr.mxu0 0.0
      %10611 = vmatpush1.msra.mxu0 0.0
      %10612 = vmatprep.subr.mxu0 0.0
      %10613 = vmatpush1.msra.mxu0 0.0
      %10614 = vmatprep.subr.mxu0 0.0
      %10615 = vmatpush1.msra.mxu0 0.0
      %10616 = vmatprep.subr.mxu0 0.0
      %10617 = vmatpush1.msra.mxu0 0.0
      %10618 = vmatprep.subr.mxu0 0.0
      %10619 = vmatpush1.msra.mxu0 0.0
      %10620 = vmatprep.subr.mxu0 0.0
      %10621 = vmatpush1.msra.mxu0 0.0
      %10622 = vmatprep.subr.mxu0 0.0
      %10623 = vmatpush1.msra.mxu0 0.0
      %10624 = vmatprep.subr.mxu0 0.0
      %10625 = vmatpush1.msra.mxu0 0.0
      %10626 = vmatprep.subr.mxu0 0.0
      %10627 = vmatpush1.msra.mxu0 0.0
      %10628 = vmatprep.subr.mxu0 0.0
      %10629 = vmatpush1.msra.mxu0 0.0
      %10630 = vmatprep.subr.mxu0 0.0
      %10631 = vmatpush1.msra.mxu0 0.0
      %10632 = vmatprep.subr.mxu0 0.0
      %10633 = vmatpush1.msra.mxu0 %v10608
      %10634 = vmatprep.subr.mxu0 0.0
      %10635 = vmatpush1.msra.mxu0 %v10605
      %10636 = vmatprep.subr.mxu0 0.0
      %10637 = vmatpush1.msra.mxu0 %v10604
      %10638 = vmatprep.subr.mxu0 0.0
      %10639 = vmatpush1.msra.mxu0 %v10603
      %10640 = vmatprep.subr.mxu0 0.0
      %10641 = vmatpush1.msra.mxu0 %v10602
      %10642 = vmatprep.subr.mxu0 0.0
      %10643 = vmatpush2.msra.mxu0 0.0
      %10644 = vmatprep.subr.mxu0 0.0
      %10645 = vmatpush2.msra.mxu0 0.0
      %10646 = vmatprep.subr.mxu0 0.0
      %10647 = vmatpush2.msra.mxu0 0.0
      %10648 = vmatprep.subr.mxu0 0.0
      %10649 = vmatpush2.msra.mxu0 0.0
      %10650 = vmatprep.subr.mxu0 0.0
      %10651 = vmatpush2.msra.mxu0 0.0
      %10652 = vmatprep.subr.mxu0 0.0
      %10653 = vmatpush2.msra.mxu0 0.0
      %10654 = vmatprep.subr.mxu0 0.0
      %10655 = vmatpush2.msra.mxu0 0.0
      %10656 = vmatprep.subr.mxu0 0.0
      %10657 = vmatpush2.msra.mxu0 0.0
      %10658 = vmatprep.subr.mxu0 0.0
      %10659 = vmatpush2.msra.mxu0 0.0
      %10660 = vmatprep.subr.mxu0 0.0
      %10661 = vmatpush2.msra.mxu0 0.0
      %10662 = vmatprep.subr.mxu0 0.0
      %10663 = vmatpush2.msra.mxu0 0.0
      %10664 = vmatprep.subr.mxu0 0.0
      %10665 = vmatpush2.msra.mxu0 0.0
      %10666 = vmatprep.subr.mxu0 0.0
      %10667 = vmatpush2.msra.mxu0 0.0
      %10668 = vmatprep.subr.mxu0 0.0
      %10669 = vmatpush2.msra.mxu0 0.0
      %10670 = vmatprep.subr.mxu0 0.0
      %10671 = vmatpush2.msra.mxu0 0.0
      %10672 = vmatprep.subr.mxu0 0.0
      %10673 = vmatpush2.msra.mxu0 0.0
      %10674 = vmatprep.mubr.f32.mxu0 0.0
      %10675 = vmatmul.mubr.f32.gmra.mxu0 %v7854
      %v10676 = vpop.f32.mrf.mxu0
      %v10677 = vadd.f32 0.0, %v10676
      %v10678 = vpop.f32.mrf.mxu0
      %10679 = vmatprep.mubr.f32.mxu0 0.0
      %10680 = vmatmul.mubr.f32.gmra.mxu0 %v7857
      %v10681 = vpop.f32.mrf.mxu0
      %v10682 = vadd.f32 0.0, %v10681
      %v10683 = vpop.f32.mrf.mxu0
      %10684 = vmatprep.mubr.f32.mxu0 0.0
      %10685 = vmatmul.mubr.f32.gmra.mxu0 %v7860
      %v10686 = vpop.f32.mrf.mxu0
      %v10687 = vadd.f32 0.0, %v10686
      %v10688 = vpop.f32.mrf.mxu0
      %10689 = vmatprep.mubr.f32.mxu0 0.0
      %10690 = vmatmul.mubr.f32.gmra.mxu0 %v7863
      %v10691 = vpop.f32.mrf.mxu0
      %v10692 = vadd.f32 0.0, %v10691
      %v10693 = vpop.f32.mrf.mxu0
      %10694 = vmatprep.mubr.f32.mxu0 0.0
      %10695 = vmatmul.mubr.f32.gmra.mxu0 %v7866
      %v10696 = vpop.f32.mrf.mxu0
      %v10697 = vadd.f32 0.0, %v10696
      %v10698 = vpop.f32.mrf.mxu0
      %10699 = vmatprep.mubr.f32.mxu0 0.0
      %10700 = vmatmul.mubr.f32.gmra.mxu0 %v7869
      %v10701 = vpop.f32.mrf.mxu0
      %v10702 = vadd.f32 0.0, %v10701
      %v10703 = vpop.f32.mrf.mxu0
      %10704 = vmatprep.mubr.f32.mxu0 0.0
      %10705 = vmatmul.mubr.f32.gmra.mxu0 %v7872
      %v10706 = vpop.f32.mrf.mxu0
      %v10707 = vadd.f32 0.0, %v10706
      %v10708 = vpop.f32.mrf.mxu0
      %10709 = vmatprep.mubr.f32.mxu0 0.0
      %10710 = vmatmul.mubr.f32.gmra.mxu0 %v7875
      %v10711 = vpop.f32.mrf.mxu0
      %v10712 = vadd.f32 0.0, %v10711
      %v10713 = vpop.f32.mrf.mxu0
      %10714 = vmatprep.mubr.f32.mxu0 0.0
      %10715 = vmatmul.mubr.f32.gmra.mxu0 %v7878
      %v10716 = vpop.f32.mrf.mxu0
      %v10717 = vadd.f32 0.0, %v10716
      %v10718 = vpop.f32.mrf.mxu0
      %10719 = vmatprep.mubr.f32.mxu0 0.0
      %10720 = vmatmul.mubr.f32.gmra.mxu0 %v7881
      %v10721 = vpop.f32.mrf.mxu0
      %v10722 = vadd.f32 0.0, %v10721
      %v10723 = vpop.f32.mrf.mxu0
      %10724 = vmatprep.mubr.f32.mxu0 0.0
      %10725 = vmatmul.mubr.f32.gmra.mxu0 %v7884
      %v10726 = vpop.f32.mrf.mxu0
      %v10727 = vadd.f32 0.0, %v10726
      %v10728 = vpop.f32.mrf.mxu0
      %10729 = vmatprep.mubr.f32.mxu0 0.0
      %10730 = vmatmul.mubr.f32.gmra.mxu0 %v7887
      %v10731 = vpop.f32.mrf.mxu0
      %v10732 = vadd.f32 0.0, %v10731
      %v10733 = vpop.f32.mrf.mxu0
      %10734 = vmatprep.mubr.f32.mxu0 0.0
      %10735 = vmatmul.mubr.f32.gmra.mxu0 %v7890
      %v10736 = vpop.f32.mrf.mxu0
      %v10737 = vadd.f32 0.0, %v10736
      %v10738 = vpop.f32.mrf.mxu0
      %10739 = vmatprep.mubr.f32.mxu0 0.0
      %10740 = vmatmul.mubr.f32.gmra.mxu0 %v7893
      %v10741 = vpop.f32.mrf.mxu0
      %v10742 = vadd.f32 0.0, %v10741
      %v10743 = vpop.f32.mrf.mxu0
      %10744 = vmatprep.mubr.f32.mxu0 0.0
      %10745 = vmatmul.mubr.f32.gmra.mxu0 %v7896
      %v10746 = vpop.f32.mrf.mxu0
      %v10747 = vadd.f32 0.0, %v10746
      %v10748 = vpop.f32.mrf.mxu0
      %10749 = vmatprep.mubr.f32.mxu0 0.0
      %10750 = vmatmul.mubr.f32.gmra.mxu0 %v7899
      %v10751 = vpop.f32.mrf.mxu0
      %v10752 = vadd.f32 0.0, %v10751
      %v10753 = vpop.f32.mrf.mxu0
      %10754 = vmatprep.mubr.f32.mxu0 0.0
      %10755 = vmatmul.mubr.f32.gmra.mxu0 %v7902
      %v10756 = vpop.f32.mrf.mxu0
      %v10757 = vadd.f32 0.0, %v10756
      %v10758 = vpop.f32.mrf.mxu0
      %10759 = vmatprep.mubr.f32.mxu0 0.0
      %10760 = vmatmul.mubr.f32.gmra.mxu0 %v7905
      %v10761 = vpop.f32.mrf.mxu0
      %v10762 = vadd.f32 0.0, %v10761
      %v10763 = vpop.f32.mrf.mxu0
      %10764 = vmatprep.mubr.f32.mxu0 0.0
      %10765 = vmatmul.mubr.f32.gmra.mxu0 %v7908
      %v10766 = vpop.f32.mrf.mxu0
      %v10767 = vadd.f32 0.0, %v10766
      %v10768 = vpop.f32.mrf.mxu0
      %10769 = vmatprep.mubr.f32.mxu0 0.0
      %10770 = vmatmul.mubr.f32.gmra.mxu0 %v7911
      %v10771 = vpop.f32.mrf.mxu0
      %v10772 = vadd.f32 0.0, %v10771
      %v10773 = vpop.f32.mrf.mxu0
      %10774 = vmatprep.mubr.f32.mxu0 0.0
      %10775 = vmatmul.mubr.f32.gmra.mxu0 %v7914
      %v10776 = vpop.f32.mrf.mxu0
      %v10777 = vadd.f32 0.0, %v10776
      %v10778 = vpop.f32.mrf.mxu0
      %10779 = vmatprep.mubr.f32.mxu0 0.0
      %10780 = vmatmul.mubr.f32.gmra.mxu0 %v7917
      %v10781 = vpop.f32.mrf.mxu0
      %v10782 = vadd.f32 0.0, %v10781
      %v10783 = vpop.f32.mrf.mxu0
      %10784 = vmatprep.mubr.f32.mxu0 0.0
      %10785 = vmatmul.mubr.f32.gmra.mxu0 %v7920
      %v10786 = vpop.f32.mrf.mxu0
      %v10787 = vadd.f32 0.0, %v10786
      %v10788 = vpop.f32.mrf.mxu0
      %10789 = vmatprep.mubr.f32.mxu0 0.0
      %10790 = vmatmul.mubr.f32.gmra.mxu0 %v7923
      %v10791 = vpop.f32.mrf.mxu0
      %v10792 = vadd.f32 0.0, %v10791
      %v10793 = vpop.f32.mrf.mxu0
      %10794 = vmatprep.mubr.f32.mxu0 0.0
      %10795 = vmatmul.mubr.f32.gmra.mxu0 %v7926
      %v10796 = vpop.f32.mrf.mxu0
      %v10797 = vadd.f32 0.0, %v10796
      %v10798 = vpop.f32.mrf.mxu0
      %10799 = vmatprep.mubr.f32.mxu0 0.0
      %10800 = vmatmul.mubr.f32.gmra.mxu0 %v7929
      %v10801 = vpop.f32.mrf.mxu0
      %v10802 = vadd.f32 0.0, %v10801
      %v10803 = vpop.f32.mrf.mxu0
      %10804 = vmatprep.mubr.f32.mxu0 0.0
      %10805 = vmatmul.mubr.f32.gmra.mxu0 %v7932
      %v10806 = vpop.f32.mrf.mxu0
      %v10807 = vadd.f32 0.0, %v10806
      %v10808 = vpop.f32.mrf.mxu0
      %10809 = vmatprep.mubr.f32.mxu0 0.0
      %10810 = vmatmul.mubr.f32.gmra.mxu0 %v7935
      %v10811 = vpop.f32.mrf.mxu0
      %v10812 = vadd.f32 0.0, %v10811
      %v10813 = vpop.f32.mrf.mxu0
      %10814 = vmatprep.mubr.f32.mxu0 0.0
      %10815 = vmatmul.mubr.f32.gmra.mxu0 %v7938
      %v10816 = vpop.f32.mrf.mxu0
      %v10817 = vadd.f32 0.0, %v10816
      %v10818 = vpop.f32.mrf.mxu0
      %10819 = vmatprep.mubr.f32.mxu0 0.0
      %10820 = vmatmul.mubr.f32.gmra.mxu0 %v7941
      %v10821 = vpop.f32.mrf.mxu0
      %v10822 = vadd.f32 0.0, %v10821
      %v10823 = vpop.f32.mrf.mxu0
      %10824 = vmatprep.mubr.f32.mxu0 0.0
      %10825 = vmatmul.mubr.f32.gmra.mxu0 %v7944
      %v10826 = vpop.f32.mrf.mxu0
      %v10827 = vadd.f32 0.0, %v10826
      %v10828 = vpop.f32.mrf.mxu0
      %10829 = vmatprep.mubr.f32.mxu0 0.0
      %10830 = vmatmul.mubr.f32.gmra.mxu0 %v7947
      %v10831 = vpop.f32.mrf.mxu0
      %v10832 = vadd.f32 0.0, %v10831
      %v10833 = vpop.f32.mrf.mxu0
      %10834 = vdwg.mxu0
      %v10835 = vmul.f32 %v10677, %v9891
      %v10836 = vmul.f32 %v10682, %v9893
      %v10837 = vmul.f32 %v10687, %v9896
      %v10838 = vmul.f32 %v10692, %v9898
      %v10839 = vmul.f32 %v10697, %v9901
      %v10840 = vmul.f32 %v10702, %v9903
      %v10841 = vmul.f32 %v10707, %v9906
      %v10842 = vmul.f32 %v10712, %v9908
      %v10843 = vmul.f32 %v10717, %v9911
      %v10844 = vmul.f32 %v10722, %v9913
      %v10845 = vmul.f32 %v10727, %v9916
      %v10846 = vmul.f32 %v10732, %v9918
      %v10847 = vmul.f32 %v10737, %v9921
      %v10848 = vmul.f32 %v10742, %v9923
      %v10849 = vmul.f32 %v10747, %v9926
      %v10850 = vmul.f32 %v10752, %v9928
      %v10851 = vmul.f32 %v10757, %v9931
      %v10852 = vmul.f32 %v10762, %v9933
      %v10853 = vmul.f32 %v10767, %v9936
      %v10854 = vmul.f32 %v10772, %v9938
      %v10855 = vmul.f32 %v10777, %v9941
      %v10856 = vmul.f32 %v10782, %v9943
      %v10857 = vmul.f32 %v10787, %v9946
      %v10858 = vmul.f32 %v10792, %v9948
      %v10859 = vmul.f32 %v10797, %v9951
      %v10860 = vmul.f32 %v10802, %v9953
      %v10861 = vmul.f32 %v10807, %v9956
      %v10862 = vmul.f32 %v10812, %v9958
      %v10863 = vmul.f32 %v10817, %v10291
      %v10864 = vmul.f32 %v10822, %v10293
      %v10865 = vmul.f32 %v10827, %v10596
      %v10866 = vmul.f32 %v10832, %v10598
      %v10867 = vadd.f32 %v10562, %v10835
      %v10868 = vadd.f32 %v10563, %v10836
      %v10869 = vadd.f32 %v10564, %v10837
      %v10870 = vadd.f32 %v10565, %v10838
      %v10871 = vadd.f32 %v10566, %v10839
      %v10872 = vadd.f32 %v10567, %v10840
      %v10873 = vadd.f32 %v10568, %v10841
      %v10874 = vadd.f32 %v10569, %v10842
      %v10875 = vadd.f32 %v10570, %v10843
      %v10876 = vadd.f32 %v10571, %v10844
      %v10877 = vadd.f32 %v10572, %v10845
      %v10878 = vadd.f32 %v10573, %v10846
      %v10879 = vadd.f32 %v10574, %v10847
      %v10880 = vadd.f32 %v10575, %v10848
      %v10881 = vadd.f32 %v10576, %v10849
      %v10882 = vadd.f32 %v10577, %v10850
      %v10883 = vadd.f32 %v10578, %v10851
      %v10884 = vadd.f32 %v10579, %v10852
      %v10885 = vadd.f32 %v10580, %v10853
      %v10886 = vadd.f32 %v10581, %v10854
      %v10887 = vadd.f32 %v10582, %v10855
      %v10888 = vadd.f32 %v10583, %v10856
      %v10889 = vadd.f32 %v10584, %v10857
      %v10890 = vadd.f32 %v10585, %v10858
      %v10891 = vadd.f32 %v10586, %v10859
      %v10892 = vadd.f32 %v10587, %v10860
      %v10893 = vadd.f32 %v10588, %v10861
      %v10894 = vadd.f32 %v10589, %v10862
      %v10895 = vadd.f32 %v10590, %v10863
      %v10896 = vadd.f32 %v10591, %v10864
      %v10897 = vadd.f32 %v10592, %v10865
      %v10898 = vadd.f32 %v10593, %v10866
      %10899 = vst.msk [vmem:[%s383] sm:$0xff] %vm602, %v10867
      %10900 = vst.msk [vmem:[%s383 + $0x8] sm:$0xff] %vm602, %v10868
      %10901 = vst.msk [vmem:[%s383 + $0x10] sm:$0xff] %vm602, %v10869
      %10902 = vst.msk [vmem:[%s383 + $0x18] sm:$0xff] %vm602, %v10870
      %10903 = vst.msk [vmem:[%s383 + $0x20] sm:$0xff] %vm602, %v10871
      %10904 = vst.msk [vmem:[%s383 + $0x28] sm:$0xff] %vm602, %v10872
      %10905 = vst.msk [vmem:[%s383 + $0x30] sm:$0xff] %vm602, %v10873
      %10906 = vst.msk [vmem:[%s383 + $0x38] sm:$0xff] %vm602, %v10874
      %10907 = vst.msk [vmem:[%s383 + $0x40] sm:$0xff] %vm602, %v10875
      %10908 = vst.msk [vmem:[%s383 + $0x48] sm:$0xff] %vm602, %v10876
      %10909 = vst.msk [vmem:[%s383 + $0x50] sm:$0xff] %vm602, %v10877
      %10910 = vst.msk [vmem:[%s383 + $0x58] sm:$0xff] %vm602, %v10878
      %10911 = vst.msk [vmem:[%s383 + $0x60] sm:$0xff] %vm602, %v10879
      %10912 = vst.msk [vmem:[%s383 + $0x68] sm:$0xff] %vm602, %v10880
      %10913 = vst.msk [vmem:[%s383 + $0x70] sm:$0xff] %vm602, %v10881
      %10914 = vst.msk [vmem:[%s383 + $0x78] sm:$0xff] %vm602, %v10882
      %10915 = vst.msk [vmem:[%s383 + $0x80] sm:$0xff] %vm602, %v10883
      %10916 = vst.msk [vmem:[%s383 + $0x88] sm:$0xff] %vm602, %v10884
      %10917 = vst.msk [vmem:[%s383 + $0x90] sm:$0xff] %vm602, %v10885
      %10918 = vst.msk [vmem:[%s383 + $0x98] sm:$0xff] %vm602, %v10886
      %10919 = vst.msk [vmem:[%s383 + $0xa0] sm:$0xff] %vm602, %v10887
      %10920 = vst.msk [vmem:[%s383 + $0xa8] sm:$0xff] %vm602, %v10888
      %10921 = vst.msk [vmem:[%s383 + $0xb0] sm:$0xff] %vm602, %v10889
      %10922 = vst.msk [vmem:[%s383 + $0xb8] sm:$0xff] %vm602, %v10890
      %10923 = vst.msk [vmem:[%s383 + $0xc0] sm:$0xff] %vm602, %v10891
      %10924 = vst.msk [vmem:[%s383 + $0xc8] sm:$0xff] %vm602, %v10892
      %10925 = vst.msk [vmem:[%s383 + $0xd0] sm:$0xff] %vm602, %v10893
      %10926 = vst.msk [vmem:[%s383 + $0xd8] sm:$0xff] %vm602, %v10894
      %10927 = vst.msk [vmem:[%s383 + $0xe0] sm:$0xff] %vm602, %v10895
      %10928 = vst.msk [vmem:[%s383 + $0xe8] sm:$0xff] %vm602, %v10896
      %10929 = vst.msk [vmem:[%s383 + $0xf0] sm:$0xff] %vm602, %v10897
      %10930 = vst.msk [vmem:[%s383 + $0xf8] sm:$0xff] %vm602, %v10898
      %s10931 = smul.u32 32, %s24
      %p10932 = scmp.lt.s32.totalorder %s23, 1
      %s10933 = scalar_select %p10932, %s23, 1
      %p10934 = scmp.lt.s32.totalorder %s10931, 31
      %s10935 = scalar_select %p10934, %s10931, 31
      %s10936 = smul.addr %s10933, 32
      %s10937 = sadd.s32 %s10935, %s10936
      %s10938 = smul.addr %s10937, 8
      %s10939 = scalar_lea.vmem %s8, %s10938
      // Predicated region
      $region53: #{tpu_custom_call.1} parent=51 // pred_check
        %p10940 = pneg %p236
      $region54: #{tpu_custom_call.1} parent=51 // pred_check_branch
        %10942 = sbr.rel (%p10940) target = $region56
      $region55: #{tpu_custom_call.1} parent=51 // pred_region
        %s10943 = smul.u32 32, %s24
      $region56: #{tpu_custom_call.1} parent=51 // pred_fallthru
        _
    $region52: #{tpu_custom_call.1} parent=5 // pred_fallthru
      _
    %p10944 = scmp.le.s32.totalorder 2, %s14
    // Predicated region
    $region57: #{tpu_custom_call.1} parent=5 // pred_check
      %p10945 = pneg %p10944
    $region58: #{tpu_custom_call.1} parent=5 // pred_check_branch
      %10947 = sbr.rel (%p10945) target = $region60
    $region59: #{tpu_custom_call.1} parent=5 // pred_region
      %s10948 = ssub.s32 %s14, 2
      // Predicated region
      $region61: #{tpu_custom_call.1} parent=59 // pred_check
        %p10949 = pneg %p242
      $region62: #{tpu_custom_call.1} parent=59 // pred_check_branch
        %10951 = sbr.rel (%p10949) target = $region64
      $region63: #{tpu_custom_call.1} parent=59 // pred_region
        %s10952 = smul.u32 32, %s26
        %p10953 = scmp.lt.s32.totalorder %s25, 1
        %s10954 = scalar_select %p10953, %s25, 1
        %p10955 = scmp.lt.s32.totalorder %s10952, 31
        %s10956 = scalar_select %p10955, %s10952, 31
        %s10957 = smul.addr %s10954, 32
        %s10958 = sadd.s32 %s10956, %s10957
        %s10959 = smul.addr %s10958, 8
        %s10960 = scalar_lea.vmem %s8, %s10959
      $region64: #{tpu_custom_call.1} parent=59 // pred_fallthru
        _
    $region60: #{tpu_custom_call.1} parent=5 // pred_fallthru
      _
  $region6: #{tpu_custom_call.1} parent=0 // loop_footer
    %s18 = sadd.s32 1, %s14
  $region7: #{tpu_custom_call.1} parent=0 // loop_footer_branch
    %13 = sbr.rel target = $region3
  $region8: #{tpu_custom_call.1} parent=0 // loop_exit
    _

</llo_original>
